<compile_context>
chip_gen: v7x
topology: tpu7x:2x2x1
jax: 0.10.0
libtpu: 0.0.40
codegen_flags: <defaults>
</compile_context>

<pallas_src>
import functools

import jax
import jax.numpy as jnp
from jax.experimental import pallas as pl
from jax.experimental.pallas import tpu as pltpu

NEG_SLOPE = 0.01   # nn.LeakyReLU default
BN_EPS = 1e-5      # nn.BatchNorm2d default

# Lane-aligned offsets of the small BN parameters inside row 1 of the packed
# parameter operand (each slice starts on a 128-lane boundary).
_OFF_G1, _OFF_BE1, _OFF_G2, _OFF_BE2 = 0, 128, 256, 384


def _round_up(n, m):
    return (n + m - 1) // m * m


# ----------------------------------------------------------------------------
# Shared math (pure array functions; used inside the kernel and by the
# plain-JAX strict reference so both execute identical formulas).
# ----------------------------------------------------------------------------
def _bn1_leaky(h, ind_t, gamma, beta, count):
    """Train-mode BatchNorm2d over channel-major columns + LeakyReLU.

    h      : (B, P1) f32 activations; padded columns are exactly zero.
    ind_t  : (C, P1) one-hot channel membership (zero columns for padding).
    gamma, beta : (1, C).
    count  : static python int = N*H*W (true element count per channel).
    """
    f32 = jnp.float32
    # Batch reduce on the VPU first, then ONE MXU contraction over the long
    # axis for both sum and sum-of-squares: (2, P1) . (C, P1)^T -> (2, C).
    row_sum = jnp.sum(h, axis=0, keepdims=True)                       # (1, P1)
    row_sq = jnp.sum(h * h, axis=0, keepdims=True)                    # (1, P1)
    stacked = jnp.concatenate([row_sum, row_sq], axis=0)              # (2, P1)
    stats = jax.lax.dot_general(stacked, ind_t,
                                (((1,), (1,)), ((), ())),
                                preferred_element_type=f32)           # (2, C)
    mean = stats[0:1, :] / count
    # NOTE: E[x^2]-E[x]^2 is cancellation-prone if |mean| >> std; fine at the
    # current activation scales (weights ~0.05).
    var = stats[1:2, :] / count - mean * mean                         # biased
    inv = jax.lax.rsqrt(var + BN_EPS)
    scale_c = gamma * inv                                             # (1, C)
    shift_c = beta - mean * scale_c                                   # (1, C)
    # ONE broadcast matmul for both scale and shift: (2, C) @ (C, P1).
    ss = jnp.dot(jnp.concatenate([scale_c, shift_c], axis=0), ind_t,
                 preferred_element_type=f32)                          # (2, P1)
    y = h * ss[0:1, :] + ss[1:2, :]                                   # pads stay 0
    return jnp.where(y >= 0, y, NEG_SLOPE * y)


def _bn2_leaky(h, gamma, beta, count):
    """BatchNorm2d with C == 1: plain sums, scalar scale/shift broadcast.

    Zero-padded lanes contribute 0 to the sums and are excluded by dividing by
    the static true `count`.  gamma/beta are (1, 1) arrays.  Padded lanes of
    the result become `shift` (nonzero) and are sliced off outside the kernel.
    """
    mean = jnp.sum(h) / count
    var = jnp.sum(h * h) / count - mean * mean
    inv = jax.lax.rsqrt(var + BN_EPS)
    scale = gamma * inv                                               # (1, 1)
    shift = beta - mean * scale                                       # (1, 1)
    y = h * scale + shift
    return jnp.where(y >= 0, y, NEG_SLOPE * y)


# ----------------------------------------------------------------------------
# Pallas kernel: one fused pass (fc+convT1 matmul, BN1+LeakyReLU, convT2
# matmul, BN2+LeakyReLU).  All operands resident in VMEM, no grid (B is tiny,
# kernel is DMA/launch bound).
# ----------------------------------------------------------------------------
def _draw_kernel(z_ref, w01_ref, pp_ref, ind1t_ref, mc2_ref, out_ref,
                 *, count1, count2):
    f32, bf16 = jnp.float32, jnp.bfloat16
    c1 = ind1t_ref.shape[0]

    # Unpack the single small-parameter operand.
    pp = pp_ref[...]                                                  # (2, P1)
    b01 = pp[0:1, :]                                                  # (1, P1)
    g1 = pp[1:2, _OFF_G1:_OFF_G1 + c1]                                # (1, C1)
    be1 = pp[1:2, _OFF_BE1:_OFF_BE1 + c1]                             # (1, C1)
    g2 = pp[1:2, _OFF_G2:_OFF_G2 + 1]                                 # (1, 1)
    be2 = pp[1:2, _OFF_BE2:_OFF_BE2 + 1]                              # (1, 1)

    # fc folded into convT1: single bf16 MXU matmul, f32 accumulation + bias.
    h1 = jnp.dot(z_ref[...].astype(bf16), w01_ref[...],
                 preferred_element_type=f32) + b01                    # (B, P1)
    y1 = _bn1_leaky(h1, ind1t_ref[...], g1, be1, count1)
    # convT2 as dense matmul (bf16 weights, f32 accumulation); conv2 bias is
    # exactly cancelled by BN2 and therefore dropped.
    h2 = jnp.dot(y1.astype(bf16), mc2_ref[...],
                 preferred_element_type=f32)                          # (B, P2)
    out_ref[...] = _bn2_leaky(h2, g2, be2, count2)


# ----------------------------------------------------------------------------
# One-time parameter preparation (dense convT matrices, fc fold, packing).
# ----------------------------------------------------------------------------
def conv_transpose_dense(w, hin, win, stride, pad):
    """Dense matrix M s.t. flatten(convT(x)) = flatten(x) @ M (NCHW flattening).

    w: ConvTranspose2d weight, shape (Cin, Cout, K, K).
    """
    cin, cout, k, _ = w.shape
    hout = (hin - 1) * stride - 2 * pad + k
    wout = (win - 1) * stride - 2 * pad + k
    ah = (jnp.arange(hout)[None, :, None] + pad
          - stride * jnp.arange(hin)[:, None, None]
          == jnp.arange(k)[None, None, :]).astype(w.dtype)     # (hin, hout, k)
    aw = (jnp.arange(wout)[None, :, None] + pad
          - stride * jnp.arange(win)[:, None, None]
          == jnp.arange(k)[None, None, :]).astype(w.dtype)     # (win, wout, k)
    m = jnp.einsum('ioh,jpw,cdhw->cijdop', ah, aw, w)
    return m.reshape(cin * hin * win, cout * hout * wout), hout, wout


def prepare_draw_params(params):
    """Bake all derived operands once (call at setup, not per forward)."""
    H0 = W0 = 7
    wc1, wc2 = params['wc1'], params['wc2']
    mc1, H1, W1 = conv_transpose_dense(wc1, H0, W0, 2, 1)       # 7x7  -> 14x14
    C1 = wc1.shape[1]
    mc2, H2, W2 = conv_transpose_dense(wc2, H1, W1, 2, 1)       # 14x14 -> 28x28
    C2 = wc2.shape[1]
    n1 = C1 * H1 * W1                                            # 1568
    n2 = C2 * H2 * W2                                            # 784
    P1, P2 = _round_up(n1, 128), _round_up(n2, 128)              # 1664, 896

    # Fold fc into convT1 (exact: BN1 comes right after conv1).  The conv
    # biases bc1/bc2 are constant per channel and exactly cancelled by their
    # train-mode BatchNorms -> dropped entirely.
    w01 = params['wfc_t'] @ mc1                                  # (128, n1)
    b01 = params['bfc'] @ mc1                                    # (n1,)

    w01 = jnp.pad(w01, ((0, 0), (0, P1 - n1))).astype(jnp.bfloat16)
    b01 = jnp.pad(b01, (0, P1 - n1)).astype(jnp.float32)
    mc2p = jnp.pad(mc2, ((0, P1 - n1), (0, P2 - n2))).astype(jnp.bfloat16)

    # Channel-membership indicator, stored TRANSPOSED only: (C1, P1).
    # Padded columns (>= n1) map to no channel -> excluded from BN1 stats.
    ind1t = (jnp.arange(P1)[None, :] // (H1 * W1)
             == jnp.arange(C1)[:, None]).astype(jnp.float32)
    ind1t = ind1t * (jnp.arange(P1)[None, :] < n1).astype(jnp.float32)

    # One packed small-parameter operand:
    #   row 0 = b01 (fc bias pushed through convT1),
    #   row 1 = {g1, be1, g2, be2} at 128-lane-aligned offsets.
    row1 = jnp.zeros((P1,), jnp.float32)
    row1 = row1.at[_OFF_G1:_OFF_G1 + C1].set(params['g1'])
    row1 = row1.at[_OFF_BE1:_OFF_BE1 + C1].set(params['be1'])
    row1 = row1.at[_OFF_G2:_OFF_G2 + C2].set(params['g2'])
    row1 = row1.at[_OFF_BE2:_OFF_BE2 + C2].set(params['be2'])
    packed = jnp.stack([b01, row1], axis=0)                      # (2, P1)

    return dict(
        w01=w01, packed=packed, ind1t=ind1t, mc2=mc2p,
        C1=C1, C2=C2, H1=H1, W1=W1, H2=H2, W2=W2, n2=n2, P2=P2,
    )


def draw_forward(z, prep):
    B = z.shape[0]
    kernel = functools.partial(_draw_kernel,
                               count1=B * prep['H1'] * prep['W1'],
                               count2=B * prep['H2'] * prep['W2'])
    vmem = pl.BlockSpec(memory_space=pltpu.MemorySpace.VMEM)
    out = pl.pallas_call(
        kernel,
        out_shape=jax.ShapeDtypeStruct((B, prep['P2']), jnp.float32),
        in_specs=[vmem] * 5,
        out_specs=vmem,
        compiler_params=pltpu.CompilerParams(vmem_limit_bytes=16 * 1024 * 1024),
    )(z, prep['w01'], prep['packed'], prep['ind1t'], prep['mc2'])
    return out[:, :prep['n2']].reshape(B, prep['C2'], prep['H2'], prep['W2'])


# ----------------------------------------------------------------------------
# References.
#  * draw_reference_quant: plain JAX, identical bf16-quantized/packed operands
#    and the exact same formulas as the kernel (strict numerical check).
#  * draw_reference_f32  : pure f32 PyTorch-equivalent math including the conv
#    biases (semantic check; loose tolerance because the kernel stores the big
#    weights in bf16).
# ----------------------------------------------------------------------------
def draw_reference_quant(z, prep):
    B = z.shape[0]
    count1 = B * prep['H1'] * prep['W1']
    count2 = B * prep['H2'] * prep['W2']
    C1 = prep['C1']
    pp = prep['packed']
    b01 = pp[0:1, :]
    g1 = pp[1:2, _OFF_G1:_OFF_G1 + C1]
    be1 = pp[1:2, _OFF_BE1:_OFF_BE1 + C1]
    g2 = pp[1:2, _OFF_G2:_OFF_G2 + 1]
    be2 = pp[1:2, _OFF_BE2:_OFF_BE2 + 1]
    h1 = jnp.dot(z.astype(jnp.bfloat16), prep['w01'],
                 preferred_element_type=jnp.float32) + b01
    y1 = _bn1_leaky(h1, prep['ind1t'], g1, be1, count1)
    h2 = jnp.dot(y1.astype(jnp.bfloat16), prep['mc2'],
                 preferred_element_type=jnp.float32)
    y2 = _bn2_leaky(h2, g2, be2, count2)
    return y2[:, :prep['n2']].reshape(B, prep['C2'], prep['H2'], prep['W2'])


def _bn_ref(h, C, gamma, beta):
    B = h.shape[0]
    h3 = h.reshape(B, C, -1)
    mean = h3.mean(axis=(0, 2))
    var = h3.var(axis=(0, 2))                 # biased variance (train mode)
    y = ((h3 - mean[None, :, None])
         * (gamma * jax.lax.rsqrt(var + BN_EPS))[None, :, None]
         + beta[None, :, None])
    y = jnp.where(y >= 0, y, NEG_SLOPE * y)
    return y.reshape(B, -1)


def draw_reference_f32(z, params):
    B = z.shape[0]
    H0 = W0 = 7
    mc1, H1, W1 = conv_transpose_dense(params['wc1'], H0, W0, 2, 1)
    C1 = params['wc1'].shape[1]
    mc2, H2, W2 = conv_transpose_dense(params['wc2'], H1, W1, 2, 1)
    C2 = params['wc2'].shape[1]
    h0 = z @ params['wfc_t'] + params['bfc'][None, :]
    h1 = h0 @ mc1 + jnp.repeat(params['bc1'], H1 * W1)[None, :]
    h1 = _bn_ref(h1, C1, params['g1'], params['be1'])
    h2 = h1 @ mc2 + jnp.repeat(params['bc2'], H2 * W2)[None, :]
    h2 = _bn_ref(h2, C2, params['g2'], params['be2'])
    return h2.reshape(B, C2, H2, W2)


# ----------------------------------------------------------------------------
if __name__ == "__main__":
    B, NDIM = 2, 128
    key = jax.random.PRNGKey(0)
    ks = jax.random.split(key, 9)

    params = dict(
        # fc: nn.Linear(128, 64*49) -> store transposed weight (128, 3136)
        wfc_t=0.05 * jax.random.normal(ks[0], (NDIM, 64 * 49), jnp.float32),
        bfc=0.05 * jax.random.normal(ks[1], (64 * 49,), jnp.float32),
        # conv1: nn.ConvTranspose2d(64, 8, 4, 2, 1) -> weight (Cin, Cout, 4, 4)
        wc1=0.05 * jax.random.normal(ks[2], (64, 8, 4, 4), jnp.float32),
        bc1=0.05 * jax.random.normal(ks[3], (8,), jnp.float32),
        # conv1_bn: nn.BatchNorm2d(8)
        g1=1.0 + 0.1 * jax.random.normal(ks[4], (8,), jnp.float32),
        be1=0.1 * jax.random.normal(ks[5], (8,), jnp.float32),
        # conv2: nn.ConvTranspose2d(8, 1, 4, 2, 1)
        wc2=0.05 * jax.random.normal(ks[6], (8, 1, 4, 4), jnp.float32),
        bc2=0.05 * jax.random.normal(ks[7], (1,), jnp.float32),
        # conv2_bn: nn.BatchNorm2d(1)
        g2=jnp.ones((1,), jnp.float32),
        be2=jnp.zeros((1,), jnp.float32),
    )

    z = jax.random.normal(ks[8], (B, NDIM), jnp.float32)

    # One-time preparation (fc fold, dense convT matrices, packing, bf16 cast).
    prep = jax.tree_util.tree_map(
        lambda x: jax.block_until_ready(x) if isinstance(x, jax.Array) else x,
        prepare_draw_params(params))

    out = jax.block_until_ready(draw_forward(z, prep))
    assert out.shape == (B, 1, 28, 28), out.shape
    assert bool(jnp.all(jnp.isfinite(out)))

    # Strict check: identical bf16-quantized/packed operands, plain-JAX math.
    ref_q = jax.block_until_ready(draw_reference_quant(z, prep))
    assert bool(jnp.allclose(out, ref_q, atol=1e-2, rtol=1e-2)), \
        "kernel/quantized-reference mismatch"

    # Semantic check vs pure-f32 PyTorch-equivalent math (bf16 weight storage,
    # BN-cancelled conv biases are exact).
    ref_f = jax.block_until_ready(draw_reference_f32(z, params))
    assert bool(jnp.allclose(out, ref_f, atol=5e-2, rtol=5e-2)), \
        "kernel/f32-reference mismatch"

    print("KERNEL_OK")
</pallas_src>

<mosaic_0001>
module attributes {stable_mosaic.version = 11 : i64} {
  func.func @_draw_kernel(%arg0: memref<2x128xf32, #tpu.memory_space<vmem>>, %arg1: memref<128x1664xbf16, #tpu.memory_space<vmem>>, %arg2: memref<2x1664xf32, #tpu.memory_space<vmem>>, %arg3: memref<8x1664xf32, #tpu.memory_space<vmem>>, %arg4: memref<1664x896xbf16, #tpu.memory_space<vmem>>, %arg5: memref<2x896xf32, #tpu.memory_space<vmem>>) attributes {dimension_semantics = [], scalar_prefetch = 0 : i64, scratch_operands = 0 : i64, tpu.core_type = #tpu.core_type<tc>} {
    %c0 = arith.constant 0 : index
    %c0_0 = arith.constant 0 : index
    %0 = vector.load %arg2[%c0, %c0_0] : memref<2x1664xf32, #tpu.memory_space<vmem>>, vector<2x1664xf32>
    %1 = vector.extract_strided_slice %0 {offsets = [0, 0], sizes = [1, 1664], strides = [1, 1]} : vector<2x1664xf32> to vector<1x1664xf32>
    %2 = vector.extract_strided_slice %0 {offsets = [1, 0], sizes = [1, 8], strides = [1, 1]} : vector<2x1664xf32> to vector<1x8xf32>
    %3 = vector.extract_strided_slice %0 {offsets = [1, 128], sizes = [1, 8], strides = [1, 1]} : vector<2x1664xf32> to vector<1x8xf32>
    %4 = vector.extract_strided_slice %0 {offsets = [1, 256], sizes = [1, 1], strides = [1, 1]} : vector<2x1664xf32> to vector<1x1xf32>
    %5 = vector.extract_strided_slice %0 {offsets = [1, 384], sizes = [1, 1], strides = [1, 1]} : vector<2x1664xf32> to vector<1x1xf32>
    %c0_1 = arith.constant 0 : index
    %c0_2 = arith.constant 0 : index
    %6 = vector.load %arg0[%c0_1, %c0_2] : memref<2x128xf32, #tpu.memory_space<vmem>>, vector<2x128xf32>
    %7 = arith.truncf %6 : vector<2x128xf32> to vector<2x128xbf16>
    %c0_3 = arith.constant 0 : index
    %c0_4 = arith.constant 0 : index
    %8 = vector.load %arg1[%c0_3, %c0_4] : memref<128x1664xbf16, #tpu.memory_space<vmem>>, vector<128x1664xbf16>
    %cst = arith.constant dense<0.000000e+00> : vector<2x1664xf32>
    %9 = tpu.matmul %7, %8, %cst {dimension_numbers = #tpu.dot_dimension_numbers<[1], [0], [0], [1], [0, 0, 1, 1], [], []>} : vector<2x128xbf16>, vector<128x1664xbf16>, vector<2x1664xf32> -> vector<2x1664xf32>
    %10 = vector.broadcast %1 : vector<1x1664xf32> to vector<2x1664xf32>
    %11 = arith.addf %9, %10 : vector<2x1664xf32>
    %c0_5 = arith.constant 0 : index
    %c0_6 = arith.constant 0 : index
    %12 = vector.load %arg3[%c0_5, %c0_6] : memref<8x1664xf32, #tpu.memory_space<vmem>>, vector<8x1664xf32>
    %cst_7 = arith.constant dense<0.000000e+00> : vector<1664xf32>
    %13 = vector.multi_reduction <add>, %11, %cst_7 [0] : vector<2x1664xf32> to vector<1664xf32>
    %14 = vector.shape_cast %13 : vector<1664xf32> to vector<1x1664xf32>
    %15 = arith.mulf %11, %11 : vector<2x1664xf32>
    %cst_8 = arith.constant dense<0.000000e+00> : vector<1664xf32>
    %16 = vector.multi_reduction <add>, %15, %cst_8 [0] : vector<2x1664xf32> to vector<1664xf32>
    %17 = vector.shape_cast %16 : vector<1664xf32> to vector<1x1664xf32>
    %18 = tpu.concatenate %14, %17 in 0 : vector<1x1664xf32>, vector<1x1664xf32> -> vector<2x1664xf32>
    %cst_9 = arith.constant dense<0.000000e+00> : vector<2x8xf32>
    %19 = tpu.matmul %18, %12, %cst_9 {dimension_numbers = #tpu.dot_dimension_numbers<[1], [1], [0], [0], [0, 0, 1, 0], [], []>} : vector<2x1664xf32>, vector<8x1664xf32>, vector<2x8xf32> -> vector<2x8xf32>
    %20 = vector.extract_strided_slice %19 {offsets = [0, 0], sizes = [1, 8], strides = [1, 1]} : vector<2x8xf32> to vector<1x8xf32>
    %cst_10 = arith.constant 3.920000e+02 : f32
    %21 = vector.broadcast %cst_10 : f32 to vector<1x8xf32>
    %22 = arith.divf %20, %21 : vector<1x8xf32>
    %23 = vector.extract_strided_slice %19 {offsets = [1, 0], sizes = [1, 8], strides = [1, 1]} : vector<2x8xf32> to vector<1x8xf32>
    %cst_11 = arith.constant 3.920000e+02 : f32
    %24 = vector.broadcast %cst_11 : f32 to vector<1x8xf32>
    %25 = arith.divf %23, %24 : vector<1x8xf32>
    %26 = arith.mulf %22, %22 : vector<1x8xf32>
    %27 = arith.subf %25, %26 : vector<1x8xf32>
    %cst_12 = arith.constant 9.99999974E-6 : f32
    %28 = vector.broadcast %cst_12 : f32 to vector<1x8xf32>
    %29 = arith.addf %27, %28 : vector<1x8xf32>
    %30 = math.rsqrt %29 : vector<1x8xf32>
    %31 = arith.mulf %2, %30 : vector<1x8xf32>
    %32 = arith.mulf %22, %31 : vector<1x8xf32>
    %33 = arith.subf %3, %32 : vector<1x8xf32>
    %34 = tpu.concatenate %31, %33 in 0 : vector<1x8xf32>, vector<1x8xf32> -> vector<2x8xf32>
    %cst_13 = arith.constant dense<0.000000e+00> : vector<2x1664xf32>
    %35 = tpu.matmul %34, %12, %cst_13 {dimension_numbers = #tpu.dot_dimension_numbers<[1], [0], [0], [1], [0, 0, 1, 1], [], []>} : vector<2x8xf32>, vector<8x1664xf32>, vector<2x1664xf32> -> vector<2x1664xf32>
    %36 = vector.extract_strided_slice %35 {offsets = [0, 0], sizes = [1, 1664], strides = [1, 1]} : vector<2x1664xf32> to vector<1x1664xf32>
    %37 = vector.broadcast %36 : vector<1x1664xf32> to vector<2x1664xf32>
    %38 = arith.mulf %11, %37 : vector<2x1664xf32>
    %39 = vector.extract_strided_slice %35 {offsets = [1, 0], sizes = [1, 1664], strides = [1, 1]} : vector<2x1664xf32> to vector<1x1664xf32>
    %40 = vector.broadcast %39 : vector<1x1664xf32> to vector<2x1664xf32>
    %41 = arith.addf %38, %40 : vector<2x1664xf32>
    %cst_14 = arith.constant 0.000000e+00 : f32
    %42 = vector.broadcast %cst_14 : f32 to vector<2x1664xf32>
    %43 = arith.cmpf oge, %41, %42 : vector<2x1664xf32>
    %cst_15 = arith.constant 0.00999999977 : f32
    %44 = vector.broadcast %cst_15 : f32 to vector<2x1664xf32>
    %45 = arith.mulf %44, %41 : vector<2x1664xf32>
    %46 = arith.select %43, %41, %45 : vector<2x1664xi1>, vector<2x1664xf32>
    %47 = arith.truncf %46 : vector<2x1664xf32> to vector<2x1664xbf16>
    %c0_16 = arith.constant 0 : index
    %c0_17 = arith.constant 0 : index
    %48 = vector.load %arg4[%c0_16, %c0_17] : memref<1664x896xbf16, #tpu.memory_space<vmem>>, vector<1664x896xbf16>
    %cst_18 = arith.constant dense<0.000000e+00> : vector<2x896xf32>
    %49 = tpu.matmul %47, %48, %cst_18 {dimension_numbers = #tpu.dot_dimension_numbers<[1], [0], [0], [1], [0, 0, 1, 1], [], []>} : vector<2x1664xbf16>, vector<1664x896xbf16>, vector<2x896xf32> -> vector<2x896xf32>
    %50 = vector.shape_cast %49 : vector<2x896xf32> to vector<1x2x896xf32>
    %cst_19 = arith.constant dense<0.000000e+00> : vector<1xf32>
    %51 = vector.multi_reduction <add>, %50, %cst_19 [1, 2] : vector<1x2x896xf32> to vector<1xf32>
    %52 = vector.shape_cast %51 : vector<1xf32> to vector<1x1x1xf32>
    %53 = vector.extract %52[0, 0, 0] : f32 from vector<1x1x1xf32>
    %cst_20 = arith.constant 1.568000e+03 : f32
    %54 = arith.divf %53, %cst_20 : f32
    %55 = arith.mulf %49, %49 : vector<2x896xf32>
    %56 = vector.shape_cast %55 : vector<2x896xf32> to vector<1x2x896xf32>
    %cst_21 = arith.constant dense<0.000000e+00> : vector<1xf32>
    %57 = vector.multi_reduction <add>, %56, %cst_21 [1, 2] : vector<1x2x896xf32> to vector<1xf32>
    %58 = vector.shape_cast %57 : vector<1xf32> to vector<1x1x1xf32>
    %59 = vector.extract %58[0, 0, 0] : f32 from vector<1x1x1xf32>
    %cst_22 = arith.constant 1.568000e+03 : f32
    %60 = arith.divf %59, %cst_22 : f32
    %61 = arith.mulf %54, %54 : f32
    %62 = arith.subf %60, %61 : f32
    %cst_23 = arith.constant 9.99999974E-6 : f32
    %63 = arith.addf %62, %cst_23 : f32
    %64 = math.rsqrt %63 : f32
    %65 = vector.broadcast %64 : f32 to vector<1x1xf32>
    %66 = arith.mulf %4, %65 : vector<1x1xf32>
    %67 = vector.broadcast %54 : f32 to vector<1x1xf32>
    %68 = arith.mulf %67, %66 : vector<1x1xf32>
    %69 = arith.subf %5, %68 : vector<1x1xf32>
    %70 = vector.broadcast %66 : vector<1x1xf32> to vector<2x896xf32>
    %71 = arith.mulf %49, %70 : vector<2x896xf32>
    %72 = vector.broadcast %69 : vector<1x1xf32> to vector<2x896xf32>
    %73 = arith.addf %71, %72 : vector<2x896xf32>
    %cst_24 = arith.constant 0.000000e+00 : f32
    %74 = vector.broadcast %cst_24 : f32 to vector<2x896xf32>
    %75 = arith.cmpf oge, %73, %74 : vector<2x896xf32>
    %cst_25 = arith.constant 0.00999999977 : f32
    %76 = vector.broadcast %cst_25 : f32 to vector<2x896xf32>
    %77 = arith.mulf %76, %73 : vector<2x896xf32>
    %78 = arith.select %75, %73, %77 : vector<2x896xi1>, vector<2x896xf32>
    %c0_26 = arith.constant 0 : index
    %c0_27 = arith.constant 0 : index
    %79 = vector.load %arg5[%c0_26, %c0_27] : memref<2x896xf32, #tpu.memory_space<vmem>>, vector<2x896xf32>
    tpu.vector_store %arg5[%c0_26, %c0_27], %78 {strides = array<i32>} : memref<2x896xf32, #tpu.memory_space<vmem>>, vector<2x896xf32>,
    return
  }
}

</mosaic_0001>

<llo_original>
// kernel: tpu_custom_call.1
$region0: #{tpu_custom_call.1}
  #allocation0 [shape = 'u32[]', space=smem, size = 0x4, offset = 0x4, fixed_abs, tag = 'smem constant byte address 0x4 - core index']
  #allocation1 [shape = 'u32[144,128]{1,0:T(1,128)}', space=vmem, size = 0x12000, scoped, tag = 'internal scratch']
  %s0 = inlined_call_operand.hbm [shape: f32[2,128], index: 0, kind: input, shape index: {}]
  %s1 = inlined_call_operand.hbm [shape: bf16[128,1664], index: 1, kind: input, shape index: {}]
  %s2 = inlined_call_operand.hbm [shape: f32[2,1664], index: 2, kind: input, shape index: {}]
  %s3 = inlined_call_operand.hbm [shape: f32[8,1664], index: 3, kind: input, shape index: {}]
  %s4 = inlined_call_operand.hbm [shape: bf16[1664,896], index: 4, kind: input, shape index: {}]
  %s5 = inlined_call_operand.hbm [shape: f32[2,896], index: 5, kind: output, shape index: {}]
  %s6 = sld [smem:[#allocation0]]
  $region50: #{tpu_custom_call.1} parent=0
    _
  %s8 = ssub.s32 1, %s6
  %s9 = scalar_select 0, %s8, %s6
  $region1: #{tpu_custom_call.1} parent=0
    #allocation2 [shape = 'u8[1024]{0}', space=vmem, size = 0x400, scoped, tag = 'input window, operand 0, single buffered']
    #allocation3 [shape = 's32[1]{0}', space=sflag, size = 0x4, scoped, tag = 'scoped memory for tpu_custom_call.1']
    #allocation4 [shape = 's32[1]{0}', space=sflag, size = 0x4, scoped, tag = 'scoped memory for tpu_custom_call.1']
    #allocation5 [shape = 'u8[425984]{0}', space=vmem, size = 0x68000, scoped, tag = 'input window, operand 1, single buffered']
    #allocation6 [shape = 's32[1]{0}', space=sflag, size = 0x4, scoped, tag = 'scoped memory for tpu_custom_call.1']
    #allocation7 [shape = 'u8[13312]{0}', space=vmem, size = 0x3400, scoped, tag = 'input window, operand 2, single buffered']
    #allocation8 [shape = 'u8[53248]{0}', space=vmem, size = 0xd000, scoped, tag = 'input window, operand 3, single buffered']
    #allocation9 [shape = 's32[1]{0}', space=sflag, size = 0x4, scoped, tag = 'scoped memory for tpu_custom_call.1']
    #allocation10 [shape = 'u8[2981888]{0}', space=vmem, size = 0x2d8000, scoped, tag = 'input window, operand 4, single buffered']
    #allocation11 [shape = 'u8[7168]{0}', space=vmem, size = 0x1c00, scoped, tag = 'output window, operand 0, single buffered']
    %10 = vsyncpa [#allocation3], 0
    %11 = vsyncpa [#allocation6], 0
    %12 = vsyncpa [#allocation9], 0
    %13 = vsyncpa [#allocation4], 0
    // Predicated region
    $region2: #{tpu_custom_call.1} parent=1 // pred_check
      _
    $region3: #{tpu_custom_call.1} parent=1 // pred_check_branch
      %15 = sbr.rel (0) target = $region5
    $region4: #{tpu_custom_call.1} parent=1 // pred_region
      %s17 = ssub.s32 32, 32
      %18 = vsyncadd [#allocation3], %s17
      %s20 = sshll.u32 [#allocation2], 4
      %s21 = int_to_ptr.vmem [resolvable:$true] %s20
      %23 = dma.hbm_to_vmem [thread:$0]  %s0, 32, %s21, [#allocation3]
    $region5: #{tpu_custom_call.1} parent=1 // pred_fallthru
      _
    // Predicated region
    $region6: #{tpu_custom_call.1} parent=1 // pred_check
      _
    $region7: #{tpu_custom_call.1} parent=1 // pred_check_branch
      %25 = sbr.rel (0) target = $region9
    $region8: #{tpu_custom_call.1} parent=1 // pred_region
      %s27 = ssub.s32 13312, 13312
      %28 = vsyncadd [#allocation6], %s27
      %s29 = sshll.u32 [#allocation5], 4
      %s30 = int_to_ptr.vmem [resolvable:$true] %s29
      %35 = dma.hbm_to_vmem [thread:$0]  %s1, 13312, %s30, [#allocation6], 832, 832, 52
    $region9: #{tpu_custom_call.1} parent=1 // pred_fallthru
      _
    // Predicated region
    $region10: #{tpu_custom_call.1} parent=1 // pred_check
      _
    $region11: #{tpu_custom_call.1} parent=1 // pred_check_branch
      %37 = sbr.rel (0) target = $region13
    $region12: #{tpu_custom_call.1} parent=1 // pred_region
      %s39 = ssub.s32 416, 416
      %40 = vsyncadd [#allocation6], %s39
      %s42 = sshll.u32 [#allocation7], 4
      %s43 = int_to_ptr.vmem [resolvable:$true] %s42
      %45 = dma.hbm_to_vmem [thread:$0]  %s2, 416, %s43, [#allocation6]
    $region13: #{tpu_custom_call.1} parent=1 // pred_fallthru
      _
    // Predicated region
    $region14: #{tpu_custom_call.1} parent=1 // pred_check
      _
    $region15: #{tpu_custom_call.1} parent=1 // pred_check_branch
      %47 = sbr.rel (0) target = $region17
    $region16: #{tpu_custom_call.1} parent=1 // pred_region
      %s49 = ssub.s32 1664, 1664
      %50 = vsyncadd [#allocation9], %s49
      %s52 = sshll.u32 [#allocation8], 4
      %s53 = int_to_ptr.vmem [resolvable:$true] %s52
      %55 = dma.hbm_to_vmem [thread:$0]  %s3, 1664, %s53, [#allocation9]
    $region17: #{tpu_custom_call.1} parent=1 // pred_fallthru
      _
    // Predicated region
    $region18: #{tpu_custom_call.1} parent=1 // pred_check
      _
    $region19: #{tpu_custom_call.1} parent=1 // pred_check_branch
      %57 = sbr.rel (0) target = $region21
    $region20: #{tpu_custom_call.1} parent=1 // pred_region
      %s59 = ssub.s32 93184, 93184
      %60 = vsyncadd [#allocation9], %s59
      %s61 = sshll.u32 [#allocation10], 4
      %s62 = int_to_ptr.vmem [resolvable:$true] %s61
      %67 = dma.hbm_to_vmem [thread:$0]  %s4, 93184, %s62, [#allocation9], 448, 448, 28
    $region21: #{tpu_custom_call.1} parent=1 // pred_fallthru
      _
    // Predicated region
    $region22: #{tpu_custom_call.1} parent=1 // pred_check
      _
    $region23: #{tpu_custom_call.1} parent=1 // pred_check_branch
      %69 = sbr.rel (0) target = $region25
    $region24: #{tpu_custom_call.1} parent=1 // pred_region
      %70 = dma.done [#allocation3], 32
    $region25: #{tpu_custom_call.1} parent=1 // pred_fallthru
      _
    // Predicated region
    $region26: #{tpu_custom_call.1} parent=1 // pred_check
      _
    $region27: #{tpu_custom_call.1} parent=1 // pred_check_branch
      %72 = sbr.rel (0) target = $region29
    $region28: #{tpu_custom_call.1} parent=1 // pred_region
      %73 = dma.done [#allocation6], 13312
    $region29: #{tpu_custom_call.1} parent=1 // pred_fallthru
      _
    // Predicated region
    $region30: #{tpu_custom_call.1} parent=1 // pred_check
      _
    $region31: #{tpu_custom_call.1} parent=1 // pred_check_branch
      %75 = sbr.rel (0) target = $region33
    $region32: #{tpu_custom_call.1} parent=1 // pred_region
      %76 = dma.done [#allocation6], 416
    $region33: #{tpu_custom_call.1} parent=1 // pred_fallthru
      _
    // Predicated region
    $region34: #{tpu_custom_call.1} parent=1 // pred_check
      _
    $region35: #{tpu_custom_call.1} parent=1 // pred_check_branch
      %78 = sbr.rel (0) target = $region37
    $region36: #{tpu_custom_call.1} parent=1 // pred_region
      %79 = dma.done [#allocation9], 1664
    $region37: #{tpu_custom_call.1} parent=1 // pred_fallthru
      _
    // Predicated region
    $region38: #{tpu_custom_call.1} parent=1 // pred_check
      _
    $region39: #{tpu_custom_call.1} parent=1 // pred_check_branch
      %81 = sbr.rel (0) target = $region41
    $region40: #{tpu_custom_call.1} parent=1 // pred_region
      %82 = dma.done [#allocation9], 93184
    $region41: #{tpu_custom_call.1} parent=1 // pred_fallthru
      _
    %v84 = vld [vmem:[#allocation7] sm:$0xff]
    %v85 = vld [vmem:[#allocation7 + $0x8] sm:$0xff]
    %v86 = vld [vmem:[#allocation7 + $0x10] sm:$0xff]
    %v87 = vld [vmem:[#allocation7 + $0x18] sm:$0x3]
    %v88 = vld [vmem:[#allocation2] sm:$0x3]
    %v89 = vpack.c.bf16 %v88, %v88
    %v90 = vld [vmem:[#allocation5] sm:$0xff]
    %v91 = vld [vmem:[#allocation5 + $0x8] sm:$0xff]
    %v92 = vld [vmem:[#allocation5 + $0x10] sm:$0xff]
    %v93 = vld [vmem:[#allocation5 + $0x18] sm:$0xff]
    %v94 = vld [vmem:[#allocation5 + $0x20] sm:$0xff]
    %v95 = vld [vmem:[#allocation5 + $0x28] sm:$0xff]
    %v96 = vld [vmem:[#allocation5 + $0x30] sm:$0xf]
    %v97 = vld [vmem:[#allocation5 + $0x34] sm:$0xff]
    %v98 = vld [vmem:[#allocation5 + $0x3c] sm:$0xff]
    %v99 = vld [vmem:[#allocation5 + $0x44] sm:$0xff]
    %v100 = vld [vmem:[#allocation5 + $0x4c] sm:$0xff]
    %v101 = vld [vmem:[#allocation5 + $0x54] sm:$0xff]
    %v102 = vld [vmem:[#allocation5 + $0x5c] sm:$0xff]
    %v103 = vld [vmem:[#allocation5 + $0x64] sm:$0xf]
    %v104 = vld [vmem:[#allocation5 + $0x68] sm:$0xff]
    %v105 = vld [vmem:[#allocation5 + $0x70] sm:$0xff]
    %v106 = vld [vmem:[#allocation5 + $0x78] sm:$0xff]
    %v107 = vld [vmem:[#allocation5 + $0x80] sm:$0xff]
    %v108 = vld [vmem:[#allocation5 + $0x88] sm:$0xff]
    %v109 = vld [vmem:[#allocation5 + $0x90] sm:$0xff]
    %v110 = vld [vmem:[#allocation5 + $0x98] sm:$0xf]
    %v111 = vld [vmem:[#allocation5 + $0x9c] sm:$0xff]
    %v112 = vld [vmem:[#allocation5 + $0xa4] sm:$0xff]
    %v113 = vld [vmem:[#allocation5 + $0xac] sm:$0xff]
    %v114 = vld [vmem:[#allocation5 + $0xb4] sm:$0xff]
    %v115 = vld [vmem:[#allocation5 + $0xbc] sm:$0xff]
    %v116 = vld [vmem:[#allocation5 + $0xc4] sm:$0xff]
    %v117 = vld [vmem:[#allocation5 + $0xcc] sm:$0xf]
    %v118 = vld [vmem:[#allocation5 + $0xd0] sm:$0xff]
    %v119 = vld [vmem:[#allocation5 + $0xd8] sm:$0xff]
    %v120 = vld [vmem:[#allocation5 + $0xe0] sm:$0xff]
    %v121 = vld [vmem:[#allocation5 + $0xe8] sm:$0xff]
    %v122 = vld [vmem:[#allocation5 + $0xf0] sm:$0xff]
    %v123 = vld [vmem:[#allocation5 + $0xf8] sm:$0xff]
    %v124 = vld [vmem:[#allocation5 + $0x100] sm:$0xf]
    %v125 = vld [vmem:[#allocation5 + $0x104] sm:$0xff]
    %v126 = vld [vmem:[#allocation5 + $0x10c] sm:$0xff]
    %v127 = vld [vmem:[#allocation5 + $0x114] sm:$0xff]
    %v128 = vld [vmem:[#allocation5 + $0x11c] sm:$0xff]
    %v129 = vld [vmem:[#allocation5 + $0x124] sm:$0xff]
    %v130 = vld [vmem:[#allocation5 + $0x12c] sm:$0xff]
    %v131 = vld [vmem:[#allocation5 + $0x134] sm:$0xf]
    %v132 = vld [vmem:[#allocation5 + $0x138] sm:$0xff]
    %v133 = vld [vmem:[#allocation5 + $0x140] sm:$0xff]
    %v134 = vld [vmem:[#allocation5 + $0x148] sm:$0xff]
    %v135 = vld [vmem:[#allocation5 + $0x150] sm:$0xff]
    %v136 = vld [vmem:[#allocation5 + $0x158] sm:$0xff]
    %v137 = vld [vmem:[#allocation5 + $0x160] sm:$0xff]
    %v138 = vld [vmem:[#allocation5 + $0x168] sm:$0xf]
    %v139 = vld [vmem:[#allocation5 + $0x16c] sm:$0xff]
    %v140 = vld [vmem:[#allocation5 + $0x174] sm:$0xff]
    %v141 = vld [vmem:[#allocation5 + $0x17c] sm:$0xff]
    %v142 = vld [vmem:[#allocation5 + $0x184] sm:$0xff]
    %v143 = vld [vmem:[#allocation5 + $0x18c] sm:$0xff]
    %v144 = vld [vmem:[#allocation5 + $0x194] sm:$0xff]
    %v145 = vld [vmem:[#allocation5 + $0x19c] sm:$0xf]
    %v146 = vld [vmem:[#allocation5 + $0x1a0] sm:$0xff]
    %v147 = vld [vmem:[#allocation5 + $0x1a8] sm:$0xff]
    %v148 = vld [vmem:[#allocation5 + $0x1b0] sm:$0xff]
    %v149 = vld [vmem:[#allocation5 + $0x1b8] sm:$0xff]
    %v150 = vld [vmem:[#allocation5 + $0x1c0] sm:$0xff]
    %v151 = vld [vmem:[#allocation5 + $0x1c8] sm:$0xff]
    %v152 = vld [vmem:[#allocation5 + $0x1d0] sm:$0xf]
    %v153 = vld [vmem:[#allocation5 + $0x1d4] sm:$0xff]
    %v154 = vld [vmem:[#allocation5 + $0x1dc] sm:$0xff]
    %v155 = vld [vmem:[#allocation5 + $0x1e4] sm:$0xff]
    %v156 = vld [vmem:[#allocation5 + $0x1ec] sm:$0xff]
    %v157 = vld [vmem:[#allocation5 + $0x1f4] sm:$0xff]
    %v158 = vld [vmem:[#allocation5 + $0x1fc] sm:$0xff]
    %v159 = vld [vmem:[#allocation5 + $0x204] sm:$0xf]
    %v160 = vld [vmem:[#allocation5 + $0x208] sm:$0xff]
    %v161 = vld [vmem:[#allocation5 + $0x210] sm:$0xff]
    %v162 = vld [vmem:[#allocation5 + $0x218] sm:$0xff]
    %v163 = vld [vmem:[#allocation5 + $0x220] sm:$0xff]
    %v164 = vld [vmem:[#allocation5 + $0x228] sm:$0xff]
    %v165 = vld [vmem:[#allocation5 + $0x230] sm:$0xff]
    %v166 = vld [vmem:[#allocation5 + $0x238] sm:$0xf]
    %v167 = vld [vmem:[#allocation5 + $0x23c] sm:$0xff]
    %v168 = vld [vmem:[#allocation5 + $0x244] sm:$0xff]
    %v169 = vld [vmem:[#allocation5 + $0x24c] sm:$0xff]
    %v170 = vld [vmem:[#allocation5 + $0x254] sm:$0xff]
    %v171 = vld [vmem:[#allocation5 + $0x25c] sm:$0xff]
    %v172 = vld [vmem:[#allocation5 + $0x264] sm:$0xff]
    %v173 = vld [vmem:[#allocation5 + $0x26c] sm:$0xf]
    %v174 = vld [vmem:[#allocation5 + $0x270] sm:$0xff]
    %v175 = vld [vmem:[#allocation5 + $0x278] sm:$0xff]
    %v176 = vld [vmem:[#allocation5 + $0x280] sm:$0xff]
    %v177 = vld [vmem:[#allocation5 + $0x288] sm:$0xff]
    %v178 = vld [vmem:[#allocation5 + $0x290] sm:$0xff]
    %v179 = vld [vmem:[#allocation5 + $0x298] sm:$0xff]
    %v180 = vld [vmem:[#allocation5 + $0x2a0] sm:$0xf]
    %v181 = vld [vmem:[#allocation5 + $0x2a4] sm:$0xff]
    %v182 = vld [vmem:[#allocation5 + $0x2ac] sm:$0xff]
    %v183 = vld [vmem:[#allocation5 + $0x2b4] sm:$0xff]
    %v184 = vld [vmem:[#allocation5 + $0x2bc] sm:$0xff]
    %v185 = vld [vmem:[#allocation5 + $0x2c4] sm:$0xff]
    %v186 = vld [vmem:[#allocation5 + $0x2cc] sm:$0xff]
    %v187 = vld [vmem:[#allocation5 + $0x2d4] sm:$0xf]
    %v188 = vld [vmem:[#allocation5 + $0x2d8] sm:$0xff]
    %v189 = vld [vmem:[#allocation5 + $0x2e0] sm:$0xff]
    %v190 = vld [vmem:[#allocation5 + $0x2e8] sm:$0xff]
    %v191 = vld [vmem:[#allocation5 + $0x2f0] sm:$0xff]
    %v192 = vld [vmem:[#allocation5 + $0x2f8] sm:$0xff]
    %v193 = vld [vmem:[#allocation5 + $0x300] sm:$0xff]
    %v194 = vld [vmem:[#allocation5 + $0x308] sm:$0xf]
    %v195 = vld [vmem:[#allocation5 + $0x30c] sm:$0xff]
    %v196 = vld [vmem:[#allocation5 + $0x314] sm:$0xff]
    %v197 = vld [vmem:[#allocation5 + $0x31c] sm:$0xff]
    %v198 = vld [vmem:[#allocation5 + $0x324] sm:$0xff]
    %v199 = vld [vmem:[#allocation5 + $0x32c] sm:$0xff]
    %v200 = vld [vmem:[#allocation5 + $0x334] sm:$0xff]
    %v201 = vld [vmem:[#allocation5 + $0x33c] sm:$0xf]
    %v206 = vlaneseq
    %v207 = vshrl.u32 %v206, 7
    %v208 = vsub.s32 0, %v207
    %v209 = vrot.slane %v84, %v208
    %v210 = vlaneseq
    %v211 = vshrl.u32 %v210, 7
    %v212 = vsub.s32 2, %v211
    %v213 = vrot.slane %v84, %v212
    %v214 = vlaneseq
    %v215 = vshrl.u32 %v214, 7
    %v216 = vsub.s32 4, %v215
    %v217 = vrot.slane %v84, %v216
    %v218 = vlaneseq
    %v219 = vshrl.u32 %v218, 7
    %v220 = vsub.s32 6, %v219
    %v221 = vrot.slane %v84, %v220
    %v222 = vlaneseq
    %v223 = vshrl.u32 %v222, 7
    %v224 = vsub.s32 0, %v223
    %v225 = vrot.slane %v85, %v224
    %v226 = vlaneseq
    %v227 = vshrl.u32 %v226, 7
    %v228 = vsub.s32 2, %v227
    %v229 = vrot.slane %v85, %v228
    %v230 = vlaneseq
    %v231 = vshrl.u32 %v230, 7
    %v232 = vsub.s32 4, %v231
    %v233 = vrot.slane %v85, %v232
    %v234 = vlaneseq
    %v235 = vshrl.u32 %v234, 7
    %v236 = vsub.s32 6, %v235
    %v237 = vrot.slane %v85, %v236
    %v238 = vlaneseq
    %v239 = vshrl.u32 %v238, 7
    %v240 = vsub.s32 0, %v239
    %v241 = vrot.slane %v86, %v240
    %v242 = vlaneseq
    %v243 = vshrl.u32 %v242, 7
    %v244 = vsub.s32 2, %v243
    %v245 = vrot.slane %v86, %v244
    %v246 = vlaneseq
    %v247 = vshrl.u32 %v246, 7
    %v248 = vsub.s32 4, %v247
    %v249 = vrot.slane %v86, %v248
    %v250 = vlaneseq
    %v251 = vshrl.u32 %v250, 7
    %v252 = vsub.s32 6, %v251
    %v253 = vrot.slane %v86, %v252
    %v254 = vlaneseq
    %v255 = vshrl.u32 %v254, 7
    %v256 = vsub.s32 0, %v255
    %v257 = vrot.slane %v87, %v256
    %v271 = vlaneseq
    %v272 = vshrl.u32 %v271, 7
    %v273 = vsub.s32 0, %v272
    %v274 = vrot.slane %v209, %v273
    %v275 = vlaneseq
    %v276 = vshrl.u32 %v275, 7
    %v277 = vsub.s32 0, %v276
    %v278 = vrot.slane %v213, %v277
    %v279 = vlaneseq
    %v280 = vshrl.u32 %v279, 7
    %v281 = vsub.s32 0, %v280
    %v282 = vrot.slane %v217, %v281
    %v283 = vlaneseq
    %v284 = vshrl.u32 %v283, 7
    %v285 = vsub.s32 0, %v284
    %v286 = vrot.slane %v221, %v285
    %v287 = vlaneseq
    %v288 = vshrl.u32 %v287, 7
    %v289 = vsub.s32 0, %v288
    %v290 = vrot.slane %v225, %v289
    %v291 = vlaneseq
    %v292 = vshrl.u32 %v291, 7
    %v293 = vsub.s32 0, %v292
    %v294 = vrot.slane %v229, %v293
    %v295 = vlaneseq
    %v296 = vshrl.u32 %v295, 7
    %v297 = vsub.s32 0, %v296
    %v298 = vrot.slane %v233, %v297
    %v299 = vlaneseq
    %v300 = vshrl.u32 %v299, 7
    %v301 = vsub.s32 0, %v300
    %v302 = vrot.slane %v237, %v301
    %v303 = vlaneseq
    %v304 = vshrl.u32 %v303, 7
    %v305 = vsub.s32 0, %v304
    %v306 = vrot.slane %v241, %v305
    %v307 = vlaneseq
    %v308 = vshrl.u32 %v307, 7
    %v309 = vsub.s32 0, %v308
    %v310 = vrot.slane %v245, %v309
    %v311 = vlaneseq
    %v312 = vshrl.u32 %v311, 7
    %v313 = vsub.s32 0, %v312
    %v314 = vrot.slane %v249, %v313
    %v315 = vlaneseq
    %v316 = vshrl.u32 %v315, 7
    %v317 = vsub.s32 0, %v316
    %v318 = vrot.slane %v253, %v317
    %v319 = vlaneseq
    %v320 = vshrl.u32 %v319, 7
    %v321 = vsub.s32 0, %v320
    %v322 = vrot.slane %v257, %v321
    %v435 = vunpack.c.l.b16 %v90
    %v436 = vunpack.c.h.b16 %v90
    %v437 = vunpack.c.l.b16 %v91
    %v438 = vunpack.c.h.b16 %v91
    %v439 = vunpack.c.l.b16 %v92
    %v440 = vunpack.c.h.b16 %v92
    %v441 = vunpack.c.l.b16 %v93
    %v442 = vunpack.c.h.b16 %v93
    %v443 = vunpack.c.l.b16 %v94
    %v444 = vunpack.c.h.b16 %v94
    %v445 = vunpack.c.l.b16 %v95
    %v446 = vunpack.c.h.b16 %v95
    %v447 = vunpack.c.l.b16 %v96
    %v448 = vunpack.c.l.b16 %v97
    %v449 = vunpack.c.h.b16 %v97
    %v450 = vunpack.c.l.b16 %v98
    %v451 = vunpack.c.h.b16 %v98
    %v452 = vunpack.c.l.b16 %v99
    %v453 = vunpack.c.h.b16 %v99
    %v454 = vunpack.c.l.b16 %v100
    %v455 = vunpack.c.h.b16 %v100
    %v456 = vunpack.c.l.b16 %v101
    %v457 = vunpack.c.h.b16 %v101
    %v458 = vunpack.c.l.b16 %v102
    %v459 = vunpack.c.h.b16 %v102
    %v460 = vunpack.c.l.b16 %v103
    %v461 = vunpack.c.l.b16 %v104
    %v462 = vunpack.c.h.b16 %v104
    %v463 = vunpack.c.l.b16 %v105
    %v464 = vunpack.c.h.b16 %v105
    %v465 = vunpack.c.l.b16 %v106
    %v466 = vunpack.c.h.b16 %v106
    %v467 = vunpack.c.l.b16 %v107
    %v468 = vunpack.c.h.b16 %v107
    %v469 = vunpack.c.l.b16 %v108
    %v470 = vunpack.c.h.b16 %v108
    %v471 = vunpack.c.l.b16 %v109
    %v472 = vunpack.c.h.b16 %v109
    %v473 = vunpack.c.l.b16 %v110
    %v474 = vunpack.c.l.b16 %v111
    %v475 = vunpack.c.h.b16 %v111
    %v476 = vunpack.c.l.b16 %v112
    %v477 = vunpack.c.h.b16 %v112
    %v478 = vunpack.c.l.b16 %v113
    %v479 = vunpack.c.h.b16 %v113
    %v480 = vunpack.c.l.b16 %v114
    %v481 = vunpack.c.h.b16 %v114
    %v482 = vunpack.c.l.b16 %v115
    %v483 = vunpack.c.h.b16 %v115
    %v484 = vunpack.c.l.b16 %v116
    %v485 = vunpack.c.h.b16 %v116
    %v486 = vunpack.c.l.b16 %v117
    %v487 = vunpack.c.l.b16 %v118
    %v488 = vunpack.c.h.b16 %v118
    %v489 = vunpack.c.l.b16 %v119
    %v490 = vunpack.c.h.b16 %v119
    %v491 = vunpack.c.l.b16 %v120
    %v492 = vunpack.c.h.b16 %v120
    %v493 = vunpack.c.l.b16 %v121
    %v494 = vunpack.c.h.b16 %v121
    %v495 = vunpack.c.l.b16 %v122
    %v496 = vunpack.c.h.b16 %v122
    %v497 = vunpack.c.l.b16 %v123
    %v498 = vunpack.c.h.b16 %v123
    %v499 = vunpack.c.l.b16 %v124
    %v500 = vunpack.c.l.b16 %v125
    %v501 = vunpack.c.h.b16 %v125
    %v502 = vunpack.c.l.b16 %v126
    %v503 = vunpack.c.h.b16 %v126
    %v504 = vunpack.c.l.b16 %v127
    %v505 = vunpack.c.h.b16 %v127
    %v506 = vunpack.c.l.b16 %v128
    %v507 = vunpack.c.h.b16 %v128
    %v508 = vunpack.c.l.b16 %v129
    %v509 = vunpack.c.h.b16 %v129
    %v510 = vunpack.c.l.b16 %v130
    %v511 = vunpack.c.h.b16 %v130
    %v512 = vunpack.c.l.b16 %v131
    %v513 = vunpack.c.l.b16 %v132
    %v514 = vunpack.c.h.b16 %v132
    %v515 = vunpack.c.l.b16 %v133
    %v516 = vunpack.c.h.b16 %v133
    %v517 = vunpack.c.l.b16 %v134
    %v518 = vunpack.c.h.b16 %v134
    %v519 = vunpack.c.l.b16 %v135
    %v520 = vunpack.c.h.b16 %v135
    %v521 = vunpack.c.l.b16 %v136
    %v522 = vunpack.c.h.b16 %v136
    %v523 = vunpack.c.l.b16 %v137
    %v524 = vunpack.c.h.b16 %v137
    %v525 = vunpack.c.l.b16 %v138
    %v526 = vunpack.c.l.b16 %v139
    %v527 = vunpack.c.h.b16 %v139
    %v528 = vunpack.c.l.b16 %v140
    %v529 = vunpack.c.h.b16 %v140
    %v530 = vunpack.c.l.b16 %v141
    %v531 = vunpack.c.h.b16 %v141
    %v532 = vunpack.c.l.b16 %v142
    %v533 = vunpack.c.h.b16 %v142
    %v534 = vunpack.c.l.b16 %v143
    %v535 = vunpack.c.h.b16 %v143
    %v536 = vunpack.c.l.b16 %v144
    %v537 = vunpack.c.h.b16 %v144
    %v538 = vunpack.c.l.b16 %v145
    %v539 = vunpack.c.l.b16 %v146
    %v540 = vunpack.c.h.b16 %v146
    %v541 = vunpack.c.l.b16 %v147
    %v542 = vunpack.c.h.b16 %v147
    %v543 = vunpack.c.l.b16 %v148
    %v544 = vunpack.c.h.b16 %v148
    %v545 = vunpack.c.l.b16 %v149
    %v546 = vunpack.c.h.b16 %v149
    %v547 = vunpack.c.l.b16 %v150
    %v548 = vunpack.c.h.b16 %v150
    %v549 = vunpack.c.l.b16 %v151
    %v550 = vunpack.c.h.b16 %v151
    %v551 = vunpack.c.l.b16 %v152
    %v552 = vunpack.c.l.b16 %v153
    %v553 = vunpack.c.h.b16 %v153
    %v554 = vunpack.c.l.b16 %v154
    %v555 = vunpack.c.h.b16 %v154
    %v556 = vunpack.c.l.b16 %v155
    %v557 = vunpack.c.h.b16 %v155
    %v558 = vunpack.c.l.b16 %v156
    %v559 = vunpack.c.h.b16 %v156
    %v560 = vunpack.c.l.b16 %v157
    %v561 = vunpack.c.h.b16 %v157
    %v562 = vunpack.c.l.b16 %v158
    %v563 = vunpack.c.h.b16 %v158
    %v564 = vunpack.c.l.b16 %v159
    %v565 = vunpack.c.l.b16 %v160
    %v566 = vunpack.c.h.b16 %v160
    %v567 = vunpack.c.l.b16 %v161
    %v568 = vunpack.c.h.b16 %v161
    %v569 = vunpack.c.l.b16 %v162
    %v570 = vunpack.c.h.b16 %v162
    %v571 = vunpack.c.l.b16 %v163
    %v572 = vunpack.c.h.b16 %v163
    %v573 = vunpack.c.l.b16 %v164
    %v574 = vunpack.c.h.b16 %v164
    %v575 = vunpack.c.l.b16 %v165
    %v576 = vunpack.c.h.b16 %v165
    %v577 = vunpack.c.l.b16 %v166
    %v578 = vunpack.c.l.b16 %v167
    %v579 = vunpack.c.h.b16 %v167
    %v580 = vunpack.c.l.b16 %v168
    %v581 = vunpack.c.h.b16 %v168
    %v582 = vunpack.c.l.b16 %v169
    %v583 = vunpack.c.h.b16 %v169
    %v584 = vunpack.c.l.b16 %v170
    %v585 = vunpack.c.h.b16 %v170
    %v586 = vunpack.c.l.b16 %v171
    %v587 = vunpack.c.h.b16 %v171
    %v588 = vunpack.c.l.b16 %v172
    %v589 = vunpack.c.h.b16 %v172
    %v590 = vunpack.c.l.b16 %v173
    %v591 = vunpack.c.l.b16 %v174
    %v592 = vunpack.c.h.b16 %v174
    %v593 = vunpack.c.l.b16 %v175
    %v594 = vunpack.c.h.b16 %v175
    %v595 = vunpack.c.l.b16 %v176
    %v596 = vunpack.c.h.b16 %v176
    %v597 = vunpack.c.l.b16 %v177
    %v598 = vunpack.c.h.b16 %v177
    %v599 = vunpack.c.l.b16 %v178
    %v600 = vunpack.c.h.b16 %v178
    %v601 = vunpack.c.l.b16 %v179
    %v602 = vunpack.c.h.b16 %v179
    %v603 = vunpack.c.l.b16 %v180
    %v604 = vunpack.c.l.b16 %v181
    %v605 = vunpack.c.h.b16 %v181
    %v606 = vunpack.c.l.b16 %v182
    %v607 = vunpack.c.h.b16 %v182
    %v608 = vunpack.c.l.b16 %v183
    %v609 = vunpack.c.h.b16 %v183
    %v610 = vunpack.c.l.b16 %v184
    %v611 = vunpack.c.h.b16 %v184
    %v612 = vunpack.c.l.b16 %v185
    %v613 = vunpack.c.h.b16 %v185
    %v614 = vunpack.c.l.b16 %v186
    %v615 = vunpack.c.h.b16 %v186
    %v616 = vunpack.c.l.b16 %v187
    %v617 = vunpack.c.l.b16 %v188
    %v618 = vunpack.c.h.b16 %v188
    %v619 = vunpack.c.l.b16 %v189
    %v620 = vunpack.c.h.b16 %v189
    %v621 = vunpack.c.l.b16 %v190
    %v622 = vunpack.c.h.b16 %v190
    %v623 = vunpack.c.l.b16 %v191
    %v624 = vunpack.c.h.b16 %v191
    %v625 = vunpack.c.l.b16 %v192
    %v626 = vunpack.c.h.b16 %v192
    %v627 = vunpack.c.l.b16 %v193
    %v628 = vunpack.c.h.b16 %v193
    %v629 = vunpack.c.l.b16 %v194
    %v630 = vunpack.c.l.b16 %v195
    %v631 = vunpack.c.h.b16 %v195
    %v632 = vunpack.c.l.b16 %v196
    %v633 = vunpack.c.h.b16 %v196
    %v634 = vunpack.c.l.b16 %v197
    %v635 = vunpack.c.h.b16 %v197
    %v636 = vunpack.c.l.b16 %v198
    %v637 = vunpack.c.h.b16 %v198
    %v638 = vunpack.c.l.b16 %v199
    %v639 = vunpack.c.h.b16 %v199
    %v640 = vunpack.c.l.b16 %v200
    %v641 = vunpack.c.h.b16 %v200
    %v642 = vunpack.c.l.b16 %v201
    %v643 = vpack.c.b16 %v448, %v435
    %v644 = vpack.c.b16 %v449, %v436
    %v645 = vpack.c.b16 %v450, %v437
    %v646 = vpack.c.b16 %v451, %v438
    %v647 = vpack.c.b16 %v452, %v439
    %v648 = vpack.c.b16 %v453, %v440
    %v649 = vpack.c.b16 %v454, %v441
    %v650 = vpack.c.b16 %v455, %v442
    %v651 = vpack.c.b16 %v456, %v443
    %v652 = vpack.c.b16 %v457, %v444
    %v653 = vpack.c.b16 %v458, %v445
    %v654 = vpack.c.b16 %v459, %v446
    %v655 = vpack.c.b16 %v460, %v447
    %v656 = vpack.c.b16 %v474, %v461
    %v657 = vpack.c.b16 %v475, %v462
    %v658 = vpack.c.b16 %v476, %v463
    %v659 = vpack.c.b16 %v477, %v464
    %v660 = vpack.c.b16 %v478, %v465
    %v661 = vpack.c.b16 %v479, %v466
    %v662 = vpack.c.b16 %v480, %v467
    %v663 = vpack.c.b16 %v481, %v468
    %v664 = vpack.c.b16 %v482, %v469
    %v665 = vpack.c.b16 %v483, %v470
    %v666 = vpack.c.b16 %v484, %v471
    %v667 = vpack.c.b16 %v485, %v472
    %v668 = vpack.c.b16 %v486, %v473
    %v669 = vpack.c.b16 %v500, %v487
    %v670 = vpack.c.b16 %v501, %v488
    %v671 = vpack.c.b16 %v502, %v489
    %v672 = vpack.c.b16 %v503, %v490
    %v673 = vpack.c.b16 %v504, %v491
    %v674 = vpack.c.b16 %v505, %v492
    %v675 = vpack.c.b16 %v506, %v493
    %v676 = vpack.c.b16 %v507, %v494
    %v677 = vpack.c.b16 %v508, %v495
    %v678 = vpack.c.b16 %v509, %v496
    %v679 = vpack.c.b16 %v510, %v497
    %v680 = vpack.c.b16 %v511, %v498
    %v681 = vpack.c.b16 %v512, %v499
    %v682 = vpack.c.b16 %v526, %v513
    %v683 = vpack.c.b16 %v527, %v514
    %v684 = vpack.c.b16 %v528, %v515
    %v685 = vpack.c.b16 %v529, %v516
    %v686 = vpack.c.b16 %v530, %v517
    %v687 = vpack.c.b16 %v531, %v518
    %v688 = vpack.c.b16 %v532, %v519
    %v689 = vpack.c.b16 %v533, %v520
    %v690 = vpack.c.b16 %v534, %v521
    %v691 = vpack.c.b16 %v535, %v522
    %v692 = vpack.c.b16 %v536, %v523
    %v693 = vpack.c.b16 %v537, %v524
    %v694 = vpack.c.b16 %v538, %v525
    %v695 = vpack.c.b16 %v552, %v539
    %v696 = vpack.c.b16 %v553, %v540
    %v697 = vpack.c.b16 %v554, %v541
    %v698 = vpack.c.b16 %v555, %v542
    %v699 = vpack.c.b16 %v556, %v543
    %v700 = vpack.c.b16 %v557, %v544
    %v701 = vpack.c.b16 %v558, %v545
    %v702 = vpack.c.b16 %v559, %v546
    %v703 = vpack.c.b16 %v560, %v547
    %v704 = vpack.c.b16 %v561, %v548
    %v705 = vpack.c.b16 %v562, %v549
    %v706 = vpack.c.b16 %v563, %v550
    %v707 = vpack.c.b16 %v564, %v551
    %v708 = vpack.c.b16 %v578, %v565
    %v709 = vpack.c.b16 %v579, %v566
    %v710 = vpack.c.b16 %v580, %v567
    %v711 = vpack.c.b16 %v581, %v568
    %v712 = vpack.c.b16 %v582, %v569
    %v713 = vpack.c.b16 %v583, %v570
    %v714 = vpack.c.b16 %v584, %v571
    %v715 = vpack.c.b16 %v585, %v572
    %v716 = vpack.c.b16 %v586, %v573
    %v717 = vpack.c.b16 %v587, %v574
    %v718 = vpack.c.b16 %v588, %v575
    %v719 = vpack.c.b16 %v589, %v576
    %v720 = vpack.c.b16 %v590, %v577
    %v721 = vpack.c.b16 %v604, %v591
    %v722 = vpack.c.b16 %v605, %v592
    %v723 = vpack.c.b16 %v606, %v593
    %v724 = vpack.c.b16 %v607, %v594
    %v725 = vpack.c.b16 %v608, %v595
    %v726 = vpack.c.b16 %v609, %v596
    %v727 = vpack.c.b16 %v610, %v597
    %v728 = vpack.c.b16 %v611, %v598
    %v729 = vpack.c.b16 %v612, %v599
    %v730 = vpack.c.b16 %v613, %v600
    %v731 = vpack.c.b16 %v614, %v601
    %v732 = vpack.c.b16 %v615, %v602
    %v733 = vpack.c.b16 %v616, %v603
    %v734 = vpack.c.b16 %v630, %v617
    %v735 = vpack.c.b16 %v631, %v618
    %v736 = vpack.c.b16 %v632, %v619
    %v737 = vpack.c.b16 %v633, %v620
    %v738 = vpack.c.b16 %v634, %v621
    %v739 = vpack.c.b16 %v635, %v622
    %v740 = vpack.c.b16 %v636, %v623
    %v741 = vpack.c.b16 %v637, %v624
    %v742 = vpack.c.b16 %v638, %v625
    %v743 = vpack.c.b16 %v639, %v626
    %v744 = vpack.c.b16 %v640, %v627
    %v745 = vpack.c.b16 %v641, %v628
    %v746 = vpack.c.b16 %v642, %v629
    %851 = vmatprep.subr.bf16.mxu0 %v644
    %852 = vmatpush1.bf16.msra.mxu0 %v643
    %853 = vmatprep.subr.bf16.mxu0 %v657
    %854 = vmatpush1.bf16.msra.mxu0 %v656
    %855 = vmatprep.subr.bf16.mxu0 %v670
    %856 = vmatpush1.bf16.msra.mxu0 %v669
    %857 = vmatprep.subr.bf16.mxu0 %v683
    %858 = vmatpush1.bf16.msra.mxu0 %v682
    %859 = vmatprep.subr.bf16.mxu0 %v696
    %860 = vmatpush1.bf16.msra.mxu0 %v695
    %861 = vmatprep.subr.bf16.mxu0 %v709
    %862 = vmatpush1.bf16.msra.mxu0 %v708
    %863 = vmatprep.subr.bf16.mxu0 %v722
    %864 = vmatpush1.bf16.msra.mxu0 %v721
    %865 = vmatprep.subr.bf16.mxu0 %v735
    %866 = vmatpush1.bf16.msra.mxu0 %v734
    %867 = vmatprep.subr.bf16.mxu0 0
    %868 = vmatpush1.bf16.msra.mxu0 0
    %869 = vmatprep.subr.bf16.mxu0 0
    %870 = vmatpush1.bf16.msra.mxu0 0
    %871 = vmatprep.subr.bf16.mxu0 0
    %872 = vmatpush1.bf16.msra.mxu0 0
    %873 = vmatprep.subr.bf16.mxu0 0
    %874 = vmatpush1.bf16.msra.mxu0 0
    %875 = vmatprep.subr.bf16.mxu0 0
    %876 = vmatpush1.bf16.msra.mxu0 0
    %877 = vmatprep.subr.bf16.mxu0 0
    %878 = vmatpush1.bf16.msra.mxu0 0
    %879 = vmatprep.subr.bf16.mxu0 0
    %880 = vmatpush1.bf16.msra.mxu0 0
    %881 = vmatprep.subr.bf16.mxu0 0
    %882 = vmatpush1.bf16.msra.mxu0 0
    %883 = vmatprep.mubr.bf16.mxu0 0
    %884 = vmatmul.mubr.bf16.gmra.mrb[0].mxu0 %v89
    %v885 = vpop.f32.mrb[0].mxu0
    %v886 = vadd.f32 %v274, %v885
    %v887 = vpop.f32.mrb[0].mxu0
    %v888 = vadd.f32 %v278, %v887
    %v889 = vpop.f32.mrb[0].mxu0
    %v890 = vpop.f32.mrb[0].mxu0
    %891 = vdwg.mxu0
    %892 = vmatprep.subr.bf16.mxu0 %v646
    %893 = vmatpush1.bf16.msra.mxu0 %v645
    %894 = vmatprep.subr.bf16.mxu0 %v659
    %895 = vmatpush1.bf16.msra.mxu0 %v658
    %896 = vmatprep.subr.bf16.mxu0 %v672
    %897 = vmatpush1.bf16.msra.mxu0 %v671
    %898 = vmatprep.subr.bf16.mxu0 %v685
    %899 = vmatpush1.bf16.msra.mxu0 %v684
    %900 = vmatprep.subr.bf16.mxu0 %v698
    %901 = vmatpush1.bf16.msra.mxu0 %v697
    %902 = vmatprep.subr.bf16.mxu0 %v711
    %903 = vmatpush1.bf16.msra.mxu0 %v710
    %904 = vmatprep.subr.bf16.mxu0 %v724
    %905 = vmatpush1.bf16.msra.mxu0 %v723
    %906 = vmatprep.subr.bf16.mxu0 %v737
    %907 = vmatpush1.bf16.msra.mxu0 %v736
    %908 = vmatprep.subr.bf16.mxu0 0
    %909 = vmatpush1.bf16.msra.mxu0 0
    %910 = vmatprep.subr.bf16.mxu0 0
    %911 = vmatpush1.bf16.msra.mxu0 0
    %912 = vmatprep.subr.bf16.mxu0 0
    %913 = vmatpush1.bf16.msra.mxu0 0
    %914 = vmatprep.subr.bf16.mxu0 0
    %915 = vmatpush1.bf16.msra.mxu0 0
    %916 = vmatprep.subr.bf16.mxu0 0
    %917 = vmatpush1.bf16.msra.mxu0 0
    %918 = vmatprep.subr.bf16.mxu0 0
    %919 = vmatpush1.bf16.msra.mxu0 0
    %920 = vmatprep.subr.bf16.mxu0 0
    %921 = vmatpush1.bf16.msra.mxu0 0
    %922 = vmatprep.subr.bf16.mxu0 0
    %923 = vmatpush1.bf16.msra.mxu0 0
    %924 = vmatprep.mubr.bf16.mxu0 0
    %925 = vmatmul.mubr.bf16.gmra.mrb[0].mxu0 %v89
    %v926 = vpop.f32.mrb[0].mxu0
    %v927 = vadd.f32 %v282, %v926
    %v928 = vpop.f32.mrb[0].mxu0
    %v929 = vadd.f32 %v286, %v928
    %v930 = vpop.f32.mrb[0].mxu0
    %v931 = vpop.f32.mrb[0].mxu0
    %932 = vdwg.mxu0
    %933 = vmatprep.subr.bf16.mxu0 %v648
    %934 = vmatpush1.bf16.msra.mxu0 %v647
    %935 = vmatprep.subr.bf16.mxu0 %v661
    %936 = vmatpush1.bf16.msra.mxu0 %v660
    %937 = vmatprep.subr.bf16.mxu0 %v674
    %938 = vmatpush1.bf16.msra.mxu0 %v673
    %939 = vmatprep.subr.bf16.mxu0 %v687
    %940 = vmatpush1.bf16.msra.mxu0 %v686
    %941 = vmatprep.subr.bf16.mxu0 %v700
    %942 = vmatpush1.bf16.msra.mxu0 %v699
    %943 = vmatprep.subr.bf16.mxu0 %v713
    %944 = vmatpush1.bf16.msra.mxu0 %v712
    %945 = vmatprep.subr.bf16.mxu0 %v726
    %946 = vmatpush1.bf16.msra.mxu0 %v725
    %947 = vmatprep.subr.bf16.mxu0 %v739
    %948 = vmatpush1.bf16.msra.mxu0 %v738
    %949 = vmatprep.subr.bf16.mxu0 0
    %950 = vmatpush1.bf16.msra.mxu0 0
    %951 = vmatprep.subr.bf16.mxu0 0
    %952 = vmatpush1.bf16.msra.mxu0 0
    %953 = vmatprep.subr.bf16.mxu0 0
    %954 = vmatpush1.bf16.msra.mxu0 0
    %955 = vmatprep.subr.bf16.mxu0 0
    %956 = vmatpush1.bf16.msra.mxu0 0
    %957 = vmatprep.subr.bf16.mxu0 0
    %958 = vmatpush1.bf16.msra.mxu0 0
    %959 = vmatprep.subr.bf16.mxu0 0
    %960 = vmatpush1.bf16.msra.mxu0 0
    %961 = vmatprep.subr.bf16.mxu0 0
    %962 = vmatpush1.bf16.msra.mxu0 0
    %963 = vmatprep.subr.bf16.mxu0 0
    %964 = vmatpush1.bf16.msra.mxu0 0
    %965 = vmatprep.mubr.bf16.mxu0 0
    %966 = vmatmul.mubr.bf16.gmra.mrb[0].mxu0 %v89
    %v967 = vpop.f32.mrb[0].mxu0
    %v968 = vadd.f32 %v290, %v967
    %v969 = vpop.f32.mrb[0].mxu0
    %v970 = vadd.f32 %v294, %v969
    %v971 = vpop.f32.mrb[0].mxu0
    %v972 = vpop.f32.mrb[0].mxu0
    %973 = vdwg.mxu0
    %974 = vmatprep.subr.bf16.mxu0 %v650
    %975 = vmatpush1.bf16.msra.mxu0 %v649
    %976 = vmatprep.subr.bf16.mxu0 %v663
    %977 = vmatpush1.bf16.msra.mxu0 %v662
    %978 = vmatprep.subr.bf16.mxu0 %v676
    %979 = vmatpush1.bf16.msra.mxu0 %v675
    %980 = vmatprep.subr.bf16.mxu0 %v689
    %981 = vmatpush1.bf16.msra.mxu0 %v688
    %982 = vmatprep.subr.bf16.mxu0 %v702
    %983 = vmatpush1.bf16.msra.mxu0 %v701
    %984 = vmatprep.subr.bf16.mxu0 %v715
    %985 = vmatpush1.bf16.msra.mxu0 %v714
    %986 = vmatprep.subr.bf16.mxu0 %v728
    %987 = vmatpush1.bf16.msra.mxu0 %v727
    %988 = vmatprep.subr.bf16.mxu0 %v741
    %989 = vmatpush1.bf16.msra.mxu0 %v740
    %990 = vmatprep.subr.bf16.mxu0 0
    %991 = vmatpush1.bf16.msra.mxu0 0
    %992 = vmatprep.subr.bf16.mxu0 0
    %993 = vmatpush1.bf16.msra.mxu0 0
    %994 = vmatprep.subr.bf16.mxu0 0
    %995 = vmatpush1.bf16.msra.mxu0 0
    %996 = vmatprep.subr.bf16.mxu0 0
    %997 = vmatpush1.bf16.msra.mxu0 0
    %998 = vmatprep.subr.bf16.mxu0 0
    %999 = vmatpush1.bf16.msra.mxu0 0
    %1000 = vmatprep.subr.bf16.mxu0 0
    %1001 = vmatpush1.bf16.msra.mxu0 0
    %1002 = vmatprep.subr.bf16.mxu0 0
    %1003 = vmatpush1.bf16.msra.mxu0 0
    %1004 = vmatprep.subr.bf16.mxu0 0
    %1005 = vmatpush1.bf16.msra.mxu0 0
    %1006 = vmatprep.mubr.bf16.mxu0 0
    %1007 = vmatmul.mubr.bf16.gmra.mrb[0].mxu0 %v89
    %v1008 = vpop.f32.mrb[0].mxu0
    %v1009 = vadd.f32 %v298, %v1008
    %v1010 = vpop.f32.mrb[0].mxu0
    %v1011 = vadd.f32 %v302, %v1010
    %v1012 = vpop.f32.mrb[0].mxu0
    %v1013 = vpop.f32.mrb[0].mxu0
    %1014 = vdwg.mxu0
    %1015 = vmatprep.subr.bf16.mxu0 %v652
    %1016 = vmatpush1.bf16.msra.mxu0 %v651
    %1017 = vmatprep.subr.bf16.mxu0 %v665
    %1018 = vmatpush1.bf16.msra.mxu0 %v664
    %1019 = vmatprep.subr.bf16.mxu0 %v678
    %1020 = vmatpush1.bf16.msra.mxu0 %v677
    %1021 = vmatprep.subr.bf16.mxu0 %v691
    %1022 = vmatpush1.bf16.msra.mxu0 %v690
    %1023 = vmatprep.subr.bf16.mxu0 %v704
    %1024 = vmatpush1.bf16.msra.mxu0 %v703
    %1025 = vmatprep.subr.bf16.mxu0 %v717
    %1026 = vmatpush1.bf16.msra.mxu0 %v716
    %1027 = vmatprep.subr.bf16.mxu0 %v730
    %1028 = vmatpush1.bf16.msra.mxu0 %v729
    %1029 = vmatprep.subr.bf16.mxu0 %v743
    %1030 = vmatpush1.bf16.msra.mxu0 %v742
    %1031 = vmatprep.subr.bf16.mxu0 0
    %1032 = vmatpush1.bf16.msra.mxu0 0
    %1033 = vmatprep.subr.bf16.mxu0 0
    %1034 = vmatpush1.bf16.msra.mxu0 0
    %1035 = vmatprep.subr.bf16.mxu0 0
    %1036 = vmatpush1.bf16.msra.mxu0 0
    %1037 = vmatprep.subr.bf16.mxu0 0
    %1038 = vmatpush1.bf16.msra.mxu0 0
    %1039 = vmatprep.subr.bf16.mxu0 0
    %1040 = vmatpush1.bf16.msra.mxu0 0
    %1041 = vmatprep.subr.bf16.mxu0 0
    %1042 = vmatpush1.bf16.msra.mxu0 0
    %1043 = vmatprep.subr.bf16.mxu0 0
    %1044 = vmatpush1.bf16.msra.mxu0 0
    %1045 = vmatprep.subr.bf16.mxu0 0
    %1046 = vmatpush1.bf16.msra.mxu0 0
    %1047 = vmatprep.mubr.bf16.mxu0 0
    %1048 = vmatmul.mubr.bf16.gmra.mrb[0].mxu0 %v89
    %v1049 = vpop.f32.mrb[0].mxu0
    %v1050 = vadd.f32 %v306, %v1049
    %v1051 = vpop.f32.mrb[0].mxu0
    %v1052 = vadd.f32 %v310, %v1051
    %v1053 = vpop.f32.mrb[0].mxu0
    %v1054 = vpop.f32.mrb[0].mxu0
    %1055 = vdwg.mxu0
    %1056 = vmatprep.subr.bf16.mxu0 %v654
    %1057 = vmatpush1.bf16.msra.mxu0 %v653
    %1058 = vmatprep.subr.bf16.mxu0 %v667
    %1059 = vmatpush1.bf16.msra.mxu0 %v666
    %1060 = vmatprep.subr.bf16.mxu0 %v680
    %1061 = vmatpush1.bf16.msra.mxu0 %v679
    %1062 = vmatprep.subr.bf16.mxu0 %v693
    %1063 = vmatpush1.bf16.msra.mxu0 %v692
    %1064 = vmatprep.subr.bf16.mxu0 %v706
    %1065 = vmatpush1.bf16.msra.mxu0 %v705
    %1066 = vmatprep.subr.bf16.mxu0 %v719
    %1067 = vmatpush1.bf16.msra.mxu0 %v718
    %1068 = vmatprep.subr.bf16.mxu0 %v732
    %1069 = vmatpush1.bf16.msra.mxu0 %v731
    %1070 = vmatprep.subr.bf16.mxu0 %v745
    %1071 = vmatpush1.bf16.msra.mxu0 %v744
    %1072 = vmatprep.subr.bf16.mxu0 0
    %1073 = vmatpush1.bf16.msra.mxu0 0
    %1074 = vmatprep.subr.bf16.mxu0 0
    %1075 = vmatpush1.bf16.msra.mxu0 0
    %1076 = vmatprep.subr.bf16.mxu0 0
    %1077 = vmatpush1.bf16.msra.mxu0 0
    %1078 = vmatprep.subr.bf16.mxu0 0
    %1079 = vmatpush1.bf16.msra.mxu0 0
    %1080 = vmatprep.subr.bf16.mxu0 0
    %1081 = vmatpush1.bf16.msra.mxu0 0
    %1082 = vmatprep.subr.bf16.mxu0 0
    %1083 = vmatpush1.bf16.msra.mxu0 0
    %1084 = vmatprep.subr.bf16.mxu0 0
    %1085 = vmatpush1.bf16.msra.mxu0 0
    %1086 = vmatprep.subr.bf16.mxu0 0
    %1087 = vmatpush1.bf16.msra.mxu0 0
    %1088 = vmatprep.mubr.bf16.mxu0 0
    %1089 = vmatmul.mubr.bf16.gmra.mrb[0].mxu0 %v89
    %v1090 = vpop.f32.mrb[0].mxu0
    %v1091 = vadd.f32 %v314, %v1090
    %v1092 = vpop.f32.mrb[0].mxu0
    %v1093 = vadd.f32 %v318, %v1092
    %v1094 = vpop.f32.mrb[0].mxu0
    %v1095 = vpop.f32.mrb[0].mxu0
    %1096 = vdwg.mxu0
    %1097 = vmatprep.subr.bf16.mxu0 0
    %1098 = vmatpush1.bf16.msra.mxu0 %v655
    %1099 = vmatprep.subr.bf16.mxu0 0
    %1100 = vmatpush1.bf16.msra.mxu0 %v668
    %1101 = vmatprep.subr.bf16.mxu0 0
    %1102 = vmatpush1.bf16.msra.mxu0 %v681
    %1103 = vmatprep.subr.bf16.mxu0 0
    %1104 = vmatpush1.bf16.msra.mxu0 %v694
    %1105 = vmatprep.subr.bf16.mxu0 0
    %1106 = vmatpush1.bf16.msra.mxu0 %v707
    %1107 = vmatprep.subr.bf16.mxu0 0
    %1108 = vmatpush1.bf16.msra.mxu0 %v720
    %1109 = vmatprep.subr.bf16.mxu0 0
    %1110 = vmatpush1.bf16.msra.mxu0 %v733
    %1111 = vmatprep.subr.bf16.mxu0 0
    %1112 = vmatpush1.bf16.msra.mxu0 %v746
    %1113 = vmatprep.subr.bf16.mxu0 0
    %1114 = vmatpush1.bf16.msra.mxu0 0
    %1115 = vmatprep.subr.bf16.mxu0 0
    %1116 = vmatpush1.bf16.msra.mxu0 0
    %1117 = vmatprep.subr.bf16.mxu0 0
    %1118 = vmatpush1.bf16.msra.mxu0 0
    %1119 = vmatprep.subr.bf16.mxu0 0
    %1120 = vmatpush1.bf16.msra.mxu0 0
    %1121 = vmatprep.subr.bf16.mxu0 0
    %1122 = vmatpush1.bf16.msra.mxu0 0
    %1123 = vmatprep.subr.bf16.mxu0 0
    %1124 = vmatpush1.bf16.msra.mxu0 0
    %1125 = vmatprep.subr.bf16.mxu0 0
    %1126 = vmatpush1.bf16.msra.mxu0 0
    %1127 = vmatprep.subr.bf16.mxu0 0
    %1128 = vmatpush1.bf16.msra.mxu0 0
    %1129 = vmatprep.mubr.bf16.mxu0 0
    %1130 = vmatmul.mubr.bf16.gmra.mrb[0].mxu0 %v89
    %v1131 = vpop.f32.mrb[0].mxu0
    %v1132 = vadd.f32 %v322, %v1131
    %v1133 = vpop.f32.mrb[0].mxu0
    %v1134 = vpop.f32.mrb[0].mxu0
    %v1135 = vpop.f32.mrb[0].mxu0
    %1136 = vdwg.mxu0
    %v1137 = vld [vmem:[#allocation8] sm:$0xff]
    %v1138 = vld [vmem:[#allocation8 + $0x8] sm:$0xff]
    %v1139 = vld [vmem:[#allocation8 + $0x10] sm:$0xff]
    %v1140 = vld [vmem:[#allocation8 + $0x18] sm:$0xff]
    %v1141 = vld [vmem:[#allocation8 + $0x20] sm:$0xff]
    %v1142 = vld [vmem:[#allocation8 + $0x28] sm:$0xff]
    %v1143 = vld [vmem:[#allocation8 + $0x30] sm:$0xff]
    %v1144 = vld [vmem:[#allocation8 + $0x38] sm:$0xff]
    %v1145 = vld [vmem:[#allocation8 + $0x40] sm:$0xff]
    %v1146 = vld [vmem:[#allocation8 + $0x48] sm:$0xff]
    %v1147 = vld [vmem:[#allocation8 + $0x50] sm:$0xff]
    %v1148 = vld [vmem:[#allocation8 + $0x58] sm:$0xff]
    %v1149 = vld [vmem:[#allocation8 + $0x60] sm:$0xff]
    %vm1150 = vcmask 1041408
    %v1151 = vsel %vm1150, %v886, 0.0
    %v1152 = vrot.slane %v1151, 4
    %v1153 = vadd.f32 %v1151, %v1152
    %v1154 = vrot.slane %v1153, 2
    %v1155 = vadd.f32 %v1153, %v1154
    %v1156 = vrot.slane %v1155, 1
    %v1157 = vadd.f32 %v1155, %v1156
    %v1158 = vsel %vm1150, %v888, 0.0
    %v1159 = vrot.slane %v1158, 4
    %v1160 = vadd.f32 %v1158, %v1159
    %v1161 = vrot.slane %v1160, 2
    %v1162 = vadd.f32 %v1160, %v1161
    %v1163 = vrot.slane %v1162, 1
    %v1164 = vadd.f32 %v1162, %v1163
    %v1165 = vsel %vm1150, %v927, 0.0
    %v1166 = vrot.slane %v1165, 4
    %v1167 = vadd.f32 %v1165, %v1166
    %v1168 = vrot.slane %v1167, 2
    %v1169 = vadd.f32 %v1167, %v1168
    %v1170 = vrot.slane %v1169, 1
    %v1171 = vadd.f32 %v1169, %v1170
    %v1172 = vsel %vm1150, %v929, 0.0
    %v1173 = vrot.slane %v1172, 4
    %v1174 = vadd.f32 %v1172, %v1173
    %v1175 = vrot.slane %v1174, 2
    %v1176 = vadd.f32 %v1174, %v1175
    %v1177 = vrot.slane %v1176, 1
    %v1178 = vadd.f32 %v1176, %v1177
    %v1179 = vsel %vm1150, %v968, 0.0
    %v1180 = vrot.slane %v1179, 4
    %v1181 = vadd.f32 %v1179, %v1180
    %v1182 = vrot.slane %v1181, 2
    %v1183 = vadd.f32 %v1181, %v1182
    %v1184 = vrot.slane %v1183, 1
    %v1185 = vadd.f32 %v1183, %v1184
    %v1186 = vsel %vm1150, %v970, 0.0
    %v1187 = vrot.slane %v1186, 4
    %v1188 = vadd.f32 %v1186, %v1187
    %v1189 = vrot.slane %v1188, 2
    %v1190 = vadd.f32 %v1188, %v1189
    %v1191 = vrot.slane %v1190, 1
    %v1192 = vadd.f32 %v1190, %v1191
    %v1193 = vsel %vm1150, %v1009, 0.0
    %v1194 = vrot.slane %v1193, 4
    %v1195 = vadd.f32 %v1193, %v1194
    %v1196 = vrot.slane %v1195, 2
    %v1197 = vadd.f32 %v1195, %v1196
    %v1198 = vrot.slane %v1197, 1
    %v1199 = vadd.f32 %v1197, %v1198
    %v1200 = vsel %vm1150, %v1011, 0.0
    %v1201 = vrot.slane %v1200, 4
    %v1202 = vadd.f32 %v1200, %v1201
    %v1203 = vrot.slane %v1202, 2
    %v1204 = vadd.f32 %v1202, %v1203
    %v1205 = vrot.slane %v1204, 1
    %v1206 = vadd.f32 %v1204, %v1205
    %v1207 = vsel %vm1150, %v1050, 0.0
    %v1208 = vrot.slane %v1207, 4
    %v1209 = vadd.f32 %v1207, %v1208
    %v1210 = vrot.slane %v1209, 2
    %v1211 = vadd.f32 %v1209, %v1210
    %v1212 = vrot.slane %v1211, 1
    %v1213 = vadd.f32 %v1211, %v1212
    %v1214 = vsel %vm1150, %v1052, 0.0
    %v1215 = vrot.slane %v1214, 4
    %v1216 = vadd.f32 %v1214, %v1215
    %v1217 = vrot.slane %v1216, 2
    %v1218 = vadd.f32 %v1216, %v1217
    %v1219 = vrot.slane %v1218, 1
    %v1220 = vadd.f32 %v1218, %v1219
    %v1221 = vsel %vm1150, %v1091, 0.0
    %v1222 = vrot.slane %v1221, 4
    %v1223 = vadd.f32 %v1221, %v1222
    %v1224 = vrot.slane %v1223, 2
    %v1225 = vadd.f32 %v1223, %v1224
    %v1226 = vrot.slane %v1225, 1
    %v1227 = vadd.f32 %v1225, %v1226
    %v1228 = vsel %vm1150, %v1093, 0.0
    %v1229 = vrot.slane %v1228, 4
    %v1230 = vadd.f32 %v1228, %v1229
    %v1231 = vrot.slane %v1230, 2
    %v1232 = vadd.f32 %v1230, %v1231
    %v1233 = vrot.slane %v1232, 1
    %v1234 = vadd.f32 %v1232, %v1233
    %v1235 = vsel %vm1150, %v1132, 0.0
    %v1236 = vrot.slane %v1235, 4
    %v1237 = vadd.f32 %v1235, %v1236
    %v1238 = vrot.slane %v1237, 2
    %v1239 = vadd.f32 %v1237, %v1238
    %v1240 = vrot.slane %v1239, 1
    %v1241 = vadd.f32 %v1239, %v1240
    %v1242 = vmul.f32 %v886, %v886
    %v1243 = vmul.f32 %v888, %v888
    %v1244 = vmul.f32 %v927, %v927
    %v1245 = vmul.f32 %v929, %v929
    %v1246 = vmul.f32 %v968, %v968
    %v1247 = vmul.f32 %v970, %v970
    %v1248 = vmul.f32 %v1009, %v1009
    %v1249 = vmul.f32 %v1011, %v1011
    %v1250 = vmul.f32 %v1050, %v1050
    %v1251 = vmul.f32 %v1052, %v1052
    %v1252 = vmul.f32 %v1091, %v1091
    %v1253 = vmul.f32 %v1093, %v1093
    %v1254 = vmul.f32 %v1132, %v1132
    %v1255 = vsel %vm1150, %v1242, 0.0
    %v1256 = vrot.slane %v1255, 4
    %v1257 = vadd.f32 %v1255, %v1256
    %v1258 = vrot.slane %v1257, 2
    %v1259 = vadd.f32 %v1257, %v1258
    %v1260 = vrot.slane %v1259, 1
    %v1261 = vadd.f32 %v1259, %v1260
    %v1262 = vsel %vm1150, %v1243, 0.0
    %v1263 = vrot.slane %v1262, 4
    %v1264 = vadd.f32 %v1262, %v1263
    %v1265 = vrot.slane %v1264, 2
    %v1266 = vadd.f32 %v1264, %v1265
    %v1267 = vrot.slane %v1266, 1
    %v1268 = vadd.f32 %v1266, %v1267
    %v1269 = vsel %vm1150, %v1244, 0.0
    %v1270 = vrot.slane %v1269, 4
    %v1271 = vadd.f32 %v1269, %v1270
    %v1272 = vrot.slane %v1271, 2
    %v1273 = vadd.f32 %v1271, %v1272
    %v1274 = vrot.slane %v1273, 1
    %v1275 = vadd.f32 %v1273, %v1274
    %v1276 = vsel %vm1150, %v1245, 0.0
    %v1277 = vrot.slane %v1276, 4
    %v1278 = vadd.f32 %v1276, %v1277
    %v1279 = vrot.slane %v1278, 2
    %v1280 = vadd.f32 %v1278, %v1279
    %v1281 = vrot.slane %v1280, 1
    %v1282 = vadd.f32 %v1280, %v1281
    %v1283 = vsel %vm1150, %v1246, 0.0
    %v1284 = vrot.slane %v1283, 4
    %v1285 = vadd.f32 %v1283, %v1284
    %v1286 = vrot.slane %v1285, 2
    %v1287 = vadd.f32 %v1285, %v1286
    %v1288 = vrot.slane %v1287, 1
    %v1289 = vadd.f32 %v1287, %v1288
    %v1290 = vsel %vm1150, %v1247, 0.0
    %v1291 = vrot.slane %v1290, 4
    %v1292 = vadd.f32 %v1290, %v1291
    %v1293 = vrot.slane %v1292, 2
    %v1294 = vadd.f32 %v1292, %v1293
    %v1295 = vrot.slane %v1294, 1
    %v1296 = vadd.f32 %v1294, %v1295
    %v1297 = vsel %vm1150, %v1248, 0.0
    %v1298 = vrot.slane %v1297, 4
    %v1299 = vadd.f32 %v1297, %v1298
    %v1300 = vrot.slane %v1299, 2
    %v1301 = vadd.f32 %v1299, %v1300
    %v1302 = vrot.slane %v1301, 1
    %v1303 = vadd.f32 %v1301, %v1302
    %v1304 = vsel %vm1150, %v1249, 0.0
    %v1305 = vrot.slane %v1304, 4
    %v1306 = vadd.f32 %v1304, %v1305
    %v1307 = vrot.slane %v1306, 2
    %v1308 = vadd.f32 %v1306, %v1307
    %v1309 = vrot.slane %v1308, 1
    %v1310 = vadd.f32 %v1308, %v1309
    %v1311 = vsel %vm1150, %v1250, 0.0
    %v1312 = vrot.slane %v1311, 4
    %v1313 = vadd.f32 %v1311, %v1312
    %v1314 = vrot.slane %v1313, 2
    %v1315 = vadd.f32 %v1313, %v1314
    %v1316 = vrot.slane %v1315, 1
    %v1317 = vadd.f32 %v1315, %v1316
    %v1318 = vsel %vm1150, %v1251, 0.0
    %v1319 = vrot.slane %v1318, 4
    %v1320 = vadd.f32 %v1318, %v1319
    %v1321 = vrot.slane %v1320, 2
    %v1322 = vadd.f32 %v1320, %v1321
    %v1323 = vrot.slane %v1322, 1
    %v1324 = vadd.f32 %v1322, %v1323
    %v1325 = vsel %vm1150, %v1252, 0.0
    %v1326 = vrot.slane %v1325, 4
    %v1327 = vadd.f32 %v1325, %v1326
    %v1328 = vrot.slane %v1327, 2
    %v1329 = vadd.f32 %v1327, %v1328
    %v1330 = vrot.slane %v1329, 1
    %v1331 = vadd.f32 %v1329, %v1330
    %v1332 = vsel %vm1150, %v1253, 0.0
    %v1333 = vrot.slane %v1332, 4
    %v1334 = vadd.f32 %v1332, %v1333
    %v1335 = vrot.slane %v1334, 2
    %v1336 = vadd.f32 %v1334, %v1335
    %v1337 = vrot.slane %v1336, 1
    %v1338 = vadd.f32 %v1336, %v1337
    %v1339 = vsel %vm1150, %v1254, 0.0
    %v1340 = vrot.slane %v1339, 4
    %v1341 = vadd.f32 %v1339, %v1340
    %v1342 = vrot.slane %v1341, 2
    %v1343 = vadd.f32 %v1341, %v1342
    %v1344 = vrot.slane %v1343, 1
    %v1345 = vadd.f32 %v1343, %v1344
    %vm1346 = vcmask 1040384
    %v1347 = vsel %vm1346, %v1157, %v1261
    %v1348 = vsel %vm1346, %v1164, %v1268
    %v1349 = vsel %vm1346, %v1171, %v1275
    %v1350 = vsel %vm1346, %v1178, %v1282
    %v1351 = vsel %vm1346, %v1185, %v1289
    %v1352 = vsel %vm1346, %v1192, %v1296
    %v1353 = vsel %vm1346, %v1199, %v1303
    %v1354 = vsel %vm1346, %v1206, %v1310
    %v1355 = vsel %vm1346, %v1213, %v1317
    %v1356 = vsel %vm1346, %v1220, %v1324
    %v1357 = vsel %vm1346, %v1227, %v1331
    %v1358 = vsel %vm1346, %v1234, %v1338
    %v1359 = vsel %vm1346, %v1241, %v1345
    %1360 = vmatprep.subr.mxu0 %v1138
    %1361 = vmatpush1.xpose.msra.mxu0 %v1137
    %1362 = vmatprep.subr.mxu0 0.0
    %1363 = vmatpush1.xpose.msra.mxu0 0.0
    %1364 = vmatprep.subr.mxu0 0.0
    %1365 = vmatpush1.xpose.msra.mxu0 0.0
    %1366 = vmatprep.subr.mxu0 0.0
    %1367 = vmatpush1.xpose.msra.mxu0 0.0
    %1368 = vmatprep.subr.mxu0 0.0
    %1369 = vmatpush1.xpose.msra.mxu0 0.0
    %1370 = vmatprep.subr.mxu0 0.0
    %1371 = vmatpush1.xpose.msra.mxu0 0.0
    %1372 = vmatprep.subr.mxu0 0.0
    %1373 = vmatpush1.xpose.msra.mxu0 0.0
    %1374 = vmatprep.subr.mxu0 0.0
    %1375 = vmatpush1.xpose.msra.mxu0 0.0
    %1376 = vmatprep.subr.mxu0 0.0
    %1377 = vmatpush1.xpose.msra.mxu0 0.0
    %1378 = vmatprep.subr.mxu0 0.0
    %1379 = vmatpush1.xpose.msra.mxu0 0.0
    %1380 = vmatprep.subr.mxu0 0.0
    %1381 = vmatpush1.xpose.msra.mxu0 0.0
    %1382 = vmatprep.subr.mxu0 0.0
    %1383 = vmatpush1.xpose.msra.mxu0 0.0
    %1384 = vmatprep.subr.mxu0 0.0
    %1385 = vmatpush1.xpose.msra.mxu0 0.0
    %1386 = vmatprep.subr.mxu0 0.0
    %1387 = vmatpush1.xpose.msra.mxu0 0.0
    %1388 = vmatprep.subr.mxu0 0.0
    %1389 = vmatpush1.xpose.msra.mxu0 0.0
    %1390 = vmatprep.subr.mxu0 0.0
    %1391 = vmatpush1.xpose.msra.mxu0 0.0
    %1392 = vmatprep.subr.mxu0 0.0
    %1393 = vmatpush1.xpose.msra.mxu0 0.0
    %1394 = vmatprep.subr.mxu0 0.0
    %1395 = vmatpush1.xpose.msra.mxu0 0.0
    %1396 = vmatprep.subr.mxu0 0.0
    %1397 = vmatpush1.xpose.msra.mxu0 0.0
    %1398 = vmatprep.subr.mxu0 0.0
    %1399 = vmatpush1.xpose.msra.mxu0 0.0
    %1400 = vmatprep.subr.mxu0 0.0
    %1401 = vmatpush1.xpose.msra.mxu0 0.0
    %1402 = vmatprep.subr.mxu0 0.0
    %1403 = vmatpush1.xpose.msra.mxu0 0.0
    %1404 = vmatprep.subr.mxu0 0.0
    %1405 = vmatpush1.xpose.msra.mxu0 0.0
    %1406 = vmatprep.subr.mxu0 0.0
    %1407 = vmatpush1.xpose.msra.mxu0 0.0
    %1408 = vmatprep.subr.mxu0 0.0
    %1409 = vmatpush1.xpose.msra.mxu0 0.0
    %1410 = vmatprep.subr.mxu0 0.0
    %1411 = vmatpush1.xpose.msra.mxu0 0.0
    %1412 = vmatprep.subr.mxu0 0.0
    %1413 = vmatpush1.xpose.msra.mxu0 0.0
    %1414 = vmatprep.subr.mxu0 0.0
    %1415 = vmatpush1.xpose.msra.mxu0 0.0
    %1416 = vmatprep.subr.mxu0 0.0
    %1417 = vmatpush1.xpose.msra.mxu0 0.0
    %1418 = vmatprep.subr.mxu0 0.0
    %1419 = vmatpush1.xpose.msra.mxu0 0.0
    %1420 = vmatprep.subr.mxu0 0.0
    %1421 = vmatpush1.xpose.msra.mxu0 0.0
    %1422 = vmatprep.subr.mxu0 0.0
    %1423 = vmatpush1.xpose.msra.mxu0 0.0
    %1424 = vmatprep.mubr.f32.mxu0 %v1348
    %1425 = vmatmul.mubr.f32.gmra.mrb[0].mxu0 %v1347
    %v1426 = vpop.f32.mrb[0].mxu0
    %v1427 = vadd.f32 0.0, %v1426
    %v1428 = vpop.f32.mrb[0].mxu0
    %1429 = vdwg.mxu0
    %1430 = vmatprep.subr.mxu0 %v1140
    %1431 = vmatpush1.xpose.msra.mxu0 %v1139
    %1432 = vmatprep.subr.mxu0 0.0
    %1433 = vmatpush1.xpose.msra.mxu0 0.0
    %1434 = vmatprep.subr.mxu0 0.0
    %1435 = vmatpush1.xpose.msra.mxu0 0.0
    %1436 = vmatprep.subr.mxu0 0.0
    %1437 = vmatpush1.xpose.msra.mxu0 0.0
    %1438 = vmatprep.subr.mxu0 0.0
    %1439 = vmatpush1.xpose.msra.mxu0 0.0
    %1440 = vmatprep.subr.mxu0 0.0
    %1441 = vmatpush1.xpose.msra.mxu0 0.0
    %1442 = vmatprep.subr.mxu0 0.0
    %1443 = vmatpush1.xpose.msra.mxu0 0.0
    %1444 = vmatprep.subr.mxu0 0.0
    %1445 = vmatpush1.xpose.msra.mxu0 0.0
    %1446 = vmatprep.subr.mxu0 0.0
    %1447 = vmatpush1.xpose.msra.mxu0 0.0
    %1448 = vmatprep.subr.mxu0 0.0
    %1449 = vmatpush1.xpose.msra.mxu0 0.0
    %1450 = vmatprep.subr.mxu0 0.0
    %1451 = vmatpush1.xpose.msra.mxu0 0.0
    %1452 = vmatprep.subr.mxu0 0.0
    %1453 = vmatpush1.xpose.msra.mxu0 0.0
    %1454 = vmatprep.subr.mxu0 0.0
    %1455 = vmatpush1.xpose.msra.mxu0 0.0
    %1456 = vmatprep.subr.mxu0 0.0
    %1457 = vmatpush1.xpose.msra.mxu0 0.0
    %1458 = vmatprep.subr.mxu0 0.0
    %1459 = vmatpush1.xpose.msra.mxu0 0.0
    %1460 = vmatprep.subr.mxu0 0.0
    %1461 = vmatpush1.xpose.msra.mxu0 0.0
    %1462 = vmatprep.subr.mxu0 0.0
    %1463 = vmatpush1.xpose.msra.mxu0 0.0
    %1464 = vmatprep.subr.mxu0 0.0
    %1465 = vmatpush1.xpose.msra.mxu0 0.0
    %1466 = vmatprep.subr.mxu0 0.0
    %1467 = vmatpush1.xpose.msra.mxu0 0.0
    %1468 = vmatprep.subr.mxu0 0.0
    %1469 = vmatpush1.xpose.msra.mxu0 0.0
    %1470 = vmatprep.subr.mxu0 0.0
    %1471 = vmatpush1.xpose.msra.mxu0 0.0
    %1472 = vmatprep.subr.mxu0 0.0
    %1473 = vmatpush1.xpose.msra.mxu0 0.0
    %1474 = vmatprep.subr.mxu0 0.0
    %1475 = vmatpush1.xpose.msra.mxu0 0.0
    %1476 = vmatprep.subr.mxu0 0.0
    %1477 = vmatpush1.xpose.msra.mxu0 0.0
    %1478 = vmatprep.subr.mxu0 0.0
    %1479 = vmatpush1.xpose.msra.mxu0 0.0
    %1480 = vmatprep.subr.mxu0 0.0
    %1481 = vmatpush1.xpose.msra.mxu0 0.0
    %1482 = vmatprep.subr.mxu0 0.0
    %1483 = vmatpush1.xpose.msra.mxu0 0.0
    %1484 = vmatprep.subr.mxu0 0.0
    %1485 = vmatpush1.xpose.msra.mxu0 0.0
    %1486 = vmatprep.subr.mxu0 0.0
    %1487 = vmatpush1.xpose.msra.mxu0 0.0
    %1488 = vmatprep.subr.mxu0 0.0
    %1489 = vmatpush1.xpose.msra.mxu0 0.0
    %1490 = vmatprep.subr.mxu0 0.0
    %1491 = vmatpush1.xpose.msra.mxu0 0.0
    %1492 = vmatprep.subr.mxu0 0.0
    %1493 = vmatpush1.xpose.msra.mxu0 0.0
    %1494 = vmatprep.mubr.f32.mxu0 %v1350
    %1495 = vmatmul.mubr.f32.gmra.mrb[0].mxu0 %v1349
    %v1496 = vpop.f32.mrb[0].mxu0
    %v1497 = vadd.f32 %v1427, %v1496
    %v1498 = vpop.f32.mrb[0].mxu0
    %1499 = vdwg.mxu0
    %1500 = vmatprep.subr.mxu0 %v1142
    %1501 = vmatpush1.xpose.msra.mxu0 %v1141
    %1502 = vmatprep.subr.mxu0 0.0
    %1503 = vmatpush1.xpose.msra.mxu0 0.0
    %1504 = vmatprep.subr.mxu0 0.0
    %1505 = vmatpush1.xpose.msra.mxu0 0.0
    %1506 = vmatprep.subr.mxu0 0.0
    %1507 = vmatpush1.xpose.msra.mxu0 0.0
    %1508 = vmatprep.subr.mxu0 0.0
    %1509 = vmatpush1.xpose.msra.mxu0 0.0
    %1510 = vmatprep.subr.mxu0 0.0
    %1511 = vmatpush1.xpose.msra.mxu0 0.0
    %1512 = vmatprep.subr.mxu0 0.0
    %1513 = vmatpush1.xpose.msra.mxu0 0.0
    %1514 = vmatprep.subr.mxu0 0.0
    %1515 = vmatpush1.xpose.msra.mxu0 0.0
    %1516 = vmatprep.subr.mxu0 0.0
    %1517 = vmatpush1.xpose.msra.mxu0 0.0
    %1518 = vmatprep.subr.mxu0 0.0
    %1519 = vmatpush1.xpose.msra.mxu0 0.0
    %1520 = vmatprep.subr.mxu0 0.0
    %1521 = vmatpush1.xpose.msra.mxu0 0.0
    %1522 = vmatprep.subr.mxu0 0.0
    %1523 = vmatpush1.xpose.msra.mxu0 0.0
    %1524 = vmatprep.subr.mxu0 0.0
    %1525 = vmatpush1.xpose.msra.mxu0 0.0
    %1526 = vmatprep.subr.mxu0 0.0
    %1527 = vmatpush1.xpose.msra.mxu0 0.0
    %1528 = vmatprep.subr.mxu0 0.0
    %1529 = vmatpush1.xpose.msra.mxu0 0.0
    %1530 = vmatprep.subr.mxu0 0.0
    %1531 = vmatpush1.xpose.msra.mxu0 0.0
    %1532 = vmatprep.subr.mxu0 0.0
    %1533 = vmatpush1.xpose.msra.mxu0 0.0
    %1534 = vmatprep.subr.mxu0 0.0
    %1535 = vmatpush1.xpose.msra.mxu0 0.0
    %1536 = vmatprep.subr.mxu0 0.0
    %1537 = vmatpush1.xpose.msra.mxu0 0.0
    %1538 = vmatprep.subr.mxu0 0.0
    %1539 = vmatpush1.xpose.msra.mxu0 0.0
    %1540 = vmatprep.subr.mxu0 0.0
    %1541 = vmatpush1.xpose.msra.mxu0 0.0
    %1542 = vmatprep.subr.mxu0 0.0
    %1543 = vmatpush1.xpose.msra.mxu0 0.0
    %1544 = vmatprep.subr.mxu0 0.0
    %1545 = vmatpush1.xpose.msra.mxu0 0.0
    %1546 = vmatprep.subr.mxu0 0.0
    %1547 = vmatpush1.xpose.msra.mxu0 0.0
    %1548 = vmatprep.subr.mxu0 0.0
    %1549 = vmatpush1.xpose.msra.mxu0 0.0
    %1550 = vmatprep.subr.mxu0 0.0
    %1551 = vmatpush1.xpose.msra.mxu0 0.0
    %1552 = vmatprep.subr.mxu0 0.0
    %1553 = vmatpush1.xpose.msra.mxu0 0.0
    %1554 = vmatprep.subr.mxu0 0.0
    %1555 = vmatpush1.xpose.msra.mxu0 0.0
    %1556 = vmatprep.subr.mxu0 0.0
    %1557 = vmatpush1.xpose.msra.mxu0 0.0
    %1558 = vmatprep.subr.mxu0 0.0
    %1559 = vmatpush1.xpose.msra.mxu0 0.0
    %1560 = vmatprep.subr.mxu0 0.0
    %1561 = vmatpush1.xpose.msra.mxu0 0.0
    %1562 = vmatprep.subr.mxu0 0.0
    %1563 = vmatpush1.xpose.msra.mxu0 0.0
    %1564 = vmatprep.mubr.f32.mxu0 %v1352
    %1565 = vmatmul.mubr.f32.gmra.mrb[0].mxu0 %v1351
    %v1566 = vpop.f32.mrb[0].mxu0
    %v1567 = vadd.f32 %v1497, %v1566
    %v1568 = vpop.f32.mrb[0].mxu0
    %1569 = vdwg.mxu0
    %1570 = vmatprep.subr.mxu0 %v1144
    %1571 = vmatpush1.xpose.msra.mxu0 %v1143
    %1572 = vmatprep.subr.mxu0 0.0
    %1573 = vmatpush1.xpose.msra.mxu0 0.0
    %1574 = vmatprep.subr.mxu0 0.0
    %1575 = vmatpush1.xpose.msra.mxu0 0.0
    %1576 = vmatprep.subr.mxu0 0.0
    %1577 = vmatpush1.xpose.msra.mxu0 0.0
    %1578 = vmatprep.subr.mxu0 0.0
    %1579 = vmatpush1.xpose.msra.mxu0 0.0
    %1580 = vmatprep.subr.mxu0 0.0
    %1581 = vmatpush1.xpose.msra.mxu0 0.0
    %1582 = vmatprep.subr.mxu0 0.0
    %1583 = vmatpush1.xpose.msra.mxu0 0.0
    %1584 = vmatprep.subr.mxu0 0.0
    %1585 = vmatpush1.xpose.msra.mxu0 0.0
    %1586 = vmatprep.subr.mxu0 0.0
    %1587 = vmatpush1.xpose.msra.mxu0 0.0
    %1588 = vmatprep.subr.mxu0 0.0
    %1589 = vmatpush1.xpose.msra.mxu0 0.0
    %1590 = vmatprep.subr.mxu0 0.0
    %1591 = vmatpush1.xpose.msra.mxu0 0.0
    %1592 = vmatprep.subr.mxu0 0.0
    %1593 = vmatpush1.xpose.msra.mxu0 0.0
    %1594 = vmatprep.subr.mxu0 0.0
    %1595 = vmatpush1.xpose.msra.mxu0 0.0
    %1596 = vmatprep.subr.mxu0 0.0
    %1597 = vmatpush1.xpose.msra.mxu0 0.0
    %1598 = vmatprep.subr.mxu0 0.0
    %1599 = vmatpush1.xpose.msra.mxu0 0.0
    %1600 = vmatprep.subr.mxu0 0.0
    %1601 = vmatpush1.xpose.msra.mxu0 0.0
    %1602 = vmatprep.subr.mxu0 0.0
    %1603 = vmatpush1.xpose.msra.mxu0 0.0
    %1604 = vmatprep.subr.mxu0 0.0
    %1605 = vmatpush1.xpose.msra.mxu0 0.0
    %1606 = vmatprep.subr.mxu0 0.0
    %1607 = vmatpush1.xpose.msra.mxu0 0.0
    %1608 = vmatprep.subr.mxu0 0.0
    %1609 = vmatpush1.xpose.msra.mxu0 0.0
    %1610 = vmatprep.subr.mxu0 0.0
    %1611 = vmatpush1.xpose.msra.mxu0 0.0
    %1612 = vmatprep.subr.mxu0 0.0
    %1613 = vmatpush1.xpose.msra.mxu0 0.0
    %1614 = vmatprep.subr.mxu0 0.0
    %1615 = vmatpush1.xpose.msra.mxu0 0.0
    %1616 = vmatprep.subr.mxu0 0.0
    %1617 = vmatpush1.xpose.msra.mxu0 0.0
    %1618 = vmatprep.subr.mxu0 0.0
    %1619 = vmatpush1.xpose.msra.mxu0 0.0
    %1620 = vmatprep.subr.mxu0 0.0
    %1621 = vmatpush1.xpose.msra.mxu0 0.0
    %1622 = vmatprep.subr.mxu0 0.0
    %1623 = vmatpush1.xpose.msra.mxu0 0.0
    %1624 = vmatprep.subr.mxu0 0.0
    %1625 = vmatpush1.xpose.msra.mxu0 0.0
    %1626 = vmatprep.subr.mxu0 0.0
    %1627 = vmatpush1.xpose.msra.mxu0 0.0
    %1628 = vmatprep.subr.mxu0 0.0
    %1629 = vmatpush1.xpose.msra.mxu0 0.0
    %1630 = vmatprep.subr.mxu0 0.0
    %1631 = vmatpush1.xpose.msra.mxu0 0.0
    %1632 = vmatprep.subr.mxu0 0.0
    %1633 = vmatpush1.xpose.msra.mxu0 0.0
    %1634 = vmatprep.mubr.f32.mxu0 %v1354
    %1635 = vmatmul.mubr.f32.gmra.mrb[0].mxu0 %v1353
    %v1636 = vpop.f32.mrb[0].mxu0
    %v1637 = vadd.f32 %v1567, %v1636
    %v1638 = vpop.f32.mrb[0].mxu0
    %1639 = vdwg.mxu0
    %1640 = vmatprep.subr.mxu0 %v1146
    %1641 = vmatpush1.xpose.msra.mxu0 %v1145
    %1642 = vmatprep.subr.mxu0 0.0
    %1643 = vmatpush1.xpose.msra.mxu0 0.0
    %1644 = vmatprep.subr.mxu0 0.0
    %1645 = vmatpush1.xpose.msra.mxu0 0.0
    %1646 = vmatprep.subr.mxu0 0.0
    %1647 = vmatpush1.xpose.msra.mxu0 0.0
    %1648 = vmatprep.subr.mxu0 0.0
    %1649 = vmatpush1.xpose.msra.mxu0 0.0
    %1650 = vmatprep.subr.mxu0 0.0
    %1651 = vmatpush1.xpose.msra.mxu0 0.0
    %1652 = vmatprep.subr.mxu0 0.0
    %1653 = vmatpush1.xpose.msra.mxu0 0.0
    %1654 = vmatprep.subr.mxu0 0.0
    %1655 = vmatpush1.xpose.msra.mxu0 0.0
    %1656 = vmatprep.subr.mxu0 0.0
    %1657 = vmatpush1.xpose.msra.mxu0 0.0
    %1658 = vmatprep.subr.mxu0 0.0
    %1659 = vmatpush1.xpose.msra.mxu0 0.0
    %1660 = vmatprep.subr.mxu0 0.0
    %1661 = vmatpush1.xpose.msra.mxu0 0.0
    %1662 = vmatprep.subr.mxu0 0.0
    %1663 = vmatpush1.xpose.msra.mxu0 0.0
    %1664 = vmatprep.subr.mxu0 0.0
    %1665 = vmatpush1.xpose.msra.mxu0 0.0
    %1666 = vmatprep.subr.mxu0 0.0
    %1667 = vmatpush1.xpose.msra.mxu0 0.0
    %1668 = vmatprep.subr.mxu0 0.0
    %1669 = vmatpush1.xpose.msra.mxu0 0.0
    %1670 = vmatprep.subr.mxu0 0.0
    %1671 = vmatpush1.xpose.msra.mxu0 0.0
    %1672 = vmatprep.subr.mxu0 0.0
    %1673 = vmatpush1.xpose.msra.mxu0 0.0
    %1674 = vmatprep.subr.mxu0 0.0
    %1675 = vmatpush1.xpose.msra.mxu0 0.0
    %1676 = vmatprep.subr.mxu0 0.0
    %1677 = vmatpush1.xpose.msra.mxu0 0.0
    %1678 = vmatprep.subr.mxu0 0.0
    %1679 = vmatpush1.xpose.msra.mxu0 0.0
    %1680 = vmatprep.subr.mxu0 0.0
    %1681 = vmatpush1.xpose.msra.mxu0 0.0
    %1682 = vmatprep.subr.mxu0 0.0
    %1683 = vmatpush1.xpose.msra.mxu0 0.0
    %1684 = vmatprep.subr.mxu0 0.0
    %1685 = vmatpush1.xpose.msra.mxu0 0.0
    %1686 = vmatprep.subr.mxu0 0.0
    %1687 = vmatpush1.xpose.msra.mxu0 0.0
    %1688 = vmatprep.subr.mxu0 0.0
    %1689 = vmatpush1.xpose.msra.mxu0 0.0
    %1690 = vmatprep.subr.mxu0 0.0
    %1691 = vmatpush1.xpose.msra.mxu0 0.0
    %1692 = vmatprep.subr.mxu0 0.0
    %1693 = vmatpush1.xpose.msra.mxu0 0.0
    %1694 = vmatprep.subr.mxu0 0.0
    %1695 = vmatpush1.xpose.msra.mxu0 0.0
    %1696 = vmatprep.subr.mxu0 0.0
    %1697 = vmatpush1.xpose.msra.mxu0 0.0
    %1698 = vmatprep.subr.mxu0 0.0
    %1699 = vmatpush1.xpose.msra.mxu0 0.0
    %1700 = vmatprep.subr.mxu0 0.0
    %1701 = vmatpush1.xpose.msra.mxu0 0.0
    %1702 = vmatprep.subr.mxu0 0.0
    %1703 = vmatpush1.xpose.msra.mxu0 0.0
    %1704 = vmatprep.mubr.f32.mxu0 %v1356
    %1705 = vmatmul.mubr.f32.gmra.mrb[0].mxu0 %v1355
    %v1706 = vpop.f32.mrb[0].mxu0
    %v1707 = vadd.f32 %v1637, %v1706
    %v1708 = vpop.f32.mrb[0].mxu0
    %1709 = vdwg.mxu0
    %1710 = vmatprep.subr.mxu0 %v1148
    %1711 = vmatpush1.xpose.msra.mxu0 %v1147
    %1712 = vmatprep.subr.mxu0 0.0
    %1713 = vmatpush1.xpose.msra.mxu0 0.0
    %1714 = vmatprep.subr.mxu0 0.0
    %1715 = vmatpush1.xpose.msra.mxu0 0.0
    %1716 = vmatprep.subr.mxu0 0.0
    %1717 = vmatpush1.xpose.msra.mxu0 0.0
    %1718 = vmatprep.subr.mxu0 0.0
    %1719 = vmatpush1.xpose.msra.mxu0 0.0
    %1720 = vmatprep.subr.mxu0 0.0
    %1721 = vmatpush1.xpose.msra.mxu0 0.0
    %1722 = vmatprep.subr.mxu0 0.0
    %1723 = vmatpush1.xpose.msra.mxu0 0.0
    %1724 = vmatprep.subr.mxu0 0.0
    %1725 = vmatpush1.xpose.msra.mxu0 0.0
    %1726 = vmatprep.subr.mxu0 0.0
    %1727 = vmatpush1.xpose.msra.mxu0 0.0
    %1728 = vmatprep.subr.mxu0 0.0
    %1729 = vmatpush1.xpose.msra.mxu0 0.0
    %1730 = vmatprep.subr.mxu0 0.0
    %1731 = vmatpush1.xpose.msra.mxu0 0.0
    %1732 = vmatprep.subr.mxu0 0.0
    %1733 = vmatpush1.xpose.msra.mxu0 0.0
    %1734 = vmatprep.subr.mxu0 0.0
    %1735 = vmatpush1.xpose.msra.mxu0 0.0
    %1736 = vmatprep.subr.mxu0 0.0
    %1737 = vmatpush1.xpose.msra.mxu0 0.0
    %1738 = vmatprep.subr.mxu0 0.0
    %1739 = vmatpush1.xpose.msra.mxu0 0.0
    %1740 = vmatprep.subr.mxu0 0.0
    %1741 = vmatpush1.xpose.msra.mxu0 0.0
    %1742 = vmatprep.subr.mxu0 0.0
    %1743 = vmatpush1.xpose.msra.mxu0 0.0
    %1744 = vmatprep.subr.mxu0 0.0
    %1745 = vmatpush1.xpose.msra.mxu0 0.0
    %1746 = vmatprep.subr.mxu0 0.0
    %1747 = vmatpush1.xpose.msra.mxu0 0.0
    %1748 = vmatprep.subr.mxu0 0.0
    %1749 = vmatpush1.xpose.msra.mxu0 0.0
    %1750 = vmatprep.subr.mxu0 0.0
    %1751 = vmatpush1.xpose.msra.mxu0 0.0
    %1752 = vmatprep.subr.mxu0 0.0
    %1753 = vmatpush1.xpose.msra.mxu0 0.0
    %1754 = vmatprep.subr.mxu0 0.0
    %1755 = vmatpush1.xpose.msra.mxu0 0.0
    %1756 = vmatprep.subr.mxu0 0.0
    %1757 = vmatpush1.xpose.msra.mxu0 0.0
    %1758 = vmatprep.subr.mxu0 0.0
    %1759 = vmatpush1.xpose.msra.mxu0 0.0
    %1760 = vmatprep.subr.mxu0 0.0
    %1761 = vmatpush1.xpose.msra.mxu0 0.0
    %1762 = vmatprep.subr.mxu0 0.0
    %1763 = vmatpush1.xpose.msra.mxu0 0.0
    %1764 = vmatprep.subr.mxu0 0.0
    %1765 = vmatpush1.xpose.msra.mxu0 0.0
    %1766 = vmatprep.subr.mxu0 0.0
    %1767 = vmatpush1.xpose.msra.mxu0 0.0
    %1768 = vmatprep.subr.mxu0 0.0
    %1769 = vmatpush1.xpose.msra.mxu0 0.0
    %1770 = vmatprep.subr.mxu0 0.0
    %1771 = vmatpush1.xpose.msra.mxu0 0.0
    %1772 = vmatprep.subr.mxu0 0.0
    %1773 = vmatpush1.xpose.msra.mxu0 0.0
    %1774 = vmatprep.mubr.f32.mxu0 %v1358
    %1775 = vmatmul.mubr.f32.gmra.mrb[0].mxu0 %v1357
    %v1776 = vpop.f32.mrb[0].mxu0
    %v1777 = vadd.f32 %v1707, %v1776
    %v1778 = vpop.f32.mrb[0].mxu0
    %1779 = vdwg.mxu0
    %1780 = vmatprep.subr.mxu0 0.0
    %1781 = vmatpush1.xpose.msra.mxu0 %v1149
    %1782 = vmatprep.subr.mxu0 0.0
    %1783 = vmatpush1.xpose.msra.mxu0 0.0
    %1784 = vmatprep.subr.mxu0 0.0
    %1785 = vmatpush1.xpose.msra.mxu0 0.0
    %1786 = vmatprep.subr.mxu0 0.0
    %1787 = vmatpush1.xpose.msra.mxu0 0.0
    %1788 = vmatprep.subr.mxu0 0.0
    %1789 = vmatpush1.xpose.msra.mxu0 0.0
    %1790 = vmatprep.subr.mxu0 0.0
    %1791 = vmatpush1.xpose.msra.mxu0 0.0
    %1792 = vmatprep.subr.mxu0 0.0
    %1793 = vmatpush1.xpose.msra.mxu0 0.0
    %1794 = vmatprep.subr.mxu0 0.0
    %1795 = vmatpush1.xpose.msra.mxu0 0.0
    %1796 = vmatprep.subr.mxu0 0.0
    %1797 = vmatpush1.xpose.msra.mxu0 0.0
    %1798 = vmatprep.subr.mxu0 0.0
    %1799 = vmatpush1.xpose.msra.mxu0 0.0
    %1800 = vmatprep.subr.mxu0 0.0
    %1801 = vmatpush1.xpose.msra.mxu0 0.0
    %1802 = vmatprep.subr.mxu0 0.0
    %1803 = vmatpush1.xpose.msra.mxu0 0.0
    %1804 = vmatprep.subr.mxu0 0.0
    %1805 = vmatpush1.xpose.msra.mxu0 0.0
    %1806 = vmatprep.subr.mxu0 0.0
    %1807 = vmatpush1.xpose.msra.mxu0 0.0
    %1808 = vmatprep.subr.mxu0 0.0
    %1809 = vmatpush1.xpose.msra.mxu0 0.0
    %1810 = vmatprep.subr.mxu0 0.0
    %1811 = vmatpush1.xpose.msra.mxu0 0.0
    %1812 = vmatprep.subr.mxu0 0.0
    %1813 = vmatpush1.xpose.msra.mxu0 0.0
    %1814 = vmatprep.subr.mxu0 0.0
    %1815 = vmatpush1.xpose.msra.mxu0 0.0
    %1816 = vmatprep.subr.mxu0 0.0
    %1817 = vmatpush1.xpose.msra.mxu0 0.0
    %1818 = vmatprep.subr.mxu0 0.0
    %1819 = vmatpush1.xpose.msra.mxu0 0.0
    %1820 = vmatprep.subr.mxu0 0.0
    %1821 = vmatpush1.xpose.msra.mxu0 0.0
    %1822 = vmatprep.subr.mxu0 0.0
    %1823 = vmatpush1.xpose.msra.mxu0 0.0
    %1824 = vmatprep.subr.mxu0 0.0
    %1825 = vmatpush1.xpose.msra.mxu0 0.0
    %1826 = vmatprep.subr.mxu0 0.0
    %1827 = vmatpush1.xpose.msra.mxu0 0.0
    %1828 = vmatprep.subr.mxu0 0.0
    %1829 = vmatpush1.xpose.msra.mxu0 0.0
    %1830 = vmatprep.subr.mxu0 0.0
    %1831 = vmatpush1.xpose.msra.mxu0 0.0
    %1832 = vmatprep.subr.mxu0 0.0
    %1833 = vmatpush1.xpose.msra.mxu0 0.0
    %1834 = vmatprep.subr.mxu0 0.0
    %1835 = vmatpush1.xpose.msra.mxu0 0.0
    %1836 = vmatprep.subr.mxu0 0.0
    %1837 = vmatpush1.xpose.msra.mxu0 0.0
    %1838 = vmatprep.subr.mxu0 0.0
    %1839 = vmatpush1.xpose.msra.mxu0 0.0
    %1840 = vmatprep.subr.mxu0 0.0
    %1841 = vmatpush1.xpose.msra.mxu0 0.0
    %1842 = vmatprep.subr.mxu0 0.0
    %1843 = vmatpush1.xpose.msra.mxu0 0.0
    %1844 = vmatprep.mubr.f32.mxu0 0.0
    %1845 = vmatmul.mubr.f32.gmra.mrb[0].mxu0 %v1359
    %v1846 = vpop.f32.mrb[0].mxu0
    %v1847 = vadd.f32 %v1777, %v1846
    %v1848 = vpop.f32.mrb[0].mxu0
    %1849 = vdwg.mxu0
    %v1850 = vrcp.pop 392.0
    %v1851 = vmul.f32 %v1847, %v1850
    %v1852 = vmul.f32 %v1851, %v1851
    %v1854 = vrot.slane %v1852, 7
    %v1856 = vsub.f32 %v1851, %v1854
    %v1857 = vadd.f32 %v1856, 1e-05
    %v1858 = vrsqrt.pop %v1857
    %v1859 = vmul.f32 %v84, %v1858
    %v1861 = vlaneseq
    %v1862 = vshrl.u32 %v1861, 7
    %v1863 = vsub.s32 1, %v1862
    %v1864 = vrot.slane %v1859, %v1863
    %v1866 = vmul.f32 %v1851, %v1864
    %v1867 = vrot.slane %v84, 2
    %v1871 = vunpack.c.l.s4 1983009808
    %v1872 = vunpack.c.0.s8 %v1871
    %v1873 = vlaneseq
    %v1874 = vshrl.u32 %v1873, 7
    %v1875 = vsub.s32 %v1872, %v1874
    %v1876 = vrot.slane %v1866, %v1875
    %v1877 = vrot.slane %v1876, 7
    %v1879 = vsub.f32 %v1867, %v1877
    %v1880 = vsel %vm1346, %v1864, %v1879
    %vm1881 = vcmask 64512
    %v1883 = vsel %vm1881, %v1880, 0
    %1885 = vmatprep.subr.mxu0 %v1138
    %1886 = vmatpush1.msra.mxu0 %v1137
    %1887 = vmatprep.subr.mxu0 0.0
    %1888 = vmatpush1.msra.mxu0 0.0
    %1889 = vmatprep.subr.mxu0 0.0
    %1890 = vmatpush1.msra.mxu0 0.0
    %1891 = vmatprep.subr.mxu0 0.0
    %1892 = vmatpush1.msra.mxu0 0.0
    %1893 = vmatprep.subr.mxu0 0.0
    %1894 = vmatpush1.msra.mxu0 0.0
    %1895 = vmatprep.subr.mxu0 0.0
    %1896 = vmatpush1.msra.mxu0 0.0
    %1897 = vmatprep.subr.mxu0 0.0
    %1898 = vmatpush1.msra.mxu0 0.0
    %1899 = vmatprep.subr.mxu0 0.0
    %1900 = vmatpush1.msra.mxu0 0.0
    %1901 = vmatprep.subr.mxu0 0.0
    %1902 = vmatpush1.msra.mxu0 0.0
    %1903 = vmatprep.subr.mxu0 0.0
    %1904 = vmatpush1.msra.mxu0 0.0
    %1905 = vmatprep.subr.mxu0 0.0
    %1906 = vmatpush1.msra.mxu0 0.0
    %1907 = vmatprep.subr.mxu0 0.0
    %1908 = vmatpush1.msra.mxu0 0.0
    %1909 = vmatprep.subr.mxu0 0.0
    %1910 = vmatpush1.msra.mxu0 0.0
    %1911 = vmatprep.subr.mxu0 0.0
    %1912 = vmatpush1.msra.mxu0 0.0
    %1913 = vmatprep.subr.mxu0 0.0
    %1914 = vmatpush1.msra.mxu0 0.0
    %1915 = vmatprep.subr.mxu0 0.0
    %1916 = vmatpush1.msra.mxu0 0.0
    %1917 = vmatprep.subr.mxu0 0.0
    %1918 = vmatpush1.msra.mxu0 0.0
    %1919 = vmatprep.subr.mxu0 0.0
    %1920 = vmatpush1.msra.mxu0 0.0
    %1921 = vmatprep.subr.mxu0 0.0
    %1922 = vmatpush1.msra.mxu0 0.0
    %1923 = vmatprep.subr.mxu0 0.0
    %1924 = vmatpush1.msra.mxu0 0.0
    %1925 = vmatprep.subr.mxu0 0.0
    %1926 = vmatpush1.msra.mxu0 0.0
    %1927 = vmatprep.subr.mxu0 0.0
    %1928 = vmatpush1.msra.mxu0 0.0
    %1929 = vmatprep.subr.mxu0 0.0
    %1930 = vmatpush1.msra.mxu0 0.0
    %1931 = vmatprep.subr.mxu0 0.0
    %1932 = vmatpush1.msra.mxu0 0.0
    %1933 = vmatprep.subr.mxu0 0.0
    %1934 = vmatpush1.msra.mxu0 0.0
    %1935 = vmatprep.subr.mxu0 0.0
    %1936 = vmatpush1.msra.mxu0 0.0
    %1937 = vmatprep.subr.mxu0 0.0
    %1938 = vmatpush1.msra.mxu0 0.0
    %1939 = vmatprep.subr.mxu0 0.0
    %1940 = vmatpush1.msra.mxu0 0.0
    %1941 = vmatprep.subr.mxu0 0.0
    %1942 = vmatpush1.msra.mxu0 0.0
    %1943 = vmatprep.subr.mxu0 0.0
    %1944 = vmatpush1.msra.mxu0 0.0
    %1945 = vmatprep.subr.mxu0 0.0
    %1946 = vmatpush1.msra.mxu0 0.0
    %1947 = vmatprep.subr.mxu0 0.0
    %1948 = vmatpush1.msra.mxu0 0.0
    %1949 = vmatprep.mubr.f32.mxu0 0.0
    %1950 = vmatmul.mubr.f32.gmra.mrb[0].mxu0 %v1883
    %v1951 = vpop.f32.mrb[0].mxu0
    %v1952 = vadd.f32 0.0, %v1951
    %v1953 = vpop.f32.mrb[0].mxu0
    %v1954 = vadd.f32 0.0, %v1953
    %1955 = vdwg.mxu0
    %1956 = vmatprep.subr.mxu0 %v1140
    %1957 = vmatpush1.msra.mxu0 %v1139
    %1958 = vmatprep.subr.mxu0 0.0
    %1959 = vmatpush1.msra.mxu0 0.0
    %1960 = vmatprep.subr.mxu0 0.0
    %1961 = vmatpush1.msra.mxu0 0.0
    %1962 = vmatprep.subr.mxu0 0.0
    %1963 = vmatpush1.msra.mxu0 0.0
    %1964 = vmatprep.subr.mxu0 0.0
    %1965 = vmatpush1.msra.mxu0 0.0
    %1966 = vmatprep.subr.mxu0 0.0
    %1967 = vmatpush1.msra.mxu0 0.0
    %1968 = vmatprep.subr.mxu0 0.0
    %1969 = vmatpush1.msra.mxu0 0.0
    %1970 = vmatprep.subr.mxu0 0.0
    %1971 = vmatpush1.msra.mxu0 0.0
    %1972 = vmatprep.subr.mxu0 0.0
    %1973 = vmatpush1.msra.mxu0 0.0
    %1974 = vmatprep.subr.mxu0 0.0
    %1975 = vmatpush1.msra.mxu0 0.0
    %1976 = vmatprep.subr.mxu0 0.0
    %1977 = vmatpush1.msra.mxu0 0.0
    %1978 = vmatprep.subr.mxu0 0.0
    %1979 = vmatpush1.msra.mxu0 0.0
    %1980 = vmatprep.subr.mxu0 0.0
    %1981 = vmatpush1.msra.mxu0 0.0
    %1982 = vmatprep.subr.mxu0 0.0
    %1983 = vmatpush1.msra.mxu0 0.0
    %1984 = vmatprep.subr.mxu0 0.0
    %1985 = vmatpush1.msra.mxu0 0.0
    %1986 = vmatprep.subr.mxu0 0.0
    %1987 = vmatpush1.msra.mxu0 0.0
    %1988 = vmatprep.subr.mxu0 0.0
    %1989 = vmatpush1.msra.mxu0 0.0
    %1990 = vmatprep.subr.mxu0 0.0
    %1991 = vmatpush1.msra.mxu0 0.0
    %1992 = vmatprep.subr.mxu0 0.0
    %1993 = vmatpush1.msra.mxu0 0.0
    %1994 = vmatprep.subr.mxu0 0.0
    %1995 = vmatpush1.msra.mxu0 0.0
    %1996 = vmatprep.subr.mxu0 0.0
    %1997 = vmatpush1.msra.mxu0 0.0
    %1998 = vmatprep.subr.mxu0 0.0
    %1999 = vmatpush1.msra.mxu0 0.0
    %2000 = vmatprep.subr.mxu0 0.0
    %2001 = vmatpush1.msra.mxu0 0.0
    %2002 = vmatprep.subr.mxu0 0.0
    %2003 = vmatpush1.msra.mxu0 0.0
    %2004 = vmatprep.subr.mxu0 0.0
    %2005 = vmatpush1.msra.mxu0 0.0
    %2006 = vmatprep.subr.mxu0 0.0
    %2007 = vmatpush1.msra.mxu0 0.0
    %2008 = vmatprep.subr.mxu0 0.0
    %2009 = vmatpush1.msra.mxu0 0.0
    %2010 = vmatprep.subr.mxu0 0.0
    %2011 = vmatpush1.msra.mxu0 0.0
    %2012 = vmatprep.subr.mxu0 0.0
    %2013 = vmatpush1.msra.mxu0 0.0
    %2014 = vmatprep.subr.mxu0 0.0
    %2015 = vmatpush1.msra.mxu0 0.0
    %2016 = vmatprep.subr.mxu0 0.0
    %2017 = vmatpush1.msra.mxu0 0.0
    %2018 = vmatprep.subr.mxu0 0.0
    %2019 = vmatpush1.msra.mxu0 0.0
    %2020 = vmatprep.mubr.f32.mxu0 0.0
    %2021 = vmatmul.mubr.f32.gmra.mrb[0].mxu0 %v1883
    %v2022 = vpop.f32.mrb[0].mxu0
    %v2023 = vadd.f32 0.0, %v2022
    %v2024 = vpop.f32.mrb[0].mxu0
    %v2025 = vadd.f32 0.0, %v2024
    %2026 = vdwg.mxu0
    %2027 = vmatprep.subr.mxu0 %v1142
    %2028 = vmatpush1.msra.mxu0 %v1141
    %2029 = vmatprep.subr.mxu0 0.0
    %2030 = vmatpush1.msra.mxu0 0.0
    %2031 = vmatprep.subr.mxu0 0.0
    %2032 = vmatpush1.msra.mxu0 0.0
    %2033 = vmatprep.subr.mxu0 0.0
    %2034 = vmatpush1.msra.mxu0 0.0
    %2035 = vmatprep.subr.mxu0 0.0
    %2036 = vmatpush1.msra.mxu0 0.0
    %2037 = vmatprep.subr.mxu0 0.0
    %2038 = vmatpush1.msra.mxu0 0.0
    %2039 = vmatprep.subr.mxu0 0.0
    %2040 = vmatpush1.msra.mxu0 0.0
    %2041 = vmatprep.subr.mxu0 0.0
    %2042 = vmatpush1.msra.mxu0 0.0
    %2043 = vmatprep.subr.mxu0 0.0
    %2044 = vmatpush1.msra.mxu0 0.0
    %2045 = vmatprep.subr.mxu0 0.0
    %2046 = vmatpush1.msra.mxu0 0.0
    %2047 = vmatprep.subr.mxu0 0.0
    %2048 = vmatpush1.msra.mxu0 0.0
    %2049 = vmatprep.subr.mxu0 0.0
    %2050 = vmatpush1.msra.mxu0 0.0
    %2051 = vmatprep.subr.mxu0 0.0
    %2052 = vmatpush1.msra.mxu0 0.0
    %2053 = vmatprep.subr.mxu0 0.0
    %2054 = vmatpush1.msra.mxu0 0.0
    %2055 = vmatprep.subr.mxu0 0.0
    %2056 = vmatpush1.msra.mxu0 0.0
    %2057 = vmatprep.subr.mxu0 0.0
    %2058 = vmatpush1.msra.mxu0 0.0
    %2059 = vmatprep.subr.mxu0 0.0
    %2060 = vmatpush1.msra.mxu0 0.0
    %2061 = vmatprep.subr.mxu0 0.0
    %2062 = vmatpush1.msra.mxu0 0.0
    %2063 = vmatprep.subr.mxu0 0.0
    %2064 = vmatpush1.msra.mxu0 0.0
    %2065 = vmatprep.subr.mxu0 0.0
    %2066 = vmatpush1.msra.mxu0 0.0
    %2067 = vmatprep.subr.mxu0 0.0
    %2068 = vmatpush1.msra.mxu0 0.0
    %2069 = vmatprep.subr.mxu0 0.0
    %2070 = vmatpush1.msra.mxu0 0.0
    %2071 = vmatprep.subr.mxu0 0.0
    %2072 = vmatpush1.msra.mxu0 0.0
    %2073 = vmatprep.subr.mxu0 0.0
    %2074 = vmatpush1.msra.mxu0 0.0
    %2075 = vmatprep.subr.mxu0 0.0
    %2076 = vmatpush1.msra.mxu0 0.0
    %2077 = vmatprep.subr.mxu0 0.0
    %2078 = vmatpush1.msra.mxu0 0.0
    %2079 = vmatprep.subr.mxu0 0.0
    %2080 = vmatpush1.msra.mxu0 0.0
    %2081 = vmatprep.subr.mxu0 0.0
    %2082 = vmatpush1.msra.mxu0 0.0
    %2083 = vmatprep.subr.mxu0 0.0
    %2084 = vmatpush1.msra.mxu0 0.0
    %2085 = vmatprep.subr.mxu0 0.0
    %2086 = vmatpush1.msra.mxu0 0.0
    %2087 = vmatprep.subr.mxu0 0.0
    %2088 = vmatpush1.msra.mxu0 0.0
    %2089 = vmatprep.subr.mxu0 0.0
    %2090 = vmatpush1.msra.mxu0 0.0
    %2091 = vmatprep.mubr.f32.mxu0 0.0
    %2092 = vmatmul.mubr.f32.gmra.mrb[0].mxu0 %v1883
    %v2093 = vpop.f32.mrb[0].mxu0
    %v2094 = vadd.f32 0.0, %v2093
    %v2095 = vpop.f32.mrb[0].mxu0
    %v2096 = vadd.f32 0.0, %v2095
    %2097 = vdwg.mxu0
    %2098 = vmatprep.subr.mxu0 %v1144
    %2099 = vmatpush1.msra.mxu0 %v1143
    %2100 = vmatprep.subr.mxu0 0.0
    %2101 = vmatpush1.msra.mxu0 0.0
    %2102 = vmatprep.subr.mxu0 0.0
    %2103 = vmatpush1.msra.mxu0 0.0
    %2104 = vmatprep.subr.mxu0 0.0
    %2105 = vmatpush1.msra.mxu0 0.0
    %2106 = vmatprep.subr.mxu0 0.0
    %2107 = vmatpush1.msra.mxu0 0.0
    %2108 = vmatprep.subr.mxu0 0.0
    %2109 = vmatpush1.msra.mxu0 0.0
    %2110 = vmatprep.subr.mxu0 0.0
    %2111 = vmatpush1.msra.mxu0 0.0
    %2112 = vmatprep.subr.mxu0 0.0
    %2113 = vmatpush1.msra.mxu0 0.0
    %2114 = vmatprep.subr.mxu0 0.0
    %2115 = vmatpush1.msra.mxu0 0.0
    %2116 = vmatprep.subr.mxu0 0.0
    %2117 = vmatpush1.msra.mxu0 0.0
    %2118 = vmatprep.subr.mxu0 0.0
    %2119 = vmatpush1.msra.mxu0 0.0
    %2120 = vmatprep.subr.mxu0 0.0
    %2121 = vmatpush1.msra.mxu0 0.0
    %2122 = vmatprep.subr.mxu0 0.0
    %2123 = vmatpush1.msra.mxu0 0.0
    %2124 = vmatprep.subr.mxu0 0.0
    %2125 = vmatpush1.msra.mxu0 0.0
    %2126 = vmatprep.subr.mxu0 0.0
    %2127 = vmatpush1.msra.mxu0 0.0
    %2128 = vmatprep.subr.mxu0 0.0
    %2129 = vmatpush1.msra.mxu0 0.0
    %2130 = vmatprep.subr.mxu0 0.0
    %2131 = vmatpush1.msra.mxu0 0.0
    %2132 = vmatprep.subr.mxu0 0.0
    %2133 = vmatpush1.msra.mxu0 0.0
    %2134 = vmatprep.subr.mxu0 0.0
    %2135 = vmatpush1.msra.mxu0 0.0
    %2136 = vmatprep.subr.mxu0 0.0
    %2137 = vmatpush1.msra.mxu0 0.0
    %2138 = vmatprep.subr.mxu0 0.0
    %2139 = vmatpush1.msra.mxu0 0.0
    %2140 = vmatprep.subr.mxu0 0.0
    %2141 = vmatpush1.msra.mxu0 0.0
    %2142 = vmatprep.subr.mxu0 0.0
    %2143 = vmatpush1.msra.mxu0 0.0
    %2144 = vmatprep.subr.mxu0 0.0
    %2145 = vmatpush1.msra.mxu0 0.0
    %2146 = vmatprep.subr.mxu0 0.0
    %2147 = vmatpush1.msra.mxu0 0.0
    %2148 = vmatprep.subr.mxu0 0.0
    %2149 = vmatpush1.msra.mxu0 0.0
    %2150 = vmatprep.subr.mxu0 0.0
    %2151 = vmatpush1.msra.mxu0 0.0
    %2152 = vmatprep.subr.mxu0 0.0
    %2153 = vmatpush1.msra.mxu0 0.0
    %2154 = vmatprep.subr.mxu0 0.0
    %2155 = vmatpush1.msra.mxu0 0.0
    %2156 = vmatprep.subr.mxu0 0.0
    %2157 = vmatpush1.msra.mxu0 0.0
    %2158 = vmatprep.subr.mxu0 0.0
    %2159 = vmatpush1.msra.mxu0 0.0
    %2160 = vmatprep.subr.mxu0 0.0
    %2161 = vmatpush1.msra.mxu0 0.0
    %2162 = vmatprep.mubr.f32.mxu0 0.0
    %2163 = vmatmul.mubr.f32.gmra.mrb[0].mxu0 %v1883
    %v2164 = vpop.f32.mrb[0].mxu0
    %v2165 = vadd.f32 0.0, %v2164
    %v2166 = vpop.f32.mrb[0].mxu0
    %v2167 = vadd.f32 0.0, %v2166
    %2168 = vdwg.mxu0
    %2169 = vmatprep.subr.mxu0 %v1146
    %2170 = vmatpush1.msra.mxu0 %v1145
    %2171 = vmatprep.subr.mxu0 0.0
    %2172 = vmatpush1.msra.mxu0 0.0
    %2173 = vmatprep.subr.mxu0 0.0
    %2174 = vmatpush1.msra.mxu0 0.0
    %2175 = vmatprep.subr.mxu0 0.0
    %2176 = vmatpush1.msra.mxu0 0.0
    %2177 = vmatprep.subr.mxu0 0.0
    %2178 = vmatpush1.msra.mxu0 0.0
    %2179 = vmatprep.subr.mxu0 0.0
    %2180 = vmatpush1.msra.mxu0 0.0
    %2181 = vmatprep.subr.mxu0 0.0
    %2182 = vmatpush1.msra.mxu0 0.0
    %2183 = vmatprep.subr.mxu0 0.0
    %2184 = vmatpush1.msra.mxu0 0.0
    %2185 = vmatprep.subr.mxu0 0.0
    %2186 = vmatpush1.msra.mxu0 0.0
    %2187 = vmatprep.subr.mxu0 0.0
    %2188 = vmatpush1.msra.mxu0 0.0
    %2189 = vmatprep.subr.mxu0 0.0
    %2190 = vmatpush1.msra.mxu0 0.0
    %2191 = vmatprep.subr.mxu0 0.0
    %2192 = vmatpush1.msra.mxu0 0.0
    %2193 = vmatprep.subr.mxu0 0.0
    %2194 = vmatpush1.msra.mxu0 0.0
    %2195 = vmatprep.subr.mxu0 0.0
    %2196 = vmatpush1.msra.mxu0 0.0
    %2197 = vmatprep.subr.mxu0 0.0
    %2198 = vmatpush1.msra.mxu0 0.0
    %2199 = vmatprep.subr.mxu0 0.0
    %2200 = vmatpush1.msra.mxu0 0.0
    %2201 = vmatprep.subr.mxu0 0.0
    %2202 = vmatpush1.msra.mxu0 0.0
    %2203 = vmatprep.subr.mxu0 0.0
    %2204 = vmatpush1.msra.mxu0 0.0
    %2205 = vmatprep.subr.mxu0 0.0
    %2206 = vmatpush1.msra.mxu0 0.0
    %2207 = vmatprep.subr.mxu0 0.0
    %2208 = vmatpush1.msra.mxu0 0.0
    %2209 = vmatprep.subr.mxu0 0.0
    %2210 = vmatpush1.msra.mxu0 0.0
    %2211 = vmatprep.subr.mxu0 0.0
    %2212 = vmatpush1.msra.mxu0 0.0
    %2213 = vmatprep.subr.mxu0 0.0
    %2214 = vmatpush1.msra.mxu0 0.0
    %2215 = vmatprep.subr.mxu0 0.0
    %2216 = vmatpush1.msra.mxu0 0.0
    %2217 = vmatprep.subr.mxu0 0.0
    %2218 = vmatpush1.msra.mxu0 0.0
    %2219 = vmatprep.subr.mxu0 0.0
    %2220 = vmatpush1.msra.mxu0 0.0
    %2221 = vmatprep.subr.mxu0 0.0
    %2222 = vmatpush1.msra.mxu0 0.0
    %2223 = vmatprep.subr.mxu0 0.0
    %2224 = vmatpush1.msra.mxu0 0.0
    %2225 = vmatprep.subr.mxu0 0.0
    %2226 = vmatpush1.msra.mxu0 0.0
    %2227 = vmatprep.subr.mxu0 0.0
    %2228 = vmatpush1.msra.mxu0 0.0
    %2229 = vmatprep.subr.mxu0 0.0
    %2230 = vmatpush1.msra.mxu0 0.0
    %2231 = vmatprep.subr.mxu0 0.0
    %2232 = vmatpush1.msra.mxu0 0.0
    %2233 = vmatprep.mubr.f32.mxu0 0.0
    %2234 = vmatmul.mubr.f32.gmra.mrb[0].mxu0 %v1883
    %v2235 = vpop.f32.mrb[0].mxu0
    %v2236 = vadd.f32 0.0, %v2235
    %v2237 = vpop.f32.mrb[0].mxu0
    %v2238 = vadd.f32 0.0, %v2237
    %2239 = vdwg.mxu0
    %2240 = vmatprep.subr.mxu0 %v1148
    %2241 = vmatpush1.msra.mxu0 %v1147
    %2242 = vmatprep.subr.mxu0 0.0
    %2243 = vmatpush1.msra.mxu0 0.0
    %2244 = vmatprep.subr.mxu0 0.0
    %2245 = vmatpush1.msra.mxu0 0.0
    %2246 = vmatprep.subr.mxu0 0.0
    %2247 = vmatpush1.msra.mxu0 0.0
    %2248 = vmatprep.subr.mxu0 0.0
    %2249 = vmatpush1.msra.mxu0 0.0
    %2250 = vmatprep.subr.mxu0 0.0
    %2251 = vmatpush1.msra.mxu0 0.0
    %2252 = vmatprep.subr.mxu0 0.0
    %2253 = vmatpush1.msra.mxu0 0.0
    %2254 = vmatprep.subr.mxu0 0.0
    %2255 = vmatpush1.msra.mxu0 0.0
    %2256 = vmatprep.subr.mxu0 0.0
    %2257 = vmatpush1.msra.mxu0 0.0
    %2258 = vmatprep.subr.mxu0 0.0
    %2259 = vmatpush1.msra.mxu0 0.0
    %2260 = vmatprep.subr.mxu0 0.0
    %2261 = vmatpush1.msra.mxu0 0.0
    %2262 = vmatprep.subr.mxu0 0.0
    %2263 = vmatpush1.msra.mxu0 0.0
    %2264 = vmatprep.subr.mxu0 0.0
    %2265 = vmatpush1.msra.mxu0 0.0
    %2266 = vmatprep.subr.mxu0 0.0
    %2267 = vmatpush1.msra.mxu0 0.0
    %2268 = vmatprep.subr.mxu0 0.0
    %2269 = vmatpush1.msra.mxu0 0.0
    %2270 = vmatprep.subr.mxu0 0.0
    %2271 = vmatpush1.msra.mxu0 0.0
    %2272 = vmatprep.subr.mxu0 0.0
    %2273 = vmatpush1.msra.mxu0 0.0
    %2274 = vmatprep.subr.mxu0 0.0
    %2275 = vmatpush1.msra.mxu0 0.0
    %2276 = vmatprep.subr.mxu0 0.0
    %2277 = vmatpush1.msra.mxu0 0.0
    %2278 = vmatprep.subr.mxu0 0.0
    %2279 = vmatpush1.msra.mxu0 0.0
    %2280 = vmatprep.subr.mxu0 0.0
    %2281 = vmatpush1.msra.mxu0 0.0
    %2282 = vmatprep.subr.mxu0 0.0
    %2283 = vmatpush1.msra.mxu0 0.0
    %2284 = vmatprep.subr.mxu0 0.0
    %2285 = vmatpush1.msra.mxu0 0.0
    %2286 = vmatprep.subr.mxu0 0.0
    %2287 = vmatpush1.msra.mxu0 0.0
    %2288 = vmatprep.subr.mxu0 0.0
    %2289 = vmatpush1.msra.mxu0 0.0
    %2290 = vmatprep.subr.mxu0 0.0
    %2291 = vmatpush1.msra.mxu0 0.0
    %2292 = vmatprep.subr.mxu0 0.0
    %2293 = vmatpush1.msra.mxu0 0.0
    %2294 = vmatprep.subr.mxu0 0.0
    %2295 = vmatpush1.msra.mxu0 0.0
    %2296 = vmatprep.subr.mxu0 0.0
    %2297 = vmatpush1.msra.mxu0 0.0
    %2298 = vmatprep.subr.mxu0 0.0
    %2299 = vmatpush1.msra.mxu0 0.0
    %2300 = vmatprep.subr.mxu0 0.0
    %2301 = vmatpush1.msra.mxu0 0.0
    %2302 = vmatprep.subr.mxu0 0.0
    %2303 = vmatpush1.msra.mxu0 0.0
    %2304 = vmatprep.mubr.f32.mxu0 0.0
    %2305 = vmatmul.mubr.f32.gmra.mrb[0].mxu0 %v1883
    %v2306 = vpop.f32.mrb[0].mxu0
    %v2307 = vadd.f32 0.0, %v2306
    %v2308 = vpop.f32.mrb[0].mxu0
    %v2309 = vadd.f32 0.0, %v2308
    %2310 = vdwg.mxu0
    %2311 = vmatprep.subr.mxu0 0.0
    %2312 = vmatpush1.msra.mxu0 %v1149
    %2313 = vmatprep.subr.mxu0 0.0
    %2314 = vmatpush1.msra.mxu0 0.0
    %2315 = vmatprep.subr.mxu0 0.0
    %2316 = vmatpush1.msra.mxu0 0.0
    %2317 = vmatprep.subr.mxu0 0.0
    %2318 = vmatpush1.msra.mxu0 0.0
    %2319 = vmatprep.subr.mxu0 0.0
    %2320 = vmatpush1.msra.mxu0 0.0
    %2321 = vmatprep.subr.mxu0 0.0
    %2322 = vmatpush1.msra.mxu0 0.0
    %2323 = vmatprep.subr.mxu0 0.0
    %2324 = vmatpush1.msra.mxu0 0.0
    %2325 = vmatprep.subr.mxu0 0.0
    %2326 = vmatpush1.msra.mxu0 0.0
    %2327 = vmatprep.subr.mxu0 0.0
    %2328 = vmatpush1.msra.mxu0 0.0
    %2329 = vmatprep.subr.mxu0 0.0
    %2330 = vmatpush1.msra.mxu0 0.0
    %2331 = vmatprep.subr.mxu0 0.0
    %2332 = vmatpush1.msra.mxu0 0.0
    %2333 = vmatprep.subr.mxu0 0.0
    %2334 = vmatpush1.msra.mxu0 0.0
    %2335 = vmatprep.subr.mxu0 0.0
    %2336 = vmatpush1.msra.mxu0 0.0
    %2337 = vmatprep.subr.mxu0 0.0
    %2338 = vmatpush1.msra.mxu0 0.0
    %2339 = vmatprep.subr.mxu0 0.0
    %2340 = vmatpush1.msra.mxu0 0.0
    %2341 = vmatprep.subr.mxu0 0.0
    %2342 = vmatpush1.msra.mxu0 0.0
    %2343 = vmatprep.subr.mxu0 0.0
    %2344 = vmatpush1.msra.mxu0 0.0
    %2345 = vmatprep.subr.mxu0 0.0
    %2346 = vmatpush1.msra.mxu0 0.0
    %2347 = vmatprep.subr.mxu0 0.0
    %2348 = vmatpush1.msra.mxu0 0.0
    %2349 = vmatprep.subr.mxu0 0.0
    %2350 = vmatpush1.msra.mxu0 0.0
    %2351 = vmatprep.subr.mxu0 0.0
    %2352 = vmatpush1.msra.mxu0 0.0
    %2353 = vmatprep.subr.mxu0 0.0
    %2354 = vmatpush1.msra.mxu0 0.0
    %2355 = vmatprep.subr.mxu0 0.0
    %2356 = vmatpush1.msra.mxu0 0.0
    %2357 = vmatprep.subr.mxu0 0.0
    %2358 = vmatpush1.msra.mxu0 0.0
    %2359 = vmatprep.subr.mxu0 0.0
    %2360 = vmatpush1.msra.mxu0 0.0
    %2361 = vmatprep.subr.mxu0 0.0
    %2362 = vmatpush1.msra.mxu0 0.0
    %2363 = vmatprep.subr.mxu0 0.0
    %2364 = vmatpush1.msra.mxu0 0.0
    %2365 = vmatprep.subr.mxu0 0.0
    %2366 = vmatpush1.msra.mxu0 0.0
    %2367 = vmatprep.subr.mxu0 0.0
    %2368 = vmatpush1.msra.mxu0 0.0
    %2369 = vmatprep.subr.mxu0 0.0
    %2370 = vmatpush1.msra.mxu0 0.0
    %2371 = vmatprep.subr.mxu0 0.0
    %2372 = vmatpush1.msra.mxu0 0.0
    %2373 = vmatprep.subr.mxu0 0.0
    %2374 = vmatpush1.msra.mxu0 0.0
    %2375 = vmatprep.mubr.f32.mxu0 0.0
    %2376 = vmatmul.mubr.f32.gmra.mrb[0].mxu0 %v1883
    %v2377 = vpop.f32.mrb[0].mxu0
    %v2378 = vadd.f32 0.0, %v2377
    %v2379 = vpop.f32.mrb[0].mxu0
    %2380 = vdwg.mxu0
    %v2381 = vlaneseq
    %v2382 = vshrl.u32 %v2381, 7
    %v2383 = vsub.s32 0, %v2382
    %v2384 = vrot.slane %v1952, %v2383
    %v2385 = vlaneseq
    %v2386 = vshrl.u32 %v2385, 7
    %v2387 = vsub.s32 0, %v2386
    %v2388 = vrot.slane %v1954, %v2387
    %v2389 = vlaneseq
    %v2390 = vshrl.u32 %v2389, 7
    %v2391 = vsub.s32 0, %v2390
    %v2392 = vrot.slane %v2023, %v2391
    %v2393 = vlaneseq
    %v2394 = vshrl.u32 %v2393, 7
    %v2395 = vsub.s32 0, %v2394
    %v2396 = vrot.slane %v2025, %v2395
    %v2397 = vlaneseq
    %v2398 = vshrl.u32 %v2397, 7
    %v2399 = vsub.s32 0, %v2398
    %v2400 = vrot.slane %v2094, %v2399
    %v2401 = vlaneseq
    %v2402 = vshrl.u32 %v2401, 7
    %v2403 = vsub.s32 0, %v2402
    %v2404 = vrot.slane %v2096, %v2403
    %v2405 = vlaneseq
    %v2406 = vshrl.u32 %v2405, 7
    %v2407 = vsub.s32 0, %v2406
    %v2408 = vrot.slane %v2165, %v2407
    %v2409 = vlaneseq
    %v2410 = vshrl.u32 %v2409, 7
    %v2411 = vsub.s32 0, %v2410
    %v2412 = vrot.slane %v2167, %v2411
    %v2413 = vlaneseq
    %v2414 = vshrl.u32 %v2413, 7
    %v2415 = vsub.s32 0, %v2414
    %v2416 = vrot.slane %v2236, %v2415
    %v2417 = vlaneseq
    %v2418 = vshrl.u32 %v2417, 7
    %v2419 = vsub.s32 0, %v2418
    %v2420 = vrot.slane %v2238, %v2419
    %v2421 = vlaneseq
    %v2422 = vshrl.u32 %v2421, 7
    %v2423 = vsub.s32 0, %v2422
    %v2424 = vrot.slane %v2307, %v2423
    %v2425 = vlaneseq
    %v2426 = vshrl.u32 %v2425, 7
    %v2427 = vsub.s32 0, %v2426
    %v2428 = vrot.slane %v2309, %v2427
    %v2429 = vlaneseq
    %v2430 = vshrl.u32 %v2429, 7
    %v2431 = vsub.s32 0, %v2430
    %v2432 = vrot.slane %v2378, %v2431
    %v2433 = vmul.f32 %v886, %v2384
    %v2434 = vmul.f32 %v888, %v2388
    %v2435 = vmul.f32 %v927, %v2392
    %v2436 = vmul.f32 %v929, %v2396
    %v2437 = vmul.f32 %v968, %v2400
    %v2438 = vmul.f32 %v970, %v2404
    %v2439 = vmul.f32 %v1009, %v2408
    %v2440 = vmul.f32 %v1011, %v2412
    %v2441 = vmul.f32 %v1050, %v2416
    %v2442 = vmul.f32 %v1052, %v2420
    %v2443 = vmul.f32 %v1091, %v2424
    %v2444 = vmul.f32 %v1093, %v2428
    %v2445 = vmul.f32 %v1132, %v2432
    %v2446 = vlaneseq
    %v2447 = vshrl.u32 %v2446, 7
    %v2448 = vsub.s32 1, %v2447
    %v2449 = vrot.slane %v1952, %v2448
    %v2450 = vlaneseq
    %v2451 = vshrl.u32 %v2450, 7
    %v2452 = vsub.s32 1, %v2451
    %v2453 = vrot.slane %v1954, %v2452
    %v2454 = vlaneseq
    %v2455 = vshrl.u32 %v2454, 7
    %v2456 = vsub.s32 1, %v2455
    %v2457 = vrot.slane %v2023, %v2456
    %v2458 = vlaneseq
    %v2459 = vshrl.u32 %v2458, 7
    %v2460 = vsub.s32 1, %v2459
    %v2461 = vrot.slane %v2025, %v2460
    %v2462 = vlaneseq
    %v2463 = vshrl.u32 %v2462, 7
    %v2464 = vsub.s32 1, %v2463
    %v2465 = vrot.slane %v2094, %v2464
    %v2466 = vlaneseq
    %v2467 = vshrl.u32 %v2466, 7
    %v2468 = vsub.s32 1, %v2467
    %v2469 = vrot.slane %v2096, %v2468
    %v2470 = vlaneseq
    %v2471 = vshrl.u32 %v2470, 7
    %v2472 = vsub.s32 1, %v2471
    %v2473 = vrot.slane %v2165, %v2472
    %v2474 = vlaneseq
    %v2475 = vshrl.u32 %v2474, 7
    %v2476 = vsub.s32 1, %v2475
    %v2477 = vrot.slane %v2167, %v2476
    %v2478 = vlaneseq
    %v2479 = vshrl.u32 %v2478, 7
    %v2480 = vsub.s32 1, %v2479
    %v2481 = vrot.slane %v2236, %v2480
    %v2482 = vlaneseq
    %v2483 = vshrl.u32 %v2482, 7
    %v2484 = vsub.s32 1, %v2483
    %v2485 = vrot.slane %v2238, %v2484
    %v2486 = vlaneseq
    %v2487 = vshrl.u32 %v2486, 7
    %v2488 = vsub.s32 1, %v2487
    %v2489 = vrot.slane %v2307, %v2488
    %v2490 = vlaneseq
    %v2491 = vshrl.u32 %v2490, 7
    %v2492 = vsub.s32 1, %v2491
    %v2493 = vrot.slane %v2309, %v2492
    %v2494 = vlaneseq
    %v2495 = vshrl.u32 %v2494, 7
    %v2496 = vsub.s32 1, %v2495
    %v2497 = vrot.slane %v2378, %v2496
    %v2498 = vadd.f32 %v2433, %v2449
    %v2499 = vadd.f32 %v2434, %v2453
    %v2500 = vadd.f32 %v2435, %v2457
    %v2501 = vadd.f32 %v2436, %v2461
    %v2502 = vadd.f32 %v2437, %v2465
    %v2503 = vadd.f32 %v2438, %v2469
    %v2504 = vadd.f32 %v2439, %v2473
    %v2505 = vadd.f32 %v2440, %v2477
    %v2506 = vadd.f32 %v2441, %v2481
    %v2507 = vadd.f32 %v2442, %v2485
    %v2508 = vadd.f32 %v2443, %v2489
    %v2509 = vadd.f32 %v2444, %v2493
    %v2510 = vadd.f32 %v2445, %v2497
    %vm2511 = vcmp.ge.f32.partialorder %v2498, 0.0
    %vm2512 = vcmp.ge.f32.partialorder %v2499, 0.0
    %vm2513 = vcmp.ge.f32.partialorder %v2500, 0.0
    %vm2514 = vcmp.ge.f32.partialorder %v2501, 0.0
    %vm2515 = vcmp.ge.f32.partialorder %v2502, 0.0
    %vm2516 = vcmp.ge.f32.partialorder %v2503, 0.0
    %vm2517 = vcmp.ge.f32.partialorder %v2504, 0.0
    %vm2518 = vcmp.ge.f32.partialorder %v2505, 0.0
    %vm2519 = vcmp.ge.f32.partialorder %v2506, 0.0
    %vm2520 = vcmp.ge.f32.partialorder %v2507, 0.0
    %vm2521 = vcmp.ge.f32.partialorder %v2508, 0.0
    %vm2522 = vcmp.ge.f32.partialorder %v2509, 0.0
    %vm2523 = vcmp.ge.f32.partialorder %v2510, 0.0
    %v2524 = vmul.f32 %v2498, 0.01
    %v2525 = vmul.f32 %v2499, 0.01
    %v2526 = vmul.f32 %v2500, 0.01
    %v2527 = vmul.f32 %v2501, 0.01
    %v2528 = vmul.f32 %v2502, 0.01
    %v2529 = vmul.f32 %v2503, 0.01
    %v2530 = vmul.f32 %v2504, 0.01
    %v2531 = vmul.f32 %v2505, 0.01
    %v2532 = vmul.f32 %v2506, 0.01
    %v2533 = vmul.f32 %v2507, 0.01
    %v2534 = vmul.f32 %v2508, 0.01
    %v2535 = vmul.f32 %v2509, 0.01
    %v2536 = vmul.f32 %v2510, 0.01
    %v2537 = vsel %vm2511, %v2498, %v2524
    %v2538 = vsel %vm2512, %v2499, %v2525
    %v2539 = vsel %vm2513, %v2500, %v2526
    %v2540 = vsel %vm2514, %v2501, %v2527
    %v2541 = vsel %vm2515, %v2502, %v2528
    %v2542 = vsel %vm2516, %v2503, %v2529
    %v2543 = vsel %vm2517, %v2504, %v2530
    %v2544 = vsel %vm2518, %v2505, %v2531
    %v2545 = vsel %vm2519, %v2506, %v2532
    %v2546 = vsel %vm2520, %v2507, %v2533
    %v2547 = vsel %vm2521, %v2508, %v2534
    %v2548 = vsel %vm2522, %v2509, %v2535
    %v2549 = vsel %vm2523, %v2510, %v2536
    %v2550 = vpack.c.bf16 %v2537, %v2537
    %v2551 = vpack.c.bf16 %v2538, %v2538
    %v2552 = vpack.c.bf16 %v2539, %v2539
    %v2553 = vpack.c.bf16 %v2540, %v2540
    %v2554 = vpack.c.bf16 %v2541, %v2541
    %v2555 = vpack.c.bf16 %v2542, %v2542
    %v2556 = vpack.c.bf16 %v2543, %v2543
    %v2557 = vpack.c.bf16 %v2544, %v2544
    %v2558 = vpack.c.bf16 %v2545, %v2545
    %v2559 = vpack.c.bf16 %v2546, %v2546
    %v2560 = vpack.c.bf16 %v2547, %v2547
    %v2561 = vpack.c.bf16 %v2548, %v2548
    %v2562 = vpack.c.bf16 %v2549, %v2549
    %v2563 = vld [vmem:[#allocation10] sm:$0xff]
    %v2564 = vld [vmem:[#allocation10 + $0x8] sm:$0xff]
    %v2565 = vld [vmem:[#allocation10 + $0x10] sm:$0xff]
    %v2566 = vld [vmem:[#allocation10 + $0x18] sm:$0xf]
    %v2567 = vld [vmem:[#allocation10 + $0x1c] sm:$0xff]
    %v2568 = vld [vmem:[#allocation10 + $0x24] sm:$0xff]
    %v2569 = vld [vmem:[#allocation10 + $0x2c] sm:$0xff]
    %v2570 = vld [vmem:[#allocation10 + $0x34] sm:$0xf]
    %v2571 = vld [vmem:[#allocation10 + $0x38] sm:$0xff]
    %v2572 = vld [vmem:[#allocation10 + $0x40] sm:$0xff]
    %v2573 = vld [vmem:[#allocation10 + $0x48] sm:$0xff]
    %v2574 = vld [vmem:[#allocation10 + $0x50] sm:$0xf]
    %v2575 = vld [vmem:[#allocation10 + $0x54] sm:$0xff]
    %v2576 = vld [vmem:[#allocation10 + $0x5c] sm:$0xff]
    %v2577 = vld [vmem:[#allocation10 + $0x64] sm:$0xff]
    %v2578 = vld [vmem:[#allocation10 + $0x6c] sm:$0xf]
    %v2579 = vld [vmem:[#allocation10 + $0x70] sm:$0xff]
    %v2580 = vld [vmem:[#allocation10 + $0x78] sm:$0xff]
    %v2581 = vld [vmem:[#allocation10 + $0x80] sm:$0xff]
    %v2582 = vld [vmem:[#allocation10 + $0x88] sm:$0xf]
    %v2583 = vld [vmem:[#allocation10 + $0x8c] sm:$0xff]
    %v2584 = vld [vmem:[#allocation10 + $0x94] sm:$0xff]
    %v2585 = vld [vmem:[#allocation10 + $0x9c] sm:$0xff]
    %v2586 = vld [vmem:[#allocation10 + $0xa4] sm:$0xf]
    %v2587 = vld [vmem:[#allocation10 + $0xa8] sm:$0xff]
    %v2588 = vld [vmem:[#allocation10 + $0xb0] sm:$0xff]
    %v2589 = vld [vmem:[#allocation10 + $0xb8] sm:$0xff]
    %v2590 = vld [vmem:[#allocation10 + $0xc0] sm:$0xf]
    %v2591 = vld [vmem:[#allocation10 + $0xc4] sm:$0xff]
    %v2592 = vld [vmem:[#allocation10 + $0xcc] sm:$0xff]
    %v2593 = vld [vmem:[#allocation10 + $0xd4] sm:$0xff]
    %v2594 = vld [vmem:[#allocation10 + $0xdc] sm:$0xf]
    %v2595 = vld [vmem:[#allocation10 + $0xe0] sm:$0xff]
    %v2596 = vld [vmem:[#allocation10 + $0xe8] sm:$0xff]
    %v2597 = vld [vmem:[#allocation10 + $0xf0] sm:$0xff]
    %v2598 = vld [vmem:[#allocation10 + $0xf8] sm:$0xf]
    %v2599 = vld [vmem:[#allocation10 + $0xfc] sm:$0xff]
    %v2600 = vld [vmem:[#allocation10 + $0x104] sm:$0xff]
    %v2601 = vld [vmem:[#allocation10 + $0x10c] sm:$0xff]
    %v2602 = vld [vmem:[#allocation10 + $0x114] sm:$0xf]
    %v2603 = vld [vmem:[#allocation10 + $0x118] sm:$0xff]
    %v2604 = vld [vmem:[#allocation10 + $0x120] sm:$0xff]
    %v2605 = vld [vmem:[#allocation10 + $0x128] sm:$0xff]
    %v2606 = vld [vmem:[#allocation10 + $0x130] sm:$0xf]
    %v2607 = vld [vmem:[#allocation10 + $0x134] sm:$0xff]
    %v2608 = vld [vmem:[#allocation10 + $0x13c] sm:$0xff]
    %v2609 = vld [vmem:[#allocation10 + $0x144] sm:$0xff]
    %v2610 = vld [vmem:[#allocation10 + $0x14c] sm:$0xf]
    %v2611 = vld [vmem:[#allocation10 + $0x150] sm:$0xff]
    %v2612 = vld [vmem:[#allocation10 + $0x158] sm:$0xff]
    %v2613 = vld [vmem:[#allocation10 + $0x160] sm:$0xff]
    %v2614 = vld [vmem:[#allocation10 + $0x168] sm:$0xf]
    %v2615 = vld [vmem:[#allocation10 + $0x16c] sm:$0xff]
    %v2616 = vld [vmem:[#allocation10 + $0x174] sm:$0xff]
    %v2617 = vld [vmem:[#allocation10 + $0x17c] sm:$0xff]
    %v2618 = vld [vmem:[#allocation10 + $0x184] sm:$0xf]
    %v2619 = vld [vmem:[#allocation10 + $0x188] sm:$0xff]
    %v2620 = vld [vmem:[#allocation10 + $0x190] sm:$0xff]
    %v2621 = vld [vmem:[#allocation10 + $0x198] sm:$0xff]
    %v2622 = vld [vmem:[#allocation10 + $0x1a0] sm:$0xf]
    %v2623 = vld [vmem:[#allocation10 + $0x1a4] sm:$0xff]
    %v2624 = vld [vmem:[#allocation10 + $0x1ac] sm:$0xff]
    %v2625 = vld [vmem:[#allocation10 + $0x1b4] sm:$0xff]
    %v2626 = vld [vmem:[#allocation10 + $0x1bc] sm:$0xf]
    %v2627 = vld [vmem:[#allocation10 + $0x1c0] sm:$0xff]
    %v2628 = vld [vmem:[#allocation10 + $0x1c8] sm:$0xff]
    %v2629 = vld [vmem:[#allocation10 + $0x1d0] sm:$0xff]
    %v2630 = vld [vmem:[#allocation10 + $0x1d8] sm:$0xf]
    %v2631 = vld [vmem:[#allocation10 + $0x1dc] sm:$0xff]
    %v2632 = vld [vmem:[#allocation10 + $0x1e4] sm:$0xff]
    %v2633 = vld [vmem:[#allocation10 + $0x1ec] sm:$0xff]
    %v2634 = vld [vmem:[#allocation10 + $0x1f4] sm:$0xf]
    %v2635 = vld [vmem:[#allocation10 + $0x1f8] sm:$0xff]
    %v2636 = vld [vmem:[#allocation10 + $0x200] sm:$0xff]
    %v2637 = vld [vmem:[#allocation10 + $0x208] sm:$0xff]
    %v2638 = vld [vmem:[#allocation10 + $0x210] sm:$0xf]
    %v2639 = vld [vmem:[#allocation10 + $0x214] sm:$0xff]
    %v2640 = vld [vmem:[#allocation10 + $0x21c] sm:$0xff]
    %v2641 = vld [vmem:[#allocation10 + $0x224] sm:$0xff]
    %v2642 = vld [vmem:[#allocation10 + $0x22c] sm:$0xf]
    %v2643 = vld [vmem:[#allocation10 + $0x230] sm:$0xff]
    %v2644 = vld [vmem:[#allocation10 + $0x238] sm:$0xff]
    %v2645 = vld [vmem:[#allocation10 + $0x240] sm:$0xff]
    %v2646 = vld [vmem:[#allocation10 + $0x248] sm:$0xf]
    %v2647 = vld [vmem:[#allocation10 + $0x24c] sm:$0xff]
    %v2648 = vld [vmem:[#allocation10 + $0x254] sm:$0xff]
    %v2649 = vld [vmem:[#allocation10 + $0x25c] sm:$0xff]
    %v2650 = vld [vmem:[#allocation10 + $0x264] sm:$0xf]
    %v2651 = vld [vmem:[#allocation10 + $0x268] sm:$0xff]
    %v2652 = vld [vmem:[#allocation10 + $0x270] sm:$0xff]
    %v2653 = vld [vmem:[#allocation10 + $0x278] sm:$0xff]
    %v2654 = vld [vmem:[#allocation10 + $0x280] sm:$0xf]
    %v2655 = vld [vmem:[#allocation10 + $0x284] sm:$0xff]
    %v2656 = vld [vmem:[#allocation10 + $0x28c] sm:$0xff]
    %v2657 = vld [vmem:[#allocation10 + $0x294] sm:$0xff]
    %v2658 = vld [vmem:[#allocation10 + $0x29c] sm:$0xf]
    %v2659 = vld [vmem:[#allocation10 + $0x2a0] sm:$0xff]
    %v2660 = vld [vmem:[#allocation10 + $0x2a8] sm:$0xff]
    %v2661 = vld [vmem:[#allocation10 + $0x2b0] sm:$0xff]
    %v2662 = vld [vmem:[#allocation10 + $0x2b8] sm:$0xf]
    %v2663 = vld [vmem:[#allocation10 + $0x2bc] sm:$0xff]
    %v2664 = vld [vmem:[#allocation10 + $0x2c4] sm:$0xff]
    %v2665 = vld [vmem:[#allocation10 + $0x2cc] sm:$0xff]
    %v2666 = vld [vmem:[#allocation10 + $0x2d4] sm:$0xf]
    %v2667 = vld [vmem:[#allocation10 + $0x2d8] sm:$0xff]
    %v2668 = vld [vmem:[#allocation10 + $0x2e0] sm:$0xff]
    %v2669 = vld [vmem:[#allocation10 + $0x2e8] sm:$0xff]
    %v2670 = vld [vmem:[#allocation10 + $0x2f0] sm:$0xf]
    %v2671 = vld [vmem:[#allocation10 + $0x2f4] sm:$0xff]
    %v2672 = vld [vmem:[#allocation10 + $0x2fc] sm:$0xff]
    %v2673 = vld [vmem:[#allocation10 + $0x304] sm:$0xff]
    %v2674 = vld [vmem:[#allocation10 + $0x30c] sm:$0xf]
    %v2675 = vld [vmem:[#allocation10 + $0x310] sm:$0xff]
    %v2676 = vld [vmem:[#allocation10 + $0x318] sm:$0xff]
    %v2677 = vld [vmem:[#allocation10 + $0x320] sm:$0xff]
    %v2678 = vld [vmem:[#allocation10 + $0x328] sm:$0xf]
    %v2679 = vld [vmem:[#allocation10 + $0x32c] sm:$0xff]
    %v2680 = vld [vmem:[#allocation10 + $0x334] sm:$0xff]
    %v2681 = vld [vmem:[#allocation10 + $0x33c] sm:$0xff]
    %v2682 = vld [vmem:[#allocation10 + $0x344] sm:$0xf]
    %v2683 = vld [vmem:[#allocation10 + $0x348] sm:$0xff]
    %v2684 = vld [vmem:[#allocation10 + $0x350] sm:$0xff]
    %v2685 = vld [vmem:[#allocation10 + $0x358] sm:$0xff]
    %v2686 = vld [vmem:[#allocation10 + $0x360] sm:$0xf]
    %v2687 = vld [vmem:[#allocation10 + $0x364] sm:$0xff]
    %v2688 = vld [vmem:[#allocation10 + $0x36c] sm:$0xff]
    %v2689 = vld [vmem:[#allocation10 + $0x374] sm:$0xff]
    %v2690 = vld [vmem:[#allocation10 + $0x37c] sm:$0xf]
    %v2691 = vld [vmem:[#allocation10 + $0x380] sm:$0xff]
    %v2692 = vld [vmem:[#allocation10 + $0x388] sm:$0xff]
    %v2693 = vld [vmem:[#allocation10 + $0x390] sm:$0xff]
    %v2694 = vld [vmem:[#allocation10 + $0x398] sm:$0xf]
    %v2695 = vld [vmem:[#allocation10 + $0x39c] sm:$0xff]
    %v2696 = vld [vmem:[#allocation10 + $0x3a4] sm:$0xff]
    %v2697 = vld [vmem:[#allocation10 + $0x3ac] sm:$0xff]
    %v2698 = vld [vmem:[#allocation10 + $0x3b4] sm:$0xf]
    %v2699 = vld [vmem:[#allocation10 + $0x3b8] sm:$0xff]
    %v2700 = vld [vmem:[#allocation10 + $0x3c0] sm:$0xff]
    %v2701 = vld [vmem:[#allocation10 + $0x3c8] sm:$0xff]
    %v2702 = vld [vmem:[#allocation10 + $0x3d0] sm:$0xf]
    %v2703 = vld [vmem:[#allocation10 + $0x3d4] sm:$0xff]
    %v2704 = vld [vmem:[#allocation10 + $0x3dc] sm:$0xff]
    %v2705 = vld [vmem:[#allocation10 + $0x3e4] sm:$0xff]
    %v2706 = vld [vmem:[#allocation10 + $0x3ec] sm:$0xf]
    %v2707 = vld [vmem:[#allocation10 + $0x3f0] sm:$0xff]
    %v2708 = vld [vmem:[#allocation10 + $0x3f8] sm:$0xff]
    %v2709 = vld [vmem:[#allocation10 + $0x400] sm:$0xff]
    %v2710 = vld [vmem:[#allocation10 + $0x408] sm:$0xf]
    %v2711 = vld [vmem:[#allocation10 + $0x40c] sm:$0xff]
    %v2712 = vld [vmem:[#allocation10 + $0x414] sm:$0xff]
    %v2713 = vld [vmem:[#allocation10 + $0x41c] sm:$0xff]
    %v2714 = vld [vmem:[#allocation10 + $0x424] sm:$0xf]
    %v2715 = vld [vmem:[#allocation10 + $0x428] sm:$0xff]
    %v2716 = vld [vmem:[#allocation10 + $0x430] sm:$0xff]
    %v2717 = vld [vmem:[#allocation10 + $0x438] sm:$0xff]
    %v2718 = vld [vmem:[#allocation10 + $0x440] sm:$0xf]
    %v2719 = vld [vmem:[#allocation10 + $0x444] sm:$0xff]
    %v2720 = vld [vmem:[#allocation10 + $0x44c] sm:$0xff]
    %v2721 = vld [vmem:[#allocation10 + $0x454] sm:$0xff]
    %v2722 = vld [vmem:[#allocation10 + $0x45c] sm:$0xf]
    %v2723 = vld [vmem:[#allocation10 + $0x460] sm:$0xff]
    %v2724 = vld [vmem:[#allocation10 + $0x468] sm:$0xff]
    %v2725 = vld [vmem:[#allocation10 + $0x470] sm:$0xff]
    %v2726 = vld [vmem:[#allocation10 + $0x478] sm:$0xf]
    %v2727 = vld [vmem:[#allocation10 + $0x47c] sm:$0xff]
    %v2728 = vld [vmem:[#allocation10 + $0x484] sm:$0xff]
    %v2729 = vld [vmem:[#allocation10 + $0x48c] sm:$0xff]
    %v2730 = vld [vmem:[#allocation10 + $0x494] sm:$0xf]
    %v2731 = vld [vmem:[#allocation10 + $0x498] sm:$0xff]
    %v2732 = vld [vmem:[#allocation10 + $0x4a0] sm:$0xff]
    %v2733 = vld [vmem:[#allocation10 + $0x4a8] sm:$0xff]
    %v2734 = vld [vmem:[#allocation10 + $0x4b0] sm:$0xf]
    %v2735 = vld [vmem:[#allocation10 + $0x4b4] sm:$0xff]
    %v2736 = vld [vmem:[#allocation10 + $0x4bc] sm:$0xff]
    %v2737 = vld [vmem:[#allocation10 + $0x4c4] sm:$0xff]
    %v2738 = vld [vmem:[#allocation10 + $0x4cc] sm:$0xf]
    %v2739 = vld [vmem:[#allocation10 + $0x4d0] sm:$0xff]
    %v2740 = vld [vmem:[#allocation10 + $0x4d8] sm:$0xff]
    %v2741 = vld [vmem:[#allocation10 + $0x4e0] sm:$0xff]
    %v2742 = vld [vmem:[#allocation10 + $0x4e8] sm:$0xf]
    %v2743 = vld [vmem:[#allocation10 + $0x4ec] sm:$0xff]
    %v2744 = vld [vmem:[#allocation10 + $0x4f4] sm:$0xff]
    %v2745 = vld [vmem:[#allocation10 + $0x4fc] sm:$0xff]
    %v2746 = vld [vmem:[#allocation10 + $0x504] sm:$0xf]
    %v2747 = vld [vmem:[#allocation10 + $0x508] sm:$0xff]
    %v2748 = vld [vmem:[#allocation10 + $0x510] sm:$0xff]
    %v2749 = vld [vmem:[#allocation10 + $0x518] sm:$0xff]
    %v2750 = vld [vmem:[#allocation10 + $0x520] sm:$0xf]
    %v2751 = vld [vmem:[#allocation10 + $0x524] sm:$0xff]
    %v2752 = vld [vmem:[#allocation10 + $0x52c] sm:$0xff]
    %v2753 = vld [vmem:[#allocation10 + $0x534] sm:$0xff]
    %v2754 = vld [vmem:[#allocation10 + $0x53c] sm:$0xf]
    %v2755 = vld [vmem:[#allocation10 + $0x540] sm:$0xff]
    %v2756 = vld [vmem:[#allocation10 + $0x548] sm:$0xff]
    %v2757 = vld [vmem:[#allocation10 + $0x550] sm:$0xff]
    %v2758 = vld [vmem:[#allocation10 + $0x558] sm:$0xf]
    %v2759 = vld [vmem:[#allocation10 + $0x55c] sm:$0xff]
    %v2760 = vld [vmem:[#allocation10 + $0x564] sm:$0xff]
    %v2761 = vld [vmem:[#allocation10 + $0x56c] sm:$0xff]
    %v2762 = vld [vmem:[#allocation10 + $0x574] sm:$0xf]
    %v2763 = vld [vmem:[#allocation10 + $0x578] sm:$0xff]
    %v2764 = vld [vmem:[#allocation10 + $0x580] sm:$0xff]
    %v2765 = vld [vmem:[#allocation10 + $0x588] sm:$0xff]
    %v2766 = vld [vmem:[#allocation10 + $0x590] sm:$0xf]
    %v2767 = vld [vmem:[#allocation10 + $0x594] sm:$0xff]
    %v2768 = vld [vmem:[#allocation10 + $0x59c] sm:$0xff]
    %v2769 = vld [vmem:[#allocation10 + $0x5a4] sm:$0xff]
    %v2770 = vld [vmem:[#allocation10 + $0x5ac] sm:$0xf]
    %v2771 = vld [vmem:[#allocation10 + $0x5b0] sm:$0xff]
    %v2772 = vld [vmem:[#allocation10 + $0x5b8] sm:$0xff]
    %v2773 = vld [vmem:[#allocation10 + $0x5c0] sm:$0xff]
    %v2774 = vld [vmem:[#allocation10 + $0x5c8] sm:$0xf]
    %v2775 = vld [vmem:[#allocation10 + $0x5cc] sm:$0xff]
    %v2776 = vld [vmem:[#allocation10 + $0x5d4] sm:$0xff]
    %v2777 = vld [vmem:[#allocation10 + $0x5dc] sm:$0xff]
    %v2778 = vld [vmem:[#allocation10 + $0x5e4] sm:$0xf]
    %v2779 = vld [vmem:[#allocation10 + $0x5e8] sm:$0xff]
    %v2780 = vld [vmem:[#allocation10 + $0x5f0] sm:$0xff]
    %v2781 = vld [vmem:[#allocation10 + $0x5f8] sm:$0xff]
    %v2782 = vld [vmem:[#allocation10 + $0x600] sm:$0xf]
    %v2783 = vld [vmem:[#allocation10 + $0x604] sm:$0xff]
    %v2784 = vld [vmem:[#allocation10 + $0x60c] sm:$0xff]
    %v2785 = vld [vmem:[#allocation10 + $0x614] sm:$0xff]
    %v2786 = vld [vmem:[#allocation10 + $0x61c] sm:$0xf]
    %v2787 = vld [vmem:[#allocation10 + $0x620] sm:$0xff]
    %v2788 = vld [vmem:[#allocation10 + $0x628] sm:$0xff]
    %v2789 = vld [vmem:[#allocation10 + $0x630] sm:$0xff]
    %v2790 = vld [vmem:[#allocation10 + $0x638] sm:$0xf]
    %v2791 = vld [vmem:[#allocation10 + $0x63c] sm:$0xff]
    %v2792 = vld [vmem:[#allocation10 + $0x644] sm:$0xff]
    %v2793 = vld [vmem:[#allocation10 + $0x64c] sm:$0xff]
    %v2794 = vld [vmem:[#allocation10 + $0x654] sm:$0xf]
    %v2795 = vld [vmem:[#allocation10 + $0x658] sm:$0xff]
    %v2796 = vld [vmem:[#allocation10 + $0x660] sm:$0xff]
    %v2797 = vld [vmem:[#allocation10 + $0x668] sm:$0xff]
    %v2798 = vld [vmem:[#allocation10 + $0x670] sm:$0xf]
    %v2799 = vld [vmem:[#allocation10 + $0x674] sm:$0xff]
    %v2800 = vld [vmem:[#allocation10 + $0x67c] sm:$0xff]
    %v2801 = vld [vmem:[#allocation10 + $0x684] sm:$0xff]
    %v2802 = vld [vmem:[#allocation10 + $0x68c] sm:$0xf]
    %v2803 = vld [vmem:[#allocation10 + $0x690] sm:$0xff]
    %v2804 = vld [vmem:[#allocation10 + $0x698] sm:$0xff]
    %v2805 = vld [vmem:[#allocation10 + $0x6a0] sm:$0xff]
    %v2806 = vld [vmem:[#allocation10 + $0x6a8] sm:$0xf]
    %v2807 = vld [vmem:[#allocation10 + $0x6ac] sm:$0xff]
    %v2808 = vld [vmem:[#allocation10 + $0x6b4] sm:$0xff]
    %v2809 = vld [vmem:[#allocation10 + $0x6bc] sm:$0xff]
    %v2810 = vld [vmem:[#allocation10 + $0x6c4] sm:$0xf]
    %v2811 = vld [vmem:[#allocation10 + $0x6c8] sm:$0xff]
    %v2812 = vld [vmem:[#allocation10 + $0x6d0] sm:$0xff]
    %v2813 = vld [vmem:[#allocation10 + $0x6d8] sm:$0xff]
    %v2814 = vld [vmem:[#allocation10 + $0x6e0] sm:$0xf]
    %v2815 = vld [vmem:[#allocation10 + $0x6e4] sm:$0xff]
    %v2816 = vld [vmem:[#allocation10 + $0x6ec] sm:$0xff]
    %v2817 = vld [vmem:[#allocation10 + $0x6f4] sm:$0xff]
    %v2818 = vld [vmem:[#allocation10 + $0x6fc] sm:$0xf]
    %v2819 = vld [vmem:[#allocation10 + $0x700] sm:$0xff]
    %v2820 = vld [vmem:[#allocation10 + $0x708] sm:$0xff]
    %v2821 = vld [vmem:[#allocation10 + $0x710] sm:$0xff]
    %v2822 = vld [vmem:[#allocation10 + $0x718] sm:$0xf]
    %v2823 = vld [vmem:[#allocation10 + $0x71c] sm:$0xff]
    %v2824 = vld [vmem:[#allocation10 + $0x724] sm:$0xff]
    %v2825 = vld [vmem:[#allocation10 + $0x72c] sm:$0xff]
    %v2826 = vld [vmem:[#allocation10 + $0x734] sm:$0xf]
    %v2827 = vld [vmem:[#allocation10 + $0x738] sm:$0xff]
    %v2828 = vld [vmem:[#allocation10 + $0x740] sm:$0xff]
    %v2829 = vld [vmem:[#allocation10 + $0x748] sm:$0xff]
    %v2830 = vld [vmem:[#allocation10 + $0x750] sm:$0xf]
    %v2831 = vld [vmem:[#allocation10 + $0x754] sm:$0xff]
    %v2832 = vld [vmem:[#allocation10 + $0x75c] sm:$0xff]
    %v2833 = vld [vmem:[#allocation10 + $0x764] sm:$0xff]
    %v2834 = vld [vmem:[#allocation10 + $0x76c] sm:$0xf]
    %v2835 = vld [vmem:[#allocation10 + $0x770] sm:$0xff]
    %v2836 = vld [vmem:[#allocation10 + $0x778] sm:$0xff]
    %v2837 = vld [vmem:[#allocation10 + $0x780] sm:$0xff]
    %v2838 = vld [vmem:[#allocation10 + $0x788] sm:$0xf]
    %v2839 = vld [vmem:[#allocation10 + $0x78c] sm:$0xff]
    %v2840 = vld [vmem:[#allocation10 + $0x794] sm:$0xff]
    %v2841 = vld [vmem:[#allocation10 + $0x79c] sm:$0xff]
    %v2842 = vld [vmem:[#allocation10 + $0x7a4] sm:$0xf]
    %v2843 = vld [vmem:[#allocation10 + $0x7a8] sm:$0xff]
    %v2844 = vld [vmem:[#allocation10 + $0x7b0] sm:$0xff]
    %v2845 = vld [vmem:[#allocation10 + $0x7b8] sm:$0xff]
    %v2846 = vld [vmem:[#allocation10 + $0x7c0] sm:$0xf]
    %v2847 = vld [vmem:[#allocation10 + $0x7c4] sm:$0xff]
    %v2848 = vld [vmem:[#allocation10 + $0x7cc] sm:$0xff]
    %v2849 = vld [vmem:[#allocation10 + $0x7d4] sm:$0xff]
    %v2850 = vld [vmem:[#allocation10 + $0x7dc] sm:$0xf]
    %v2851 = vld [vmem:[#allocation10 + $0x7e0] sm:$0xff]
    %v2852 = vld [vmem:[#allocation10 + $0x7e8] sm:$0xff]
    %v2853 = vld [vmem:[#allocation10 + $0x7f0] sm:$0xff]
    %v2854 = vld [vmem:[#allocation10 + $0x7f8] sm:$0xf]
    %v2855 = vld [vmem:[#allocation10 + $0x7fc] sm:$0xff]
    %v2856 = vld [vmem:[#allocation10 + $0x804] sm:$0xff]
    %v2857 = vld [vmem:[#allocation10 + $0x80c] sm:$0xff]
    %v2858 = vld [vmem:[#allocation10 + $0x814] sm:$0xf]
    %v2859 = vld [vmem:[#allocation10 + $0x818] sm:$0xff]
    %v2860 = vld [vmem:[#allocation10 + $0x820] sm:$0xff]
    %v2861 = vld [vmem:[#allocation10 + $0x828] sm:$0xff]
    %v2862 = vld [vmem:[#allocation10 + $0x830] sm:$0xf]
    %v2863 = vld [vmem:[#allocation10 + $0x834] sm:$0xff]
    %v2864 = vld [vmem:[#allocation10 + $0x83c] sm:$0xff]
    %v2865 = vld [vmem:[#allocation10 + $0x844] sm:$0xff]
    %v2866 = vld [vmem:[#allocation10 + $0x84c] sm:$0xf]
    %v2867 = vld [vmem:[#allocation10 + $0x850] sm:$0xff]
    %v2868 = vld [vmem:[#allocation10 + $0x858] sm:$0xff]
    %v2869 = vld [vmem:[#allocation10 + $0x860] sm:$0xff]
    %v2870 = vld [vmem:[#allocation10 + $0x868] sm:$0xf]
    %v2871 = vld [vmem:[#allocation10 + $0x86c] sm:$0xff]
    %v2872 = vld [vmem:[#allocation10 + $0x874] sm:$0xff]
    %v2873 = vld [vmem:[#allocation10 + $0x87c] sm:$0xff]
    %v2874 = vld [vmem:[#allocation10 + $0x884] sm:$0xf]
    %v2875 = vld [vmem:[#allocation10 + $0x888] sm:$0xff]
    %v2876 = vld [vmem:[#allocation10 + $0x890] sm:$0xff]
    %v2877 = vld [vmem:[#allocation10 + $0x898] sm:$0xff]
    %v2878 = vld [vmem:[#allocation10 + $0x8a0] sm:$0xf]
    %v2879 = vld [vmem:[#allocation10 + $0x8a4] sm:$0xff]
    %v2880 = vld [vmem:[#allocation10 + $0x8ac] sm:$0xff]
    %v2881 = vld [vmem:[#allocation10 + $0x8b4] sm:$0xff]
    %v2882 = vld [vmem:[#allocation10 + $0x8bc] sm:$0xf]
    %v2883 = vld [vmem:[#allocation10 + $0x8c0] sm:$0xff]
    %v2884 = vld [vmem:[#allocation10 + $0x8c8] sm:$0xff]
    %v2885 = vld [vmem:[#allocation10 + $0x8d0] sm:$0xff]
    %v2886 = vld [vmem:[#allocation10 + $0x8d8] sm:$0xf]
    %v2887 = vld [vmem:[#allocation10 + $0x8dc] sm:$0xff]
    %v2888 = vld [vmem:[#allocation10 + $0x8e4] sm:$0xff]
    %v2889 = vld [vmem:[#allocation10 + $0x8ec] sm:$0xff]
    %v2890 = vld [vmem:[#allocation10 + $0x8f4] sm:$0xf]
    %v2891 = vld [vmem:[#allocation10 + $0x8f8] sm:$0xff]
    %v2892 = vld [vmem:[#allocation10 + $0x900] sm:$0xff]
    %v2893 = vld [vmem:[#allocation10 + $0x908] sm:$0xff]
    %v2894 = vld [vmem:[#allocation10 + $0x910] sm:$0xf]
    %v2895 = vld [vmem:[#allocation10 + $0x914] sm:$0xff]
    %v2896 = vld [vmem:[#allocation10 + $0x91c] sm:$0xff]
    %v2897 = vld [vmem:[#allocation10 + $0x924] sm:$0xff]
    %v2898 = vld [vmem:[#allocation10 + $0x92c] sm:$0xf]
    %v2899 = vld [vmem:[#allocation10 + $0x930] sm:$0xff]
    %v2900 = vld [vmem:[#allocation10 + $0x938] sm:$0xff]
    %v2901 = vld [vmem:[#allocation10 + $0x940] sm:$0xff]
    %v2902 = vld [vmem:[#allocation10 + $0x948] sm:$0xf]
    %v2903 = vld [vmem:[#allocation10 + $0x94c] sm:$0xff]
    %v2904 = vld [vmem:[#allocation10 + $0x954] sm:$0xff]
    %v2905 = vld [vmem:[#allocation10 + $0x95c] sm:$0xff]
    %v2906 = vld [vmem:[#allocation10 + $0x964] sm:$0xf]
    %v2907 = vld [vmem:[#allocation10 + $0x968] sm:$0xff]
    %v2908 = vld [vmem:[#allocation10 + $0x970] sm:$0xff]
    %v2909 = vld [vmem:[#allocation10 + $0x978] sm:$0xff]
    %v2910 = vld [vmem:[#allocation10 + $0x980] sm:$0xf]
    %v2911 = vld [vmem:[#allocation10 + $0x984] sm:$0xff]
    %v2912 = vld [vmem:[#allocation10 + $0x98c] sm:$0xff]
    %v2913 = vld [vmem:[#allocation10 + $0x994] sm:$0xff]
    %v2914 = vld [vmem:[#allocation10 + $0x99c] sm:$0xf]
    %v2915 = vld [vmem:[#allocation10 + $0x9a0] sm:$0xff]
    %v2916 = vld [vmem:[#allocation10 + $0x9a8] sm:$0xff]
    %v2917 = vld [vmem:[#allocation10 + $0x9b0] sm:$0xff]
    %v2918 = vld [vmem:[#allocation10 + $0x9b8] sm:$0xf]
    %v2919 = vld [vmem:[#allocation10 + $0x9bc] sm:$0xff]
    %v2920 = vld [vmem:[#allocation10 + $0x9c4] sm:$0xff]
    %v2921 = vld [vmem:[#allocation10 + $0x9cc] sm:$0xff]
    %v2922 = vld [vmem:[#allocation10 + $0x9d4] sm:$0xf]
    %v2923 = vld [vmem:[#allocation10 + $0x9d8] sm:$0xff]
    %v2924 = vld [vmem:[#allocation10 + $0x9e0] sm:$0xff]
    %v2925 = vld [vmem:[#allocation10 + $0x9e8] sm:$0xff]
    %v2926 = vld [vmem:[#allocation10 + $0x9f0] sm:$0xf]
    %v2927 = vld [vmem:[#allocation10 + $0x9f4] sm:$0xff]
    %v2928 = vld [vmem:[#allocation10 + $0x9fc] sm:$0xff]
    %v2929 = vld [vmem:[#allocation10 + $0xa04] sm:$0xff]
    %v2930 = vld [vmem:[#allocation10 + $0xa0c] sm:$0xf]
    %v2931 = vld [vmem:[#allocation10 + $0xa10] sm:$0xff]
    %v2932 = vld [vmem:[#allocation10 + $0xa18] sm:$0xff]
    %v2933 = vld [vmem:[#allocation10 + $0xa20] sm:$0xff]
    %v2934 = vld [vmem:[#allocation10 + $0xa28] sm:$0xf]
    %v2935 = vld [vmem:[#allocation10 + $0xa2c] sm:$0xff]
    %v2936 = vld [vmem:[#allocation10 + $0xa34] sm:$0xff]
    %v2937 = vld [vmem:[#allocation10 + $0xa3c] sm:$0xff]
    %v2938 = vld [vmem:[#allocation10 + $0xa44] sm:$0xf]
    %v2939 = vld [vmem:[#allocation10 + $0xa48] sm:$0xff]
    %v2940 = vld [vmem:[#allocation10 + $0xa50] sm:$0xff]
    %v2941 = vld [vmem:[#allocation10 + $0xa58] sm:$0xff]
    %v2942 = vld [vmem:[#allocation10 + $0xa60] sm:$0xf]
    %v2943 = vld [vmem:[#allocation10 + $0xa64] sm:$0xff]
    %v2944 = vld [vmem:[#allocation10 + $0xa6c] sm:$0xff]
    %v2945 = vld [vmem:[#allocation10 + $0xa74] sm:$0xff]
    %v2946 = vld [vmem:[#allocation10 + $0xa7c] sm:$0xf]
    %v2947 = vld [vmem:[#allocation10 + $0xa80] sm:$0xff]
    %v2948 = vld [vmem:[#allocation10 + $0xa88] sm:$0xff]
    %v2949 = vld [vmem:[#allocation10 + $0xa90] sm:$0xff]
    %v2950 = vld [vmem:[#allocation10 + $0xa98] sm:$0xf]
    %v2951 = vld [vmem:[#allocation10 + $0xa9c] sm:$0xff]
    %v2952 = vld [vmem:[#allocation10 + $0xaa4] sm:$0xff]
    %v2953 = vld [vmem:[#allocation10 + $0xaac] sm:$0xff]
    %v2954 = vld [vmem:[#allocation10 + $0xab4] sm:$0xf]
    %v2955 = vld [vmem:[#allocation10 + $0xab8] sm:$0xff]
    %v2956 = vld [vmem:[#allocation10 + $0xac0] sm:$0xff]
    %v2957 = vld [vmem:[#allocation10 + $0xac8] sm:$0xff]
    %v2958 = vld [vmem:[#allocation10 + $0xad0] sm:$0xf]
    %v2959 = vld [vmem:[#allocation10 + $0xad4] sm:$0xff]
    %v2960 = vld [vmem:[#allocation10 + $0xadc] sm:$0xff]
    %v2961 = vld [vmem:[#allocation10 + $0xae4] sm:$0xff]
    %v2962 = vld [vmem:[#allocation10 + $0xaec] sm:$0xf]
    %v2963 = vld [vmem:[#allocation10 + $0xaf0] sm:$0xff]
    %v2964 = vld [vmem:[#allocation10 + $0xaf8] sm:$0xff]
    %v2965 = vld [vmem:[#allocation10 + $0xb00] sm:$0xff]
    %v2966 = vld [vmem:[#allocation10 + $0xb08] sm:$0xf]
    %v2967 = vld [vmem:[#allocation10 + $0xb0c] sm:$0xff]
    %v2968 = vld [vmem:[#allocation10 + $0xb14] sm:$0xff]
    %v2969 = vld [vmem:[#allocation10 + $0xb1c] sm:$0xff]
    %v2970 = vld [vmem:[#allocation10 + $0xb24] sm:$0xf]
    %v2971 = vld [vmem:[#allocation10 + $0xb28] sm:$0xff]
    %v2972 = vld [vmem:[#allocation10 + $0xb30] sm:$0xff]
    %v2973 = vld [vmem:[#allocation10 + $0xb38] sm:$0xff]
    %v2974 = vld [vmem:[#allocation10 + $0xb40] sm:$0xf]
    %v2975 = vld [vmem:[#allocation10 + $0xb44] sm:$0xff]
    %v2976 = vld [vmem:[#allocation10 + $0xb4c] sm:$0xff]
    %v2977 = vld [vmem:[#allocation10 + $0xb54] sm:$0xff]
    %v2978 = vld [vmem:[#allocation10 + $0xb5c] sm:$0xf]
    %v2979 = vld [vmem:[#allocation10 + $0xb60] sm:$0xff]
    %v2980 = vld [vmem:[#allocation10 + $0xb68] sm:$0xff]
    %v2981 = vld [vmem:[#allocation10 + $0xb70] sm:$0xff]
    %v2982 = vld [vmem:[#allocation10 + $0xb78] sm:$0xf]
    %v2983 = vld [vmem:[#allocation10 + $0xb7c] sm:$0xff]
    %v2984 = vld [vmem:[#allocation10 + $0xb84] sm:$0xff]
    %v2985 = vld [vmem:[#allocation10 + $0xb8c] sm:$0xff]
    %v2986 = vld [vmem:[#allocation10 + $0xb94] sm:$0xf]
    %v2987 = vld [vmem:[#allocation10 + $0xb98] sm:$0xff]
    %v2988 = vld [vmem:[#allocation10 + $0xba0] sm:$0xff]
    %v2989 = vld [vmem:[#allocation10 + $0xba8] sm:$0xff]
    %v2990 = vld [vmem:[#allocation10 + $0xbb0] sm:$0xf]
    %v2991 = vld [vmem:[#allocation10 + $0xbb4] sm:$0xff]
    %v2992 = vld [vmem:[#allocation10 + $0xbbc] sm:$0xff]
    %v2993 = vld [vmem:[#allocation10 + $0xbc4] sm:$0xff]
    %v2994 = vld [vmem:[#allocation10 + $0xbcc] sm:$0xf]
    %v2995 = vld [vmem:[#allocation10 + $0xbd0] sm:$0xff]
    %v2996 = vld [vmem:[#allocation10 + $0xbd8] sm:$0xff]
    %v2997 = vld [vmem:[#allocation10 + $0xbe0] sm:$0xff]
    %v2998 = vld [vmem:[#allocation10 + $0xbe8] sm:$0xf]
    %v2999 = vld [vmem:[#allocation10 + $0xbec] sm:$0xff]
    %v3000 = vld [vmem:[#allocation10 + $0xbf4] sm:$0xff]
    %v3001 = vld [vmem:[#allocation10 + $0xbfc] sm:$0xff]
    %v3002 = vld [vmem:[#allocation10 + $0xc04] sm:$0xf]
    %v3003 = vld [vmem:[#allocation10 + $0xc08] sm:$0xff]
    %v3004 = vld [vmem:[#allocation10 + $0xc10] sm:$0xff]
    %v3005 = vld [vmem:[#allocation10 + $0xc18] sm:$0xff]
    %v3006 = vld [vmem:[#allocation10 + $0xc20] sm:$0xf]
    %v3007 = vld [vmem:[#allocation10 + $0xc24] sm:$0xff]
    %v3008 = vld [vmem:[#allocation10 + $0xc2c] sm:$0xff]
    %v3009 = vld [vmem:[#allocation10 + $0xc34] sm:$0xff]
    %v3010 = vld [vmem:[#allocation10 + $0xc3c] sm:$0xf]
    %v3011 = vld [vmem:[#allocation10 + $0xc40] sm:$0xff]
    %v3012 = vld [vmem:[#allocation10 + $0xc48] sm:$0xff]
    %v3013 = vld [vmem:[#allocation10 + $0xc50] sm:$0xff]
    %v3014 = vld [vmem:[#allocation10 + $0xc58] sm:$0xf]
    %v3015 = vld [vmem:[#allocation10 + $0xc5c] sm:$0xff]
    %v3016 = vld [vmem:[#allocation10 + $0xc64] sm:$0xff]
    %v3017 = vld [vmem:[#allocation10 + $0xc6c] sm:$0xff]
    %v3018 = vld [vmem:[#allocation10 + $0xc74] sm:$0xf]
    %v3019 = vld [vmem:[#allocation10 + $0xc78] sm:$0xff]
    %v3020 = vld [vmem:[#allocation10 + $0xc80] sm:$0xff]
    %v3021 = vld [vmem:[#allocation10 + $0xc88] sm:$0xff]
    %v3022 = vld [vmem:[#allocation10 + $0xc90] sm:$0xf]
    %v3023 = vld [vmem:[#allocation10 + $0xc94] sm:$0xff]
    %v3024 = vld [vmem:[#allocation10 + $0xc9c] sm:$0xff]
    %v3025 = vld [vmem:[#allocation10 + $0xca4] sm:$0xff]
    %v3026 = vld [vmem:[#allocation10 + $0xcac] sm:$0xf]
    %v3027 = vld [vmem:[#allocation10 + $0xcb0] sm:$0xff]
    %v3028 = vld [vmem:[#allocation10 + $0xcb8] sm:$0xff]
    %v3029 = vld [vmem:[#allocation10 + $0xcc0] sm:$0xff]
    %v3030 = vld [vmem:[#allocation10 + $0xcc8] sm:$0xf]
    %v3031 = vld [vmem:[#allocation10 + $0xccc] sm:$0xff]
    %v3032 = vld [vmem:[#allocation10 + $0xcd4] sm:$0xff]
    %v3033 = vld [vmem:[#allocation10 + $0xcdc] sm:$0xff]
    %v3034 = vld [vmem:[#allocation10 + $0xce4] sm:$0xf]
    %v3035 = vld [vmem:[#allocation10 + $0xce8] sm:$0xff]
    %v3036 = vld [vmem:[#allocation10 + $0xcf0] sm:$0xff]
    %v3037 = vld [vmem:[#allocation10 + $0xcf8] sm:$0xff]
    %v3038 = vld [vmem:[#allocation10 + $0xd00] sm:$0xf]
    %v3039 = vld [vmem:[#allocation10 + $0xd04] sm:$0xff]
    %v3040 = vld [vmem:[#allocation10 + $0xd0c] sm:$0xff]
    %v3041 = vld [vmem:[#allocation10 + $0xd14] sm:$0xff]
    %v3042 = vld [vmem:[#allocation10 + $0xd1c] sm:$0xf]
    %v3043 = vld [vmem:[#allocation10 + $0xd20] sm:$0xff]
    %v3044 = vld [vmem:[#allocation10 + $0xd28] sm:$0xff]
    %v3045 = vld [vmem:[#allocation10 + $0xd30] sm:$0xff]
    %v3046 = vld [vmem:[#allocation10 + $0xd38] sm:$0xf]
    %v3047 = vld [vmem:[#allocation10 + $0xd3c] sm:$0xff]
    %v3048 = vld [vmem:[#allocation10 + $0xd44] sm:$0xff]
    %v3049 = vld [vmem:[#allocation10 + $0xd4c] sm:$0xff]
    %v3050 = vld [vmem:[#allocation10 + $0xd54] sm:$0xf]
    %v3051 = vld [vmem:[#allocation10 + $0xd58] sm:$0xff]
    %v3052 = vld [vmem:[#allocation10 + $0xd60] sm:$0xff]
    %v3053 = vld [vmem:[#allocation10 + $0xd68] sm:$0xff]
    %v3054 = vld [vmem:[#allocation10 + $0xd70] sm:$0xf]
    %v3055 = vld [vmem:[#allocation10 + $0xd74] sm:$0xff]
    %v3056 = vld [vmem:[#allocation10 + $0xd7c] sm:$0xff]
    %v3057 = vld [vmem:[#allocation10 + $0xd84] sm:$0xff]
    %v3058 = vld [vmem:[#allocation10 + $0xd8c] sm:$0xf]
    %v3059 = vld [vmem:[#allocation10 + $0xd90] sm:$0xff]
    %v3060 = vld [vmem:[#allocation10 + $0xd98] sm:$0xff]
    %v3061 = vld [vmem:[#allocation10 + $0xda0] sm:$0xff]
    %v3062 = vld [vmem:[#allocation10 + $0xda8] sm:$0xf]
    %v3063 = vld [vmem:[#allocation10 + $0xdac] sm:$0xff]
    %v3064 = vld [vmem:[#allocation10 + $0xdb4] sm:$0xff]
    %v3065 = vld [vmem:[#allocation10 + $0xdbc] sm:$0xff]
    %v3066 = vld [vmem:[#allocation10 + $0xdc4] sm:$0xf]
    %v3067 = vld [vmem:[#allocation10 + $0xdc8] sm:$0xff]
    %v3068 = vld [vmem:[#allocation10 + $0xdd0] sm:$0xff]
    %v3069 = vld [vmem:[#allocation10 + $0xdd8] sm:$0xff]
    %v3070 = vld [vmem:[#allocation10 + $0xde0] sm:$0xf]
    %v3071 = vld [vmem:[#allocation10 + $0xde4] sm:$0xff]
    %v3072 = vld [vmem:[#allocation10 + $0xdec] sm:$0xff]
    %v3073 = vld [vmem:[#allocation10 + $0xdf4] sm:$0xff]
    %v3074 = vld [vmem:[#allocation10 + $0xdfc] sm:$0xf]
    %v3075 = vld [vmem:[#allocation10 + $0xe00] sm:$0xff]
    %v3076 = vld [vmem:[#allocation10 + $0xe08] sm:$0xff]
    %v3077 = vld [vmem:[#allocation10 + $0xe10] sm:$0xff]
    %v3078 = vld [vmem:[#allocation10 + $0xe18] sm:$0xf]
    %v3079 = vld [vmem:[#allocation10 + $0xe1c] sm:$0xff]
    %v3080 = vld [vmem:[#allocation10 + $0xe24] sm:$0xff]
    %v3081 = vld [vmem:[#allocation10 + $0xe2c] sm:$0xff]
    %v3082 = vld [vmem:[#allocation10 + $0xe34] sm:$0xf]
    %v3083 = vld [vmem:[#allocation10 + $0xe38] sm:$0xff]
    %v3084 = vld [vmem:[#allocation10 + $0xe40] sm:$0xff]
    %v3085 = vld [vmem:[#allocation10 + $0xe48] sm:$0xff]
    %v3086 = vld [vmem:[#allocation10 + $0xe50] sm:$0xf]
    %v3087 = vld [vmem:[#allocation10 + $0xe54] sm:$0xff]
    %v3088 = vld [vmem:[#allocation10 + $0xe5c] sm:$0xff]
    %v3089 = vld [vmem:[#allocation10 + $0xe64] sm:$0xff]
    %v3090 = vld [vmem:[#allocation10 + $0xe6c] sm:$0xf]
    %v3091 = vld [vmem:[#allocation10 + $0xe70] sm:$0xff]
    %v3092 = vld [vmem:[#allocation10 + $0xe78] sm:$0xff]
    %v3093 = vld [vmem:[#allocation10 + $0xe80] sm:$0xff]
    %v3094 = vld [vmem:[#allocation10 + $0xe88] sm:$0xf]
    %v3095 = vld [vmem:[#allocation10 + $0xe8c] sm:$0xff]
    %v3096 = vld [vmem:[#allocation10 + $0xe94] sm:$0xff]
    %v3097 = vld [vmem:[#allocation10 + $0xe9c] sm:$0xff]
    %v3098 = vld [vmem:[#allocation10 + $0xea4] sm:$0xf]
    %v3099 = vld [vmem:[#allocation10 + $0xea8] sm:$0xff]
    %v3100 = vld [vmem:[#allocation10 + $0xeb0] sm:$0xff]
    %v3101 = vld [vmem:[#allocation10 + $0xeb8] sm:$0xff]
    %v3102 = vld [vmem:[#allocation10 + $0xec0] sm:$0xf]
    %v3103 = vld [vmem:[#allocation10 + $0xec4] sm:$0xff]
    %v3104 = vld [vmem:[#allocation10 + $0xecc] sm:$0xff]
    %v3105 = vld [vmem:[#allocation10 + $0xed4] sm:$0xff]
    %v3106 = vld [vmem:[#allocation10 + $0xedc] sm:$0xf]
    %v3107 = vld [vmem:[#allocation10 + $0xee0] sm:$0xff]
    %v3108 = vld [vmem:[#allocation10 + $0xee8] sm:$0xff]
    %v3109 = vld [vmem:[#allocation10 + $0xef0] sm:$0xff]
    %v3110 = vld [vmem:[#allocation10 + $0xef8] sm:$0xf]
    %v3111 = vld [vmem:[#allocation10 + $0xefc] sm:$0xff]
    %v3112 = vld [vmem:[#allocation10 + $0xf04] sm:$0xff]
    %v3113 = vld [vmem:[#allocation10 + $0xf0c] sm:$0xff]
    %v3114 = vld [vmem:[#allocation10 + $0xf14] sm:$0xf]
    %v3115 = vld [vmem:[#allocation10 + $0xf18] sm:$0xff]
    %v3116 = vld [vmem:[#allocation10 + $0xf20] sm:$0xff]
    %v3117 = vld [vmem:[#allocation10 + $0xf28] sm:$0xff]
    %v3118 = vld [vmem:[#allocation10 + $0xf30] sm:$0xf]
    %v3119 = vld [vmem:[#allocation10 + $0xf34] sm:$0xff]
    %v3120 = vld [vmem:[#allocation10 + $0xf3c] sm:$0xff]
    %v3121 = vld [vmem:[#allocation10 + $0xf44] sm:$0xff]
    %v3122 = vld [vmem:[#allocation10 + $0xf4c] sm:$0xf]
    %v3123 = vld [vmem:[#allocation10 + $0xf50] sm:$0xff]
    %v3124 = vld [vmem:[#allocation10 + $0xf58] sm:$0xff]
    %v3125 = vld [vmem:[#allocation10 + $0xf60] sm:$0xff]
    %v3126 = vld [vmem:[#allocation10 + $0xf68] sm:$0xf]
    %v3127 = vld [vmem:[#allocation10 + $0xf6c] sm:$0xff]
    %v3128 = vld [vmem:[#allocation10 + $0xf74] sm:$0xff]
    %v3129 = vld [vmem:[#allocation10 + $0xf7c] sm:$0xff]
    %v3130 = vld [vmem:[#allocation10 + $0xf84] sm:$0xf]
    %v3131 = vld [vmem:[#allocation10 + $0xf88] sm:$0xff]
    %v3132 = vld [vmem:[#allocation10 + $0xf90] sm:$0xff]
    %v3133 = vld [vmem:[#allocation10 + $0xf98] sm:$0xff]
    %v3134 = vld [vmem:[#allocation10 + $0xfa0] sm:$0xf]
    %v3135 = vld [vmem:[#allocation10 + $0xfa4] sm:$0xff]
    %v3136 = vld [vmem:[#allocation10 + $0xfac] sm:$0xff]
    %v3137 = vld [vmem:[#allocation10 + $0xfb4] sm:$0xff]
    %v3138 = vld [vmem:[#allocation10 + $0xfbc] sm:$0xf]
    %v3139 = vld [vmem:[#allocation10 + $0xfc0] sm:$0xff]
    %v3140 = vld [vmem:[#allocation10 + $0xfc8] sm:$0xff]
    %v3141 = vld [vmem:[#allocation10 + $0xfd0] sm:$0xff]
    %v3142 = vld [vmem:[#allocation10 + $0xfd8] sm:$0xf]
    %v3143 = vld [vmem:[#allocation10 + $0xfdc] sm:$0xff]
    %v3144 = vld [vmem:[#allocation10 + $0xfe4] sm:$0xff]
    %v3145 = vld [vmem:[#allocation10 + $0xfec] sm:$0xff]
    %v3146 = vld [vmem:[#allocation10 + $0xff4] sm:$0xf]
    %v3147 = vld [vmem:[#allocation10 + $0xff8] sm:$0xff]
    %v3148 = vld [vmem:[#allocation10 + $0x1000] sm:$0xff]
    %v3149 = vld [vmem:[#allocation10 + $0x1008] sm:$0xff]
    %v3150 = vld [vmem:[#allocation10 + $0x1010] sm:$0xf]
    %v3151 = vld [vmem:[#allocation10 + $0x1014] sm:$0xff]
    %v3152 = vld [vmem:[#allocation10 + $0x101c] sm:$0xff]
    %v3153 = vld [vmem:[#allocation10 + $0x1024] sm:$0xff]
    %v3154 = vld [vmem:[#allocation10 + $0x102c] sm:$0xf]
    %v3155 = vld [vmem:[#allocation10 + $0x1030] sm:$0xff]
    %v3156 = vld [vmem:[#allocation10 + $0x1038] sm:$0xff]
    %v3157 = vld [vmem:[#allocation10 + $0x1040] sm:$0xff]
    %v3158 = vld [vmem:[#allocation10 + $0x1048] sm:$0xf]
    %v3159 = vld [vmem:[#allocation10 + $0x104c] sm:$0xff]
    %v3160 = vld [vmem:[#allocation10 + $0x1054] sm:$0xff]
    %v3161 = vld [vmem:[#allocation10 + $0x105c] sm:$0xff]
    %v3162 = vld [vmem:[#allocation10 + $0x1064] sm:$0xf]
    %v3163 = vld [vmem:[#allocation10 + $0x1068] sm:$0xff]
    %v3164 = vld [vmem:[#allocation10 + $0x1070] sm:$0xff]
    %v3165 = vld [vmem:[#allocation10 + $0x1078] sm:$0xff]
    %v3166 = vld [vmem:[#allocation10 + $0x1080] sm:$0xf]
    %v3167 = vld [vmem:[#allocation10 + $0x1084] sm:$0xff]
    %v3168 = vld [vmem:[#allocation10 + $0x108c] sm:$0xff]
    %v3169 = vld [vmem:[#allocation10 + $0x1094] sm:$0xff]
    %v3170 = vld [vmem:[#allocation10 + $0x109c] sm:$0xf]
    %v3171 = vld [vmem:[#allocation10 + $0x10a0] sm:$0xff]
    %v3172 = vld [vmem:[#allocation10 + $0x10a8] sm:$0xff]
    %v3173 = vld [vmem:[#allocation10 + $0x10b0] sm:$0xff]
    %v3174 = vld [vmem:[#allocation10 + $0x10b8] sm:$0xf]
    %v3175 = vld [vmem:[#allocation10 + $0x10bc] sm:$0xff]
    %v3176 = vld [vmem:[#allocation10 + $0x10c4] sm:$0xff]
    %v3177 = vld [vmem:[#allocation10 + $0x10cc] sm:$0xff]
    %v3178 = vld [vmem:[#allocation10 + $0x10d4] sm:$0xf]
    %v3179 = vld [vmem:[#allocation10 + $0x10d8] sm:$0xff]
    %v3180 = vld [vmem:[#allocation10 + $0x10e0] sm:$0xff]
    %v3181 = vld [vmem:[#allocation10 + $0x10e8] sm:$0xff]
    %v3182 = vld [vmem:[#allocation10 + $0x10f0] sm:$0xf]
    %v3183 = vld [vmem:[#allocation10 + $0x10f4] sm:$0xff]
    %v3184 = vld [vmem:[#allocation10 + $0x10fc] sm:$0xff]
    %v3185 = vld [vmem:[#allocation10 + $0x1104] sm:$0xff]
    %v3186 = vld [vmem:[#allocation10 + $0x110c] sm:$0xf]
    %v3187 = vld [vmem:[#allocation10 + $0x1110] sm:$0xff]
    %v3188 = vld [vmem:[#allocation10 + $0x1118] sm:$0xff]
    %v3189 = vld [vmem:[#allocation10 + $0x1120] sm:$0xff]
    %v3190 = vld [vmem:[#allocation10 + $0x1128] sm:$0xf]
    %v3191 = vld [vmem:[#allocation10 + $0x112c] sm:$0xff]
    %v3192 = vld [vmem:[#allocation10 + $0x1134] sm:$0xff]
    %v3193 = vld [vmem:[#allocation10 + $0x113c] sm:$0xff]
    %v3194 = vld [vmem:[#allocation10 + $0x1144] sm:$0xf]
    %v3195 = vld [vmem:[#allocation10 + $0x1148] sm:$0xff]
    %v3196 = vld [vmem:[#allocation10 + $0x1150] sm:$0xff]
    %v3197 = vld [vmem:[#allocation10 + $0x1158] sm:$0xff]
    %v3198 = vld [vmem:[#allocation10 + $0x1160] sm:$0xf]
    %v3199 = vld [vmem:[#allocation10 + $0x1164] sm:$0xff]
    %v3200 = vld [vmem:[#allocation10 + $0x116c] sm:$0xff]
    %v3201 = vld [vmem:[#allocation10 + $0x1174] sm:$0xff]
    %v3202 = vld [vmem:[#allocation10 + $0x117c] sm:$0xf]
    %v3203 = vld [vmem:[#allocation10 + $0x1180] sm:$0xff]
    %v3204 = vld [vmem:[#allocation10 + $0x1188] sm:$0xff]
    %v3205 = vld [vmem:[#allocation10 + $0x1190] sm:$0xff]
    %v3206 = vld [vmem:[#allocation10 + $0x1198] sm:$0xf]
    %v3207 = vld [vmem:[#allocation10 + $0x119c] sm:$0xff]
    %v3208 = vld [vmem:[#allocation10 + $0x11a4] sm:$0xff]
    %v3209 = vld [vmem:[#allocation10 + $0x11ac] sm:$0xff]
    %v3210 = vld [vmem:[#allocation10 + $0x11b4] sm:$0xf]
    %v3211 = vld [vmem:[#allocation10 + $0x11b8] sm:$0xff]
    %v3212 = vld [vmem:[#allocation10 + $0x11c0] sm:$0xff]
    %v3213 = vld [vmem:[#allocation10 + $0x11c8] sm:$0xff]
    %v3214 = vld [vmem:[#allocation10 + $0x11d0] sm:$0xf]
    %v3215 = vld [vmem:[#allocation10 + $0x11d4] sm:$0xff]
    %v3216 = vld [vmem:[#allocation10 + $0x11dc] sm:$0xff]
    %v3217 = vld [vmem:[#allocation10 + $0x11e4] sm:$0xff]
    %v3218 = vld [vmem:[#allocation10 + $0x11ec] sm:$0xf]
    %v3219 = vld [vmem:[#allocation10 + $0x11f0] sm:$0xff]
    %v3220 = vld [vmem:[#allocation10 + $0x11f8] sm:$0xff]
    %v3221 = vld [vmem:[#allocation10 + $0x1200] sm:$0xff]
    %v3222 = vld [vmem:[#allocation10 + $0x1208] sm:$0xf]
    %v3223 = vld [vmem:[#allocation10 + $0x120c] sm:$0xff]
    %v3224 = vld [vmem:[#allocation10 + $0x1214] sm:$0xff]
    %v3225 = vld [vmem:[#allocation10 + $0x121c] sm:$0xff]
    %v3226 = vld [vmem:[#allocation10 + $0x1224] sm:$0xf]
    %v3227 = vld [vmem:[#allocation10 + $0x1228] sm:$0xff]
    %v3228 = vld [vmem:[#allocation10 + $0x1230] sm:$0xff]
    %v3229 = vld [vmem:[#allocation10 + $0x1238] sm:$0xff]
    %v3230 = vld [vmem:[#allocation10 + $0x1240] sm:$0xf]
    %v3231 = vld [vmem:[#allocation10 + $0x1244] sm:$0xff]
    %v3232 = vld [vmem:[#allocation10 + $0x124c] sm:$0xff]
    %v3233 = vld [vmem:[#allocation10 + $0x1254] sm:$0xff]
    %v3234 = vld [vmem:[#allocation10 + $0x125c] sm:$0xf]
    %v3235 = vld [vmem:[#allocation10 + $0x1260] sm:$0xff]
    %v3236 = vld [vmem:[#allocation10 + $0x1268] sm:$0xff]
    %v3237 = vld [vmem:[#allocation10 + $0x1270] sm:$0xff]
    %v3238 = vld [vmem:[#allocation10 + $0x1278] sm:$0xf]
    %v3239 = vld [vmem:[#allocation10 + $0x127c] sm:$0xff]
    %v3240 = vld [vmem:[#allocation10 + $0x1284] sm:$0xff]
    %v3241 = vld [vmem:[#allocation10 + $0x128c] sm:$0xff]
    %v3242 = vld [vmem:[#allocation10 + $0x1294] sm:$0xf]
    %v3243 = vld [vmem:[#allocation10 + $0x1298] sm:$0xff]
    %v3244 = vld [vmem:[#allocation10 + $0x12a0] sm:$0xff]
    %v3245 = vld [vmem:[#allocation10 + $0x12a8] sm:$0xff]
    %v3246 = vld [vmem:[#allocation10 + $0x12b0] sm:$0xf]
    %v3247 = vld [vmem:[#allocation10 + $0x12b4] sm:$0xff]
    %v3248 = vld [vmem:[#allocation10 + $0x12bc] sm:$0xff]
    %v3249 = vld [vmem:[#allocation10 + $0x12c4] sm:$0xff]
    %v3250 = vld [vmem:[#allocation10 + $0x12cc] sm:$0xf]
    %v3251 = vld [vmem:[#allocation10 + $0x12d0] sm:$0xff]
    %v3252 = vld [vmem:[#allocation10 + $0x12d8] sm:$0xff]
    %v3253 = vld [vmem:[#allocation10 + $0x12e0] sm:$0xff]
    %v3254 = vld [vmem:[#allocation10 + $0x12e8] sm:$0xf]
    %v3255 = vld [vmem:[#allocation10 + $0x12ec] sm:$0xff]
    %v3256 = vld [vmem:[#allocation10 + $0x12f4] sm:$0xff]
    %v3257 = vld [vmem:[#allocation10 + $0x12fc] sm:$0xff]
    %v3258 = vld [vmem:[#allocation10 + $0x1304] sm:$0xf]
    %v3259 = vld [vmem:[#allocation10 + $0x1308] sm:$0xff]
    %v3260 = vld [vmem:[#allocation10 + $0x1310] sm:$0xff]
    %v3261 = vld [vmem:[#allocation10 + $0x1318] sm:$0xff]
    %v3262 = vld [vmem:[#allocation10 + $0x1320] sm:$0xf]
    %v3263 = vld [vmem:[#allocation10 + $0x1324] sm:$0xff]
    %v3264 = vld [vmem:[#allocation10 + $0x132c] sm:$0xff]
    %v3265 = vld [vmem:[#allocation10 + $0x1334] sm:$0xff]
    %v3266 = vld [vmem:[#allocation10 + $0x133c] sm:$0xf]
    %v3267 = vld [vmem:[#allocation10 + $0x1340] sm:$0xff]
    %v3268 = vld [vmem:[#allocation10 + $0x1348] sm:$0xff]
    %v3269 = vld [vmem:[#allocation10 + $0x1350] sm:$0xff]
    %v3270 = vld [vmem:[#allocation10 + $0x1358] sm:$0xf]
    %v3271 = vld [vmem:[#allocation10 + $0x135c] sm:$0xff]
    %v3272 = vld [vmem:[#allocation10 + $0x1364] sm:$0xff]
    %v3273 = vld [vmem:[#allocation10 + $0x136c] sm:$0xff]
    %v3274 = vld [vmem:[#allocation10 + $0x1374] sm:$0xf]
    %v3275 = vld [vmem:[#allocation10 + $0x1378] sm:$0xff]
    %v3276 = vld [vmem:[#allocation10 + $0x1380] sm:$0xff]
    %v3277 = vld [vmem:[#allocation10 + $0x1388] sm:$0xff]
    %v3278 = vld [vmem:[#allocation10 + $0x1390] sm:$0xf]
    %v3279 = vld [vmem:[#allocation10 + $0x1394] sm:$0xff]
    %v3280 = vld [vmem:[#allocation10 + $0x139c] sm:$0xff]
    %v3281 = vld [vmem:[#allocation10 + $0x13a4] sm:$0xff]
    %v3282 = vld [vmem:[#allocation10 + $0x13ac] sm:$0xf]
    %v3283 = vld [vmem:[#allocation10 + $0x13b0] sm:$0xff]
    %v3284 = vld [vmem:[#allocation10 + $0x13b8] sm:$0xff]
    %v3285 = vld [vmem:[#allocation10 + $0x13c0] sm:$0xff]
    %v3286 = vld [vmem:[#allocation10 + $0x13c8] sm:$0xf]
    %v3287 = vld [vmem:[#allocation10 + $0x13cc] sm:$0xff]
    %v3288 = vld [vmem:[#allocation10 + $0x13d4] sm:$0xff]
    %v3289 = vld [vmem:[#allocation10 + $0x13dc] sm:$0xff]
    %v3290 = vld [vmem:[#allocation10 + $0x13e4] sm:$0xf]
    %v3291 = vld [vmem:[#allocation10 + $0x13e8] sm:$0xff]
    %v3292 = vld [vmem:[#allocation10 + $0x13f0] sm:$0xff]
    %v3293 = vld [vmem:[#allocation10 + $0x13f8] sm:$0xff]
    %v3294 = vld [vmem:[#allocation10 + $0x1400] sm:$0xf]
    %v3295 = vld [vmem:[#allocation10 + $0x1404] sm:$0xff]
    %v3296 = vld [vmem:[#allocation10 + $0x140c] sm:$0xff]
    %v3297 = vld [vmem:[#allocation10 + $0x1414] sm:$0xff]
    %v3298 = vld [vmem:[#allocation10 + $0x141c] sm:$0xf]
    %v3299 = vld [vmem:[#allocation10 + $0x1420] sm:$0xff]
    %v3300 = vld [vmem:[#allocation10 + $0x1428] sm:$0xff]
    %v3301 = vld [vmem:[#allocation10 + $0x1430] sm:$0xff]
    %v3302 = vld [vmem:[#allocation10 + $0x1438] sm:$0xf]
    %v3303 = vld [vmem:[#allocation10 + $0x143c] sm:$0xff]
    %v3304 = vld [vmem:[#allocation10 + $0x1444] sm:$0xff]
    %v3305 = vld [vmem:[#allocation10 + $0x144c] sm:$0xff]
    %v3306 = vld [vmem:[#allocation10 + $0x1454] sm:$0xf]
    %v3307 = vld [vmem:[#allocation10 + $0x1458] sm:$0xff]
    %v3308 = vld [vmem:[#allocation10 + $0x1460] sm:$0xff]
    %v3309 = vld [vmem:[#allocation10 + $0x1468] sm:$0xff]
    %v3310 = vld [vmem:[#allocation10 + $0x1470] sm:$0xf]
    %v3311 = vld [vmem:[#allocation10 + $0x1474] sm:$0xff]
    %v3312 = vld [vmem:[#allocation10 + $0x147c] sm:$0xff]
    %v3313 = vld [vmem:[#allocation10 + $0x1484] sm:$0xff]
    %v3314 = vld [vmem:[#allocation10 + $0x148c] sm:$0xf]
    %v3315 = vld [vmem:[#allocation10 + $0x1490] sm:$0xff]
    %v3316 = vld [vmem:[#allocation10 + $0x1498] sm:$0xff]
    %v3317 = vld [vmem:[#allocation10 + $0x14a0] sm:$0xff]
    %v3318 = vld [vmem:[#allocation10 + $0x14a8] sm:$0xf]
    %v3319 = vld [vmem:[#allocation10 + $0x14ac] sm:$0xff]
    %v3320 = vld [vmem:[#allocation10 + $0x14b4] sm:$0xff]
    %v3321 = vld [vmem:[#allocation10 + $0x14bc] sm:$0xff]
    %v3322 = vld [vmem:[#allocation10 + $0x14c4] sm:$0xf]
    %v3323 = vld [vmem:[#allocation10 + $0x14c8] sm:$0xff]
    %v3324 = vld [vmem:[#allocation10 + $0x14d0] sm:$0xff]
    %v3325 = vld [vmem:[#allocation10 + $0x14d8] sm:$0xff]
    %v3326 = vld [vmem:[#allocation10 + $0x14e0] sm:$0xf]
    %v3327 = vld [vmem:[#allocation10 + $0x14e4] sm:$0xff]
    %v3328 = vld [vmem:[#allocation10 + $0x14ec] sm:$0xff]
    %v3329 = vld [vmem:[#allocation10 + $0x14f4] sm:$0xff]
    %v3330 = vld [vmem:[#allocation10 + $0x14fc] sm:$0xf]
    %v3331 = vld [vmem:[#allocation10 + $0x1500] sm:$0xff]
    %v3332 = vld [vmem:[#allocation10 + $0x1508] sm:$0xff]
    %v3333 = vld [vmem:[#allocation10 + $0x1510] sm:$0xff]
    %v3334 = vld [vmem:[#allocation10 + $0x1518] sm:$0xf]
    %v3335 = vld [vmem:[#allocation10 + $0x151c] sm:$0xff]
    %v3336 = vld [vmem:[#allocation10 + $0x1524] sm:$0xff]
    %v3337 = vld [vmem:[#allocation10 + $0x152c] sm:$0xff]
    %v3338 = vld [vmem:[#allocation10 + $0x1534] sm:$0xf]
    %v3339 = vld [vmem:[#allocation10 + $0x1538] sm:$0xff]
    %v3340 = vld [vmem:[#allocation10 + $0x1540] sm:$0xff]
    %v3341 = vld [vmem:[#allocation10 + $0x1548] sm:$0xff]
    %v3342 = vld [vmem:[#allocation10 + $0x1550] sm:$0xf]
    %v3343 = vld [vmem:[#allocation10 + $0x1554] sm:$0xff]
    %v3344 = vld [vmem:[#allocation10 + $0x155c] sm:$0xff]
    %v3345 = vld [vmem:[#allocation10 + $0x1564] sm:$0xff]
    %v3346 = vld [vmem:[#allocation10 + $0x156c] sm:$0xf]
    %v3347 = vld [vmem:[#allocation10 + $0x1570] sm:$0xff]
    %v3348 = vld [vmem:[#allocation10 + $0x1578] sm:$0xff]
    %v3349 = vld [vmem:[#allocation10 + $0x1580] sm:$0xff]
    %v3350 = vld [vmem:[#allocation10 + $0x1588] sm:$0xf]
    %v3351 = vld [vmem:[#allocation10 + $0x158c] sm:$0xff]
    %v3352 = vld [vmem:[#allocation10 + $0x1594] sm:$0xff]
    %v3353 = vld [vmem:[#allocation10 + $0x159c] sm:$0xff]
    %v3354 = vld [vmem:[#allocation10 + $0x15a4] sm:$0xf]
    %v3355 = vld [vmem:[#allocation10 + $0x15a8] sm:$0xff]
    %v3356 = vld [vmem:[#allocation10 + $0x15b0] sm:$0xff]
    %v3357 = vld [vmem:[#allocation10 + $0x15b8] sm:$0xff]
    %v3358 = vld [vmem:[#allocation10 + $0x15c0] sm:$0xf]
    %v3359 = vld [vmem:[#allocation10 + $0x15c4] sm:$0xff]
    %v3360 = vld [vmem:[#allocation10 + $0x15cc] sm:$0xff]
    %v3361 = vld [vmem:[#allocation10 + $0x15d4] sm:$0xff]
    %v3362 = vld [vmem:[#allocation10 + $0x15dc] sm:$0xf]
    %v3363 = vld [vmem:[#allocation10 + $0x15e0] sm:$0xff]
    %v3364 = vld [vmem:[#allocation10 + $0x15e8] sm:$0xff]
    %v3365 = vld [vmem:[#allocation10 + $0x15f0] sm:$0xff]
    %v3366 = vld [vmem:[#allocation10 + $0x15f8] sm:$0xf]
    %v3367 = vld [vmem:[#allocation10 + $0x15fc] sm:$0xff]
    %v3368 = vld [vmem:[#allocation10 + $0x1604] sm:$0xff]
    %v3369 = vld [vmem:[#allocation10 + $0x160c] sm:$0xff]
    %v3370 = vld [vmem:[#allocation10 + $0x1614] sm:$0xf]
    %v3371 = vld [vmem:[#allocation10 + $0x1618] sm:$0xff]
    %v3372 = vld [vmem:[#allocation10 + $0x1620] sm:$0xff]
    %v3373 = vld [vmem:[#allocation10 + $0x1628] sm:$0xff]
    %v3374 = vld [vmem:[#allocation10 + $0x1630] sm:$0xf]
    %v3375 = vld [vmem:[#allocation10 + $0x1634] sm:$0xff]
    %v3376 = vld [vmem:[#allocation10 + $0x163c] sm:$0xff]
    %v3377 = vld [vmem:[#allocation10 + $0x1644] sm:$0xff]
    %v3378 = vld [vmem:[#allocation10 + $0x164c] sm:$0xf]
    %v3379 = vld [vmem:[#allocation10 + $0x1650] sm:$0xff]
    %v3380 = vld [vmem:[#allocation10 + $0x1658] sm:$0xff]
    %v3381 = vld [vmem:[#allocation10 + $0x1660] sm:$0xff]
    %v3382 = vld [vmem:[#allocation10 + $0x1668] sm:$0xf]
    %v3383 = vld [vmem:[#allocation10 + $0x166c] sm:$0xff]
    %v3384 = vld [vmem:[#allocation10 + $0x1674] sm:$0xff]
    %v3385 = vld [vmem:[#allocation10 + $0x167c] sm:$0xff]
    %v3386 = vld [vmem:[#allocation10 + $0x1684] sm:$0xf]
    %v3387 = vld [vmem:[#allocation10 + $0x1688] sm:$0xff]
    %v3388 = vld [vmem:[#allocation10 + $0x1690] sm:$0xff]
    %v3389 = vld [vmem:[#allocation10 + $0x1698] sm:$0xff]
    %v3390 = vld [vmem:[#allocation10 + $0x16a0] sm:$0xf]
    %v3391 = vld [vmem:[#allocation10 + $0x16a4] sm:$0xff]
    %v3392 = vld [vmem:[#allocation10 + $0x16ac] sm:$0xff]
    %v3393 = vld [vmem:[#allocation10 + $0x16b4] sm:$0xff]
    %v3394 = vld [vmem:[#allocation10 + $0x16bc] sm:$0xf]
    %v4227 = vunpack.c.l.b16 %v2563
    %v4228 = vunpack.c.h.b16 %v2563
    %v4229 = vunpack.c.l.b16 %v2564
    %v4230 = vunpack.c.h.b16 %v2564
    %v4231 = vunpack.c.l.b16 %v2565
    %v4232 = vunpack.c.h.b16 %v2565
    %v4233 = vunpack.c.l.b16 %v2566
    %v4234 = vunpack.c.l.b16 %v2567
    %v4235 = vunpack.c.h.b16 %v2567
    %v4236 = vunpack.c.l.b16 %v2568
    %v4237 = vunpack.c.h.b16 %v2568
    %v4238 = vunpack.c.l.b16 %v2569
    %v4239 = vunpack.c.h.b16 %v2569
    %v4240 = vunpack.c.l.b16 %v2570
    %v4241 = vunpack.c.l.b16 %v2571
    %v4242 = vunpack.c.h.b16 %v2571
    %v4243 = vunpack.c.l.b16 %v2572
    %v4244 = vunpack.c.h.b16 %v2572
    %v4245 = vunpack.c.l.b16 %v2573
    %v4246 = vunpack.c.h.b16 %v2573
    %v4247 = vunpack.c.l.b16 %v2574
    %v4248 = vunpack.c.l.b16 %v2575
    %v4249 = vunpack.c.h.b16 %v2575
    %v4250 = vunpack.c.l.b16 %v2576
    %v4251 = vunpack.c.h.b16 %v2576
    %v4252 = vunpack.c.l.b16 %v2577
    %v4253 = vunpack.c.h.b16 %v2577
    %v4254 = vunpack.c.l.b16 %v2578
    %v4255 = vunpack.c.l.b16 %v2579
    %v4256 = vunpack.c.h.b16 %v2579
    %v4257 = vunpack.c.l.b16 %v2580
    %v4258 = vunpack.c.h.b16 %v2580
    %v4259 = vunpack.c.l.b16 %v2581
    %v4260 = vunpack.c.h.b16 %v2581
    %v4261 = vunpack.c.l.b16 %v2582
    %v4262 = vunpack.c.l.b16 %v2583
    %v4263 = vunpack.c.h.b16 %v2583
    %v4264 = vunpack.c.l.b16 %v2584
    %v4265 = vunpack.c.h.b16 %v2584
    %v4266 = vunpack.c.l.b16 %v2585
    %v4267 = vunpack.c.h.b16 %v2585
    %v4268 = vunpack.c.l.b16 %v2586
    %v4269 = vunpack.c.l.b16 %v2587
    %v4270 = vunpack.c.h.b16 %v2587
    %v4271 = vunpack.c.l.b16 %v2588
    %v4272 = vunpack.c.h.b16 %v2588
    %v4273 = vunpack.c.l.b16 %v2589
    %v4274 = vunpack.c.h.b16 %v2589
    %v4275 = vunpack.c.l.b16 %v2590
    %v4276 = vunpack.c.l.b16 %v2591
    %v4277 = vunpack.c.h.b16 %v2591
    %v4278 = vunpack.c.l.b16 %v2592
    %v4279 = vunpack.c.h.b16 %v2592
    %v4280 = vunpack.c.l.b16 %v2593
    %v4281 = vunpack.c.h.b16 %v2593
    %v4282 = vunpack.c.l.b16 %v2594
    %v4283 = vunpack.c.l.b16 %v2595
    %v4284 = vunpack.c.h.b16 %v2595
    %v4285 = vunpack.c.l.b16 %v2596
    %v4286 = vunpack.c.h.b16 %v2596
    %v4287 = vunpack.c.l.b16 %v2597
    %v4288 = vunpack.c.h.b16 %v2597
    %v4289 = vunpack.c.l.b16 %v2598
    %v4290 = vunpack.c.l.b16 %v2599
    %v4291 = vunpack.c.h.b16 %v2599
    %v4292 = vunpack.c.l.b16 %v2600
    %v4293 = vunpack.c.h.b16 %v2600
    %v4294 = vunpack.c.l.b16 %v2601
    %v4295 = vunpack.c.h.b16 %v2601
    %v4296 = vunpack.c.l.b16 %v2602
    %v4297 = vunpack.c.l.b16 %v2603
    %v4298 = vunpack.c.h.b16 %v2603
    %v4299 = vunpack.c.l.b16 %v2604
    %v4300 = vunpack.c.h.b16 %v2604
    %v4301 = vunpack.c.l.b16 %v2605
    %v4302 = vunpack.c.h.b16 %v2605
    %v4303 = vunpack.c.l.b16 %v2606
    %v4304 = vunpack.c.l.b16 %v2607
    %v4305 = vunpack.c.h.b16 %v2607
    %v4306 = vunpack.c.l.b16 %v2608
    %v4307 = vunpack.c.h.b16 %v2608
    %v4308 = vunpack.c.l.b16 %v2609
    %v4309 = vunpack.c.h.b16 %v2609
    %v4310 = vunpack.c.l.b16 %v2610
    %v4311 = vunpack.c.l.b16 %v2611
    %v4312 = vunpack.c.h.b16 %v2611
    %v4313 = vunpack.c.l.b16 %v2612
    %v4314 = vunpack.c.h.b16 %v2612
    %v4315 = vunpack.c.l.b16 %v2613
    %v4316 = vunpack.c.h.b16 %v2613
    %v4317 = vunpack.c.l.b16 %v2614
    %v4318 = vunpack.c.l.b16 %v2615
    %v4319 = vunpack.c.h.b16 %v2615
    %v4320 = vunpack.c.l.b16 %v2616
    %v4321 = vunpack.c.h.b16 %v2616
    %v4322 = vunpack.c.l.b16 %v2617
    %v4323 = vunpack.c.h.b16 %v2617
    %v4324 = vunpack.c.l.b16 %v2618
    %v4325 = vunpack.c.l.b16 %v2619
    %v4326 = vunpack.c.h.b16 %v2619
    %v4327 = vunpack.c.l.b16 %v2620
    %v4328 = vunpack.c.h.b16 %v2620
    %v4329 = vunpack.c.l.b16 %v2621
    %v4330 = vunpack.c.h.b16 %v2621
    %v4331 = vunpack.c.l.b16 %v2622
    %v4332 = vunpack.c.l.b16 %v2623
    %v4333 = vunpack.c.h.b16 %v2623
    %v4334 = vunpack.c.l.b16 %v2624
    %v4335 = vunpack.c.h.b16 %v2624
    %v4336 = vunpack.c.l.b16 %v2625
    %v4337 = vunpack.c.h.b16 %v2625
    %v4338 = vunpack.c.l.b16 %v2626
    %v4339 = vunpack.c.l.b16 %v2627
    %v4340 = vunpack.c.h.b16 %v2627
    %v4341 = vunpack.c.l.b16 %v2628
    %v4342 = vunpack.c.h.b16 %v2628
    %v4343 = vunpack.c.l.b16 %v2629
    %v4344 = vunpack.c.h.b16 %v2629
    %v4345 = vunpack.c.l.b16 %v2630
    %v4346 = vunpack.c.l.b16 %v2631
    %v4347 = vunpack.c.h.b16 %v2631
    %v4348 = vunpack.c.l.b16 %v2632
    %v4349 = vunpack.c.h.b16 %v2632
    %v4350 = vunpack.c.l.b16 %v2633
    %v4351 = vunpack.c.h.b16 %v2633
    %v4352 = vunpack.c.l.b16 %v2634
    %v4353 = vunpack.c.l.b16 %v2635
    %v4354 = vunpack.c.h.b16 %v2635
    %v4355 = vunpack.c.l.b16 %v2636
    %v4356 = vunpack.c.h.b16 %v2636
    %v4357 = vunpack.c.l.b16 %v2637
    %v4358 = vunpack.c.h.b16 %v2637
    %v4359 = vunpack.c.l.b16 %v2638
    %v4360 = vunpack.c.l.b16 %v2639
    %v4361 = vunpack.c.h.b16 %v2639
    %v4362 = vunpack.c.l.b16 %v2640
    %v4363 = vunpack.c.h.b16 %v2640
    %v4364 = vunpack.c.l.b16 %v2641
    %v4365 = vunpack.c.h.b16 %v2641
    %v4366 = vunpack.c.l.b16 %v2642
    %v4367 = vunpack.c.l.b16 %v2643
    %v4368 = vunpack.c.h.b16 %v2643
    %v4369 = vunpack.c.l.b16 %v2644
    %v4370 = vunpack.c.h.b16 %v2644
    %v4371 = vunpack.c.l.b16 %v2645
    %v4372 = vunpack.c.h.b16 %v2645
    %v4373 = vunpack.c.l.b16 %v2646
    %v4374 = vunpack.c.l.b16 %v2647
    %v4375 = vunpack.c.h.b16 %v2647
    %v4376 = vunpack.c.l.b16 %v2648
    %v4377 = vunpack.c.h.b16 %v2648
    %v4378 = vunpack.c.l.b16 %v2649
    %v4379 = vunpack.c.h.b16 %v2649
    %v4380 = vunpack.c.l.b16 %v2650
    %v4381 = vunpack.c.l.b16 %v2651
    %v4382 = vunpack.c.h.b16 %v2651
    %v4383 = vunpack.c.l.b16 %v2652
    %v4384 = vunpack.c.h.b16 %v2652
    %v4385 = vunpack.c.l.b16 %v2653
    %v4386 = vunpack.c.h.b16 %v2653
    %v4387 = vunpack.c.l.b16 %v2654
    %v4388 = vunpack.c.l.b16 %v2655
    %v4389 = vunpack.c.h.b16 %v2655
    %v4390 = vunpack.c.l.b16 %v2656
    %v4391 = vunpack.c.h.b16 %v2656
    %v4392 = vunpack.c.l.b16 %v2657
    %v4393 = vunpack.c.h.b16 %v2657
    %v4394 = vunpack.c.l.b16 %v2658
    %v4395 = vunpack.c.l.b16 %v2659
    %v4396 = vunpack.c.h.b16 %v2659
    %v4397 = vunpack.c.l.b16 %v2660
    %v4398 = vunpack.c.h.b16 %v2660
    %v4399 = vunpack.c.l.b16 %v2661
    %v4400 = vunpack.c.h.b16 %v2661
    %v4401 = vunpack.c.l.b16 %v2662
    %v4402 = vunpack.c.l.b16 %v2663
    %v4403 = vunpack.c.h.b16 %v2663
    %v4404 = vunpack.c.l.b16 %v2664
    %v4405 = vunpack.c.h.b16 %v2664
    %v4406 = vunpack.c.l.b16 %v2665
    %v4407 = vunpack.c.h.b16 %v2665
    %v4408 = vunpack.c.l.b16 %v2666
    %v4409 = vunpack.c.l.b16 %v2667
    %v4410 = vunpack.c.h.b16 %v2667
    %v4411 = vunpack.c.l.b16 %v2668
    %v4412 = vunpack.c.h.b16 %v2668
    %v4413 = vunpack.c.l.b16 %v2669
    %v4414 = vunpack.c.h.b16 %v2669
    %v4415 = vunpack.c.l.b16 %v2670
    %v4416 = vunpack.c.l.b16 %v2671
    %v4417 = vunpack.c.h.b16 %v2671
    %v4418 = vunpack.c.l.b16 %v2672
    %v4419 = vunpack.c.h.b16 %v2672
    %v4420 = vunpack.c.l.b16 %v2673
    %v4421 = vunpack.c.h.b16 %v2673
    %v4422 = vunpack.c.l.b16 %v2674
    %v4423 = vunpack.c.l.b16 %v2675
    %v4424 = vunpack.c.h.b16 %v2675
    %v4425 = vunpack.c.l.b16 %v2676
    %v4426 = vunpack.c.h.b16 %v2676
    %v4427 = vunpack.c.l.b16 %v2677
    %v4428 = vunpack.c.h.b16 %v2677
    %v4429 = vunpack.c.l.b16 %v2678
    %v4430 = vunpack.c.l.b16 %v2679
    %v4431 = vunpack.c.h.b16 %v2679
    %v4432 = vunpack.c.l.b16 %v2680
    %v4433 = vunpack.c.h.b16 %v2680
    %v4434 = vunpack.c.l.b16 %v2681
    %v4435 = vunpack.c.h.b16 %v2681
    %v4436 = vunpack.c.l.b16 %v2682
    %v4437 = vunpack.c.l.b16 %v2683
    %v4438 = vunpack.c.h.b16 %v2683
    %v4439 = vunpack.c.l.b16 %v2684
    %v4440 = vunpack.c.h.b16 %v2684
    %v4441 = vunpack.c.l.b16 %v2685
    %v4442 = vunpack.c.h.b16 %v2685
    %v4443 = vunpack.c.l.b16 %v2686
    %v4444 = vunpack.c.l.b16 %v2687
    %v4445 = vunpack.c.h.b16 %v2687
    %v4446 = vunpack.c.l.b16 %v2688
    %v4447 = vunpack.c.h.b16 %v2688
    %v4448 = vunpack.c.l.b16 %v2689
    %v4449 = vunpack.c.h.b16 %v2689
    %v4450 = vunpack.c.l.b16 %v2690
    %v4451 = vunpack.c.l.b16 %v2691
    %v4452 = vunpack.c.h.b16 %v2691
    %v4453 = vunpack.c.l.b16 %v2692
    %v4454 = vunpack.c.h.b16 %v2692
    %v4455 = vunpack.c.l.b16 %v2693
    %v4456 = vunpack.c.h.b16 %v2693
    %v4457 = vunpack.c.l.b16 %v2694
    %v4458 = vunpack.c.l.b16 %v2695
    %v4459 = vunpack.c.h.b16 %v2695
    %v4460 = vunpack.c.l.b16 %v2696
    %v4461 = vunpack.c.h.b16 %v2696
    %v4462 = vunpack.c.l.b16 %v2697
    %v4463 = vunpack.c.h.b16 %v2697
    %v4464 = vunpack.c.l.b16 %v2698
    %v4465 = vunpack.c.l.b16 %v2699
    %v4466 = vunpack.c.h.b16 %v2699
    %v4467 = vunpack.c.l.b16 %v2700
    %v4468 = vunpack.c.h.b16 %v2700
    %v4469 = vunpack.c.l.b16 %v2701
    %v4470 = vunpack.c.h.b16 %v2701
    %v4471 = vunpack.c.l.b16 %v2702
    %v4472 = vunpack.c.l.b16 %v2703
    %v4473 = vunpack.c.h.b16 %v2703
    %v4474 = vunpack.c.l.b16 %v2704
    %v4475 = vunpack.c.h.b16 %v2704
    %v4476 = vunpack.c.l.b16 %v2705
    %v4477 = vunpack.c.h.b16 %v2705
    %v4478 = vunpack.c.l.b16 %v2706
    %v4479 = vunpack.c.l.b16 %v2707
    %v4480 = vunpack.c.h.b16 %v2707
    %v4481 = vunpack.c.l.b16 %v2708
    %v4482 = vunpack.c.h.b16 %v2708
    %v4483 = vunpack.c.l.b16 %v2709
    %v4484 = vunpack.c.h.b16 %v2709
    %v4485 = vunpack.c.l.b16 %v2710
    %v4486 = vunpack.c.l.b16 %v2711
    %v4487 = vunpack.c.h.b16 %v2711
    %v4488 = vunpack.c.l.b16 %v2712
    %v4489 = vunpack.c.h.b16 %v2712
    %v4490 = vunpack.c.l.b16 %v2713
    %v4491 = vunpack.c.h.b16 %v2713
    %v4492 = vunpack.c.l.b16 %v2714
    %v4493 = vunpack.c.l.b16 %v2715
    %v4494 = vunpack.c.h.b16 %v2715
    %v4495 = vunpack.c.l.b16 %v2716
    %v4496 = vunpack.c.h.b16 %v2716
    %v4497 = vunpack.c.l.b16 %v2717
    %v4498 = vunpack.c.h.b16 %v2717
    %v4499 = vunpack.c.l.b16 %v2718
    %v4500 = vunpack.c.l.b16 %v2719
    %v4501 = vunpack.c.h.b16 %v2719
    %v4502 = vunpack.c.l.b16 %v2720
    %v4503 = vunpack.c.h.b16 %v2720
    %v4504 = vunpack.c.l.b16 %v2721
    %v4505 = vunpack.c.h.b16 %v2721
    %v4506 = vunpack.c.l.b16 %v2722
    %v4507 = vunpack.c.l.b16 %v2723
    %v4508 = vunpack.c.h.b16 %v2723
    %v4509 = vunpack.c.l.b16 %v2724
    %v4510 = vunpack.c.h.b16 %v2724
    %v4511 = vunpack.c.l.b16 %v2725
    %v4512 = vunpack.c.h.b16 %v2725
    %v4513 = vunpack.c.l.b16 %v2726
    %v4514 = vunpack.c.l.b16 %v2727
    %v4515 = vunpack.c.h.b16 %v2727
    %v4516 = vunpack.c.l.b16 %v2728
    %v4517 = vunpack.c.h.b16 %v2728
    %v4518 = vunpack.c.l.b16 %v2729
    %v4519 = vunpack.c.h.b16 %v2729
    %v4520 = vunpack.c.l.b16 %v2730
    %v4521 = vunpack.c.l.b16 %v2731
    %v4522 = vunpack.c.h.b16 %v2731
    %v4523 = vunpack.c.l.b16 %v2732
    %v4524 = vunpack.c.h.b16 %v2732
    %v4525 = vunpack.c.l.b16 %v2733
    %v4526 = vunpack.c.h.b16 %v2733
    %v4527 = vunpack.c.l.b16 %v2734
    %v4528 = vunpack.c.l.b16 %v2735
    %v4529 = vunpack.c.h.b16 %v2735
    %v4530 = vunpack.c.l.b16 %v2736
    %v4531 = vunpack.c.h.b16 %v2736
    %v4532 = vunpack.c.l.b16 %v2737
    %v4533 = vunpack.c.h.b16 %v2737
    %v4534 = vunpack.c.l.b16 %v2738
    %v4535 = vunpack.c.l.b16 %v2739
    %v4536 = vunpack.c.h.b16 %v2739
    %v4537 = vunpack.c.l.b16 %v2740
    %v4538 = vunpack.c.h.b16 %v2740
    %v4539 = vunpack.c.l.b16 %v2741
    %v4540 = vunpack.c.h.b16 %v2741
    %v4541 = vunpack.c.l.b16 %v2742
    %v4542 = vunpack.c.l.b16 %v2743
    %v4543 = vunpack.c.h.b16 %v2743
    %v4544 = vunpack.c.l.b16 %v2744
    %v4545 = vunpack.c.h.b16 %v2744
    %v4546 = vunpack.c.l.b16 %v2745
    %v4547 = vunpack.c.h.b16 %v2745
    %v4548 = vunpack.c.l.b16 %v2746
    %v4549 = vunpack.c.l.b16 %v2747
    %v4550 = vunpack.c.h.b16 %v2747
    %v4551 = vunpack.c.l.b16 %v2748
    %v4552 = vunpack.c.h.b16 %v2748
    %v4553 = vunpack.c.l.b16 %v2749
    %v4554 = vunpack.c.h.b16 %v2749
    %v4555 = vunpack.c.l.b16 %v2750
    %v4556 = vunpack.c.l.b16 %v2751
    %v4557 = vunpack.c.h.b16 %v2751
    %v4558 = vunpack.c.l.b16 %v2752
    %v4559 = vunpack.c.h.b16 %v2752
    %v4560 = vunpack.c.l.b16 %v2753
    %v4561 = vunpack.c.h.b16 %v2753
    %v4562 = vunpack.c.l.b16 %v2754
    %v4563 = vunpack.c.l.b16 %v2755
    %v4564 = vunpack.c.h.b16 %v2755
    %v4565 = vunpack.c.l.b16 %v2756
    %v4566 = vunpack.c.h.b16 %v2756
    %v4567 = vunpack.c.l.b16 %v2757
    %v4568 = vunpack.c.h.b16 %v2757
    %v4569 = vunpack.c.l.b16 %v2758
    %v4570 = vunpack.c.l.b16 %v2759
    %v4571 = vunpack.c.h.b16 %v2759
    %v4572 = vunpack.c.l.b16 %v2760
    %v4573 = vunpack.c.h.b16 %v2760
    %v4574 = vunpack.c.l.b16 %v2761
    %v4575 = vunpack.c.h.b16 %v2761
    %v4576 = vunpack.c.l.b16 %v2762
    %v4577 = vunpack.c.l.b16 %v2763
    %v4578 = vunpack.c.h.b16 %v2763
    %v4579 = vunpack.c.l.b16 %v2764
    %v4580 = vunpack.c.h.b16 %v2764
    %v4581 = vunpack.c.l.b16 %v2765
    %v4582 = vunpack.c.h.b16 %v2765
    %v4583 = vunpack.c.l.b16 %v2766
    %v4584 = vunpack.c.l.b16 %v2767
    %v4585 = vunpack.c.h.b16 %v2767
    %v4586 = vunpack.c.l.b16 %v2768
    %v4587 = vunpack.c.h.b16 %v2768
    %v4588 = vunpack.c.l.b16 %v2769
    %v4589 = vunpack.c.h.b16 %v2769
    %v4590 = vunpack.c.l.b16 %v2770
    %v4591 = vunpack.c.l.b16 %v2771
    %v4592 = vunpack.c.h.b16 %v2771
    %v4593 = vunpack.c.l.b16 %v2772
    %v4594 = vunpack.c.h.b16 %v2772
    %v4595 = vunpack.c.l.b16 %v2773
    %v4596 = vunpack.c.h.b16 %v2773
    %v4597 = vunpack.c.l.b16 %v2774
    %v4598 = vunpack.c.l.b16 %v2775
    %v4599 = vunpack.c.h.b16 %v2775
    %v4600 = vunpack.c.l.b16 %v2776
    %v4601 = vunpack.c.h.b16 %v2776
    %v4602 = vunpack.c.l.b16 %v2777
    %v4603 = vunpack.c.h.b16 %v2777
    %v4604 = vunpack.c.l.b16 %v2778
    %v4605 = vunpack.c.l.b16 %v2779
    %v4606 = vunpack.c.h.b16 %v2779
    %v4607 = vunpack.c.l.b16 %v2780
    %v4608 = vunpack.c.h.b16 %v2780
    %v4609 = vunpack.c.l.b16 %v2781
    %v4610 = vunpack.c.h.b16 %v2781
    %v4611 = vunpack.c.l.b16 %v2782
    %v4612 = vunpack.c.l.b16 %v2783
    %v4613 = vunpack.c.h.b16 %v2783
    %v4614 = vunpack.c.l.b16 %v2784
    %v4615 = vunpack.c.h.b16 %v2784
    %v4616 = vunpack.c.l.b16 %v2785
    %v4617 = vunpack.c.h.b16 %v2785
    %v4618 = vunpack.c.l.b16 %v2786
    %v4619 = vunpack.c.l.b16 %v2787
    %v4620 = vunpack.c.h.b16 %v2787
    %v4621 = vunpack.c.l.b16 %v2788
    %v4622 = vunpack.c.h.b16 %v2788
    %v4623 = vunpack.c.l.b16 %v2789
    %v4624 = vunpack.c.h.b16 %v2789
    %v4625 = vunpack.c.l.b16 %v2790
    %v4626 = vunpack.c.l.b16 %v2791
    %v4627 = vunpack.c.h.b16 %v2791
    %v4628 = vunpack.c.l.b16 %v2792
    %v4629 = vunpack.c.h.b16 %v2792
    %v4630 = vunpack.c.l.b16 %v2793
    %v4631 = vunpack.c.h.b16 %v2793
    %v4632 = vunpack.c.l.b16 %v2794
    %v4633 = vunpack.c.l.b16 %v2795
    %v4634 = vunpack.c.h.b16 %v2795
    %v4635 = vunpack.c.l.b16 %v2796
    %v4636 = vunpack.c.h.b16 %v2796
    %v4637 = vunpack.c.l.b16 %v2797
    %v4638 = vunpack.c.h.b16 %v2797
    %v4639 = vunpack.c.l.b16 %v2798
    %v4640 = vunpack.c.l.b16 %v2799
    %v4641 = vunpack.c.h.b16 %v2799
    %v4642 = vunpack.c.l.b16 %v2800
    %v4643 = vunpack.c.h.b16 %v2800
    %v4644 = vunpack.c.l.b16 %v2801
    %v4645 = vunpack.c.h.b16 %v2801
    %v4646 = vunpack.c.l.b16 %v2802
    %v4647 = vunpack.c.l.b16 %v2803
    %v4648 = vunpack.c.h.b16 %v2803
    %v4649 = vunpack.c.l.b16 %v2804
    %v4650 = vunpack.c.h.b16 %v2804
    %v4651 = vunpack.c.l.b16 %v2805
    %v4652 = vunpack.c.h.b16 %v2805
    %v4653 = vunpack.c.l.b16 %v2806
    %v4654 = vunpack.c.l.b16 %v2807
    %v4655 = vunpack.c.h.b16 %v2807
    %v4656 = vunpack.c.l.b16 %v2808
    %v4657 = vunpack.c.h.b16 %v2808
    %v4658 = vunpack.c.l.b16 %v2809
    %v4659 = vunpack.c.h.b16 %v2809
    %v4660 = vunpack.c.l.b16 %v2810
    %v4661 = vunpack.c.l.b16 %v2811
    %v4662 = vunpack.c.h.b16 %v2811
    %v4663 = vunpack.c.l.b16 %v2812
    %v4664 = vunpack.c.h.b16 %v2812
    %v4665 = vunpack.c.l.b16 %v2813
    %v4666 = vunpack.c.h.b16 %v2813
    %v4667 = vunpack.c.l.b16 %v2814
    %v4668 = vunpack.c.l.b16 %v2815
    %v4669 = vunpack.c.h.b16 %v2815
    %v4670 = vunpack.c.l.b16 %v2816
    %v4671 = vunpack.c.h.b16 %v2816
    %v4672 = vunpack.c.l.b16 %v2817
    %v4673 = vunpack.c.h.b16 %v2817
    %v4674 = vunpack.c.l.b16 %v2818
    %v4675 = vunpack.c.l.b16 %v2819
    %v4676 = vunpack.c.h.b16 %v2819
    %v4677 = vunpack.c.l.b16 %v2820
    %v4678 = vunpack.c.h.b16 %v2820
    %v4679 = vunpack.c.l.b16 %v2821
    %v4680 = vunpack.c.h.b16 %v2821
    %v4681 = vunpack.c.l.b16 %v2822
    %v4682 = vunpack.c.l.b16 %v2823
    %v4683 = vunpack.c.h.b16 %v2823
    %v4684 = vunpack.c.l.b16 %v2824
    %v4685 = vunpack.c.h.b16 %v2824
    %v4686 = vunpack.c.l.b16 %v2825
    %v4687 = vunpack.c.h.b16 %v2825
    %v4688 = vunpack.c.l.b16 %v2826
    %v4689 = vunpack.c.l.b16 %v2827
    %v4690 = vunpack.c.h.b16 %v2827
    %v4691 = vunpack.c.l.b16 %v2828
    %v4692 = vunpack.c.h.b16 %v2828
    %v4693 = vunpack.c.l.b16 %v2829
    %v4694 = vunpack.c.h.b16 %v2829
    %v4695 = vunpack.c.l.b16 %v2830
    %v4696 = vunpack.c.l.b16 %v2831
    %v4697 = vunpack.c.h.b16 %v2831
    %v4698 = vunpack.c.l.b16 %v2832
    %v4699 = vunpack.c.h.b16 %v2832
    %v4700 = vunpack.c.l.b16 %v2833
    %v4701 = vunpack.c.h.b16 %v2833
    %v4702 = vunpack.c.l.b16 %v2834
    %v4703 = vunpack.c.l.b16 %v2835
    %v4704 = vunpack.c.h.b16 %v2835
    %v4705 = vunpack.c.l.b16 %v2836
    %v4706 = vunpack.c.h.b16 %v2836
    %v4707 = vunpack.c.l.b16 %v2837
    %v4708 = vunpack.c.h.b16 %v2837
    %v4709 = vunpack.c.l.b16 %v2838
    %v4710 = vunpack.c.l.b16 %v2839
    %v4711 = vunpack.c.h.b16 %v2839
    %v4712 = vunpack.c.l.b16 %v2840
    %v4713 = vunpack.c.h.b16 %v2840
    %v4714 = vunpack.c.l.b16 %v2841
    %v4715 = vunpack.c.h.b16 %v2841
    %v4716 = vunpack.c.l.b16 %v2842
    %v4717 = vunpack.c.l.b16 %v2843
    %v4718 = vunpack.c.h.b16 %v2843
    %v4719 = vunpack.c.l.b16 %v2844
    %v4720 = vunpack.c.h.b16 %v2844
    %v4721 = vunpack.c.l.b16 %v2845
    %v4722 = vunpack.c.h.b16 %v2845
    %v4723 = vunpack.c.l.b16 %v2846
    %v4724 = vunpack.c.l.b16 %v2847
    %v4725 = vunpack.c.h.b16 %v2847
    %v4726 = vunpack.c.l.b16 %v2848
    %v4727 = vunpack.c.h.b16 %v2848
    %v4728 = vunpack.c.l.b16 %v2849
    %v4729 = vunpack.c.h.b16 %v2849
    %v4730 = vunpack.c.l.b16 %v2850
    %v4731 = vunpack.c.l.b16 %v2851
    %v4732 = vunpack.c.h.b16 %v2851
    %v4733 = vunpack.c.l.b16 %v2852
    %v4734 = vunpack.c.h.b16 %v2852
    %v4735 = vunpack.c.l.b16 %v2853
    %v4736 = vunpack.c.h.b16 %v2853
    %v4737 = vunpack.c.l.b16 %v2854
    %v4738 = vunpack.c.l.b16 %v2855
    %v4739 = vunpack.c.h.b16 %v2855
    %v4740 = vunpack.c.l.b16 %v2856
    %v4741 = vunpack.c.h.b16 %v2856
    %v4742 = vunpack.c.l.b16 %v2857
    %v4743 = vunpack.c.h.b16 %v2857
    %v4744 = vunpack.c.l.b16 %v2858
    %v4745 = vunpack.c.l.b16 %v2859
    %v4746 = vunpack.c.h.b16 %v2859
    %v4747 = vunpack.c.l.b16 %v2860
    %v4748 = vunpack.c.h.b16 %v2860
    %v4749 = vunpack.c.l.b16 %v2861
    %v4750 = vunpack.c.h.b16 %v2861
    %v4751 = vunpack.c.l.b16 %v2862
    %v4752 = vunpack.c.l.b16 %v2863
    %v4753 = vunpack.c.h.b16 %v2863
    %v4754 = vunpack.c.l.b16 %v2864
    %v4755 = vunpack.c.h.b16 %v2864
    %v4756 = vunpack.c.l.b16 %v2865
    %v4757 = vunpack.c.h.b16 %v2865
    %v4758 = vunpack.c.l.b16 %v2866
    %v4759 = vunpack.c.l.b16 %v2867
    %v4760 = vunpack.c.h.b16 %v2867
    %v4761 = vunpack.c.l.b16 %v2868
    %v4762 = vunpack.c.h.b16 %v2868
    %v4763 = vunpack.c.l.b16 %v2869
    %v4764 = vunpack.c.h.b16 %v2869
    %v4765 = vunpack.c.l.b16 %v2870
    %v4766 = vunpack.c.l.b16 %v2871
    %v4767 = vunpack.c.h.b16 %v2871
    %v4768 = vunpack.c.l.b16 %v2872
    %v4769 = vunpack.c.h.b16 %v2872
    %v4770 = vunpack.c.l.b16 %v2873
    %v4771 = vunpack.c.h.b16 %v2873
    %v4772 = vunpack.c.l.b16 %v2874
    %v4773 = vunpack.c.l.b16 %v2875
    %v4774 = vunpack.c.h.b16 %v2875
    %v4775 = vunpack.c.l.b16 %v2876
    %v4776 = vunpack.c.h.b16 %v2876
    %v4777 = vunpack.c.l.b16 %v2877
    %v4778 = vunpack.c.h.b16 %v2877
    %v4779 = vunpack.c.l.b16 %v2878
    %v4780 = vunpack.c.l.b16 %v2879
    %v4781 = vunpack.c.h.b16 %v2879
    %v4782 = vunpack.c.l.b16 %v2880
    %v4783 = vunpack.c.h.b16 %v2880
    %v4784 = vunpack.c.l.b16 %v2881
    %v4785 = vunpack.c.h.b16 %v2881
    %v4786 = vunpack.c.l.b16 %v2882
    %v4787 = vunpack.c.l.b16 %v2883
    %v4788 = vunpack.c.h.b16 %v2883
    %v4789 = vunpack.c.l.b16 %v2884
    %v4790 = vunpack.c.h.b16 %v2884
    %v4791 = vunpack.c.l.b16 %v2885
    %v4792 = vunpack.c.h.b16 %v2885
    %v4793 = vunpack.c.l.b16 %v2886
    %v4794 = vunpack.c.l.b16 %v2887
    %v4795 = vunpack.c.h.b16 %v2887
    %v4796 = vunpack.c.l.b16 %v2888
    %v4797 = vunpack.c.h.b16 %v2888
    %v4798 = vunpack.c.l.b16 %v2889
    %v4799 = vunpack.c.h.b16 %v2889
    %v4800 = vunpack.c.l.b16 %v2890
    %v4801 = vunpack.c.l.b16 %v2891
    %v4802 = vunpack.c.h.b16 %v2891
    %v4803 = vunpack.c.l.b16 %v2892
    %v4804 = vunpack.c.h.b16 %v2892
    %v4805 = vunpack.c.l.b16 %v2893
    %v4806 = vunpack.c.h.b16 %v2893
    %v4807 = vunpack.c.l.b16 %v2894
    %v4808 = vunpack.c.l.b16 %v2895
    %v4809 = vunpack.c.h.b16 %v2895
    %v4810 = vunpack.c.l.b16 %v2896
    %v4811 = vunpack.c.h.b16 %v2896
    %v4812 = vunpack.c.l.b16 %v2897
    %v4813 = vunpack.c.h.b16 %v2897
    %v4814 = vunpack.c.l.b16 %v2898
    %v4815 = vunpack.c.l.b16 %v2899
    %v4816 = vunpack.c.h.b16 %v2899
    %v4817 = vunpack.c.l.b16 %v2900
    %v4818 = vunpack.c.h.b16 %v2900
    %v4819 = vunpack.c.l.b16 %v2901
    %v4820 = vunpack.c.h.b16 %v2901
    %v4821 = vunpack.c.l.b16 %v2902
    %v4822 = vunpack.c.l.b16 %v2903
    %v4823 = vunpack.c.h.b16 %v2903
    %v4824 = vunpack.c.l.b16 %v2904
    %v4825 = vunpack.c.h.b16 %v2904
    %v4826 = vunpack.c.l.b16 %v2905
    %v4827 = vunpack.c.h.b16 %v2905
    %v4828 = vunpack.c.l.b16 %v2906
    %v4829 = vunpack.c.l.b16 %v2907
    %v4830 = vunpack.c.h.b16 %v2907
    %v4831 = vunpack.c.l.b16 %v2908
    %v4832 = vunpack.c.h.b16 %v2908
    %v4833 = vunpack.c.l.b16 %v2909
    %v4834 = vunpack.c.h.b16 %v2909
    %v4835 = vunpack.c.l.b16 %v2910
    %v4836 = vunpack.c.l.b16 %v2911
    %v4837 = vunpack.c.h.b16 %v2911
    %v4838 = vunpack.c.l.b16 %v2912
    %v4839 = vunpack.c.h.b16 %v2912
    %v4840 = vunpack.c.l.b16 %v2913
    %v4841 = vunpack.c.h.b16 %v2913
    %v4842 = vunpack.c.l.b16 %v2914
    %v4843 = vunpack.c.l.b16 %v2915
    %v4844 = vunpack.c.h.b16 %v2915
    %v4845 = vunpack.c.l.b16 %v2916
    %v4846 = vunpack.c.h.b16 %v2916
    %v4847 = vunpack.c.l.b16 %v2917
    %v4848 = vunpack.c.h.b16 %v2917
    %v4849 = vunpack.c.l.b16 %v2918
    %v4850 = vunpack.c.l.b16 %v2919
    %v4851 = vunpack.c.h.b16 %v2919
    %v4852 = vunpack.c.l.b16 %v2920
    %v4853 = vunpack.c.h.b16 %v2920
    %v4854 = vunpack.c.l.b16 %v2921
    %v4855 = vunpack.c.h.b16 %v2921
    %v4856 = vunpack.c.l.b16 %v2922
    %v4857 = vunpack.c.l.b16 %v2923
    %v4858 = vunpack.c.h.b16 %v2923
    %v4859 = vunpack.c.l.b16 %v2924
    %v4860 = vunpack.c.h.b16 %v2924
    %v4861 = vunpack.c.l.b16 %v2925
    %v4862 = vunpack.c.h.b16 %v2925
    %v4863 = vunpack.c.l.b16 %v2926
    %v4864 = vunpack.c.l.b16 %v2927
    %v4865 = vunpack.c.h.b16 %v2927
    %v4866 = vunpack.c.l.b16 %v2928
    %v4867 = vunpack.c.h.b16 %v2928
    %v4868 = vunpack.c.l.b16 %v2929
    %v4869 = vunpack.c.h.b16 %v2929
    %v4870 = vunpack.c.l.b16 %v2930
    %v4871 = vunpack.c.l.b16 %v2931
    %v4872 = vunpack.c.h.b16 %v2931
    %v4873 = vunpack.c.l.b16 %v2932
    %v4874 = vunpack.c.h.b16 %v2932
    %v4875 = vunpack.c.l.b16 %v2933
    %v4876 = vunpack.c.h.b16 %v2933
    %v4877 = vunpack.c.l.b16 %v2934
    %v4878 = vunpack.c.l.b16 %v2935
    %v4879 = vunpack.c.h.b16 %v2935
    %v4880 = vunpack.c.l.b16 %v2936
    %v4881 = vunpack.c.h.b16 %v2936
    %v4882 = vunpack.c.l.b16 %v2937
    %v4883 = vunpack.c.h.b16 %v2937
    %v4884 = vunpack.c.l.b16 %v2938
    %v4885 = vunpack.c.l.b16 %v2939
    %v4886 = vunpack.c.h.b16 %v2939
    %v4887 = vunpack.c.l.b16 %v2940
    %v4888 = vunpack.c.h.b16 %v2940
    %v4889 = vunpack.c.l.b16 %v2941
    %v4890 = vunpack.c.h.b16 %v2941
    %v4891 = vunpack.c.l.b16 %v2942
    %v4892 = vunpack.c.l.b16 %v2943
    %v4893 = vunpack.c.h.b16 %v2943
    %v4894 = vunpack.c.l.b16 %v2944
    %v4895 = vunpack.c.h.b16 %v2944
    %v4896 = vunpack.c.l.b16 %v2945
    %v4897 = vunpack.c.h.b16 %v2945
    %v4898 = vunpack.c.l.b16 %v2946
    %v4899 = vunpack.c.l.b16 %v2947
    %v4900 = vunpack.c.h.b16 %v2947
    %v4901 = vunpack.c.l.b16 %v2948
    %v4902 = vunpack.c.h.b16 %v2948
    %v4903 = vunpack.c.l.b16 %v2949
    %v4904 = vunpack.c.h.b16 %v2949
    %v4905 = vunpack.c.l.b16 %v2950
    %v4906 = vunpack.c.l.b16 %v2951
    %v4907 = vunpack.c.h.b16 %v2951
    %v4908 = vunpack.c.l.b16 %v2952
    %v4909 = vunpack.c.h.b16 %v2952
    %v4910 = vunpack.c.l.b16 %v2953
    %v4911 = vunpack.c.h.b16 %v2953
    %v4912 = vunpack.c.l.b16 %v2954
    %v4913 = vunpack.c.l.b16 %v2955
    %v4914 = vunpack.c.h.b16 %v2955
    %v4915 = vunpack.c.l.b16 %v2956
    %v4916 = vunpack.c.h.b16 %v2956
    %v4917 = vunpack.c.l.b16 %v2957
    %v4918 = vunpack.c.h.b16 %v2957
    %v4919 = vunpack.c.l.b16 %v2958
    %v4920 = vunpack.c.l.b16 %v2959
    %v4921 = vunpack.c.h.b16 %v2959
    %v4922 = vunpack.c.l.b16 %v2960
    %v4923 = vunpack.c.h.b16 %v2960
    %v4924 = vunpack.c.l.b16 %v2961
    %v4925 = vunpack.c.h.b16 %v2961
    %v4926 = vunpack.c.l.b16 %v2962
    %v4927 = vunpack.c.l.b16 %v2963
    %v4928 = vunpack.c.h.b16 %v2963
    %v4929 = vunpack.c.l.b16 %v2964
    %v4930 = vunpack.c.h.b16 %v2964
    %v4931 = vunpack.c.l.b16 %v2965
    %v4932 = vunpack.c.h.b16 %v2965
    %v4933 = vunpack.c.l.b16 %v2966
    %v4934 = vunpack.c.l.b16 %v2967
    %v4935 = vunpack.c.h.b16 %v2967
    %v4936 = vunpack.c.l.b16 %v2968
    %v4937 = vunpack.c.h.b16 %v2968
    %v4938 = vunpack.c.l.b16 %v2969
    %v4939 = vunpack.c.h.b16 %v2969
    %v4940 = vunpack.c.l.b16 %v2970
    %v4941 = vunpack.c.l.b16 %v2971
    %v4942 = vunpack.c.h.b16 %v2971
    %v4943 = vunpack.c.l.b16 %v2972
    %v4944 = vunpack.c.h.b16 %v2972
    %v4945 = vunpack.c.l.b16 %v2973
    %v4946 = vunpack.c.h.b16 %v2973
    %v4947 = vunpack.c.l.b16 %v2974
    %v4948 = vunpack.c.l.b16 %v2975
    %v4949 = vunpack.c.h.b16 %v2975
    %v4950 = vunpack.c.l.b16 %v2976
    %v4951 = vunpack.c.h.b16 %v2976
    %v4952 = vunpack.c.l.b16 %v2977
    %v4953 = vunpack.c.h.b16 %v2977
    %v4954 = vunpack.c.l.b16 %v2978
    %v4955 = vunpack.c.l.b16 %v2979
    %v4956 = vunpack.c.h.b16 %v2979
    %v4957 = vunpack.c.l.b16 %v2980
    %v4958 = vunpack.c.h.b16 %v2980
    %v4959 = vunpack.c.l.b16 %v2981
    %v4960 = vunpack.c.h.b16 %v2981
    %v4961 = vunpack.c.l.b16 %v2982
    %v4962 = vunpack.c.l.b16 %v2983
    %v4963 = vunpack.c.h.b16 %v2983
    %v4964 = vunpack.c.l.b16 %v2984
    %v4965 = vunpack.c.h.b16 %v2984
    %v4966 = vunpack.c.l.b16 %v2985
    %v4967 = vunpack.c.h.b16 %v2985
    %v4968 = vunpack.c.l.b16 %v2986
    %v4969 = vunpack.c.l.b16 %v2987
    %v4970 = vunpack.c.h.b16 %v2987
    %v4971 = vunpack.c.l.b16 %v2988
    %v4972 = vunpack.c.h.b16 %v2988
    %v4973 = vunpack.c.l.b16 %v2989
    %v4974 = vunpack.c.h.b16 %v2989
    %v4975 = vunpack.c.l.b16 %v2990
    %v4976 = vunpack.c.l.b16 %v2991
    %v4977 = vunpack.c.h.b16 %v2991
    %v4978 = vunpack.c.l.b16 %v2992
    %v4979 = vunpack.c.h.b16 %v2992
    %v4980 = vunpack.c.l.b16 %v2993
    %v4981 = vunpack.c.h.b16 %v2993
    %v4982 = vunpack.c.l.b16 %v2994
    %v4983 = vunpack.c.l.b16 %v2995
    %v4984 = vunpack.c.h.b16 %v2995
    %v4985 = vunpack.c.l.b16 %v2996
    %v4986 = vunpack.c.h.b16 %v2996
    %v4987 = vunpack.c.l.b16 %v2997
    %v4988 = vunpack.c.h.b16 %v2997
    %v4989 = vunpack.c.l.b16 %v2998
    %v4990 = vunpack.c.l.b16 %v2999
    %v4991 = vunpack.c.h.b16 %v2999
    %v4992 = vunpack.c.l.b16 %v3000
    %v4993 = vunpack.c.h.b16 %v3000
    %v4994 = vunpack.c.l.b16 %v3001
    %v4995 = vunpack.c.h.b16 %v3001
    %v4996 = vunpack.c.l.b16 %v3002
    %v4997 = vunpack.c.l.b16 %v3003
    %v4998 = vunpack.c.h.b16 %v3003
    %v4999 = vunpack.c.l.b16 %v3004
    %v5000 = vunpack.c.h.b16 %v3004
    %v5001 = vunpack.c.l.b16 %v3005
    %v5002 = vunpack.c.h.b16 %v3005
    %v5003 = vunpack.c.l.b16 %v3006
    %v5004 = vunpack.c.l.b16 %v3007
    %v5005 = vunpack.c.h.b16 %v3007
    %v5006 = vunpack.c.l.b16 %v3008
    %v5007 = vunpack.c.h.b16 %v3008
    %v5008 = vunpack.c.l.b16 %v3009
    %v5009 = vunpack.c.h.b16 %v3009
    %v5010 = vunpack.c.l.b16 %v3010
    %v5011 = vunpack.c.l.b16 %v3011
    %v5012 = vunpack.c.h.b16 %v3011
    %v5013 = vunpack.c.l.b16 %v3012
    %v5014 = vunpack.c.h.b16 %v3012
    %v5015 = vunpack.c.l.b16 %v3013
    %v5016 = vunpack.c.h.b16 %v3013
    %v5017 = vunpack.c.l.b16 %v3014
    %v5018 = vunpack.c.l.b16 %v3015
    %v5019 = vunpack.c.h.b16 %v3015
    %v5020 = vunpack.c.l.b16 %v3016
    %v5021 = vunpack.c.h.b16 %v3016
    %v5022 = vunpack.c.l.b16 %v3017
    %v5023 = vunpack.c.h.b16 %v3017
    %v5024 = vunpack.c.l.b16 %v3018
    %v5025 = vunpack.c.l.b16 %v3019
    %v5026 = vunpack.c.h.b16 %v3019
    %v5027 = vunpack.c.l.b16 %v3020
    %v5028 = vunpack.c.h.b16 %v3020
    %v5029 = vunpack.c.l.b16 %v3021
    %v5030 = vunpack.c.h.b16 %v3021
    %v5031 = vunpack.c.l.b16 %v3022
    %v5032 = vunpack.c.l.b16 %v3023
    %v5033 = vunpack.c.h.b16 %v3023
    %v5034 = vunpack.c.l.b16 %v3024
    %v5035 = vunpack.c.h.b16 %v3024
    %v5036 = vunpack.c.l.b16 %v3025
    %v5037 = vunpack.c.h.b16 %v3025
    %v5038 = vunpack.c.l.b16 %v3026
    %v5039 = vunpack.c.l.b16 %v3027
    %v5040 = vunpack.c.h.b16 %v3027
    %v5041 = vunpack.c.l.b16 %v3028
    %v5042 = vunpack.c.h.b16 %v3028
    %v5043 = vunpack.c.l.b16 %v3029
    %v5044 = vunpack.c.h.b16 %v3029
    %v5045 = vunpack.c.l.b16 %v3030
    %v5046 = vunpack.c.l.b16 %v3031
    %v5047 = vunpack.c.h.b16 %v3031
    %v5048 = vunpack.c.l.b16 %v3032
    %v5049 = vunpack.c.h.b16 %v3032
    %v5050 = vunpack.c.l.b16 %v3033
    %v5051 = vunpack.c.h.b16 %v3033
    %v5052 = vunpack.c.l.b16 %v3034
    %v5053 = vunpack.c.l.b16 %v3035
    %v5054 = vunpack.c.h.b16 %v3035
    %v5055 = vunpack.c.l.b16 %v3036
    %v5056 = vunpack.c.h.b16 %v3036
    %v5057 = vunpack.c.l.b16 %v3037
    %v5058 = vunpack.c.h.b16 %v3037
    %v5059 = vunpack.c.l.b16 %v3038
    %v5060 = vunpack.c.l.b16 %v3039
    %v5061 = vunpack.c.h.b16 %v3039
    %v5062 = vunpack.c.l.b16 %v3040
    %v5063 = vunpack.c.h.b16 %v3040
    %v5064 = vunpack.c.l.b16 %v3041
    %v5065 = vunpack.c.h.b16 %v3041
    %v5066 = vunpack.c.l.b16 %v3042
    %v5067 = vunpack.c.l.b16 %v3043
    %v5068 = vunpack.c.h.b16 %v3043
    %v5069 = vunpack.c.l.b16 %v3044
    %v5070 = vunpack.c.h.b16 %v3044
    %v5071 = vunpack.c.l.b16 %v3045
    %v5072 = vunpack.c.h.b16 %v3045
    %v5073 = vunpack.c.l.b16 %v3046
    %v5074 = vunpack.c.l.b16 %v3047
    %v5075 = vunpack.c.h.b16 %v3047
    %v5076 = vunpack.c.l.b16 %v3048
    %v5077 = vunpack.c.h.b16 %v3048
    %v5078 = vunpack.c.l.b16 %v3049
    %v5079 = vunpack.c.h.b16 %v3049
    %v5080 = vunpack.c.l.b16 %v3050
    %v5081 = vunpack.c.l.b16 %v3051
    %v5082 = vunpack.c.h.b16 %v3051
    %v5083 = vunpack.c.l.b16 %v3052
    %v5084 = vunpack.c.h.b16 %v3052
    %v5085 = vunpack.c.l.b16 %v3053
    %v5086 = vunpack.c.h.b16 %v3053
    %v5087 = vunpack.c.l.b16 %v3054
    %v5088 = vunpack.c.l.b16 %v3055
    %v5089 = vunpack.c.h.b16 %v3055
    %v5090 = vunpack.c.l.b16 %v3056
    %v5091 = vunpack.c.h.b16 %v3056
    %v5092 = vunpack.c.l.b16 %v3057
    %v5093 = vunpack.c.h.b16 %v3057
    %v5094 = vunpack.c.l.b16 %v3058
    %v5095 = vunpack.c.l.b16 %v3059
    %v5096 = vunpack.c.h.b16 %v3059
    %v5097 = vunpack.c.l.b16 %v3060
    %v5098 = vunpack.c.h.b16 %v3060
    %v5099 = vunpack.c.l.b16 %v3061
    %v5100 = vunpack.c.h.b16 %v3061
    %v5101 = vunpack.c.l.b16 %v3062
    %v5102 = vunpack.c.l.b16 %v3063
    %v5103 = vunpack.c.h.b16 %v3063
    %v5104 = vunpack.c.l.b16 %v3064
    %v5105 = vunpack.c.h.b16 %v3064
    %v5106 = vunpack.c.l.b16 %v3065
    %v5107 = vunpack.c.h.b16 %v3065
    %v5108 = vunpack.c.l.b16 %v3066
    %v5109 = vunpack.c.l.b16 %v3067
    %v5110 = vunpack.c.h.b16 %v3067
    %v5111 = vunpack.c.l.b16 %v3068
    %v5112 = vunpack.c.h.b16 %v3068
    %v5113 = vunpack.c.l.b16 %v3069
    %v5114 = vunpack.c.h.b16 %v3069
    %v5115 = vunpack.c.l.b16 %v3070
    %v5116 = vunpack.c.l.b16 %v3071
    %v5117 = vunpack.c.h.b16 %v3071
    %v5118 = vunpack.c.l.b16 %v3072
    %v5119 = vunpack.c.h.b16 %v3072
    %v5120 = vunpack.c.l.b16 %v3073
    %v5121 = vunpack.c.h.b16 %v3073
    %v5122 = vunpack.c.l.b16 %v3074
    %v5123 = vunpack.c.l.b16 %v3075
    %v5124 = vunpack.c.h.b16 %v3075
    %v5125 = vunpack.c.l.b16 %v3076
    %v5126 = vunpack.c.h.b16 %v3076
    %v5127 = vunpack.c.l.b16 %v3077
    %v5128 = vunpack.c.h.b16 %v3077
    %v5129 = vunpack.c.l.b16 %v3078
    %v5130 = vunpack.c.l.b16 %v3079
    %v5131 = vunpack.c.h.b16 %v3079
    %v5132 = vunpack.c.l.b16 %v3080
    %v5133 = vunpack.c.h.b16 %v3080
    %v5134 = vunpack.c.l.b16 %v3081
    %v5135 = vunpack.c.h.b16 %v3081
    %v5136 = vunpack.c.l.b16 %v3082
    %v5137 = vunpack.c.l.b16 %v3083
    %v5138 = vunpack.c.h.b16 %v3083
    %v5139 = vunpack.c.l.b16 %v3084
    %v5140 = vunpack.c.h.b16 %v3084
    %v5141 = vunpack.c.l.b16 %v3085
    %v5142 = vunpack.c.h.b16 %v3085
    %v5143 = vunpack.c.l.b16 %v3086
    %v5144 = vunpack.c.l.b16 %v3087
    %v5145 = vunpack.c.h.b16 %v3087
    %v5146 = vunpack.c.l.b16 %v3088
    %v5147 = vunpack.c.h.b16 %v3088
    %v5148 = vunpack.c.l.b16 %v3089
    %v5149 = vunpack.c.h.b16 %v3089
    %v5150 = vunpack.c.l.b16 %v3090
    %v5151 = vunpack.c.l.b16 %v3091
    %v5152 = vunpack.c.h.b16 %v3091
    %v5153 = vunpack.c.l.b16 %v3092
    %v5154 = vunpack.c.h.b16 %v3092
    %v5155 = vunpack.c.l.b16 %v3093
    %v5156 = vunpack.c.h.b16 %v3093
    %v5157 = vunpack.c.l.b16 %v3094
    %v5158 = vunpack.c.l.b16 %v3095
    %v5159 = vunpack.c.h.b16 %v3095
    %v5160 = vunpack.c.l.b16 %v3096
    %v5161 = vunpack.c.h.b16 %v3096
    %v5162 = vunpack.c.l.b16 %v3097
    %v5163 = vunpack.c.h.b16 %v3097
    %v5164 = vunpack.c.l.b16 %v3098
    %v5165 = vunpack.c.l.b16 %v3099
    %v5166 = vunpack.c.h.b16 %v3099
    %v5167 = vunpack.c.l.b16 %v3100
    %v5168 = vunpack.c.h.b16 %v3100
    %v5169 = vunpack.c.l.b16 %v3101
    %v5170 = vunpack.c.h.b16 %v3101
    %v5171 = vunpack.c.l.b16 %v3102
    %v5172 = vunpack.c.l.b16 %v3103
    %v5173 = vunpack.c.h.b16 %v3103
    %v5174 = vunpack.c.l.b16 %v3104
    %v5175 = vunpack.c.h.b16 %v3104
    %v5176 = vunpack.c.l.b16 %v3105
    %v5177 = vunpack.c.h.b16 %v3105
    %v5178 = vunpack.c.l.b16 %v3106
    %v5179 = vunpack.c.l.b16 %v3107
    %v5180 = vunpack.c.h.b16 %v3107
    %v5181 = vunpack.c.l.b16 %v3108
    %v5182 = vunpack.c.h.b16 %v3108
    %v5183 = vunpack.c.l.b16 %v3109
    %v5184 = vunpack.c.h.b16 %v3109
    %v5185 = vunpack.c.l.b16 %v3110
    %v5186 = vunpack.c.l.b16 %v3111
    %v5187 = vunpack.c.h.b16 %v3111
    %v5188 = vunpack.c.l.b16 %v3112
    %v5189 = vunpack.c.h.b16 %v3112
    %v5190 = vunpack.c.l.b16 %v3113
    %v5191 = vunpack.c.h.b16 %v3113
    %v5192 = vunpack.c.l.b16 %v3114
    %v5193 = vunpack.c.l.b16 %v3115
    %v5194 = vunpack.c.h.b16 %v3115
    %v5195 = vunpack.c.l.b16 %v3116
    %v5196 = vunpack.c.h.b16 %v3116
    %v5197 = vunpack.c.l.b16 %v3117
    %v5198 = vunpack.c.h.b16 %v3117
    %v5199 = vunpack.c.l.b16 %v3118
    %v5200 = vunpack.c.l.b16 %v3119
    %v5201 = vunpack.c.h.b16 %v3119
    %v5202 = vunpack.c.l.b16 %v3120
    %v5203 = vunpack.c.h.b16 %v3120
    %v5204 = vunpack.c.l.b16 %v3121
    %v5205 = vunpack.c.h.b16 %v3121
    %v5206 = vunpack.c.l.b16 %v3122
    %v5207 = vunpack.c.l.b16 %v3123
    %v5208 = vunpack.c.h.b16 %v3123
    %v5209 = vunpack.c.l.b16 %v3124
    %v5210 = vunpack.c.h.b16 %v3124
    %v5211 = vunpack.c.l.b16 %v3125
    %v5212 = vunpack.c.h.b16 %v3125
    %v5213 = vunpack.c.l.b16 %v3126
    %v5214 = vunpack.c.l.b16 %v3127
    %v5215 = vunpack.c.h.b16 %v3127
    %v5216 = vunpack.c.l.b16 %v3128
    %v5217 = vunpack.c.h.b16 %v3128
    %v5218 = vunpack.c.l.b16 %v3129
    %v5219 = vunpack.c.h.b16 %v3129
    %v5220 = vunpack.c.l.b16 %v3130
    %v5221 = vunpack.c.l.b16 %v3131
    %v5222 = vunpack.c.h.b16 %v3131
    %v5223 = vunpack.c.l.b16 %v3132
    %v5224 = vunpack.c.h.b16 %v3132
    %v5225 = vunpack.c.l.b16 %v3133
    %v5226 = vunpack.c.h.b16 %v3133
    %v5227 = vunpack.c.l.b16 %v3134
    %v5228 = vunpack.c.l.b16 %v3135
    %v5229 = vunpack.c.h.b16 %v3135
    %v5230 = vunpack.c.l.b16 %v3136
    %v5231 = vunpack.c.h.b16 %v3136
    %v5232 = vunpack.c.l.b16 %v3137
    %v5233 = vunpack.c.h.b16 %v3137
    %v5234 = vunpack.c.l.b16 %v3138
    %v5235 = vunpack.c.l.b16 %v3139
    %v5236 = vunpack.c.h.b16 %v3139
    %v5237 = vunpack.c.l.b16 %v3140
    %v5238 = vunpack.c.h.b16 %v3140
    %v5239 = vunpack.c.l.b16 %v3141
    %v5240 = vunpack.c.h.b16 %v3141
    %v5241 = vunpack.c.l.b16 %v3142
    %v5242 = vunpack.c.l.b16 %v3143
    %v5243 = vunpack.c.h.b16 %v3143
    %v5244 = vunpack.c.l.b16 %v3144
    %v5245 = vunpack.c.h.b16 %v3144
    %v5246 = vunpack.c.l.b16 %v3145
    %v5247 = vunpack.c.h.b16 %v3145
    %v5248 = vunpack.c.l.b16 %v3146
    %v5249 = vunpack.c.l.b16 %v3147
    %v5250 = vunpack.c.h.b16 %v3147
    %v5251 = vunpack.c.l.b16 %v3148
    %v5252 = vunpack.c.h.b16 %v3148
    %v5253 = vunpack.c.l.b16 %v3149
    %v5254 = vunpack.c.h.b16 %v3149
    %v5255 = vunpack.c.l.b16 %v3150
    %v5256 = vunpack.c.l.b16 %v3151
    %v5257 = vunpack.c.h.b16 %v3151
    %v5258 = vunpack.c.l.b16 %v3152
    %v5259 = vunpack.c.h.b16 %v3152
    %v5260 = vunpack.c.l.b16 %v3153
    %v5261 = vunpack.c.h.b16 %v3153
    %v5262 = vunpack.c.l.b16 %v3154
    %v5263 = vunpack.c.l.b16 %v3155
    %v5264 = vunpack.c.h.b16 %v3155
    %v5265 = vunpack.c.l.b16 %v3156
    %v5266 = vunpack.c.h.b16 %v3156
    %v5267 = vunpack.c.l.b16 %v3157
    %v5268 = vunpack.c.h.b16 %v3157
    %v5269 = vunpack.c.l.b16 %v3158
    %v5270 = vunpack.c.l.b16 %v3159
    %v5271 = vunpack.c.h.b16 %v3159
    %v5272 = vunpack.c.l.b16 %v3160
    %v5273 = vunpack.c.h.b16 %v3160
    %v5274 = vunpack.c.l.b16 %v3161
    %v5275 = vunpack.c.h.b16 %v3161
    %v5276 = vunpack.c.l.b16 %v3162
    %v5277 = vunpack.c.l.b16 %v3163
    %v5278 = vunpack.c.h.b16 %v3163
    %v5279 = vunpack.c.l.b16 %v3164
    %v5280 = vunpack.c.h.b16 %v3164
    %v5281 = vunpack.c.l.b16 %v3165
    %v5282 = vunpack.c.h.b16 %v3165
    %v5283 = vunpack.c.l.b16 %v3166
    %v5284 = vunpack.c.l.b16 %v3167
    %v5285 = vunpack.c.h.b16 %v3167
    %v5286 = vunpack.c.l.b16 %v3168
    %v5287 = vunpack.c.h.b16 %v3168
    %v5288 = vunpack.c.l.b16 %v3169
    %v5289 = vunpack.c.h.b16 %v3169
    %v5290 = vunpack.c.l.b16 %v3170
    %v5291 = vunpack.c.l.b16 %v3171
    %v5292 = vunpack.c.h.b16 %v3171
    %v5293 = vunpack.c.l.b16 %v3172
    %v5294 = vunpack.c.h.b16 %v3172
    %v5295 = vunpack.c.l.b16 %v3173
    %v5296 = vunpack.c.h.b16 %v3173
    %v5297 = vunpack.c.l.b16 %v3174
    %v5298 = vunpack.c.l.b16 %v3175
    %v5299 = vunpack.c.h.b16 %v3175
    %v5300 = vunpack.c.l.b16 %v3176
    %v5301 = vunpack.c.h.b16 %v3176
    %v5302 = vunpack.c.l.b16 %v3177
    %v5303 = vunpack.c.h.b16 %v3177
    %v5304 = vunpack.c.l.b16 %v3178
    %v5305 = vunpack.c.l.b16 %v3179
    %v5306 = vunpack.c.h.b16 %v3179
    %v5307 = vunpack.c.l.b16 %v3180
    %v5308 = vunpack.c.h.b16 %v3180
    %v5309 = vunpack.c.l.b16 %v3181
    %v5310 = vunpack.c.h.b16 %v3181
    %v5311 = vunpack.c.l.b16 %v3182
    %v5312 = vunpack.c.l.b16 %v3183
    %v5313 = vunpack.c.h.b16 %v3183
    %v5314 = vunpack.c.l.b16 %v3184
    %v5315 = vunpack.c.h.b16 %v3184
    %v5316 = vunpack.c.l.b16 %v3185
    %v5317 = vunpack.c.h.b16 %v3185
    %v5318 = vunpack.c.l.b16 %v3186
    %v5319 = vunpack.c.l.b16 %v3187
    %v5320 = vunpack.c.h.b16 %v3187
    %v5321 = vunpack.c.l.b16 %v3188
    %v5322 = vunpack.c.h.b16 %v3188
    %v5323 = vunpack.c.l.b16 %v3189
    %v5324 = vunpack.c.h.b16 %v3189
    %v5325 = vunpack.c.l.b16 %v3190
    %v5326 = vunpack.c.l.b16 %v3191
    %v5327 = vunpack.c.h.b16 %v3191
    %v5328 = vunpack.c.l.b16 %v3192
    %v5329 = vunpack.c.h.b16 %v3192
    %v5330 = vunpack.c.l.b16 %v3193
    %v5331 = vunpack.c.h.b16 %v3193
    %v5332 = vunpack.c.l.b16 %v3194
    %v5333 = vunpack.c.l.b16 %v3195
    %v5334 = vunpack.c.h.b16 %v3195
    %v5335 = vunpack.c.l.b16 %v3196
    %v5336 = vunpack.c.h.b16 %v3196
    %v5337 = vunpack.c.l.b16 %v3197
    %v5338 = vunpack.c.h.b16 %v3197
    %v5339 = vunpack.c.l.b16 %v3198
    %v5340 = vunpack.c.l.b16 %v3199
    %v5341 = vunpack.c.h.b16 %v3199
    %v5342 = vunpack.c.l.b16 %v3200
    %v5343 = vunpack.c.h.b16 %v3200
    %v5344 = vunpack.c.l.b16 %v3201
    %v5345 = vunpack.c.h.b16 %v3201
    %v5346 = vunpack.c.l.b16 %v3202
    %v5347 = vunpack.c.l.b16 %v3203
    %v5348 = vunpack.c.h.b16 %v3203
    %v5349 = vunpack.c.l.b16 %v3204
    %v5350 = vunpack.c.h.b16 %v3204
    %v5351 = vunpack.c.l.b16 %v3205
    %v5352 = vunpack.c.h.b16 %v3205
    %v5353 = vunpack.c.l.b16 %v3206
    %v5354 = vunpack.c.l.b16 %v3207
    %v5355 = vunpack.c.h.b16 %v3207
    %v5356 = vunpack.c.l.b16 %v3208
    %v5357 = vunpack.c.h.b16 %v3208
    %v5358 = vunpack.c.l.b16 %v3209
    %v5359 = vunpack.c.h.b16 %v3209
    %v5360 = vunpack.c.l.b16 %v3210
    %v5361 = vunpack.c.l.b16 %v3211
    %v5362 = vunpack.c.h.b16 %v3211
    %v5363 = vunpack.c.l.b16 %v3212
    %v5364 = vunpack.c.h.b16 %v3212
    %v5365 = vunpack.c.l.b16 %v3213
    %v5366 = vunpack.c.h.b16 %v3213
    %v5367 = vunpack.c.l.b16 %v3214
    %v5368 = vunpack.c.l.b16 %v3215
    %v5369 = vunpack.c.h.b16 %v3215
    %v5370 = vunpack.c.l.b16 %v3216
    %v5371 = vunpack.c.h.b16 %v3216
    %v5372 = vunpack.c.l.b16 %v3217
    %v5373 = vunpack.c.h.b16 %v3217
    %v5374 = vunpack.c.l.b16 %v3218
    %v5375 = vunpack.c.l.b16 %v3219
    %v5376 = vunpack.c.h.b16 %v3219
    %v5377 = vunpack.c.l.b16 %v3220
    %v5378 = vunpack.c.h.b16 %v3220
    %v5379 = vunpack.c.l.b16 %v3221
    %v5380 = vunpack.c.h.b16 %v3221
    %v5381 = vunpack.c.l.b16 %v3222
    %v5382 = vunpack.c.l.b16 %v3223
    %v5383 = vunpack.c.h.b16 %v3223
    %v5384 = vunpack.c.l.b16 %v3224
    %v5385 = vunpack.c.h.b16 %v3224
    %v5386 = vunpack.c.l.b16 %v3225
    %v5387 = vunpack.c.h.b16 %v3225
    %v5388 = vunpack.c.l.b16 %v3226
    %v5389 = vunpack.c.l.b16 %v3227
    %v5390 = vunpack.c.h.b16 %v3227
    %v5391 = vunpack.c.l.b16 %v3228
    %v5392 = vunpack.c.h.b16 %v3228
    %v5393 = vunpack.c.l.b16 %v3229
    %v5394 = vunpack.c.h.b16 %v3229
    %v5395 = vunpack.c.l.b16 %v3230
    %v5396 = vunpack.c.l.b16 %v3231
    %v5397 = vunpack.c.h.b16 %v3231
    %v5398 = vunpack.c.l.b16 %v3232
    %v5399 = vunpack.c.h.b16 %v3232
    %v5400 = vunpack.c.l.b16 %v3233
    %v5401 = vunpack.c.h.b16 %v3233
    %v5402 = vunpack.c.l.b16 %v3234
    %v5403 = vunpack.c.l.b16 %v3235
    %v5404 = vunpack.c.h.b16 %v3235
    %v5405 = vunpack.c.l.b16 %v3236
    %v5406 = vunpack.c.h.b16 %v3236
    %v5407 = vunpack.c.l.b16 %v3237
    %v5408 = vunpack.c.h.b16 %v3237
    %v5409 = vunpack.c.l.b16 %v3238
    %v5410 = vunpack.c.l.b16 %v3239
    %v5411 = vunpack.c.h.b16 %v3239
    %v5412 = vunpack.c.l.b16 %v3240
    %v5413 = vunpack.c.h.b16 %v3240
    %v5414 = vunpack.c.l.b16 %v3241
    %v5415 = vunpack.c.h.b16 %v3241
    %v5416 = vunpack.c.l.b16 %v3242
    %v5417 = vunpack.c.l.b16 %v3243
    %v5418 = vunpack.c.h.b16 %v3243
    %v5419 = vunpack.c.l.b16 %v3244
    %v5420 = vunpack.c.h.b16 %v3244
    %v5421 = vunpack.c.l.b16 %v3245
    %v5422 = vunpack.c.h.b16 %v3245
    %v5423 = vunpack.c.l.b16 %v3246
    %v5424 = vunpack.c.l.b16 %v3247
    %v5425 = vunpack.c.h.b16 %v3247
    %v5426 = vunpack.c.l.b16 %v3248
    %v5427 = vunpack.c.h.b16 %v3248
    %v5428 = vunpack.c.l.b16 %v3249
    %v5429 = vunpack.c.h.b16 %v3249
    %v5430 = vunpack.c.l.b16 %v3250
    %v5431 = vunpack.c.l.b16 %v3251
    %v5432 = vunpack.c.h.b16 %v3251
    %v5433 = vunpack.c.l.b16 %v3252
    %v5434 = vunpack.c.h.b16 %v3252
    %v5435 = vunpack.c.l.b16 %v3253
    %v5436 = vunpack.c.h.b16 %v3253
    %v5437 = vunpack.c.l.b16 %v3254
    %v5438 = vunpack.c.l.b16 %v3255
    %v5439 = vunpack.c.h.b16 %v3255
    %v5440 = vunpack.c.l.b16 %v3256
    %v5441 = vunpack.c.h.b16 %v3256
    %v5442 = vunpack.c.l.b16 %v3257
    %v5443 = vunpack.c.h.b16 %v3257
    %v5444 = vunpack.c.l.b16 %v3258
    %v5445 = vunpack.c.l.b16 %v3259
    %v5446 = vunpack.c.h.b16 %v3259
    %v5447 = vunpack.c.l.b16 %v3260
    %v5448 = vunpack.c.h.b16 %v3260
    %v5449 = vunpack.c.l.b16 %v3261
    %v5450 = vunpack.c.h.b16 %v3261
    %v5451 = vunpack.c.l.b16 %v3262
    %v5452 = vunpack.c.l.b16 %v3263
    %v5453 = vunpack.c.h.b16 %v3263
    %v5454 = vunpack.c.l.b16 %v3264
    %v5455 = vunpack.c.h.b16 %v3264
    %v5456 = vunpack.c.l.b16 %v3265
    %v5457 = vunpack.c.h.b16 %v3265
    %v5458 = vunpack.c.l.b16 %v3266
    %v5459 = vunpack.c.l.b16 %v3267
    %v5460 = vunpack.c.h.b16 %v3267
    %v5461 = vunpack.c.l.b16 %v3268
    %v5462 = vunpack.c.h.b16 %v3268
    %v5463 = vunpack.c.l.b16 %v3269
    %v5464 = vunpack.c.h.b16 %v3269
    %v5465 = vunpack.c.l.b16 %v3270
    %v5466 = vunpack.c.l.b16 %v3271
    %v5467 = vunpack.c.h.b16 %v3271
    %v5468 = vunpack.c.l.b16 %v3272
    %v5469 = vunpack.c.h.b16 %v3272
    %v5470 = vunpack.c.l.b16 %v3273
    %v5471 = vunpack.c.h.b16 %v3273
    %v5472 = vunpack.c.l.b16 %v3274
    %v5473 = vunpack.c.l.b16 %v3275
    %v5474 = vunpack.c.h.b16 %v3275
    %v5475 = vunpack.c.l.b16 %v3276
    %v5476 = vunpack.c.h.b16 %v3276
    %v5477 = vunpack.c.l.b16 %v3277
    %v5478 = vunpack.c.h.b16 %v3277
    %v5479 = vunpack.c.l.b16 %v3278
    %v5480 = vunpack.c.l.b16 %v3279
    %v5481 = vunpack.c.h.b16 %v3279
    %v5482 = vunpack.c.l.b16 %v3280
    %v5483 = vunpack.c.h.b16 %v3280
    %v5484 = vunpack.c.l.b16 %v3281
    %v5485 = vunpack.c.h.b16 %v3281
    %v5486 = vunpack.c.l.b16 %v3282
    %v5487 = vunpack.c.l.b16 %v3283
    %v5488 = vunpack.c.h.b16 %v3283
    %v5489 = vunpack.c.l.b16 %v3284
    %v5490 = vunpack.c.h.b16 %v3284
    %v5491 = vunpack.c.l.b16 %v3285
    %v5492 = vunpack.c.h.b16 %v3285
    %v5493 = vunpack.c.l.b16 %v3286
    %v5494 = vunpack.c.l.b16 %v3287
    %v5495 = vunpack.c.h.b16 %v3287
    %v5496 = vunpack.c.l.b16 %v3288
    %v5497 = vunpack.c.h.b16 %v3288
    %v5498 = vunpack.c.l.b16 %v3289
    %v5499 = vunpack.c.h.b16 %v3289
    %v5500 = vunpack.c.l.b16 %v3290
    %v5501 = vunpack.c.l.b16 %v3291
    %v5502 = vunpack.c.h.b16 %v3291
    %v5503 = vunpack.c.l.b16 %v3292
    %v5504 = vunpack.c.h.b16 %v3292
    %v5505 = vunpack.c.l.b16 %v3293
    %v5506 = vunpack.c.h.b16 %v3293
    %v5507 = vunpack.c.l.b16 %v3294
    %v5508 = vunpack.c.l.b16 %v3295
    %v5509 = vunpack.c.h.b16 %v3295
    %v5510 = vunpack.c.l.b16 %v3296
    %v5511 = vunpack.c.h.b16 %v3296
    %v5512 = vunpack.c.l.b16 %v3297
    %v5513 = vunpack.c.h.b16 %v3297
    %v5514 = vunpack.c.l.b16 %v3298
    %v5515 = vunpack.c.l.b16 %v3299
    %v5516 = vunpack.c.h.b16 %v3299
    %v5517 = vunpack.c.l.b16 %v3300
    %v5518 = vunpack.c.h.b16 %v3300
    %v5519 = vunpack.c.l.b16 %v3301
    %v5520 = vunpack.c.h.b16 %v3301
    %v5521 = vunpack.c.l.b16 %v3302
    %v5522 = vunpack.c.l.b16 %v3303
    %v5523 = vunpack.c.h.b16 %v3303
    %v5524 = vunpack.c.l.b16 %v3304
    %v5525 = vunpack.c.h.b16 %v3304
    %v5526 = vunpack.c.l.b16 %v3305
    %v5527 = vunpack.c.h.b16 %v3305
    %v5528 = vunpack.c.l.b16 %v3306
    %v5529 = vunpack.c.l.b16 %v3307
    %v5530 = vunpack.c.h.b16 %v3307
    %v5531 = vunpack.c.l.b16 %v3308
    %v5532 = vunpack.c.h.b16 %v3308
    %v5533 = vunpack.c.l.b16 %v3309
    %v5534 = vunpack.c.h.b16 %v3309
    %v5535 = vunpack.c.l.b16 %v3310
    %v5536 = vunpack.c.l.b16 %v3311
    %v5537 = vunpack.c.h.b16 %v3311
    %v5538 = vunpack.c.l.b16 %v3312
    %v5539 = vunpack.c.h.b16 %v3312
    %v5540 = vunpack.c.l.b16 %v3313
    %v5541 = vunpack.c.h.b16 %v3313
    %v5542 = vunpack.c.l.b16 %v3314
    %v5543 = vunpack.c.l.b16 %v3315
    %v5544 = vunpack.c.h.b16 %v3315
    %v5545 = vunpack.c.l.b16 %v3316
    %v5546 = vunpack.c.h.b16 %v3316
    %v5547 = vunpack.c.l.b16 %v3317
    %v5548 = vunpack.c.h.b16 %v3317
    %v5549 = vunpack.c.l.b16 %v3318
    %v5550 = vunpack.c.l.b16 %v3319
    %v5551 = vunpack.c.h.b16 %v3319
    %v5552 = vunpack.c.l.b16 %v3320
    %v5553 = vunpack.c.h.b16 %v3320
    %v5554 = vunpack.c.l.b16 %v3321
    %v5555 = vunpack.c.h.b16 %v3321
    %v5556 = vunpack.c.l.b16 %v3322
    %v5557 = vunpack.c.l.b16 %v3323
    %v5558 = vunpack.c.h.b16 %v3323
    %v5559 = vunpack.c.l.b16 %v3324
    %v5560 = vunpack.c.h.b16 %v3324
    %v5561 = vunpack.c.l.b16 %v3325
    %v5562 = vunpack.c.h.b16 %v3325
    %v5563 = vunpack.c.l.b16 %v3326
    %v5564 = vunpack.c.l.b16 %v3327
    %v5565 = vunpack.c.h.b16 %v3327
    %v5566 = vunpack.c.l.b16 %v3328
    %v5567 = vunpack.c.h.b16 %v3328
    %v5568 = vunpack.c.l.b16 %v3329
    %v5569 = vunpack.c.h.b16 %v3329
    %v5570 = vunpack.c.l.b16 %v3330
    %v5571 = vunpack.c.l.b16 %v3331
    %v5572 = vunpack.c.h.b16 %v3331
    %v5573 = vunpack.c.l.b16 %v3332
    %v5574 = vunpack.c.h.b16 %v3332
    %v5575 = vunpack.c.l.b16 %v3333
    %v5576 = vunpack.c.h.b16 %v3333
    %v5577 = vunpack.c.l.b16 %v3334
    %v5578 = vunpack.c.l.b16 %v3335
    %v5579 = vunpack.c.h.b16 %v3335
    %v5580 = vunpack.c.l.b16 %v3336
    %v5581 = vunpack.c.h.b16 %v3336
    %v5582 = vunpack.c.l.b16 %v3337
    %v5583 = vunpack.c.h.b16 %v3337
    %v5584 = vunpack.c.l.b16 %v3338
    %v5585 = vunpack.c.l.b16 %v3339
    %v5586 = vunpack.c.h.b16 %v3339
    %v5587 = vunpack.c.l.b16 %v3340
    %v5588 = vunpack.c.h.b16 %v3340
    %v5589 = vunpack.c.l.b16 %v3341
    %v5590 = vunpack.c.h.b16 %v3341
    %v5591 = vunpack.c.l.b16 %v3342
    %v5592 = vunpack.c.l.b16 %v3343
    %v5593 = vunpack.c.h.b16 %v3343
    %v5594 = vunpack.c.l.b16 %v3344
    %v5595 = vunpack.c.h.b16 %v3344
    %v5596 = vunpack.c.l.b16 %v3345
    %v5597 = vunpack.c.h.b16 %v3345
    %v5598 = vunpack.c.l.b16 %v3346
    %v5599 = vunpack.c.l.b16 %v3347
    %v5600 = vunpack.c.h.b16 %v3347
    %v5601 = vunpack.c.l.b16 %v3348
    %v5602 = vunpack.c.h.b16 %v3348
    %v5603 = vunpack.c.l.b16 %v3349
    %v5604 = vunpack.c.h.b16 %v3349
    %v5605 = vunpack.c.l.b16 %v3350
    %v5606 = vunpack.c.l.b16 %v3351
    %v5607 = vunpack.c.h.b16 %v3351
    %v5608 = vunpack.c.l.b16 %v3352
    %v5609 = vunpack.c.h.b16 %v3352
    %v5610 = vunpack.c.l.b16 %v3353
    %v5611 = vunpack.c.h.b16 %v3353
    %v5612 = vunpack.c.l.b16 %v3354
    %v5613 = vunpack.c.l.b16 %v3355
    %v5614 = vunpack.c.h.b16 %v3355
    %v5615 = vunpack.c.l.b16 %v3356
    %v5616 = vunpack.c.h.b16 %v3356
    %v5617 = vunpack.c.l.b16 %v3357
    %v5618 = vunpack.c.h.b16 %v3357
    %v5619 = vunpack.c.l.b16 %v3358
    %v5620 = vunpack.c.l.b16 %v3359
    %v5621 = vunpack.c.h.b16 %v3359
    %v5622 = vunpack.c.l.b16 %v3360
    %v5623 = vunpack.c.h.b16 %v3360
    %v5624 = vunpack.c.l.b16 %v3361
    %v5625 = vunpack.c.h.b16 %v3361
    %v5626 = vunpack.c.l.b16 %v3362
    %v5627 = vunpack.c.l.b16 %v3363
    %v5628 = vunpack.c.h.b16 %v3363
    %v5629 = vunpack.c.l.b16 %v3364
    %v5630 = vunpack.c.h.b16 %v3364
    %v5631 = vunpack.c.l.b16 %v3365
    %v5632 = vunpack.c.h.b16 %v3365
    %v5633 = vunpack.c.l.b16 %v3366
    %v5634 = vunpack.c.l.b16 %v3367
    %v5635 = vunpack.c.h.b16 %v3367
    %v5636 = vunpack.c.l.b16 %v3368
    %v5637 = vunpack.c.h.b16 %v3368
    %v5638 = vunpack.c.l.b16 %v3369
    %v5639 = vunpack.c.h.b16 %v3369
    %v5640 = vunpack.c.l.b16 %v3370
    %v5641 = vunpack.c.l.b16 %v3371
    %v5642 = vunpack.c.h.b16 %v3371
    %v5643 = vunpack.c.l.b16 %v3372
    %v5644 = vunpack.c.h.b16 %v3372
    %v5645 = vunpack.c.l.b16 %v3373
    %v5646 = vunpack.c.h.b16 %v3373
    %v5647 = vunpack.c.l.b16 %v3374
    %v5648 = vunpack.c.l.b16 %v3375
    %v5649 = vunpack.c.h.b16 %v3375
    %v5650 = vunpack.c.l.b16 %v3376
    %v5651 = vunpack.c.h.b16 %v3376
    %v5652 = vunpack.c.l.b16 %v3377
    %v5653 = vunpack.c.h.b16 %v3377
    %v5654 = vunpack.c.l.b16 %v3378
    %v5655 = vunpack.c.l.b16 %v3379
    %v5656 = vunpack.c.h.b16 %v3379
    %v5657 = vunpack.c.l.b16 %v3380
    %v5658 = vunpack.c.h.b16 %v3380
    %v5659 = vunpack.c.l.b16 %v3381
    %v5660 = vunpack.c.h.b16 %v3381
    %v5661 = vunpack.c.l.b16 %v3382
    %v5662 = vunpack.c.l.b16 %v3383
    %v5663 = vunpack.c.h.b16 %v3383
    %v5664 = vunpack.c.l.b16 %v3384
    %v5665 = vunpack.c.h.b16 %v3384
    %v5666 = vunpack.c.l.b16 %v3385
    %v5667 = vunpack.c.h.b16 %v3385
    %v5668 = vunpack.c.l.b16 %v3386
    %v5669 = vunpack.c.l.b16 %v3387
    %v5670 = vunpack.c.h.b16 %v3387
    %v5671 = vunpack.c.l.b16 %v3388
    %v5672 = vunpack.c.h.b16 %v3388
    %v5673 = vunpack.c.l.b16 %v3389
    %v5674 = vunpack.c.h.b16 %v3389
    %v5675 = vunpack.c.l.b16 %v3390
    %v5676 = vunpack.c.l.b16 %v3391
    %v5677 = vunpack.c.h.b16 %v3391
    %v5678 = vunpack.c.l.b16 %v3392
    %v5679 = vunpack.c.h.b16 %v3392
    %v5680 = vunpack.c.l.b16 %v3393
    %v5681 = vunpack.c.h.b16 %v3393
    %v5682 = vunpack.c.l.b16 %v3394
    %v5683 = vpack.c.b16 %v4234, %v4227
    %v5684 = vpack.c.b16 %v4235, %v4228
    %v5685 = vpack.c.b16 %v4236, %v4229
    %v5686 = vpack.c.b16 %v4237, %v4230
    %v5687 = vpack.c.b16 %v4238, %v4231
    %v5688 = vpack.c.b16 %v4239, %v4232
    %v5689 = vpack.c.b16 %v4240, %v4233
    %v5690 = vpack.c.b16 %v4248, %v4241
    %v5691 = vpack.c.b16 %v4249, %v4242
    %v5692 = vpack.c.b16 %v4250, %v4243
    %v5693 = vpack.c.b16 %v4251, %v4244
    %v5694 = vpack.c.b16 %v4252, %v4245
    %v5695 = vpack.c.b16 %v4253, %v4246
    %v5696 = vpack.c.b16 %v4254, %v4247
    %v5697 = vpack.c.b16 %v4262, %v4255
    %v5698 = vpack.c.b16 %v4263, %v4256
    %v5699 = vpack.c.b16 %v4264, %v4257
    %v5700 = vpack.c.b16 %v4265, %v4258
    %v5701 = vpack.c.b16 %v4266, %v4259
    %v5702 = vpack.c.b16 %v4267, %v4260
    %v5703 = vpack.c.b16 %v4268, %v4261
    %v5704 = vpack.c.b16 %v4276, %v4269
    %v5705 = vpack.c.b16 %v4277, %v4270
    %v5706 = vpack.c.b16 %v4278, %v4271
    %v5707 = vpack.c.b16 %v4279, %v4272
    %v5708 = vpack.c.b16 %v4280, %v4273
    %v5709 = vpack.c.b16 %v4281, %v4274
    %v5710 = vpack.c.b16 %v4282, %v4275
    %v5711 = vpack.c.b16 %v4290, %v4283
    %v5712 = vpack.c.b16 %v4291, %v4284
    %v5713 = vpack.c.b16 %v4292, %v4285
    %v5714 = vpack.c.b16 %v4293, %v4286
    %v5715 = vpack.c.b16 %v4294, %v4287
    %v5716 = vpack.c.b16 %v4295, %v4288
    %v5717 = vpack.c.b16 %v4296, %v4289
    %v5718 = vpack.c.b16 %v4304, %v4297
    %v5719 = vpack.c.b16 %v4305, %v4298
    %v5720 = vpack.c.b16 %v4306, %v4299
    %v5721 = vpack.c.b16 %v4307, %v4300
    %v5722 = vpack.c.b16 %v4308, %v4301
    %v5723 = vpack.c.b16 %v4309, %v4302
    %v5724 = vpack.c.b16 %v4310, %v4303
    %v5725 = vpack.c.b16 %v4318, %v4311
    %v5726 = vpack.c.b16 %v4319, %v4312
    %v5727 = vpack.c.b16 %v4320, %v4313
    %v5728 = vpack.c.b16 %v4321, %v4314
    %v5729 = vpack.c.b16 %v4322, %v4315
    %v5730 = vpack.c.b16 %v4323, %v4316
    %v5731 = vpack.c.b16 %v4324, %v4317
    %v5732 = vpack.c.b16 %v4332, %v4325
    %v5733 = vpack.c.b16 %v4333, %v4326
    %v5734 = vpack.c.b16 %v4334, %v4327
    %v5735 = vpack.c.b16 %v4335, %v4328
    %v5736 = vpack.c.b16 %v4336, %v4329
    %v5737 = vpack.c.b16 %v4337, %v4330
    %v5738 = vpack.c.b16 %v4338, %v4331
    %v5739 = vpack.c.b16 %v4346, %v4339
    %v5740 = vpack.c.b16 %v4347, %v4340
    %v5741 = vpack.c.b16 %v4348, %v4341
    %v5742 = vpack.c.b16 %v4349, %v4342
    %v5743 = vpack.c.b16 %v4350, %v4343
    %v5744 = vpack.c.b16 %v4351, %v4344
    %v5745 = vpack.c.b16 %v4352, %v4345
    %v5746 = vpack.c.b16 %v4360, %v4353
    %v5747 = vpack.c.b16 %v4361, %v4354
    %v5748 = vpack.c.b16 %v4362, %v4355
    %v5749 = vpack.c.b16 %v4363, %v4356
    %v5750 = vpack.c.b16 %v4364, %v4357
    %v5751 = vpack.c.b16 %v4365, %v4358
    %v5752 = vpack.c.b16 %v4366, %v4359
    %v5753 = vpack.c.b16 %v4374, %v4367
    %v5754 = vpack.c.b16 %v4375, %v4368
    %v5755 = vpack.c.b16 %v4376, %v4369
    %v5756 = vpack.c.b16 %v4377, %v4370
    %v5757 = vpack.c.b16 %v4378, %v4371
    %v5758 = vpack.c.b16 %v4379, %v4372
    %v5759 = vpack.c.b16 %v4380, %v4373
    %v5760 = vpack.c.b16 %v4388, %v4381
    %v5761 = vpack.c.b16 %v4389, %v4382
    %v5762 = vpack.c.b16 %v4390, %v4383
    %v5763 = vpack.c.b16 %v4391, %v4384
    %v5764 = vpack.c.b16 %v4392, %v4385
    %v5765 = vpack.c.b16 %v4393, %v4386
    %v5766 = vpack.c.b16 %v4394, %v4387
    %v5767 = vpack.c.b16 %v4402, %v4395
    %v5768 = vpack.c.b16 %v4403, %v4396
    %v5769 = vpack.c.b16 %v4404, %v4397
    %v5770 = vpack.c.b16 %v4405, %v4398
    %v5771 = vpack.c.b16 %v4406, %v4399
    %v5772 = vpack.c.b16 %v4407, %v4400
    %v5773 = vpack.c.b16 %v4408, %v4401
    %v5774 = vpack.c.b16 %v4416, %v4409
    %v5775 = vpack.c.b16 %v4417, %v4410
    %v5776 = vpack.c.b16 %v4418, %v4411
    %v5777 = vpack.c.b16 %v4419, %v4412
    %v5778 = vpack.c.b16 %v4420, %v4413
    %v5779 = vpack.c.b16 %v4421, %v4414
    %v5780 = vpack.c.b16 %v4422, %v4415
    %v5781 = vpack.c.b16 %v4430, %v4423
    %v5782 = vpack.c.b16 %v4431, %v4424
    %v5783 = vpack.c.b16 %v4432, %v4425
    %v5784 = vpack.c.b16 %v4433, %v4426
    %v5785 = vpack.c.b16 %v4434, %v4427
    %v5786 = vpack.c.b16 %v4435, %v4428
    %v5787 = vpack.c.b16 %v4436, %v4429
    %v5788 = vpack.c.b16 %v4444, %v4437
    %v5789 = vpack.c.b16 %v4445, %v4438
    %v5790 = vpack.c.b16 %v4446, %v4439
    %v5791 = vpack.c.b16 %v4447, %v4440
    %v5792 = vpack.c.b16 %v4448, %v4441
    %v5793 = vpack.c.b16 %v4449, %v4442
    %v5794 = vpack.c.b16 %v4450, %v4443
    %v5795 = vpack.c.b16 %v4458, %v4451
    %v5796 = vpack.c.b16 %v4459, %v4452
    %v5797 = vpack.c.b16 %v4460, %v4453
    %v5798 = vpack.c.b16 %v4461, %v4454
    %v5799 = vpack.c.b16 %v4462, %v4455
    %v5800 = vpack.c.b16 %v4463, %v4456
    %v5801 = vpack.c.b16 %v4464, %v4457
    %v5802 = vpack.c.b16 %v4472, %v4465
    %v5803 = vpack.c.b16 %v4473, %v4466
    %v5804 = vpack.c.b16 %v4474, %v4467
    %v5805 = vpack.c.b16 %v4475, %v4468
    %v5806 = vpack.c.b16 %v4476, %v4469
    %v5807 = vpack.c.b16 %v4477, %v4470
    %v5808 = vpack.c.b16 %v4478, %v4471
    %v5809 = vpack.c.b16 %v4486, %v4479
    %v5810 = vpack.c.b16 %v4487, %v4480
    %v5811 = vpack.c.b16 %v4488, %v4481
    %v5812 = vpack.c.b16 %v4489, %v4482
    %v5813 = vpack.c.b16 %v4490, %v4483
    %v5814 = vpack.c.b16 %v4491, %v4484
    %v5815 = vpack.c.b16 %v4492, %v4485
    %v5816 = vpack.c.b16 %v4500, %v4493
    %v5817 = vpack.c.b16 %v4501, %v4494
    %v5818 = vpack.c.b16 %v4502, %v4495
    %v5819 = vpack.c.b16 %v4503, %v4496
    %v5820 = vpack.c.b16 %v4504, %v4497
    %v5821 = vpack.c.b16 %v4505, %v4498
    %v5822 = vpack.c.b16 %v4506, %v4499
    %v5823 = vpack.c.b16 %v4514, %v4507
    %v5824 = vpack.c.b16 %v4515, %v4508
    %v5825 = vpack.c.b16 %v4516, %v4509
    %v5826 = vpack.c.b16 %v4517, %v4510
    %v5827 = vpack.c.b16 %v4518, %v4511
    %v5828 = vpack.c.b16 %v4519, %v4512
    %v5829 = vpack.c.b16 %v4520, %v4513
    %v5830 = vpack.c.b16 %v4528, %v4521
    %v5831 = vpack.c.b16 %v4529, %v4522
    %v5832 = vpack.c.b16 %v4530, %v4523
    %v5833 = vpack.c.b16 %v4531, %v4524
    %v5834 = vpack.c.b16 %v4532, %v4525
    %v5835 = vpack.c.b16 %v4533, %v4526
    %v5836 = vpack.c.b16 %v4534, %v4527
    %v5837 = vpack.c.b16 %v4542, %v4535
    %v5838 = vpack.c.b16 %v4543, %v4536
    %v5839 = vpack.c.b16 %v4544, %v4537
    %v5840 = vpack.c.b16 %v4545, %v4538
    %v5841 = vpack.c.b16 %v4546, %v4539
    %v5842 = vpack.c.b16 %v4547, %v4540
    %v5843 = vpack.c.b16 %v4548, %v4541
    %v5844 = vpack.c.b16 %v4556, %v4549
    %v5845 = vpack.c.b16 %v4557, %v4550
    %v5846 = vpack.c.b16 %v4558, %v4551
    %v5847 = vpack.c.b16 %v4559, %v4552
    %v5848 = vpack.c.b16 %v4560, %v4553
    %v5849 = vpack.c.b16 %v4561, %v4554
    %v5850 = vpack.c.b16 %v4562, %v4555
    %v5851 = vpack.c.b16 %v4570, %v4563
    %v5852 = vpack.c.b16 %v4571, %v4564
    %v5853 = vpack.c.b16 %v4572, %v4565
    %v5854 = vpack.c.b16 %v4573, %v4566
    %v5855 = vpack.c.b16 %v4574, %v4567
    %v5856 = vpack.c.b16 %v4575, %v4568
    %v5857 = vpack.c.b16 %v4576, %v4569
    %v5858 = vpack.c.b16 %v4584, %v4577
    %v5859 = vpack.c.b16 %v4585, %v4578
    %v5860 = vpack.c.b16 %v4586, %v4579
    %v5861 = vpack.c.b16 %v4587, %v4580
    %v5862 = vpack.c.b16 %v4588, %v4581
    %v5863 = vpack.c.b16 %v4589, %v4582
    %v5864 = vpack.c.b16 %v4590, %v4583
    %v5865 = vpack.c.b16 %v4598, %v4591
    %v5866 = vpack.c.b16 %v4599, %v4592
    %v5867 = vpack.c.b16 %v4600, %v4593
    %v5868 = vpack.c.b16 %v4601, %v4594
    %v5869 = vpack.c.b16 %v4602, %v4595
    %v5870 = vpack.c.b16 %v4603, %v4596
    %v5871 = vpack.c.b16 %v4604, %v4597
    %v5872 = vpack.c.b16 %v4612, %v4605
    %v5873 = vpack.c.b16 %v4613, %v4606
    %v5874 = vpack.c.b16 %v4614, %v4607
    %v5875 = vpack.c.b16 %v4615, %v4608
    %v5876 = vpack.c.b16 %v4616, %v4609
    %v5877 = vpack.c.b16 %v4617, %v4610
    %v5878 = vpack.c.b16 %v4618, %v4611
    %v5879 = vpack.c.b16 %v4626, %v4619
    %v5880 = vpack.c.b16 %v4627, %v4620
    %v5881 = vpack.c.b16 %v4628, %v4621
    %v5882 = vpack.c.b16 %v4629, %v4622
    %v5883 = vpack.c.b16 %v4630, %v4623
    %v5884 = vpack.c.b16 %v4631, %v4624
    %v5885 = vpack.c.b16 %v4632, %v4625
    %v5886 = vpack.c.b16 %v4640, %v4633
    %v5887 = vpack.c.b16 %v4641, %v4634
    %v5888 = vpack.c.b16 %v4642, %v4635
    %v5889 = vpack.c.b16 %v4643, %v4636
    %v5890 = vpack.c.b16 %v4644, %v4637
    %v5891 = vpack.c.b16 %v4645, %v4638
    %v5892 = vpack.c.b16 %v4646, %v4639
    %v5893 = vpack.c.b16 %v4654, %v4647
    %v5894 = vpack.c.b16 %v4655, %v4648
    %v5895 = vpack.c.b16 %v4656, %v4649
    %v5896 = vpack.c.b16 %v4657, %v4650
    %v5897 = vpack.c.b16 %v4658, %v4651
    %v5898 = vpack.c.b16 %v4659, %v4652
    %v5899 = vpack.c.b16 %v4660, %v4653
    %v5900 = vpack.c.b16 %v4668, %v4661
    %v5901 = vpack.c.b16 %v4669, %v4662
    %v5902 = vpack.c.b16 %v4670, %v4663
    %v5903 = vpack.c.b16 %v4671, %v4664
    %v5904 = vpack.c.b16 %v4672, %v4665
    %v5905 = vpack.c.b16 %v4673, %v4666
    %v5906 = vpack.c.b16 %v4674, %v4667
    %v5907 = vpack.c.b16 %v4682, %v4675
    %v5908 = vpack.c.b16 %v4683, %v4676
    %v5909 = vpack.c.b16 %v4684, %v4677
    %v5910 = vpack.c.b16 %v4685, %v4678
    %v5911 = vpack.c.b16 %v4686, %v4679
    %v5912 = vpack.c.b16 %v4687, %v4680
    %v5913 = vpack.c.b16 %v4688, %v4681
    %v5914 = vpack.c.b16 %v4696, %v4689
    %v5915 = vpack.c.b16 %v4697, %v4690
    %v5916 = vpack.c.b16 %v4698, %v4691
    %v5917 = vpack.c.b16 %v4699, %v4692
    %v5918 = vpack.c.b16 %v4700, %v4693
    %v5919 = vpack.c.b16 %v4701, %v4694
    %v5920 = vpack.c.b16 %v4702, %v4695
    %v5921 = vpack.c.b16 %v4710, %v4703
    %v5922 = vpack.c.b16 %v4711, %v4704
    %v5923 = vpack.c.b16 %v4712, %v4705
    %v5924 = vpack.c.b16 %v4713, %v4706
    %v5925 = vpack.c.b16 %v4714, %v4707
    %v5926 = vpack.c.b16 %v4715, %v4708
    %v5927 = vpack.c.b16 %v4716, %v4709
    %v5928 = vpack.c.b16 %v4724, %v4717
    %v5929 = vpack.c.b16 %v4725, %v4718
    %v5930 = vpack.c.b16 %v4726, %v4719
    %v5931 = vpack.c.b16 %v4727, %v4720
    %v5932 = vpack.c.b16 %v4728, %v4721
    %v5933 = vpack.c.b16 %v4729, %v4722
    %v5934 = vpack.c.b16 %v4730, %v4723
    %v5935 = vpack.c.b16 %v4738, %v4731
    %v5936 = vpack.c.b16 %v4739, %v4732
    %v5937 = vpack.c.b16 %v4740, %v4733
    %v5938 = vpack.c.b16 %v4741, %v4734
    %v5939 = vpack.c.b16 %v4742, %v4735
    %v5940 = vpack.c.b16 %v4743, %v4736
    %v5941 = vpack.c.b16 %v4744, %v4737
    %v5942 = vpack.c.b16 %v4752, %v4745
    %v5943 = vpack.c.b16 %v4753, %v4746
    %v5944 = vpack.c.b16 %v4754, %v4747
    %v5945 = vpack.c.b16 %v4755, %v4748
    %v5946 = vpack.c.b16 %v4756, %v4749
    %v5947 = vpack.c.b16 %v4757, %v4750
    %v5948 = vpack.c.b16 %v4758, %v4751
    %v5949 = vpack.c.b16 %v4766, %v4759
    %v5950 = vpack.c.b16 %v4767, %v4760
    %v5951 = vpack.c.b16 %v4768, %v4761
    %v5952 = vpack.c.b16 %v4769, %v4762
    %v5953 = vpack.c.b16 %v4770, %v4763
    %v5954 = vpack.c.b16 %v4771, %v4764
    %v5955 = vpack.c.b16 %v4772, %v4765
    %v5956 = vpack.c.b16 %v4780, %v4773
    %v5957 = vpack.c.b16 %v4781, %v4774
    %v5958 = vpack.c.b16 %v4782, %v4775
    %v5959 = vpack.c.b16 %v4783, %v4776
    %v5960 = vpack.c.b16 %v4784, %v4777
    %v5961 = vpack.c.b16 %v4785, %v4778
    %v5962 = vpack.c.b16 %v4786, %v4779
    %v5963 = vpack.c.b16 %v4794, %v4787
    %v5964 = vpack.c.b16 %v4795, %v4788
    %v5965 = vpack.c.b16 %v4796, %v4789
    %v5966 = vpack.c.b16 %v4797, %v4790
    %v5967 = vpack.c.b16 %v4798, %v4791
    %v5968 = vpack.c.b16 %v4799, %v4792
    %v5969 = vpack.c.b16 %v4800, %v4793
    %v5970 = vpack.c.b16 %v4808, %v4801
    %v5971 = vpack.c.b16 %v4809, %v4802
    %v5972 = vpack.c.b16 %v4810, %v4803
    %v5973 = vpack.c.b16 %v4811, %v4804
    %v5974 = vpack.c.b16 %v4812, %v4805
    %v5975 = vpack.c.b16 %v4813, %v4806
    %v5976 = vpack.c.b16 %v4814, %v4807
    %v5977 = vpack.c.b16 %v4822, %v4815
    %v5978 = vpack.c.b16 %v4823, %v4816
    %v5979 = vpack.c.b16 %v4824, %v4817
    %v5980 = vpack.c.b16 %v4825, %v4818
    %v5981 = vpack.c.b16 %v4826, %v4819
    %v5982 = vpack.c.b16 %v4827, %v4820
    %v5983 = vpack.c.b16 %v4828, %v4821
    %v5984 = vpack.c.b16 %v4836, %v4829
    %v5985 = vpack.c.b16 %v4837, %v4830
    %v5986 = vpack.c.b16 %v4838, %v4831
    %v5987 = vpack.c.b16 %v4839, %v4832
    %v5988 = vpack.c.b16 %v4840, %v4833
    %v5989 = vpack.c.b16 %v4841, %v4834
    %v5990 = vpack.c.b16 %v4842, %v4835
    %v5991 = vpack.c.b16 %v4850, %v4843
    %v5992 = vpack.c.b16 %v4851, %v4844
    %v5993 = vpack.c.b16 %v4852, %v4845
    %v5994 = vpack.c.b16 %v4853, %v4846
    %v5995 = vpack.c.b16 %v4854, %v4847
    %v5996 = vpack.c.b16 %v4855, %v4848
    %v5997 = vpack.c.b16 %v4856, %v4849
    %v5998 = vpack.c.b16 %v4864, %v4857
    %v5999 = vpack.c.b16 %v4865, %v4858
    %v6000 = vpack.c.b16 %v4866, %v4859
    %v6001 = vpack.c.b16 %v4867, %v4860
    %v6002 = vpack.c.b16 %v4868, %v4861
    %v6003 = vpack.c.b16 %v4869, %v4862
    %v6004 = vpack.c.b16 %v4870, %v4863
    %v6005 = vpack.c.b16 %v4878, %v4871
    %v6006 = vpack.c.b16 %v4879, %v4872
    %v6007 = vpack.c.b16 %v4880, %v4873
    %v6008 = vpack.c.b16 %v4881, %v4874
    %v6009 = vpack.c.b16 %v4882, %v4875
    %v6010 = vpack.c.b16 %v4883, %v4876
    %v6011 = vpack.c.b16 %v4884, %v4877
    %v6012 = vpack.c.b16 %v4892, %v4885
    %v6013 = vpack.c.b16 %v4893, %v4886
    %v6014 = vpack.c.b16 %v4894, %v4887
    %v6015 = vpack.c.b16 %v4895, %v4888
    %v6016 = vpack.c.b16 %v4896, %v4889
    %v6017 = vpack.c.b16 %v4897, %v4890
    %v6018 = vpack.c.b16 %v4898, %v4891
    %v6019 = vpack.c.b16 %v4906, %v4899
    %v6020 = vpack.c.b16 %v4907, %v4900
    %v6021 = vpack.c.b16 %v4908, %v4901
    %v6022 = vpack.c.b16 %v4909, %v4902
    %v6023 = vpack.c.b16 %v4910, %v4903
    %v6024 = vpack.c.b16 %v4911, %v4904
    %v6025 = vpack.c.b16 %v4912, %v4905
    %v6026 = vpack.c.b16 %v4920, %v4913
    %v6027 = vpack.c.b16 %v4921, %v4914
    %v6028 = vpack.c.b16 %v4922, %v4915
    %v6029 = vpack.c.b16 %v4923, %v4916
    %v6030 = vpack.c.b16 %v4924, %v4917
    %v6031 = vpack.c.b16 %v4925, %v4918
    %v6032 = vpack.c.b16 %v4926, %v4919
    %v6033 = vpack.c.b16 %v4934, %v4927
    %v6034 = vpack.c.b16 %v4935, %v4928
    %v6035 = vpack.c.b16 %v4936, %v4929
    %v6036 = vpack.c.b16 %v4937, %v4930
    %v6037 = vpack.c.b16 %v4938, %v4931
    %v6038 = vpack.c.b16 %v4939, %v4932
    %v6039 = vpack.c.b16 %v4940, %v4933
    %v6040 = vpack.c.b16 %v4948, %v4941
    %v6041 = vpack.c.b16 %v4949, %v4942
    %v6042 = vpack.c.b16 %v4950, %v4943
    %v6043 = vpack.c.b16 %v4951, %v4944
    %v6044 = vpack.c.b16 %v4952, %v4945
    %v6045 = vpack.c.b16 %v4953, %v4946
    %v6046 = vpack.c.b16 %v4954, %v4947
    %v6047 = vpack.c.b16 %v4962, %v4955
    %v6048 = vpack.c.b16 %v4963, %v4956
    %v6049 = vpack.c.b16 %v4964, %v4957
    %v6050 = vpack.c.b16 %v4965, %v4958
    %v6051 = vpack.c.b16 %v4966, %v4959
    %v6052 = vpack.c.b16 %v4967, %v4960
    %v6053 = vpack.c.b16 %v4968, %v4961
    %v6054 = vpack.c.b16 %v4976, %v4969
    %v6055 = vpack.c.b16 %v4977, %v4970
    %v6056 = vpack.c.b16 %v4978, %v4971
    %v6057 = vpack.c.b16 %v4979, %v4972
    %v6058 = vpack.c.b16 %v4980, %v4973
    %v6059 = vpack.c.b16 %v4981, %v4974
    %v6060 = vpack.c.b16 %v4982, %v4975
    %v6061 = vpack.c.b16 %v4990, %v4983
    %v6062 = vpack.c.b16 %v4991, %v4984
    %v6063 = vpack.c.b16 %v4992, %v4985
    %v6064 = vpack.c.b16 %v4993, %v4986
    %v6065 = vpack.c.b16 %v4994, %v4987
    %v6066 = vpack.c.b16 %v4995, %v4988
    %v6067 = vpack.c.b16 %v4996, %v4989
    %v6068 = vpack.c.b16 %v5004, %v4997
    %v6069 = vpack.c.b16 %v5005, %v4998
    %v6070 = vpack.c.b16 %v5006, %v4999
    %v6071 = vpack.c.b16 %v5007, %v5000
    %v6072 = vpack.c.b16 %v5008, %v5001
    %v6073 = vpack.c.b16 %v5009, %v5002
    %v6074 = vpack.c.b16 %v5010, %v5003
    %v6075 = vpack.c.b16 %v5018, %v5011
    %v6076 = vpack.c.b16 %v5019, %v5012
    %v6077 = vpack.c.b16 %v5020, %v5013
    %v6078 = vpack.c.b16 %v5021, %v5014
    %v6079 = vpack.c.b16 %v5022, %v5015
    %v6080 = vpack.c.b16 %v5023, %v5016
    %v6081 = vpack.c.b16 %v5024, %v5017
    %v6082 = vpack.c.b16 %v5032, %v5025
    %v6083 = vpack.c.b16 %v5033, %v5026
    %v6084 = vpack.c.b16 %v5034, %v5027
    %v6085 = vpack.c.b16 %v5035, %v5028
    %v6086 = vpack.c.b16 %v5036, %v5029
    %v6087 = vpack.c.b16 %v5037, %v5030
    %v6088 = vpack.c.b16 %v5038, %v5031
    %v6089 = vpack.c.b16 %v5046, %v5039
    %v6090 = vpack.c.b16 %v5047, %v5040
    %v6091 = vpack.c.b16 %v5048, %v5041
    %v6092 = vpack.c.b16 %v5049, %v5042
    %v6093 = vpack.c.b16 %v5050, %v5043
    %v6094 = vpack.c.b16 %v5051, %v5044
    %v6095 = vpack.c.b16 %v5052, %v5045
    %v6096 = vpack.c.b16 %v5060, %v5053
    %v6097 = vpack.c.b16 %v5061, %v5054
    %v6098 = vpack.c.b16 %v5062, %v5055
    %v6099 = vpack.c.b16 %v5063, %v5056
    %v6100 = vpack.c.b16 %v5064, %v5057
    %v6101 = vpack.c.b16 %v5065, %v5058
    %v6102 = vpack.c.b16 %v5066, %v5059
    %v6103 = vpack.c.b16 %v5074, %v5067
    %v6104 = vpack.c.b16 %v5075, %v5068
    %v6105 = vpack.c.b16 %v5076, %v5069
    %v6106 = vpack.c.b16 %v5077, %v5070
    %v6107 = vpack.c.b16 %v5078, %v5071
    %v6108 = vpack.c.b16 %v5079, %v5072
    %v6109 = vpack.c.b16 %v5080, %v5073
    %v6110 = vpack.c.b16 %v5088, %v5081
    %v6111 = vpack.c.b16 %v5089, %v5082
    %v6112 = vpack.c.b16 %v5090, %v5083
    %v6113 = vpack.c.b16 %v5091, %v5084
    %v6114 = vpack.c.b16 %v5092, %v5085
    %v6115 = vpack.c.b16 %v5093, %v5086
    %v6116 = vpack.c.b16 %v5094, %v5087
    %v6117 = vpack.c.b16 %v5102, %v5095
    %v6118 = vpack.c.b16 %v5103, %v5096
    %v6119 = vpack.c.b16 %v5104, %v5097
    %v6120 = vpack.c.b16 %v5105, %v5098
    %v6121 = vpack.c.b16 %v5106, %v5099
    %v6122 = vpack.c.b16 %v5107, %v5100
    %v6123 = vpack.c.b16 %v5108, %v5101
    %v6124 = vpack.c.b16 %v5116, %v5109
    %v6125 = vpack.c.b16 %v5117, %v5110
    %v6126 = vpack.c.b16 %v5118, %v5111
    %v6127 = vpack.c.b16 %v5119, %v5112
    %v6128 = vpack.c.b16 %v5120, %v5113
    %v6129 = vpack.c.b16 %v5121, %v5114
    %v6130 = vpack.c.b16 %v5122, %v5115
    %v6131 = vpack.c.b16 %v5130, %v5123
    %v6132 = vpack.c.b16 %v5131, %v5124
    %v6133 = vpack.c.b16 %v5132, %v5125
    %v6134 = vpack.c.b16 %v5133, %v5126
    %v6135 = vpack.c.b16 %v5134, %v5127
    %v6136 = vpack.c.b16 %v5135, %v5128
    %v6137 = vpack.c.b16 %v5136, %v5129
    %v6138 = vpack.c.b16 %v5144, %v5137
    %v6139 = vpack.c.b16 %v5145, %v5138
    %v6140 = vpack.c.b16 %v5146, %v5139
    %v6141 = vpack.c.b16 %v5147, %v5140
    %v6142 = vpack.c.b16 %v5148, %v5141
    %v6143 = vpack.c.b16 %v5149, %v5142
    %v6144 = vpack.c.b16 %v5150, %v5143
    %v6145 = vpack.c.b16 %v5158, %v5151
    %v6146 = vpack.c.b16 %v5159, %v5152
    %v6147 = vpack.c.b16 %v5160, %v5153
    %v6148 = vpack.c.b16 %v5161, %v5154
    %v6149 = vpack.c.b16 %v5162, %v5155
    %v6150 = vpack.c.b16 %v5163, %v5156
    %v6151 = vpack.c.b16 %v5164, %v5157
    %v6152 = vpack.c.b16 %v5172, %v5165
    %v6153 = vpack.c.b16 %v5173, %v5166
    %v6154 = vpack.c.b16 %v5174, %v5167
    %v6155 = vpack.c.b16 %v5175, %v5168
    %v6156 = vpack.c.b16 %v5176, %v5169
    %v6157 = vpack.c.b16 %v5177, %v5170
    %v6158 = vpack.c.b16 %v5178, %v5171
    %v6159 = vpack.c.b16 %v5186, %v5179
    %v6160 = vpack.c.b16 %v5187, %v5180
    %v6161 = vpack.c.b16 %v5188, %v5181
    %v6162 = vpack.c.b16 %v5189, %v5182
    %v6163 = vpack.c.b16 %v5190, %v5183
    %v6164 = vpack.c.b16 %v5191, %v5184
    %v6165 = vpack.c.b16 %v5192, %v5185
    %v6166 = vpack.c.b16 %v5200, %v5193
    %v6167 = vpack.c.b16 %v5201, %v5194
    %v6168 = vpack.c.b16 %v5202, %v5195
    %v6169 = vpack.c.b16 %v5203, %v5196
    %v6170 = vpack.c.b16 %v5204, %v5197
    %v6171 = vpack.c.b16 %v5205, %v5198
    %v6172 = vpack.c.b16 %v5206, %v5199
    %v6173 = vpack.c.b16 %v5214, %v5207
    %v6174 = vpack.c.b16 %v5215, %v5208
    %v6175 = vpack.c.b16 %v5216, %v5209
    %v6176 = vpack.c.b16 %v5217, %v5210
    %v6177 = vpack.c.b16 %v5218, %v5211
    %v6178 = vpack.c.b16 %v5219, %v5212
    %v6179 = vpack.c.b16 %v5220, %v5213
    %v6180 = vpack.c.b16 %v5228, %v5221
    %v6181 = vpack.c.b16 %v5229, %v5222
    %v6182 = vpack.c.b16 %v5230, %v5223
    %v6183 = vpack.c.b16 %v5231, %v5224
    %v6184 = vpack.c.b16 %v5232, %v5225
    %v6185 = vpack.c.b16 %v5233, %v5226
    %v6186 = vpack.c.b16 %v5234, %v5227
    %v6187 = vpack.c.b16 %v5242, %v5235
    %v6188 = vpack.c.b16 %v5243, %v5236
    %v6189 = vpack.c.b16 %v5244, %v5237
    %v6190 = vpack.c.b16 %v5245, %v5238
    %v6191 = vpack.c.b16 %v5246, %v5239
    %v6192 = vpack.c.b16 %v5247, %v5240
    %v6193 = vpack.c.b16 %v5248, %v5241
    %v6194 = vpack.c.b16 %v5256, %v5249
    %v6195 = vpack.c.b16 %v5257, %v5250
    %v6196 = vpack.c.b16 %v5258, %v5251
    %v6197 = vpack.c.b16 %v5259, %v5252
    %v6198 = vpack.c.b16 %v5260, %v5253
    %v6199 = vpack.c.b16 %v5261, %v5254
    %v6200 = vpack.c.b16 %v5262, %v5255
    %v6201 = vpack.c.b16 %v5270, %v5263
    %v6202 = vpack.c.b16 %v5271, %v5264
    %v6203 = vpack.c.b16 %v5272, %v5265
    %v6204 = vpack.c.b16 %v5273, %v5266
    %v6205 = vpack.c.b16 %v5274, %v5267
    %v6206 = vpack.c.b16 %v5275, %v5268
    %v6207 = vpack.c.b16 %v5276, %v5269
    %v6208 = vpack.c.b16 %v5284, %v5277
    %v6209 = vpack.c.b16 %v5285, %v5278
    %v6210 = vpack.c.b16 %v5286, %v5279
    %v6211 = vpack.c.b16 %v5287, %v5280
    %v6212 = vpack.c.b16 %v5288, %v5281
    %v6213 = vpack.c.b16 %v5289, %v5282
    %v6214 = vpack.c.b16 %v5290, %v5283
    %v6215 = vpack.c.b16 %v5298, %v5291
    %v6216 = vpack.c.b16 %v5299, %v5292
    %v6217 = vpack.c.b16 %v5300, %v5293
    %v6218 = vpack.c.b16 %v5301, %v5294
    %v6219 = vpack.c.b16 %v5302, %v5295
    %v6220 = vpack.c.b16 %v5303, %v5296
    %v6221 = vpack.c.b16 %v5304, %v5297
    %v6222 = vpack.c.b16 %v5312, %v5305
    %v6223 = vpack.c.b16 %v5313, %v5306
    %v6224 = vpack.c.b16 %v5314, %v5307
    %v6225 = vpack.c.b16 %v5315, %v5308
    %v6226 = vpack.c.b16 %v5316, %v5309
    %v6227 = vpack.c.b16 %v5317, %v5310
    %v6228 = vpack.c.b16 %v5318, %v5311
    %v6229 = vpack.c.b16 %v5326, %v5319
    %v6230 = vpack.c.b16 %v5327, %v5320
    %v6231 = vpack.c.b16 %v5328, %v5321
    %v6232 = vpack.c.b16 %v5329, %v5322
    %v6233 = vpack.c.b16 %v5330, %v5323
    %v6234 = vpack.c.b16 %v5331, %v5324
    %v6235 = vpack.c.b16 %v5332, %v5325
    %v6236 = vpack.c.b16 %v5340, %v5333
    %v6237 = vpack.c.b16 %v5341, %v5334
    %v6238 = vpack.c.b16 %v5342, %v5335
    %v6239 = vpack.c.b16 %v5343, %v5336
    %v6240 = vpack.c.b16 %v5344, %v5337
    %v6241 = vpack.c.b16 %v5345, %v5338
    %v6242 = vpack.c.b16 %v5346, %v5339
    %v6243 = vpack.c.b16 %v5354, %v5347
    %v6244 = vpack.c.b16 %v5355, %v5348
    %v6245 = vpack.c.b16 %v5356, %v5349
    %v6246 = vpack.c.b16 %v5357, %v5350
    %v6247 = vpack.c.b16 %v5358, %v5351
    %v6248 = vpack.c.b16 %v5359, %v5352
    %v6249 = vpack.c.b16 %v5360, %v5353
    %v6250 = vpack.c.b16 %v5368, %v5361
    %v6251 = vpack.c.b16 %v5369, %v5362
    %v6252 = vpack.c.b16 %v5370, %v5363
    %v6253 = vpack.c.b16 %v5371, %v5364
    %v6254 = vpack.c.b16 %v5372, %v5365
    %v6255 = vpack.c.b16 %v5373, %v5366
    %v6256 = vpack.c.b16 %v5374, %v5367
    %v6257 = vpack.c.b16 %v5382, %v5375
    %v6258 = vpack.c.b16 %v5383, %v5376
    %v6259 = vpack.c.b16 %v5384, %v5377
    %v6260 = vpack.c.b16 %v5385, %v5378
    %v6261 = vpack.c.b16 %v5386, %v5379
    %v6262 = vpack.c.b16 %v5387, %v5380
    %v6263 = vpack.c.b16 %v5388, %v5381
    %v6264 = vpack.c.b16 %v5396, %v5389
    %v6265 = vpack.c.b16 %v5397, %v5390
    %v6266 = vpack.c.b16 %v5398, %v5391
    %v6267 = vpack.c.b16 %v5399, %v5392
    %v6268 = vpack.c.b16 %v5400, %v5393
    %v6269 = vpack.c.b16 %v5401, %v5394
    %v6270 = vpack.c.b16 %v5402, %v5395
    %v6271 = vpack.c.b16 %v5410, %v5403
    %v6272 = vpack.c.b16 %v5411, %v5404
    %v6273 = vpack.c.b16 %v5412, %v5405
    %v6274 = vpack.c.b16 %v5413, %v5406
    %v6275 = vpack.c.b16 %v5414, %v5407
    %v6276 = vpack.c.b16 %v5415, %v5408
    %v6277 = vpack.c.b16 %v5416, %v5409
    %v6278 = vpack.c.b16 %v5424, %v5417
    %v6279 = vpack.c.b16 %v5425, %v5418
    %v6280 = vpack.c.b16 %v5426, %v5419
    %v6281 = vpack.c.b16 %v5427, %v5420
    %v6282 = vpack.c.b16 %v5428, %v5421
    %v6283 = vpack.c.b16 %v5429, %v5422
    %v6284 = vpack.c.b16 %v5430, %v5423
    %v6285 = vpack.c.b16 %v5438, %v5431
    %v6286 = vpack.c.b16 %v5439, %v5432
    %v6287 = vpack.c.b16 %v5440, %v5433
    %v6288 = vpack.c.b16 %v5441, %v5434
    %v6289 = vpack.c.b16 %v5442, %v5435
    %v6290 = vpack.c.b16 %v5443, %v5436
    %v6291 = vpack.c.b16 %v5444, %v5437
    %v6292 = vpack.c.b16 %v5452, %v5445
    %v6293 = vpack.c.b16 %v5453, %v5446
    %v6294 = vpack.c.b16 %v5454, %v5447
    %v6295 = vpack.c.b16 %v5455, %v5448
    %v6296 = vpack.c.b16 %v5456, %v5449
    %v6297 = vpack.c.b16 %v5457, %v5450
    %v6298 = vpack.c.b16 %v5458, %v5451
    %v6299 = vpack.c.b16 %v5466, %v5459
    %v6300 = vpack.c.b16 %v5467, %v5460
    %v6301 = vpack.c.b16 %v5468, %v5461
    %v6302 = vpack.c.b16 %v5469, %v5462
    %v6303 = vpack.c.b16 %v5470, %v5463
    %v6304 = vpack.c.b16 %v5471, %v5464
    %v6305 = vpack.c.b16 %v5472, %v5465
    %v6306 = vpack.c.b16 %v5480, %v5473
    %v6307 = vpack.c.b16 %v5481, %v5474
    %v6308 = vpack.c.b16 %v5482, %v5475
    %v6309 = vpack.c.b16 %v5483, %v5476
    %v6310 = vpack.c.b16 %v5484, %v5477
    %v6311 = vpack.c.b16 %v5485, %v5478
    %v6312 = vpack.c.b16 %v5486, %v5479
    %v6313 = vpack.c.b16 %v5494, %v5487
    %v6314 = vpack.c.b16 %v5495, %v5488
    %v6315 = vpack.c.b16 %v5496, %v5489
    %v6316 = vpack.c.b16 %v5497, %v5490
    %v6317 = vpack.c.b16 %v5498, %v5491
    %v6318 = vpack.c.b16 %v5499, %v5492
    %v6319 = vpack.c.b16 %v5500, %v5493
    %v6320 = vpack.c.b16 %v5508, %v5501
    %v6321 = vpack.c.b16 %v5509, %v5502
    %v6322 = vpack.c.b16 %v5510, %v5503
    %v6323 = vpack.c.b16 %v5511, %v5504
    %v6324 = vpack.c.b16 %v5512, %v5505
    %v6325 = vpack.c.b16 %v5513, %v5506
    %v6326 = vpack.c.b16 %v5514, %v5507
    %v6327 = vpack.c.b16 %v5522, %v5515
    %v6328 = vpack.c.b16 %v5523, %v5516
    %v6329 = vpack.c.b16 %v5524, %v5517
    %v6330 = vpack.c.b16 %v5525, %v5518
    %v6331 = vpack.c.b16 %v5526, %v5519
    %v6332 = vpack.c.b16 %v5527, %v5520
    %v6333 = vpack.c.b16 %v5528, %v5521
    %v6334 = vpack.c.b16 %v5536, %v5529
    %v6335 = vpack.c.b16 %v5537, %v5530
    %v6336 = vpack.c.b16 %v5538, %v5531
    %v6337 = vpack.c.b16 %v5539, %v5532
    %v6338 = vpack.c.b16 %v5540, %v5533
    %v6339 = vpack.c.b16 %v5541, %v5534
    %v6340 = vpack.c.b16 %v5542, %v5535
    %v6341 = vpack.c.b16 %v5550, %v5543
    %v6342 = vpack.c.b16 %v5551, %v5544
    %v6343 = vpack.c.b16 %v5552, %v5545
    %v6344 = vpack.c.b16 %v5553, %v5546
    %v6345 = vpack.c.b16 %v5554, %v5547
    %v6346 = vpack.c.b16 %v5555, %v5548
    %v6347 = vpack.c.b16 %v5556, %v5549
    %v6348 = vpack.c.b16 %v5564, %v5557
    %v6349 = vpack.c.b16 %v5565, %v5558
    %v6350 = vpack.c.b16 %v5566, %v5559
    %v6351 = vpack.c.b16 %v5567, %v5560
    %v6352 = vpack.c.b16 %v5568, %v5561
    %v6353 = vpack.c.b16 %v5569, %v5562
    %v6354 = vpack.c.b16 %v5570, %v5563
    %v6355 = vpack.c.b16 %v5578, %v5571
    %v6356 = vpack.c.b16 %v5579, %v5572
    %v6357 = vpack.c.b16 %v5580, %v5573
    %v6358 = vpack.c.b16 %v5581, %v5574
    %v6359 = vpack.c.b16 %v5582, %v5575
    %v6360 = vpack.c.b16 %v5583, %v5576
    %v6361 = vpack.c.b16 %v5584, %v5577
    %v6362 = vpack.c.b16 %v5592, %v5585
    %v6363 = vpack.c.b16 %v5593, %v5586
    %v6364 = vpack.c.b16 %v5594, %v5587
    %v6365 = vpack.c.b16 %v5595, %v5588
    %v6366 = vpack.c.b16 %v5596, %v5589
    %v6367 = vpack.c.b16 %v5597, %v5590
    %v6368 = vpack.c.b16 %v5598, %v5591
    %v6369 = vpack.c.b16 %v5606, %v5599
    %v6370 = vpack.c.b16 %v5607, %v5600
    %v6371 = vpack.c.b16 %v5608, %v5601
    %v6372 = vpack.c.b16 %v5609, %v5602
    %v6373 = vpack.c.b16 %v5610, %v5603
    %v6374 = vpack.c.b16 %v5611, %v5604
    %v6375 = vpack.c.b16 %v5612, %v5605
    %v6376 = vpack.c.b16 %v5620, %v5613
    %v6377 = vpack.c.b16 %v5621, %v5614
    %v6378 = vpack.c.b16 %v5622, %v5615
    %v6379 = vpack.c.b16 %v5623, %v5616
    %v6380 = vpack.c.b16 %v5624, %v5617
    %v6381 = vpack.c.b16 %v5625, %v5618
    %v6382 = vpack.c.b16 %v5626, %v5619
    %v6383 = vpack.c.b16 %v5634, %v5627
    %v6384 = vpack.c.b16 %v5635, %v5628
    %v6385 = vpack.c.b16 %v5636, %v5629
    %v6386 = vpack.c.b16 %v5637, %v5630
    %v6387 = vpack.c.b16 %v5638, %v5631
    %v6388 = vpack.c.b16 %v5639, %v5632
    %v6389 = vpack.c.b16 %v5640, %v5633
    %v6390 = vpack.c.b16 %v5648, %v5641
    %v6391 = vpack.c.b16 %v5649, %v5642
    %v6392 = vpack.c.b16 %v5650, %v5643
    %v6393 = vpack.c.b16 %v5651, %v5644
    %v6394 = vpack.c.b16 %v5652, %v5645
    %v6395 = vpack.c.b16 %v5653, %v5646
    %v6396 = vpack.c.b16 %v5654, %v5647
    %v6397 = vpack.c.b16 %v5662, %v5655
    %v6398 = vpack.c.b16 %v5663, %v5656
    %v6399 = vpack.c.b16 %v5664, %v5657
    %v6400 = vpack.c.b16 %v5665, %v5658
    %v6401 = vpack.c.b16 %v5666, %v5659
    %v6402 = vpack.c.b16 %v5667, %v5660
    %v6403 = vpack.c.b16 %v5668, %v5661
    %v6404 = vpack.c.b16 %v5676, %v5669
    %v6405 = vpack.c.b16 %v5677, %v5670
    %v6406 = vpack.c.b16 %v5678, %v5671
    %v6407 = vpack.c.b16 %v5679, %v5672
    %v6408 = vpack.c.b16 %v5680, %v5673
    %v6409 = vpack.c.b16 %v5681, %v5674
    %v6410 = vpack.c.b16 %v5682, %v5675
    %7139 = vmatprep.subr.bf16.mxu0 %v5684
    %7140 = vmatpush1.bf16.msra.mxu0 %v5683
    %7141 = vmatprep.subr.bf16.mxu0 %v5691
    %7142 = vmatpush1.bf16.msra.mxu0 %v5690
    %7143 = vmatprep.subr.bf16.mxu0 %v5698
    %7144 = vmatpush1.bf16.msra.mxu0 %v5697
    %7145 = vmatprep.subr.bf16.mxu0 %v5705
    %7146 = vmatpush1.bf16.msra.mxu0 %v5704
    %7147 = vmatprep.subr.bf16.mxu0 %v5712
    %7148 = vmatpush1.bf16.msra.mxu0 %v5711
    %7149 = vmatprep.subr.bf16.mxu0 %v5719
    %7150 = vmatpush1.bf16.msra.mxu0 %v5718
    %7151 = vmatprep.subr.bf16.mxu0 %v5726
    %7152 = vmatpush1.bf16.msra.mxu0 %v5725
    %7153 = vmatprep.subr.bf16.mxu0 %v5733
    %7154 = vmatpush1.bf16.msra.mxu0 %v5732
    %7155 = vmatprep.subr.bf16.mxu0 %v5740
    %7156 = vmatpush1.bf16.msra.mxu0 %v5739
    %7157 = vmatprep.subr.bf16.mxu0 %v5747
    %7158 = vmatpush1.bf16.msra.mxu0 %v5746
    %7159 = vmatprep.subr.bf16.mxu0 %v5754
    %7160 = vmatpush1.bf16.msra.mxu0 %v5753
    %7161 = vmatprep.subr.bf16.mxu0 %v5761
    %7162 = vmatpush1.bf16.msra.mxu0 %v5760
    %7163 = vmatprep.subr.bf16.mxu0 %v5768
    %7164 = vmatpush1.bf16.msra.mxu0 %v5767
    %7165 = vmatprep.subr.bf16.mxu0 %v5775
    %7166 = vmatpush1.bf16.msra.mxu0 %v5774
    %7167 = vmatprep.subr.bf16.mxu0 %v5782
    %7168 = vmatpush1.bf16.msra.mxu0 %v5781
    %7169 = vmatprep.subr.bf16.mxu0 %v5789
    %7170 = vmatpush1.bf16.msra.mxu0 %v5788
    %7171 = vmatprep.mubr.bf16.mxu0 %v2551
    %7172 = vmatmul.mubr.bf16.gmra.mrb[0].mxu0 %v2550
    %v7173 = vpop.f32.mrb[0].mxu0
    %v7174 = vadd.f32 0.0, %v7173
    %v7175 = vpop.f32.mrb[0].mxu0
    %v7176 = vadd.f32 0.0, %v7175
    %v7177 = vpop.f32.mrb[0].mxu0
    %v7178 = vpop.f32.mrb[0].mxu0
    %7179 = vdwg.mxu0
    %7180 = vmatprep.subr.bf16.mxu0 %v5796
    %7181 = vmatpush1.bf16.msra.mxu0 %v5795
    %7182 = vmatprep.subr.bf16.mxu0 %v5803
    %7183 = vmatpush1.bf16.msra.mxu0 %v5802
    %7184 = vmatprep.subr.bf16.mxu0 %v5810
    %7185 = vmatpush1.bf16.msra.mxu0 %v5809
    %7186 = vmatprep.subr.bf16.mxu0 %v5817
    %7187 = vmatpush1.bf16.msra.mxu0 %v5816
    %7188 = vmatprep.subr.bf16.mxu0 %v5824
    %7189 = vmatpush1.bf16.msra.mxu0 %v5823
    %7190 = vmatprep.subr.bf16.mxu0 %v5831
    %7191 = vmatpush1.bf16.msra.mxu0 %v5830
    %7192 = vmatprep.subr.bf16.mxu0 %v5838
    %7193 = vmatpush1.bf16.msra.mxu0 %v5837
    %7194 = vmatprep.subr.bf16.mxu0 %v5845
    %7195 = vmatpush1.bf16.msra.mxu0 %v5844
    %7196 = vmatprep.subr.bf16.mxu0 %v5852
    %7197 = vmatpush1.bf16.msra.mxu0 %v5851
    %7198 = vmatprep.subr.bf16.mxu0 %v5859
    %7199 = vmatpush1.bf16.msra.mxu0 %v5858
    %7200 = vmatprep.subr.bf16.mxu0 %v5866
    %7201 = vmatpush1.bf16.msra.mxu0 %v5865
    %7202 = vmatprep.subr.bf16.mxu0 %v5873
    %7203 = vmatpush1.bf16.msra.mxu0 %v5872
    %7204 = vmatprep.subr.bf16.mxu0 %v5880
    %7205 = vmatpush1.bf16.msra.mxu0 %v5879
    %7206 = vmatprep.subr.bf16.mxu0 %v5887
    %7207 = vmatpush1.bf16.msra.mxu0 %v5886
    %7208 = vmatprep.subr.bf16.mxu0 %v5894
    %7209 = vmatpush1.bf16.msra.mxu0 %v5893
    %7210 = vmatprep.subr.bf16.mxu0 %v5901
    %7211 = vmatpush1.bf16.msra.mxu0 %v5900
    %7212 = vmatprep.mubr.bf16.mxu0 %v2553
    %7213 = vmatmul.mubr.bf16.gmra.mrb[0].mxu0 %v2552
    %v7214 = vpop.f32.mrb[0].mxu0
    %v7215 = vadd.f32 %v7174, %v7214
    %v7216 = vpop.f32.mrb[0].mxu0
    %v7217 = vadd.f32 %v7176, %v7216
    %v7218 = vpop.f32.mrb[0].mxu0
    %v7219 = vpop.f32.mrb[0].mxu0
    %7220 = vdwg.mxu0
    %7221 = vmatprep.subr.bf16.mxu0 %v5908
    %7222 = vmatpush1.bf16.msra.mxu0 %v5907
    %7223 = vmatprep.subr.bf16.mxu0 %v5915
    %7224 = vmatpush1.bf16.msra.mxu0 %v5914
    %7225 = vmatprep.subr.bf16.mxu0 %v5922
    %7226 = vmatpush1.bf16.msra.mxu0 %v5921
    %7227 = vmatprep.subr.bf16.mxu0 %v5929
    %7228 = vmatpush1.bf16.msra.mxu0 %v5928
    %7229 = vmatprep.subr.bf16.mxu0 %v5936
    %7230 = vmatpush1.bf16.msra.mxu0 %v5935
    %7231 = vmatprep.subr.bf16.mxu0 %v5943
    %7232 = vmatpush1.bf16.msra.mxu0 %v5942
    %7233 = vmatprep.subr.bf16.mxu0 %v5950
    %7234 = vmatpush1.bf16.msra.mxu0 %v5949
    %7235 = vmatprep.subr.bf16.mxu0 %v5957
    %7236 = vmatpush1.bf16.msra.mxu0 %v5956
    %7237 = vmatprep.subr.bf16.mxu0 %v5964
    %7238 = vmatpush1.bf16.msra.mxu0 %v5963
    %7239 = vmatprep.subr.bf16.mxu0 %v5971
    %7240 = vmatpush1.bf16.msra.mxu0 %v5970
    %7241 = vmatprep.subr.bf16.mxu0 %v5978
    %7242 = vmatpush1.bf16.msra.mxu0 %v5977
    %7243 = vmatprep.subr.bf16.mxu0 %v5985
    %7244 = vmatpush1.bf16.msra.mxu0 %v5984
    %7245 = vmatprep.subr.bf16.mxu0 %v5992
    %7246 = vmatpush1.bf16.msra.mxu0 %v5991
    %7247 = vmatprep.subr.bf16.mxu0 %v5999
    %7248 = vmatpush1.bf16.msra.mxu0 %v5998
    %7249 = vmatprep.subr.bf16.mxu0 %v6006
    %7250 = vmatpush1.bf16.msra.mxu0 %v6005
    %7251 = vmatprep.subr.bf16.mxu0 %v6013
    %7252 = vmatpush1.bf16.msra.mxu0 %v6012
    %7253 = vmatprep.mubr.bf16.mxu0 %v2555
    %7254 = vmatmul.mubr.bf16.gmra.mrb[0].mxu0 %v2554
    %v7255 = vpop.f32.mrb[0].mxu0
    %v7256 = vadd.f32 %v7215, %v7255
    %v7257 = vpop.f32.mrb[0].mxu0
    %v7258 = vadd.f32 %v7217, %v7257
    %v7259 = vpop.f32.mrb[0].mxu0
    %v7260 = vpop.f32.mrb[0].mxu0
    %7261 = vdwg.mxu0
    %7262 = vmatprep.subr.bf16.mxu0 %v6020
    %7263 = vmatpush1.bf16.msra.mxu0 %v6019
    %7264 = vmatprep.subr.bf16.mxu0 %v6027
    %7265 = vmatpush1.bf16.msra.mxu0 %v6026
    %7266 = vmatprep.subr.bf16.mxu0 %v6034
    %7267 = vmatpush1.bf16.msra.mxu0 %v6033
    %7268 = vmatprep.subr.bf16.mxu0 %v6041
    %7269 = vmatpush1.bf16.msra.mxu0 %v6040
    %7270 = vmatprep.subr.bf16.mxu0 %v6048
    %7271 = vmatpush1.bf16.msra.mxu0 %v6047
    %7272 = vmatprep.subr.bf16.mxu0 %v6055
    %7273 = vmatpush1.bf16.msra.mxu0 %v6054
    %7274 = vmatprep.subr.bf16.mxu0 %v6062
    %7275 = vmatpush1.bf16.msra.mxu0 %v6061
    %7276 = vmatprep.subr.bf16.mxu0 %v6069
    %7277 = vmatpush1.bf16.msra.mxu0 %v6068
    %7278 = vmatprep.subr.bf16.mxu0 %v6076
    %7279 = vmatpush1.bf16.msra.mxu0 %v6075
    %7280 = vmatprep.subr.bf16.mxu0 %v6083
    %7281 = vmatpush1.bf16.msra.mxu0 %v6082
    %7282 = vmatprep.subr.bf16.mxu0 %v6090
    %7283 = vmatpush1.bf16.msra.mxu0 %v6089
    %7284 = vmatprep.subr.bf16.mxu0 %v6097
    %7285 = vmatpush1.bf16.msra.mxu0 %v6096
    %7286 = vmatprep.subr.bf16.mxu0 %v6104
    %7287 = vmatpush1.bf16.msra.mxu0 %v6103
    %7288 = vmatprep.subr.bf16.mxu0 %v6111
    %7289 = vmatpush1.bf16.msra.mxu0 %v6110
    %7290 = vmatprep.subr.bf16.mxu0 %v6118
    %7291 = vmatpush1.bf16.msra.mxu0 %v6117
    %7292 = vmatprep.subr.bf16.mxu0 %v6125
    %7293 = vmatpush1.bf16.msra.mxu0 %v6124
    %7294 = vmatprep.mubr.bf16.mxu0 %v2557
    %7295 = vmatmul.mubr.bf16.gmra.mrb[0].mxu0 %v2556
    %v7296 = vpop.f32.mrb[0].mxu0
    %v7297 = vadd.f32 %v7256, %v7296
    %v7298 = vpop.f32.mrb[0].mxu0
    %v7299 = vadd.f32 %v7258, %v7298
    %v7300 = vpop.f32.mrb[0].mxu0
    %v7301 = vpop.f32.mrb[0].mxu0
    %7302 = vdwg.mxu0
    %7303 = vmatprep.subr.bf16.mxu0 %v6132
    %7304 = vmatpush1.bf16.msra.mxu0 %v6131
    %7305 = vmatprep.subr.bf16.mxu0 %v6139
    %7306 = vmatpush1.bf16.msra.mxu0 %v6138
    %7307 = vmatprep.subr.bf16.mxu0 %v6146
    %7308 = vmatpush1.bf16.msra.mxu0 %v6145
    %7309 = vmatprep.subr.bf16.mxu0 %v6153
    %7310 = vmatpush1.bf16.msra.mxu0 %v6152
    %7311 = vmatprep.subr.bf16.mxu0 %v6160
    %7312 = vmatpush1.bf16.msra.mxu0 %v6159
    %7313 = vmatprep.subr.bf16.mxu0 %v6167
    %7314 = vmatpush1.bf16.msra.mxu0 %v6166
    %7315 = vmatprep.subr.bf16.mxu0 %v6174
    %7316 = vmatpush1.bf16.msra.mxu0 %v6173
    %7317 = vmatprep.subr.bf16.mxu0 %v6181
    %7318 = vmatpush1.bf16.msra.mxu0 %v6180
    %7319 = vmatprep.subr.bf16.mxu0 %v6188
    %7320 = vmatpush1.bf16.msra.mxu0 %v6187
    %7321 = vmatprep.subr.bf16.mxu0 %v6195
    %7322 = vmatpush1.bf16.msra.mxu0 %v6194
    %7323 = vmatprep.subr.bf16.mxu0 %v6202
    %7324 = vmatpush1.bf16.msra.mxu0 %v6201
    %7325 = vmatprep.subr.bf16.mxu0 %v6209
    %7326 = vmatpush1.bf16.msra.mxu0 %v6208
    %7327 = vmatprep.subr.bf16.mxu0 %v6216
    %7328 = vmatpush1.bf16.msra.mxu0 %v6215
    %7329 = vmatprep.subr.bf16.mxu0 %v6223
    %7330 = vmatpush1.bf16.msra.mxu0 %v6222
    %7331 = vmatprep.subr.bf16.mxu0 %v6230
    %7332 = vmatpush1.bf16.msra.mxu0 %v6229
    %7333 = vmatprep.subr.bf16.mxu0 %v6237
    %7334 = vmatpush1.bf16.msra.mxu0 %v6236
    %7335 = vmatprep.mubr.bf16.mxu0 %v2559
    %7336 = vmatmul.mubr.bf16.gmra.mrb[0].mxu0 %v2558
    %v7337 = vpop.f32.mrb[0].mxu0
    %v7338 = vadd.f32 %v7297, %v7337
    %v7339 = vpop.f32.mrb[0].mxu0
    %v7340 = vadd.f32 %v7299, %v7339
    %v7341 = vpop.f32.mrb[0].mxu0
    %v7342 = vpop.f32.mrb[0].mxu0
    %7343 = vdwg.mxu0
    %7344 = vmatprep.subr.bf16.mxu0 %v6244
    %7345 = vmatpush1.bf16.msra.mxu0 %v6243
    %7346 = vmatprep.subr.bf16.mxu0 %v6251
    %7347 = vmatpush1.bf16.msra.mxu0 %v6250
    %7348 = vmatprep.subr.bf16.mxu0 %v6258
    %7349 = vmatpush1.bf16.msra.mxu0 %v6257
    %7350 = vmatprep.subr.bf16.mxu0 %v6265
    %7351 = vmatpush1.bf16.msra.mxu0 %v6264
    %7352 = vmatprep.subr.bf16.mxu0 %v6272
    %7353 = vmatpush1.bf16.msra.mxu0 %v6271
    %7354 = vmatprep.subr.bf16.mxu0 %v6279
    %7355 = vmatpush1.bf16.msra.mxu0 %v6278
    %7356 = vmatprep.subr.bf16.mxu0 %v6286
    %7357 = vmatpush1.bf16.msra.mxu0 %v6285
    %7358 = vmatprep.subr.bf16.mxu0 %v6293
    %7359 = vmatpush1.bf16.msra.mxu0 %v6292
    %7360 = vmatprep.subr.bf16.mxu0 %v6300
    %7361 = vmatpush1.bf16.msra.mxu0 %v6299
    %7362 = vmatprep.subr.bf16.mxu0 %v6307
    %7363 = vmatpush1.bf16.msra.mxu0 %v6306
    %7364 = vmatprep.subr.bf16.mxu0 %v6314
    %7365 = vmatpush1.bf16.msra.mxu0 %v6313
    %7366 = vmatprep.subr.bf16.mxu0 %v6321
    %7367 = vmatpush1.bf16.msra.mxu0 %v6320
    %7368 = vmatprep.subr.bf16.mxu0 %v6328
    %7369 = vmatpush1.bf16.msra.mxu0 %v6327
    %7370 = vmatprep.subr.bf16.mxu0 %v6335
    %7371 = vmatpush1.bf16.msra.mxu0 %v6334
    %7372 = vmatprep.subr.bf16.mxu0 %v6342
    %7373 = vmatpush1.bf16.msra.mxu0 %v6341
    %7374 = vmatprep.subr.bf16.mxu0 %v6349
    %7375 = vmatpush1.bf16.msra.mxu0 %v6348
    %7376 = vmatprep.mubr.bf16.mxu0 %v2561
    %7377 = vmatmul.mubr.bf16.gmra.mrb[0].mxu0 %v2560
    %v7378 = vpop.f32.mrb[0].mxu0
    %v7379 = vadd.f32 %v7338, %v7378
    %v7380 = vpop.f32.mrb[0].mxu0
    %v7381 = vadd.f32 %v7340, %v7380
    %v7382 = vpop.f32.mrb[0].mxu0
    %v7383 = vpop.f32.mrb[0].mxu0
    %7384 = vdwg.mxu0
    %7385 = vmatprep.subr.bf16.mxu0 %v6356
    %7386 = vmatpush1.bf16.msra.mxu0 %v6355
    %7387 = vmatprep.subr.bf16.mxu0 %v6363
    %7388 = vmatpush1.bf16.msra.mxu0 %v6362
    %7389 = vmatprep.subr.bf16.mxu0 %v6370
    %7390 = vmatpush1.bf16.msra.mxu0 %v6369
    %7391 = vmatprep.subr.bf16.mxu0 %v6377
    %7392 = vmatpush1.bf16.msra.mxu0 %v6376
    %7393 = vmatprep.subr.bf16.mxu0 %v6384
    %7394 = vmatpush1.bf16.msra.mxu0 %v6383
    %7395 = vmatprep.subr.bf16.mxu0 %v6391
    %7396 = vmatpush1.bf16.msra.mxu0 %v6390
    %7397 = vmatprep.subr.bf16.mxu0 %v6398
    %7398 = vmatpush1.bf16.msra.mxu0 %v6397
    %7399 = vmatprep.subr.bf16.mxu0 %v6405
    %7400 = vmatpush1.bf16.msra.mxu0 %v6404
    %7401 = vmatprep.subr.bf16.mxu0 0
    %7402 = vmatpush1.bf16.msra.mxu0 0
    %7403 = vmatprep.subr.bf16.mxu0 0
    %7404 = vmatpush1.bf16.msra.mxu0 0
    %7405 = vmatprep.subr.bf16.mxu0 0
    %7406 = vmatpush1.bf16.msra.mxu0 0
    %7407 = vmatprep.subr.bf16.mxu0 0
    %7408 = vmatpush1.bf16.msra.mxu0 0
    %7409 = vmatprep.subr.bf16.mxu0 0
    %7410 = vmatpush1.bf16.msra.mxu0 0
    %7411 = vmatprep.subr.bf16.mxu0 0
    %7412 = vmatpush1.bf16.msra.mxu0 0
    %7413 = vmatprep.subr.bf16.mxu0 0
    %7414 = vmatpush1.bf16.msra.mxu0 0
    %7415 = vmatprep.subr.bf16.mxu0 0
    %7416 = vmatpush1.bf16.msra.mxu0 0
    %7417 = vmatprep.mubr.bf16.mxu0 0
    %7418 = vmatmul.mubr.bf16.gmra.mrb[0].mxu0 %v2562
    %v7419 = vpop.f32.mrb[0].mxu0
    %v7420 = vadd.f32 %v7379, %v7419
    %v7421 = vpop.f32.mrb[0].mxu0
    %v7422 = vadd.f32 %v7381, %v7421
    %v7423 = vpop.f32.mrb[0].mxu0
    %v7424 = vpop.f32.mrb[0].mxu0
    %7425 = vdwg.mxu0
    %7426 = vmatprep.subr.bf16.mxu0 %v5686
    %7427 = vmatpush1.bf16.msra.mxu0 %v5685
    %7428 = vmatprep.subr.bf16.mxu0 %v5693
    %7429 = vmatpush1.bf16.msra.mxu0 %v5692
    %7430 = vmatprep.subr.bf16.mxu0 %v5700
    %7431 = vmatpush1.bf16.msra.mxu0 %v5699
    %7432 = vmatprep.subr.bf16.mxu0 %v5707
    %7433 = vmatpush1.bf16.msra.mxu0 %v5706
    %7434 = vmatprep.subr.bf16.mxu0 %v5714
    %7435 = vmatpush1.bf16.msra.mxu0 %v5713
    %7436 = vmatprep.subr.bf16.mxu0 %v5721
    %7437 = vmatpush1.bf16.msra.mxu0 %v5720
    %7438 = vmatprep.subr.bf16.mxu0 %v5728
    %7439 = vmatpush1.bf16.msra.mxu0 %v5727
    %7440 = vmatprep.subr.bf16.mxu0 %v5735
    %7441 = vmatpush1.bf16.msra.mxu0 %v5734
    %7442 = vmatprep.subr.bf16.mxu0 %v5742
    %7443 = vmatpush1.bf16.msra.mxu0 %v5741
    %7444 = vmatprep.subr.bf16.mxu0 %v5749
    %7445 = vmatpush1.bf16.msra.mxu0 %v5748
    %7446 = vmatprep.subr.bf16.mxu0 %v5756
    %7447 = vmatpush1.bf16.msra.mxu0 %v5755
    %7448 = vmatprep.subr.bf16.mxu0 %v5763
    %7449 = vmatpush1.bf16.msra.mxu0 %v5762
    %7450 = vmatprep.subr.bf16.mxu0 %v5770
    %7451 = vmatpush1.bf16.msra.mxu0 %v5769
    %7452 = vmatprep.subr.bf16.mxu0 %v5777
    %7453 = vmatpush1.bf16.msra.mxu0 %v5776
    %7454 = vmatprep.subr.bf16.mxu0 %v5784
    %7455 = vmatpush1.bf16.msra.mxu0 %v5783
    %7456 = vmatprep.subr.bf16.mxu0 %v5791
    %7457 = vmatpush1.bf16.msra.mxu0 %v5790
    %7458 = vmatprep.mubr.bf16.mxu0 %v2551
    %7459 = vmatmul.mubr.bf16.gmra.mrb[0].mxu0 %v2550
    %v7460 = vpop.f32.mrb[0].mxu0
    %v7461 = vadd.f32 0.0, %v7460
    %v7462 = vpop.f32.mrb[0].mxu0
    %v7463 = vadd.f32 0.0, %v7462
    %v7464 = vpop.f32.mrb[0].mxu0
    %v7465 = vpop.f32.mrb[0].mxu0
    %7466 = vdwg.mxu0
    %7467 = vmatprep.subr.bf16.mxu0 %v5798
    %7468 = vmatpush1.bf16.msra.mxu0 %v5797
    %7469 = vmatprep.subr.bf16.mxu0 %v5805
    %7470 = vmatpush1.bf16.msra.mxu0 %v5804
    %7471 = vmatprep.subr.bf16.mxu0 %v5812
    %7472 = vmatpush1.bf16.msra.mxu0 %v5811
    %7473 = vmatprep.subr.bf16.mxu0 %v5819
    %7474 = vmatpush1.bf16.msra.mxu0 %v5818
    %7475 = vmatprep.subr.bf16.mxu0 %v5826
    %7476 = vmatpush1.bf16.msra.mxu0 %v5825
    %7477 = vmatprep.subr.bf16.mxu0 %v5833
    %7478 = vmatpush1.bf16.msra.mxu0 %v5832
    %7479 = vmatprep.subr.bf16.mxu0 %v5840
    %7480 = vmatpush1.bf16.msra.mxu0 %v5839
    %7481 = vmatprep.subr.bf16.mxu0 %v5847
    %7482 = vmatpush1.bf16.msra.mxu0 %v5846
    %7483 = vmatprep.subr.bf16.mxu0 %v5854
    %7484 = vmatpush1.bf16.msra.mxu0 %v5853
    %7485 = vmatprep.subr.bf16.mxu0 %v5861
    %7486 = vmatpush1.bf16.msra.mxu0 %v5860
    %7487 = vmatprep.subr.bf16.mxu0 %v5868
    %7488 = vmatpush1.bf16.msra.mxu0 %v5867
    %7489 = vmatprep.subr.bf16.mxu0 %v5875
    %7490 = vmatpush1.bf16.msra.mxu0 %v5874
    %7491 = vmatprep.subr.bf16.mxu0 %v5882
    %7492 = vmatpush1.bf16.msra.mxu0 %v5881
    %7493 = vmatprep.subr.bf16.mxu0 %v5889
    %7494 = vmatpush1.bf16.msra.mxu0 %v5888
    %7495 = vmatprep.subr.bf16.mxu0 %v5896
    %7496 = vmatpush1.bf16.msra.mxu0 %v5895
    %7497 = vmatprep.subr.bf16.mxu0 %v5903
    %7498 = vmatpush1.bf16.msra.mxu0 %v5902
    %7499 = vmatprep.mubr.bf16.mxu0 %v2553
    %7500 = vmatmul.mubr.bf16.gmra.mrb[0].mxu0 %v2552
    %v7501 = vpop.f32.mrb[0].mxu0
    %v7502 = vadd.f32 %v7461, %v7501
    %v7503 = vpop.f32.mrb[0].mxu0
    %v7504 = vadd.f32 %v7463, %v7503
    %v7505 = vpop.f32.mrb[0].mxu0
    %v7506 = vpop.f32.mrb[0].mxu0
    %7507 = vdwg.mxu0
    %7508 = vmatprep.subr.bf16.mxu0 %v5910
    %7509 = vmatpush1.bf16.msra.mxu0 %v5909
    %7510 = vmatprep.subr.bf16.mxu0 %v5917
    %7511 = vmatpush1.bf16.msra.mxu0 %v5916
    %7512 = vmatprep.subr.bf16.mxu0 %v5924
    %7513 = vmatpush1.bf16.msra.mxu0 %v5923
    %7514 = vmatprep.subr.bf16.mxu0 %v5931
    %7515 = vmatpush1.bf16.msra.mxu0 %v5930
    %7516 = vmatprep.subr.bf16.mxu0 %v5938
    %7517 = vmatpush1.bf16.msra.mxu0 %v5937
    %7518 = vmatprep.subr.bf16.mxu0 %v5945
    %7519 = vmatpush1.bf16.msra.mxu0 %v5944
    %7520 = vmatprep.subr.bf16.mxu0 %v5952
    %7521 = vmatpush1.bf16.msra.mxu0 %v5951
    %7522 = vmatprep.subr.bf16.mxu0 %v5959
    %7523 = vmatpush1.bf16.msra.mxu0 %v5958
    %7524 = vmatprep.subr.bf16.mxu0 %v5966
    %7525 = vmatpush1.bf16.msra.mxu0 %v5965
    %7526 = vmatprep.subr.bf16.mxu0 %v5973
    %7527 = vmatpush1.bf16.msra.mxu0 %v5972
    %7528 = vmatprep.subr.bf16.mxu0 %v5980
    %7529 = vmatpush1.bf16.msra.mxu0 %v5979
    %7530 = vmatprep.subr.bf16.mxu0 %v5987
    %7531 = vmatpush1.bf16.msra.mxu0 %v5986
    %7532 = vmatprep.subr.bf16.mxu0 %v5994
    %7533 = vmatpush1.bf16.msra.mxu0 %v5993
    %7534 = vmatprep.subr.bf16.mxu0 %v6001
    %7535 = vmatpush1.bf16.msra.mxu0 %v6000
    %7536 = vmatprep.subr.bf16.mxu0 %v6008
    %7537 = vmatpush1.bf16.msra.mxu0 %v6007
    %7538 = vmatprep.subr.bf16.mxu0 %v6015
    %7539 = vmatpush1.bf16.msra.mxu0 %v6014
    %7540 = vmatprep.mubr.bf16.mxu0 %v2555
    %7541 = vmatmul.mubr.bf16.gmra.mrb[0].mxu0 %v2554
    %v7542 = vpop.f32.mrb[0].mxu0
    %v7543 = vadd.f32 %v7502, %v7542
    %v7544 = vpop.f32.mrb[0].mxu0
    %v7545 = vadd.f32 %v7504, %v7544
    %v7546 = vpop.f32.mrb[0].mxu0
    %v7547 = vpop.f32.mrb[0].mxu0
    %7548 = vdwg.mxu0
    %7549 = vmatprep.subr.bf16.mxu0 %v6022
    %7550 = vmatpush1.bf16.msra.mxu0 %v6021
    %7551 = vmatprep.subr.bf16.mxu0 %v6029
    %7552 = vmatpush1.bf16.msra.mxu0 %v6028
    %7553 = vmatprep.subr.bf16.mxu0 %v6036
    %7554 = vmatpush1.bf16.msra.mxu0 %v6035
    %7555 = vmatprep.subr.bf16.mxu0 %v6043
    %7556 = vmatpush1.bf16.msra.mxu0 %v6042
    %7557 = vmatprep.subr.bf16.mxu0 %v6050
    %7558 = vmatpush1.bf16.msra.mxu0 %v6049
    %7559 = vmatprep.subr.bf16.mxu0 %v6057
    %7560 = vmatpush1.bf16.msra.mxu0 %v6056
    %7561 = vmatprep.subr.bf16.mxu0 %v6064
    %7562 = vmatpush1.bf16.msra.mxu0 %v6063
    %7563 = vmatprep.subr.bf16.mxu0 %v6071
    %7564 = vmatpush1.bf16.msra.mxu0 %v6070
    %7565 = vmatprep.subr.bf16.mxu0 %v6078
    %7566 = vmatpush1.bf16.msra.mxu0 %v6077
    %7567 = vmatprep.subr.bf16.mxu0 %v6085
    %7568 = vmatpush1.bf16.msra.mxu0 %v6084
    %7569 = vmatprep.subr.bf16.mxu0 %v6092
    %7570 = vmatpush1.bf16.msra.mxu0 %v6091
    %7571 = vmatprep.subr.bf16.mxu0 %v6099
    %7572 = vmatpush1.bf16.msra.mxu0 %v6098
    %7573 = vmatprep.subr.bf16.mxu0 %v6106
    %7574 = vmatpush1.bf16.msra.mxu0 %v6105
    %7575 = vmatprep.subr.bf16.mxu0 %v6113
    %7576 = vmatpush1.bf16.msra.mxu0 %v6112
    %7577 = vmatprep.subr.bf16.mxu0 %v6120
    %7578 = vmatpush1.bf16.msra.mxu0 %v6119
    %7579 = vmatprep.subr.bf16.mxu0 %v6127
    %7580 = vmatpush1.bf16.msra.mxu0 %v6126
    %7581 = vmatprep.mubr.bf16.mxu0 %v2557
    %7582 = vmatmul.mubr.bf16.gmra.mrb[0].mxu0 %v2556
    %v7583 = vpop.f32.mrb[0].mxu0
    %v7584 = vadd.f32 %v7543, %v7583
    %v7585 = vpop.f32.mrb[0].mxu0
    %v7586 = vadd.f32 %v7545, %v7585
    %v7587 = vpop.f32.mrb[0].mxu0
    %v7588 = vpop.f32.mrb[0].mxu0
    %7589 = vdwg.mxu0
    %7590 = vmatprep.subr.bf16.mxu0 %v6134
    %7591 = vmatpush1.bf16.msra.mxu0 %v6133
    %7592 = vmatprep.subr.bf16.mxu0 %v6141
    %7593 = vmatpush1.bf16.msra.mxu0 %v6140
    %7594 = vmatprep.subr.bf16.mxu0 %v6148
    %7595 = vmatpush1.bf16.msra.mxu0 %v6147
    %7596 = vmatprep.subr.bf16.mxu0 %v6155
    %7597 = vmatpush1.bf16.msra.mxu0 %v6154
    %7598 = vmatprep.subr.bf16.mxu0 %v6162
    %7599 = vmatpush1.bf16.msra.mxu0 %v6161
    %7600 = vmatprep.subr.bf16.mxu0 %v6169
    %7601 = vmatpush1.bf16.msra.mxu0 %v6168
    %7602 = vmatprep.subr.bf16.mxu0 %v6176
    %7603 = vmatpush1.bf16.msra.mxu0 %v6175
    %7604 = vmatprep.subr.bf16.mxu0 %v6183
    %7605 = vmatpush1.bf16.msra.mxu0 %v6182
    %7606 = vmatprep.subr.bf16.mxu0 %v6190
    %7607 = vmatpush1.bf16.msra.mxu0 %v6189
    %7608 = vmatprep.subr.bf16.mxu0 %v6197
    %7609 = vmatpush1.bf16.msra.mxu0 %v6196
    %7610 = vmatprep.subr.bf16.mxu0 %v6204
    %7611 = vmatpush1.bf16.msra.mxu0 %v6203
    %7612 = vmatprep.subr.bf16.mxu0 %v6211
    %7613 = vmatpush1.bf16.msra.mxu0 %v6210
    %7614 = vmatprep.subr.bf16.mxu0 %v6218
    %7615 = vmatpush1.bf16.msra.mxu0 %v6217
    %7616 = vmatprep.subr.bf16.mxu0 %v6225
    %7617 = vmatpush1.bf16.msra.mxu0 %v6224
    %7618 = vmatprep.subr.bf16.mxu0 %v6232
    %7619 = vmatpush1.bf16.msra.mxu0 %v6231
    %7620 = vmatprep.subr.bf16.mxu0 %v6239
    %7621 = vmatpush1.bf16.msra.mxu0 %v6238
    %7622 = vmatprep.mubr.bf16.mxu0 %v2559
    %7623 = vmatmul.mubr.bf16.gmra.mrb[0].mxu0 %v2558
    %v7624 = vpop.f32.mrb[0].mxu0
    %v7625 = vadd.f32 %v7584, %v7624
    %v7626 = vpop.f32.mrb[0].mxu0
    %v7627 = vadd.f32 %v7586, %v7626
    %v7628 = vpop.f32.mrb[0].mxu0
    %v7629 = vpop.f32.mrb[0].mxu0
    %7630 = vdwg.mxu0
    %7631 = vmatprep.subr.bf16.mxu0 %v6246
    %7632 = vmatpush1.bf16.msra.mxu0 %v6245
    %7633 = vmatprep.subr.bf16.mxu0 %v6253
    %7634 = vmatpush1.bf16.msra.mxu0 %v6252
    %7635 = vmatprep.subr.bf16.mxu0 %v6260
    %7636 = vmatpush1.bf16.msra.mxu0 %v6259
    %7637 = vmatprep.subr.bf16.mxu0 %v6267
    %7638 = vmatpush1.bf16.msra.mxu0 %v6266
    %7639 = vmatprep.subr.bf16.mxu0 %v6274
    %7640 = vmatpush1.bf16.msra.mxu0 %v6273
    %7641 = vmatprep.subr.bf16.mxu0 %v6281
    %7642 = vmatpush1.bf16.msra.mxu0 %v6280
    %7643 = vmatprep.subr.bf16.mxu0 %v6288
    %7644 = vmatpush1.bf16.msra.mxu0 %v6287
    %7645 = vmatprep.subr.bf16.mxu0 %v6295
    %7646 = vmatpush1.bf16.msra.mxu0 %v6294
    %7647 = vmatprep.subr.bf16.mxu0 %v6302
    %7648 = vmatpush1.bf16.msra.mxu0 %v6301
    %7649 = vmatprep.subr.bf16.mxu0 %v6309
    %7650 = vmatpush1.bf16.msra.mxu0 %v6308
    %7651 = vmatprep.subr.bf16.mxu0 %v6316
    %7652 = vmatpush1.bf16.msra.mxu0 %v6315
    %7653 = vmatprep.subr.bf16.mxu0 %v6323
    %7654 = vmatpush1.bf16.msra.mxu0 %v6322
    %7655 = vmatprep.subr.bf16.mxu0 %v6330
    %7656 = vmatpush1.bf16.msra.mxu0 %v6329
    %7657 = vmatprep.subr.bf16.mxu0 %v6337
    %7658 = vmatpush1.bf16.msra.mxu0 %v6336
    %7659 = vmatprep.subr.bf16.mxu0 %v6344
    %7660 = vmatpush1.bf16.msra.mxu0 %v6343
    %7661 = vmatprep.subr.bf16.mxu0 %v6351
    %7662 = vmatpush1.bf16.msra.mxu0 %v6350
    %7663 = vmatprep.mubr.bf16.mxu0 %v2561
    %7664 = vmatmul.mubr.bf16.gmra.mrb[0].mxu0 %v2560
    %v7665 = vpop.f32.mrb[0].mxu0
    %v7666 = vadd.f32 %v7625, %v7665
    %v7667 = vpop.f32.mrb[0].mxu0
    %v7668 = vadd.f32 %v7627, %v7667
    %v7669 = vpop.f32.mrb[0].mxu0
    %v7670 = vpop.f32.mrb[0].mxu0
    %7671 = vdwg.mxu0
    %7672 = vmatprep.subr.bf16.mxu0 %v6358
    %7673 = vmatpush1.bf16.msra.mxu0 %v6357
    %7674 = vmatprep.subr.bf16.mxu0 %v6365
    %7675 = vmatpush1.bf16.msra.mxu0 %v6364
    %7676 = vmatprep.subr.bf16.mxu0 %v6372
    %7677 = vmatpush1.bf16.msra.mxu0 %v6371
    %7678 = vmatprep.subr.bf16.mxu0 %v6379
    %7679 = vmatpush1.bf16.msra.mxu0 %v6378
    %7680 = vmatprep.subr.bf16.mxu0 %v6386
    %7681 = vmatpush1.bf16.msra.mxu0 %v6385
    %7682 = vmatprep.subr.bf16.mxu0 %v6393
    %7683 = vmatpush1.bf16.msra.mxu0 %v6392
    %7684 = vmatprep.subr.bf16.mxu0 %v6400
    %7685 = vmatpush1.bf16.msra.mxu0 %v6399
    %7686 = vmatprep.subr.bf16.mxu0 %v6407
    %7687 = vmatpush1.bf16.msra.mxu0 %v6406
    %7688 = vmatprep.subr.bf16.mxu0 0
    %7689 = vmatpush1.bf16.msra.mxu0 0
    %7690 = vmatprep.subr.bf16.mxu0 0
    %7691 = vmatpush1.bf16.msra.mxu0 0
    %7692 = vmatprep.subr.bf16.mxu0 0
    %7693 = vmatpush1.bf16.msra.mxu0 0
    %7694 = vmatprep.subr.bf16.mxu0 0
    %7695 = vmatpush1.bf16.msra.mxu0 0
    %7696 = vmatprep.subr.bf16.mxu0 0
    %7697 = vmatpush1.bf16.msra.mxu0 0
    %7698 = vmatprep.subr.bf16.mxu0 0
    %7699 = vmatpush1.bf16.msra.mxu0 0
    %7700 = vmatprep.subr.bf16.mxu0 0
    %7701 = vmatpush1.bf16.msra.mxu0 0
    %7702 = vmatprep.subr.bf16.mxu0 0
    %7703 = vmatpush1.bf16.msra.mxu0 0
    %7704 = vmatprep.mubr.bf16.mxu0 0
    %7705 = vmatmul.mubr.bf16.gmra.mrb[0].mxu0 %v2562
    %v7706 = vpop.f32.mrb[0].mxu0
    %v7707 = vadd.f32 %v7666, %v7706
    %v7708 = vpop.f32.mrb[0].mxu0
    %v7709 = vadd.f32 %v7668, %v7708
    %v7710 = vpop.f32.mrb[0].mxu0
    %v7711 = vpop.f32.mrb[0].mxu0
    %7712 = vdwg.mxu0
    %7713 = vmatprep.subr.bf16.mxu0 %v5688
    %7714 = vmatpush1.bf16.msra.mxu0 %v5687
    %7715 = vmatprep.subr.bf16.mxu0 %v5695
    %7716 = vmatpush1.bf16.msra.mxu0 %v5694
    %7717 = vmatprep.subr.bf16.mxu0 %v5702
    %7718 = vmatpush1.bf16.msra.mxu0 %v5701
    %7719 = vmatprep.subr.bf16.mxu0 %v5709
    %7720 = vmatpush1.bf16.msra.mxu0 %v5708
    %7721 = vmatprep.subr.bf16.mxu0 %v5716
    %7722 = vmatpush1.bf16.msra.mxu0 %v5715
    %7723 = vmatprep.subr.bf16.mxu0 %v5723
    %7724 = vmatpush1.bf16.msra.mxu0 %v5722
    %7725 = vmatprep.subr.bf16.mxu0 %v5730
    %7726 = vmatpush1.bf16.msra.mxu0 %v5729
    %7727 = vmatprep.subr.bf16.mxu0 %v5737
    %7728 = vmatpush1.bf16.msra.mxu0 %v5736
    %7729 = vmatprep.subr.bf16.mxu0 %v5744
    %7730 = vmatpush1.bf16.msra.mxu0 %v5743
    %7731 = vmatprep.subr.bf16.mxu0 %v5751
    %7732 = vmatpush1.bf16.msra.mxu0 %v5750
    %7733 = vmatprep.subr.bf16.mxu0 %v5758
    %7734 = vmatpush1.bf16.msra.mxu0 %v5757
    %7735 = vmatprep.subr.bf16.mxu0 %v5765
    %7736 = vmatpush1.bf16.msra.mxu0 %v5764
    %7737 = vmatprep.subr.bf16.mxu0 %v5772
    %7738 = vmatpush1.bf16.msra.mxu0 %v5771
    %7739 = vmatprep.subr.bf16.mxu0 %v5779
    %7740 = vmatpush1.bf16.msra.mxu0 %v5778
    %7741 = vmatprep.subr.bf16.mxu0 %v5786
    %7742 = vmatpush1.bf16.msra.mxu0 %v5785
    %7743 = vmatprep.subr.bf16.mxu0 %v5793
    %7744 = vmatpush1.bf16.msra.mxu0 %v5792
    %7745 = vmatprep.mubr.bf16.mxu0 %v2551
    %7746 = vmatmul.mubr.bf16.gmra.mrb[0].mxu0 %v2550
    %v7747 = vpop.f32.mrb[0].mxu0
    %v7748 = vadd.f32 0.0, %v7747
    %v7749 = vpop.f32.mrb[0].mxu0
    %v7750 = vadd.f32 0.0, %v7749
    %v7751 = vpop.f32.mrb[0].mxu0
    %v7752 = vpop.f32.mrb[0].mxu0
    %7753 = vdwg.mxu0
    %7754 = vmatprep.subr.bf16.mxu0 %v5800
    %7755 = vmatpush1.bf16.msra.mxu0 %v5799
    %7756 = vmatprep.subr.bf16.mxu0 %v5807
    %7757 = vmatpush1.bf16.msra.mxu0 %v5806
    %7758 = vmatprep.subr.bf16.mxu0 %v5814
    %7759 = vmatpush1.bf16.msra.mxu0 %v5813
    %7760 = vmatprep.subr.bf16.mxu0 %v5821
    %7761 = vmatpush1.bf16.msra.mxu0 %v5820
    %7762 = vmatprep.subr.bf16.mxu0 %v5828
    %7763 = vmatpush1.bf16.msra.mxu0 %v5827
    %7764 = vmatprep.subr.bf16.mxu0 %v5835
    %7765 = vmatpush1.bf16.msra.mxu0 %v5834
    %7766 = vmatprep.subr.bf16.mxu0 %v5842
    %7767 = vmatpush1.bf16.msra.mxu0 %v5841
    %7768 = vmatprep.subr.bf16.mxu0 %v5849
    %7769 = vmatpush1.bf16.msra.mxu0 %v5848
    %7770 = vmatprep.subr.bf16.mxu0 %v5856
    %7771 = vmatpush1.bf16.msra.mxu0 %v5855
    %7772 = vmatprep.subr.bf16.mxu0 %v5863
    %7773 = vmatpush1.bf16.msra.mxu0 %v5862
    %7774 = vmatprep.subr.bf16.mxu0 %v5870
    %7775 = vmatpush1.bf16.msra.mxu0 %v5869
    %7776 = vmatprep.subr.bf16.mxu0 %v5877
    %7777 = vmatpush1.bf16.msra.mxu0 %v5876
    %7778 = vmatprep.subr.bf16.mxu0 %v5884
    %7779 = vmatpush1.bf16.msra.mxu0 %v5883
    %7780 = vmatprep.subr.bf16.mxu0 %v5891
    %7781 = vmatpush1.bf16.msra.mxu0 %v5890
    %7782 = vmatprep.subr.bf16.mxu0 %v5898
    %7783 = vmatpush1.bf16.msra.mxu0 %v5897
    %7784 = vmatprep.subr.bf16.mxu0 %v5905
    %7785 = vmatpush1.bf16.msra.mxu0 %v5904
    %7786 = vmatprep.mubr.bf16.mxu0 %v2553
    %7787 = vmatmul.mubr.bf16.gmra.mrb[0].mxu0 %v2552
    %v7788 = vpop.f32.mrb[0].mxu0
    %v7789 = vadd.f32 %v7748, %v7788
    %v7790 = vpop.f32.mrb[0].mxu0
    %v7791 = vadd.f32 %v7750, %v7790
    %v7792 = vpop.f32.mrb[0].mxu0
    %v7793 = vpop.f32.mrb[0].mxu0
    %7794 = vdwg.mxu0
    %7795 = vmatprep.subr.bf16.mxu0 %v5912
    %7796 = vmatpush1.bf16.msra.mxu0 %v5911
    %7797 = vmatprep.subr.bf16.mxu0 %v5919
    %7798 = vmatpush1.bf16.msra.mxu0 %v5918
    %7799 = vmatprep.subr.bf16.mxu0 %v5926
    %7800 = vmatpush1.bf16.msra.mxu0 %v5925
    %7801 = vmatprep.subr.bf16.mxu0 %v5933
    %7802 = vmatpush1.bf16.msra.mxu0 %v5932
    %7803 = vmatprep.subr.bf16.mxu0 %v5940
    %7804 = vmatpush1.bf16.msra.mxu0 %v5939
    %7805 = vmatprep.subr.bf16.mxu0 %v5947
    %7806 = vmatpush1.bf16.msra.mxu0 %v5946
    %7807 = vmatprep.subr.bf16.mxu0 %v5954
    %7808 = vmatpush1.bf16.msra.mxu0 %v5953
    %7809 = vmatprep.subr.bf16.mxu0 %v5961
    %7810 = vmatpush1.bf16.msra.mxu0 %v5960
    %7811 = vmatprep.subr.bf16.mxu0 %v5968
    %7812 = vmatpush1.bf16.msra.mxu0 %v5967
    %7813 = vmatprep.subr.bf16.mxu0 %v5975
    %7814 = vmatpush1.bf16.msra.mxu0 %v5974
    %7815 = vmatprep.subr.bf16.mxu0 %v5982
    %7816 = vmatpush1.bf16.msra.mxu0 %v5981
    %7817 = vmatprep.subr.bf16.mxu0 %v5989
    %7818 = vmatpush1.bf16.msra.mxu0 %v5988
    %7819 = vmatprep.subr.bf16.mxu0 %v5996
    %7820 = vmatpush1.bf16.msra.mxu0 %v5995
    %7821 = vmatprep.subr.bf16.mxu0 %v6003
    %7822 = vmatpush1.bf16.msra.mxu0 %v6002
    %7823 = vmatprep.subr.bf16.mxu0 %v6010
    %7824 = vmatpush1.bf16.msra.mxu0 %v6009
    %7825 = vmatprep.subr.bf16.mxu0 %v6017
    %7826 = vmatpush1.bf16.msra.mxu0 %v6016
    %7827 = vmatprep.mubr.bf16.mxu0 %v2555
    %7828 = vmatmul.mubr.bf16.gmra.mrb[0].mxu0 %v2554
    %v7829 = vpop.f32.mrb[0].mxu0
    %v7830 = vadd.f32 %v7789, %v7829
    %v7831 = vpop.f32.mrb[0].mxu0
    %v7832 = vadd.f32 %v7791, %v7831
    %v7833 = vpop.f32.mrb[0].mxu0
    %v7834 = vpop.f32.mrb[0].mxu0
    %7835 = vdwg.mxu0
    %7836 = vmatprep.subr.bf16.mxu0 %v6024
    %7837 = vmatpush1.bf16.msra.mxu0 %v6023
    %7838 = vmatprep.subr.bf16.mxu0 %v6031
    %7839 = vmatpush1.bf16.msra.mxu0 %v6030
    %7840 = vmatprep.subr.bf16.mxu0 %v6038
    %7841 = vmatpush1.bf16.msra.mxu0 %v6037
    %7842 = vmatprep.subr.bf16.mxu0 %v6045
    %7843 = vmatpush1.bf16.msra.mxu0 %v6044
    %7844 = vmatprep.subr.bf16.mxu0 %v6052
    %7845 = vmatpush1.bf16.msra.mxu0 %v6051
    %7846 = vmatprep.subr.bf16.mxu0 %v6059
    %7847 = vmatpush1.bf16.msra.mxu0 %v6058
    %7848 = vmatprep.subr.bf16.mxu0 %v6066
    %7849 = vmatpush1.bf16.msra.mxu0 %v6065
    %7850 = vmatprep.subr.bf16.mxu0 %v6073
    %7851 = vmatpush1.bf16.msra.mxu0 %v6072
    %7852 = vmatprep.subr.bf16.mxu0 %v6080
    %7853 = vmatpush1.bf16.msra.mxu0 %v6079
    %7854 = vmatprep.subr.bf16.mxu0 %v6087
    %7855 = vmatpush1.bf16.msra.mxu0 %v6086
    %7856 = vmatprep.subr.bf16.mxu0 %v6094
    %7857 = vmatpush1.bf16.msra.mxu0 %v6093
    %7858 = vmatprep.subr.bf16.mxu0 %v6101
    %7859 = vmatpush1.bf16.msra.mxu0 %v6100
    %7860 = vmatprep.subr.bf16.mxu0 %v6108
    %7861 = vmatpush1.bf16.msra.mxu0 %v6107
    %7862 = vmatprep.subr.bf16.mxu0 %v6115
    %7863 = vmatpush1.bf16.msra.mxu0 %v6114
    %7864 = vmatprep.subr.bf16.mxu0 %v6122
    %7865 = vmatpush1.bf16.msra.mxu0 %v6121
    %7866 = vmatprep.subr.bf16.mxu0 %v6129
    %7867 = vmatpush1.bf16.msra.mxu0 %v6128
    %7868 = vmatprep.mubr.bf16.mxu0 %v2557
    %7869 = vmatmul.mubr.bf16.gmra.mrb[0].mxu0 %v2556
    %v7870 = vpop.f32.mrb[0].mxu0
    %v7871 = vadd.f32 %v7830, %v7870
    %v7872 = vpop.f32.mrb[0].mxu0
    %v7873 = vadd.f32 %v7832, %v7872
    %v7874 = vpop.f32.mrb[0].mxu0
    %v7875 = vpop.f32.mrb[0].mxu0
    %7876 = vdwg.mxu0
    %7877 = vmatprep.subr.bf16.mxu0 %v6136
    %7878 = vmatpush1.bf16.msra.mxu0 %v6135
    %7879 = vmatprep.subr.bf16.mxu0 %v6143
    %7880 = vmatpush1.bf16.msra.mxu0 %v6142
    %7881 = vmatprep.subr.bf16.mxu0 %v6150
    %7882 = vmatpush1.bf16.msra.mxu0 %v6149
    %7883 = vmatprep.subr.bf16.mxu0 %v6157
    %7884 = vmatpush1.bf16.msra.mxu0 %v6156
    %7885 = vmatprep.subr.bf16.mxu0 %v6164
    %7886 = vmatpush1.bf16.msra.mxu0 %v6163
    %7887 = vmatprep.subr.bf16.mxu0 %v6171
    %7888 = vmatpush1.bf16.msra.mxu0 %v6170
    %7889 = vmatprep.subr.bf16.mxu0 %v6178
    %7890 = vmatpush1.bf16.msra.mxu0 %v6177
    %7891 = vmatprep.subr.bf16.mxu0 %v6185
    %7892 = vmatpush1.bf16.msra.mxu0 %v6184
    %7893 = vmatprep.subr.bf16.mxu0 %v6192
    %7894 = vmatpush1.bf16.msra.mxu0 %v6191
    %7895 = vmatprep.subr.bf16.mxu0 %v6199
    %7896 = vmatpush1.bf16.msra.mxu0 %v6198
    %7897 = vmatprep.subr.bf16.mxu0 %v6206
    %7898 = vmatpush1.bf16.msra.mxu0 %v6205
    %7899 = vmatprep.subr.bf16.mxu0 %v6213
    %7900 = vmatpush1.bf16.msra.mxu0 %v6212
    %7901 = vmatprep.subr.bf16.mxu0 %v6220
    %7902 = vmatpush1.bf16.msra.mxu0 %v6219
    %7903 = vmatprep.subr.bf16.mxu0 %v6227
    %7904 = vmatpush1.bf16.msra.mxu0 %v6226
    %7905 = vmatprep.subr.bf16.mxu0 %v6234
    %7906 = vmatpush1.bf16.msra.mxu0 %v6233
    %7907 = vmatprep.subr.bf16.mxu0 %v6241
    %7908 = vmatpush1.bf16.msra.mxu0 %v6240
    %7909 = vmatprep.mubr.bf16.mxu0 %v2559
    %7910 = vmatmul.mubr.bf16.gmra.mrb[0].mxu0 %v2558
    %v7911 = vpop.f32.mrb[0].mxu0
    %v7912 = vadd.f32 %v7871, %v7911
    %v7913 = vpop.f32.mrb[0].mxu0
    %v7914 = vadd.f32 %v7873, %v7913
    %v7915 = vpop.f32.mrb[0].mxu0
    %v7916 = vpop.f32.mrb[0].mxu0
    %7917 = vdwg.mxu0
    %7918 = vmatprep.subr.bf16.mxu0 %v6248
    %7919 = vmatpush1.bf16.msra.mxu0 %v6247
    %7920 = vmatprep.subr.bf16.mxu0 %v6255
    %7921 = vmatpush1.bf16.msra.mxu0 %v6254
    %7922 = vmatprep.subr.bf16.mxu0 %v6262
    %7923 = vmatpush1.bf16.msra.mxu0 %v6261
    %7924 = vmatprep.subr.bf16.mxu0 %v6269
    %7925 = vmatpush1.bf16.msra.mxu0 %v6268
    %7926 = vmatprep.subr.bf16.mxu0 %v6276
    %7927 = vmatpush1.bf16.msra.mxu0 %v6275
    %7928 = vmatprep.subr.bf16.mxu0 %v6283
    %7929 = vmatpush1.bf16.msra.mxu0 %v6282
    %7930 = vmatprep.subr.bf16.mxu0 %v6290
    %7931 = vmatpush1.bf16.msra.mxu0 %v6289
    %7932 = vmatprep.subr.bf16.mxu0 %v6297
    %7933 = vmatpush1.bf16.msra.mxu0 %v6296
    %7934 = vmatprep.subr.bf16.mxu0 %v6304
    %7935 = vmatpush1.bf16.msra.mxu0 %v6303
    %7936 = vmatprep.subr.bf16.mxu0 %v6311
    %7937 = vmatpush1.bf16.msra.mxu0 %v6310
    %7938 = vmatprep.subr.bf16.mxu0 %v6318
    %7939 = vmatpush1.bf16.msra.mxu0 %v6317
    %7940 = vmatprep.subr.bf16.mxu0 %v6325
    %7941 = vmatpush1.bf16.msra.mxu0 %v6324
    %7942 = vmatprep.subr.bf16.mxu0 %v6332
    %7943 = vmatpush1.bf16.msra.mxu0 %v6331
    %7944 = vmatprep.subr.bf16.mxu0 %v6339
    %7945 = vmatpush1.bf16.msra.mxu0 %v6338
    %7946 = vmatprep.subr.bf16.mxu0 %v6346
    %7947 = vmatpush1.bf16.msra.mxu0 %v6345
    %7948 = vmatprep.subr.bf16.mxu0 %v6353
    %7949 = vmatpush1.bf16.msra.mxu0 %v6352
    %7950 = vmatprep.mubr.bf16.mxu0 %v2561
    %7951 = vmatmul.mubr.bf16.gmra.mrb[0].mxu0 %v2560
    %v7952 = vpop.f32.mrb[0].mxu0
    %v7953 = vadd.f32 %v7912, %v7952
    %v7954 = vpop.f32.mrb[0].mxu0
    %v7955 = vadd.f32 %v7914, %v7954
    %v7956 = vpop.f32.mrb[0].mxu0
    %v7957 = vpop.f32.mrb[0].mxu0
    %7958 = vdwg.mxu0
    %7959 = vmatprep.subr.bf16.mxu0 %v6360
    %7960 = vmatpush1.bf16.msra.mxu0 %v6359
    %7961 = vmatprep.subr.bf16.mxu0 %v6367
    %7962 = vmatpush1.bf16.msra.mxu0 %v6366
    %7963 = vmatprep.subr.bf16.mxu0 %v6374
    %7964 = vmatpush1.bf16.msra.mxu0 %v6373
    %7965 = vmatprep.subr.bf16.mxu0 %v6381
    %7966 = vmatpush1.bf16.msra.mxu0 %v6380
    %7967 = vmatprep.subr.bf16.mxu0 %v6388
    %7968 = vmatpush1.bf16.msra.mxu0 %v6387
    %7969 = vmatprep.subr.bf16.mxu0 %v6395
    %7970 = vmatpush1.bf16.msra.mxu0 %v6394
    %7971 = vmatprep.subr.bf16.mxu0 %v6402
    %7972 = vmatpush1.bf16.msra.mxu0 %v6401
    %7973 = vmatprep.subr.bf16.mxu0 %v6409
    %7974 = vmatpush1.bf16.msra.mxu0 %v6408
    %7975 = vmatprep.subr.bf16.mxu0 0
    %7976 = vmatpush1.bf16.msra.mxu0 0
    %7977 = vmatprep.subr.bf16.mxu0 0
    %7978 = vmatpush1.bf16.msra.mxu0 0
    %7979 = vmatprep.subr.bf16.mxu0 0
    %7980 = vmatpush1.bf16.msra.mxu0 0
    %7981 = vmatprep.subr.bf16.mxu0 0
    %7982 = vmatpush1.bf16.msra.mxu0 0
    %7983 = vmatprep.subr.bf16.mxu0 0
    %7984 = vmatpush1.bf16.msra.mxu0 0
    %7985 = vmatprep.subr.bf16.mxu0 0
    %7986 = vmatpush1.bf16.msra.mxu0 0
    %7987 = vmatprep.subr.bf16.mxu0 0
    %7988 = vmatpush1.bf16.msra.mxu0 0
    %7989 = vmatprep.subr.bf16.mxu0 0
    %7990 = vmatpush1.bf16.msra.mxu0 0
    %7991 = vmatprep.mubr.bf16.mxu0 0
    %7992 = vmatmul.mubr.bf16.gmra.mrb[0].mxu0 %v2562
    %v7993 = vpop.f32.mrb[0].mxu0
    %v7994 = vadd.f32 %v7953, %v7993
    %v7995 = vpop.f32.mrb[0].mxu0
    %v7996 = vadd.f32 %v7955, %v7995
    %v7997 = vpop.f32.mrb[0].mxu0
    %v7998 = vpop.f32.mrb[0].mxu0
    %7999 = vdwg.mxu0
    %8000 = vmatprep.subr.bf16.mxu0 0
    %8001 = vmatpush1.bf16.msra.mxu0 %v5689
    %8002 = vmatprep.subr.bf16.mxu0 0
    %8003 = vmatpush1.bf16.msra.mxu0 %v5696
    %8004 = vmatprep.subr.bf16.mxu0 0
    %8005 = vmatpush1.bf16.msra.mxu0 %v5703
    %8006 = vmatprep.subr.bf16.mxu0 0
    %8007 = vmatpush1.bf16.msra.mxu0 %v5710
    %8008 = vmatprep.subr.bf16.mxu0 0
    %8009 = vmatpush1.bf16.msra.mxu0 %v5717
    %8010 = vmatprep.subr.bf16.mxu0 0
    %8011 = vmatpush1.bf16.msra.mxu0 %v5724
    %8012 = vmatprep.subr.bf16.mxu0 0
    %8013 = vmatpush1.bf16.msra.mxu0 %v5731
    %8014 = vmatprep.subr.bf16.mxu0 0
    %8015 = vmatpush1.bf16.msra.mxu0 %v5738
    %8016 = vmatprep.subr.bf16.mxu0 0
    %8017 = vmatpush1.bf16.msra.mxu0 %v5745
    %8018 = vmatprep.subr.bf16.mxu0 0
    %8019 = vmatpush1.bf16.msra.mxu0 %v5752
    %8020 = vmatprep.subr.bf16.mxu0 0
    %8021 = vmatpush1.bf16.msra.mxu0 %v5759
    %8022 = vmatprep.subr.bf16.mxu0 0
    %8023 = vmatpush1.bf16.msra.mxu0 %v5766
    %8024 = vmatprep.subr.bf16.mxu0 0
    %8025 = vmatpush1.bf16.msra.mxu0 %v5773
    %8026 = vmatprep.subr.bf16.mxu0 0
    %8027 = vmatpush1.bf16.msra.mxu0 %v5780
    %8028 = vmatprep.subr.bf16.mxu0 0
    %8029 = vmatpush1.bf16.msra.mxu0 %v5787
    %8030 = vmatprep.subr.bf16.mxu0 0
    %8031 = vmatpush1.bf16.msra.mxu0 %v5794
    %8032 = vmatprep.mubr.bf16.mxu0 %v2551
    %8033 = vmatmul.mubr.bf16.gmra.mrb[0].mxu0 %v2550
    %v8034 = vpop.f32.mrb[0].mxu0
    %v8035 = vadd.f32 0.0, %v8034
    %v8036 = vpop.f32.mrb[0].mxu0
    %v8037 = vpop.f32.mrb[0].mxu0
    %v8038 = vpop.f32.mrb[0].mxu0
    %8039 = vdwg.mxu0
    %8040 = vmatprep.subr.bf16.mxu0 0
    %8041 = vmatpush1.bf16.msra.mxu0 %v5801
    %8042 = vmatprep.subr.bf16.mxu0 0
    %8043 = vmatpush1.bf16.msra.mxu0 %v5808
    %8044 = vmatprep.subr.bf16.mxu0 0
    %8045 = vmatpush1.bf16.msra.mxu0 %v5815
    %8046 = vmatprep.subr.bf16.mxu0 0
    %8047 = vmatpush1.bf16.msra.mxu0 %v5822
    %8048 = vmatprep.subr.bf16.mxu0 0
    %8049 = vmatpush1.bf16.msra.mxu0 %v5829
    %8050 = vmatprep.subr.bf16.mxu0 0
    %8051 = vmatpush1.bf16.msra.mxu0 %v5836
    %8052 = vmatprep.subr.bf16.mxu0 0
    %8053 = vmatpush1.bf16.msra.mxu0 %v5843
    %8054 = vmatprep.subr.bf16.mxu0 0
    %8055 = vmatpush1.bf16.msra.mxu0 %v5850
    %8056 = vmatprep.subr.bf16.mxu0 0
    %8057 = vmatpush1.bf16.msra.mxu0 %v5857
    %8058 = vmatprep.subr.bf16.mxu0 0
    %8059 = vmatpush1.bf16.msra.mxu0 %v5864
    %8060 = vmatprep.subr.bf16.mxu0 0
    %8061 = vmatpush1.bf16.msra.mxu0 %v5871
    %8062 = vmatprep.subr.bf16.mxu0 0
    %8063 = vmatpush1.bf16.msra.mxu0 %v5878
    %8064 = vmatprep.subr.bf16.mxu0 0
    %8065 = vmatpush1.bf16.msra.mxu0 %v5885
    %8066 = vmatprep.subr.bf16.mxu0 0
    %8067 = vmatpush1.bf16.msra.mxu0 %v5892
    %8068 = vmatprep.subr.bf16.mxu0 0
    %8069 = vmatpush1.bf16.msra.mxu0 %v5899
    %8070 = vmatprep.subr.bf16.mxu0 0
    %8071 = vmatpush1.bf16.msra.mxu0 %v5906
    %8072 = vmatprep.mubr.bf16.mxu0 %v2553
    %8073 = vmatmul.mubr.bf16.gmra.mrb[0].mxu0 %v2552
    %v8074 = vpop.f32.mrb[0].mxu0
    %v8075 = vadd.f32 %v8035, %v8074
    %v8076 = vpop.f32.mrb[0].mxu0
    %v8077 = vpop.f32.mrb[0].mxu0
    %v8078 = vpop.f32.mrb[0].mxu0
    %8079 = vdwg.mxu0
    %8080 = vmatprep.subr.bf16.mxu0 0
    %8081 = vmatpush1.bf16.msra.mxu0 %v5913
    %8082 = vmatprep.subr.bf16.mxu0 0
    %8083 = vmatpush1.bf16.msra.mxu0 %v5920
    %8084 = vmatprep.subr.bf16.mxu0 0
    %8085 = vmatpush1.bf16.msra.mxu0 %v5927
    %8086 = vmatprep.subr.bf16.mxu0 0
    %8087 = vmatpush1.bf16.msra.mxu0 %v5934
    %8088 = vmatprep.subr.bf16.mxu0 0
    %8089 = vmatpush1.bf16.msra.mxu0 %v5941
    %8090 = vmatprep.subr.bf16.mxu0 0
    %8091 = vmatpush1.bf16.msra.mxu0 %v5948
    %8092 = vmatprep.subr.bf16.mxu0 0
    %8093 = vmatpush1.bf16.msra.mxu0 %v5955
    %8094 = vmatprep.subr.bf16.mxu0 0
    %8095 = vmatpush1.bf16.msra.mxu0 %v5962
    %8096 = vmatprep.subr.bf16.mxu0 0
    %8097 = vmatpush1.bf16.msra.mxu0 %v5969
    %8098 = vmatprep.subr.bf16.mxu0 0
    %8099 = vmatpush1.bf16.msra.mxu0 %v5976
    %8100 = vmatprep.subr.bf16.mxu0 0
    %8101 = vmatpush1.bf16.msra.mxu0 %v5983
    %8102 = vmatprep.subr.bf16.mxu0 0
    %8103 = vmatpush1.bf16.msra.mxu0 %v5990
    %8104 = vmatprep.subr.bf16.mxu0 0
    %8105 = vmatpush1.bf16.msra.mxu0 %v5997
    %8106 = vmatprep.subr.bf16.mxu0 0
    %8107 = vmatpush1.bf16.msra.mxu0 %v6004
    %8108 = vmatprep.subr.bf16.mxu0 0
    %8109 = vmatpush1.bf16.msra.mxu0 %v6011
    %8110 = vmatprep.subr.bf16.mxu0 0
    %8111 = vmatpush1.bf16.msra.mxu0 %v6018
    %8112 = vmatprep.mubr.bf16.mxu0 %v2555
    %8113 = vmatmul.mubr.bf16.gmra.mrb[0].mxu0 %v2554
    %v8114 = vpop.f32.mrb[0].mxu0
    %v8115 = vadd.f32 %v8075, %v8114
    %v8116 = vpop.f32.mrb[0].mxu0
    %v8117 = vpop.f32.mrb[0].mxu0
    %v8118 = vpop.f32.mrb[0].mxu0
    %8119 = vdwg.mxu0
    %8120 = vmatprep.subr.bf16.mxu0 0
    %8121 = vmatpush1.bf16.msra.mxu0 %v6025
    %8122 = vmatprep.subr.bf16.mxu0 0
    %8123 = vmatpush1.bf16.msra.mxu0 %v6032
    %8124 = vmatprep.subr.bf16.mxu0 0
    %8125 = vmatpush1.bf16.msra.mxu0 %v6039
    %8126 = vmatprep.subr.bf16.mxu0 0
    %8127 = vmatpush1.bf16.msra.mxu0 %v6046
    %8128 = vmatprep.subr.bf16.mxu0 0
    %8129 = vmatpush1.bf16.msra.mxu0 %v6053
    %8130 = vmatprep.subr.bf16.mxu0 0
    %8131 = vmatpush1.bf16.msra.mxu0 %v6060
    %8132 = vmatprep.subr.bf16.mxu0 0
    %8133 = vmatpush1.bf16.msra.mxu0 %v6067
    %8134 = vmatprep.subr.bf16.mxu0 0
    %8135 = vmatpush1.bf16.msra.mxu0 %v6074
    %8136 = vmatprep.subr.bf16.mxu0 0
    %8137 = vmatpush1.bf16.msra.mxu0 %v6081
    %8138 = vmatprep.subr.bf16.mxu0 0
    %8139 = vmatpush1.bf16.msra.mxu0 %v6088
    %8140 = vmatprep.subr.bf16.mxu0 0
    %8141 = vmatpush1.bf16.msra.mxu0 %v6095
    %8142 = vmatprep.subr.bf16.mxu0 0
    %8143 = vmatpush1.bf16.msra.mxu0 %v6102
    %8144 = vmatprep.subr.bf16.mxu0 0
    %8145 = vmatpush1.bf16.msra.mxu0 %v6109
    %8146 = vmatprep.subr.bf16.mxu0 0
    %8147 = vmatpush1.bf16.msra.mxu0 %v6116
    %8148 = vmatprep.subr.bf16.mxu0 0
    %8149 = vmatpush1.bf16.msra.mxu0 %v6123
    %8150 = vmatprep.subr.bf16.mxu0 0
    %8151 = vmatpush1.bf16.msra.mxu0 %v6130
    %8152 = vmatprep.mubr.bf16.mxu0 %v2557
    %8153 = vmatmul.mubr.bf16.gmra.mrb[0].mxu0 %v2556
    %v8154 = vpop.f32.mrb[0].mxu0
    %v8155 = vadd.f32 %v8115, %v8154
    %v8156 = vpop.f32.mrb[0].mxu0
    %v8157 = vpop.f32.mrb[0].mxu0
    %v8158 = vpop.f32.mrb[0].mxu0
    %8159 = vdwg.mxu0
    %8160 = vmatprep.subr.bf16.mxu0 0
    %8161 = vmatpush1.bf16.msra.mxu0 %v6137
    %8162 = vmatprep.subr.bf16.mxu0 0
    %8163 = vmatpush1.bf16.msra.mxu0 %v6144
    %8164 = vmatprep.subr.bf16.mxu0 0
    %8165 = vmatpush1.bf16.msra.mxu0 %v6151
    %8166 = vmatprep.subr.bf16.mxu0 0
    %8167 = vmatpush1.bf16.msra.mxu0 %v6158
    %8168 = vmatprep.subr.bf16.mxu0 0
    %8169 = vmatpush1.bf16.msra.mxu0 %v6165
    %8170 = vmatprep.subr.bf16.mxu0 0
    %8171 = vmatpush1.bf16.msra.mxu0 %v6172
    %8172 = vmatprep.subr.bf16.mxu0 0
    %8173 = vmatpush1.bf16.msra.mxu0 %v6179
    %8174 = vmatprep.subr.bf16.mxu0 0
    %8175 = vmatpush1.bf16.msra.mxu0 %v6186
    %8176 = vmatprep.subr.bf16.mxu0 0
    %8177 = vmatpush1.bf16.msra.mxu0 %v6193
    %8178 = vmatprep.subr.bf16.mxu0 0
    %8179 = vmatpush1.bf16.msra.mxu0 %v6200
    %8180 = vmatprep.subr.bf16.mxu0 0
    %8181 = vmatpush1.bf16.msra.mxu0 %v6207
    %8182 = vmatprep.subr.bf16.mxu0 0
    %8183 = vmatpush1.bf16.msra.mxu0 %v6214
    %8184 = vmatprep.subr.bf16.mxu0 0
    %8185 = vmatpush1.bf16.msra.mxu0 %v6221
    %8186 = vmatprep.subr.bf16.mxu0 0
    %8187 = vmatpush1.bf16.msra.mxu0 %v6228
    %8188 = vmatprep.subr.bf16.mxu0 0
    %8189 = vmatpush1.bf16.msra.mxu0 %v6235
    %8190 = vmatprep.subr.bf16.mxu0 0
    %8191 = vmatpush1.bf16.msra.mxu0 %v6242
    %8192 = vmatprep.mubr.bf16.mxu0 %v2559
    %8193 = vmatmul.mubr.bf16.gmra.mrb[0].mxu0 %v2558
    %v8194 = vpop.f32.mrb[0].mxu0
    %v8195 = vadd.f32 %v8155, %v8194
    %v8196 = vpop.f32.mrb[0].mxu0
    %v8197 = vpop.f32.mrb[0].mxu0
    %v8198 = vpop.f32.mrb[0].mxu0
    %8199 = vdwg.mxu0
    %8200 = vmatprep.subr.bf16.mxu0 0
    %8201 = vmatpush1.bf16.msra.mxu0 %v6249
    %8202 = vmatprep.subr.bf16.mxu0 0
    %8203 = vmatpush1.bf16.msra.mxu0 %v6256
    %8204 = vmatprep.subr.bf16.mxu0 0
    %8205 = vmatpush1.bf16.msra.mxu0 %v6263
    %8206 = vmatprep.subr.bf16.mxu0 0
    %8207 = vmatpush1.bf16.msra.mxu0 %v6270
    %8208 = vmatprep.subr.bf16.mxu0 0
    %8209 = vmatpush1.bf16.msra.mxu0 %v6277
    %8210 = vmatprep.subr.bf16.mxu0 0
    %8211 = vmatpush1.bf16.msra.mxu0 %v6284
    %8212 = vmatprep.subr.bf16.mxu0 0
    %8213 = vmatpush1.bf16.msra.mxu0 %v6291
    %8214 = vmatprep.subr.bf16.mxu0 0
    %8215 = vmatpush1.bf16.msra.mxu0 %v6298
    %8216 = vmatprep.subr.bf16.mxu0 0
    %8217 = vmatpush1.bf16.msra.mxu0 %v6305
    %8218 = vmatprep.subr.bf16.mxu0 0
    %8219 = vmatpush1.bf16.msra.mxu0 %v6312
    %8220 = vmatprep.subr.bf16.mxu0 0
    %8221 = vmatpush1.bf16.msra.mxu0 %v6319
    %8222 = vmatprep.subr.bf16.mxu0 0
    %8223 = vmatpush1.bf16.msra.mxu0 %v6326
    %8224 = vmatprep.subr.bf16.mxu0 0
    %8225 = vmatpush1.bf16.msra.mxu0 %v6333
    %8226 = vmatprep.subr.bf16.mxu0 0
    %8227 = vmatpush1.bf16.msra.mxu0 %v6340
    %8228 = vmatprep.subr.bf16.mxu0 0
    %8229 = vmatpush1.bf16.msra.mxu0 %v6347
    %8230 = vmatprep.subr.bf16.mxu0 0
    %8231 = vmatpush1.bf16.msra.mxu0 %v6354
    %8232 = vmatprep.mubr.bf16.mxu0 %v2561
    %8233 = vmatmul.mubr.bf16.gmra.mrb[0].mxu0 %v2560
    %v8234 = vpop.f32.mrb[0].mxu0
    %v8235 = vadd.f32 %v8195, %v8234
    %v8236 = vpop.f32.mrb[0].mxu0
    %v8237 = vpop.f32.mrb[0].mxu0
    %v8238 = vpop.f32.mrb[0].mxu0
    %8239 = vdwg.mxu0
    %8240 = vmatprep.subr.bf16.mxu0 0
    %8241 = vmatpush1.bf16.msra.mxu0 %v6361
    %8242 = vmatprep.subr.bf16.mxu0 0
    %8243 = vmatpush1.bf16.msra.mxu0 %v6368
    %8244 = vmatprep.subr.bf16.mxu0 0
    %8245 = vmatpush1.bf16.msra.mxu0 %v6375
    %8246 = vmatprep.subr.bf16.mxu0 0
    %8247 = vmatpush1.bf16.msra.mxu0 %v6382
    %8248 = vmatprep.subr.bf16.mxu0 0
    %8249 = vmatpush1.bf16.msra.mxu0 %v6389
    %8250 = vmatprep.subr.bf16.mxu0 0
    %8251 = vmatpush1.bf16.msra.mxu0 %v6396
    %8252 = vmatprep.subr.bf16.mxu0 0
    %8253 = vmatpush1.bf16.msra.mxu0 %v6403
    %8254 = vmatprep.subr.bf16.mxu0 0
    %8255 = vmatpush1.bf16.msra.mxu0 %v6410
    %8256 = vmatprep.subr.bf16.mxu0 0
    %8257 = vmatpush1.bf16.msra.mxu0 0
    %8258 = vmatprep.subr.bf16.mxu0 0
    %8259 = vmatpush1.bf16.msra.mxu0 0
    %8260 = vmatprep.subr.bf16.mxu0 0
    %8261 = vmatpush1.bf16.msra.mxu0 0
    %8262 = vmatprep.subr.bf16.mxu0 0
    %8263 = vmatpush1.bf16.msra.mxu0 0
    %8264 = vmatprep.subr.bf16.mxu0 0
    %8265 = vmatpush1.bf16.msra.mxu0 0
    %8266 = vmatprep.subr.bf16.mxu0 0
    %8267 = vmatpush1.bf16.msra.mxu0 0
    %8268 = vmatprep.subr.bf16.mxu0 0
    %8269 = vmatpush1.bf16.msra.mxu0 0
    %8270 = vmatprep.subr.bf16.mxu0 0
    %8271 = vmatpush1.bf16.msra.mxu0 0
    %8272 = vmatprep.mubr.bf16.mxu0 0
    %8273 = vmatmul.mubr.bf16.gmra.mrb[0].mxu0 %v2562
    %v8274 = vpop.f32.mrb[0].mxu0
    %v8275 = vadd.f32 %v8235, %v8274
    %v8276 = vpop.f32.mrb[0].mxu0
    %v8277 = vpop.f32.mrb[0].mxu0
    %v8278 = vpop.f32.mrb[0].mxu0
    %8279 = vdwg.mxu0
    %v8280 = vsel %vm1150, %v7420, 0.0
    %v8281 = vsel %vm1150, %v7422, 0.0
    %v8282 = vadd.f32 %v8280, %v8281
    %v8283 = vsel %vm1150, %v7707, 0.0
    %v8284 = vadd.f32 %v8282, %v8283
    %v8285 = vsel %vm1150, %v7709, 0.0
    %v8286 = vadd.f32 %v8284, %v8285
    %v8287 = vsel %vm1150, %v7994, 0.0
    %v8288 = vadd.f32 %v8286, %v8287
    %v8289 = vsel %vm1150, %v7996, 0.0
    %v8290 = vadd.f32 %v8288, %v8289
    %v8291 = vsel %vm1150, %v8275, 0.0
    %v8292 = vadd.f32 %v8290, %v8291
    %8293 = vadd.xlane.f32.xlu0 %v8292
    %v8294 = vpop.xlane.xlu0 %8293
    %v8295 = vrot.slane %v8294, 4
    %v8296 = vadd.f32 %v8294, %v8295
    %v8297 = vrot.slane %v8296, 2
    %v8298 = vadd.f32 %v8296, %v8297
    %v8299 = vrot.slane %v8298, 1
    %v8300 = vadd.f32 %v8298, %v8299
    %s8301 = vtos %v8300
    %v8302 = vrcp.pop 1568.0
    %s8303 = vtos %v8302
    %s8304 = smul.f32 %s8301, %s8303
    %v8305 = vmul.f32 %v7420, %v7420
    %v8306 = vmul.f32 %v7422, %v7422
    %v8307 = vmul.f32 %v7707, %v7707
    %v8308 = vmul.f32 %v7709, %v7709
    %v8309 = vmul.f32 %v7994, %v7994
    %v8310 = vmul.f32 %v7996, %v7996
    %v8311 = vmul.f32 %v8275, %v8275
    %v8312 = vsel %vm1150, %v8305, 0.0
    %v8313 = vsel %vm1150, %v8306, 0.0
    %v8314 = vadd.f32 %v8312, %v8313
    %v8315 = vsel %vm1150, %v8307, 0.0
    %v8316 = vadd.f32 %v8314, %v8315
    %v8317 = vsel %vm1150, %v8308, 0.0
    %v8318 = vadd.f32 %v8316, %v8317
    %v8319 = vsel %vm1150, %v8309, 0.0
    %v8320 = vadd.f32 %v8318, %v8319
    %v8321 = vsel %vm1150, %v8310, 0.0
    %v8322 = vadd.f32 %v8320, %v8321
    %v8323 = vsel %vm1150, %v8311, 0.0
    %v8324 = vadd.f32 %v8322, %v8323
    %8325 = vadd.xlane.f32.xlu0 %v8324
    %v8326 = vpop.xlane.xlu0 %8325
    %v8327 = vrot.slane %v8326, 4
    %v8328 = vadd.f32 %v8326, %v8327
    %v8329 = vrot.slane %v8328, 2
    %v8330 = vadd.f32 %v8328, %v8329
    %v8331 = vrot.slane %v8330, 1
    %v8332 = vadd.f32 %v8330, %v8331
    %s8333 = vtos %v8332
    %v8334 = vrcp.pop 1568.0
    %s8335 = vtos %v8334
    %s8336 = smul.f32 %s8333, %s8335
    %s8337 = smul.f32 %s8304, %s8304
    %s8338 = ssub.f32 %s8336, %s8337
    %s8339 = sadd.f32 %s8338, 1e-05
    %v8340 = vstv %s8339
    %v8341 = vrsqrt.pop %v8340
    %s8342 = vtos %v8341
    %v8343 = vstv %s8342
    %v8344 = vrot.slane %v84, 4
    %v8346 = vmul.f32 %v8344, %v8343
    %v8347 = vstv %s8304
    %v8348 = vmul.f32 %v8347, %v8346
    %v8349 = vrot.slane %v84, 6
    %v8351 = vsub.f32 %v8349, %v8348
    %v8353 = vlaneseq
    %v8354 = vshrl.u32 %v8353, 7
    %v8355 = vsub.s32 1, %v8354
    %v8356 = vrot.slane %v8346, %v8355
    %s8357 = vtos %v8356
    %v8358 = vstv %s8357
    %v8360 = vmul.f32 %v7420, %v8358
    %v8361 = vmul.f32 %v7422, %v8358
    %v8362 = vmul.f32 %v7707, %v8358
    %v8363 = vmul.f32 %v7709, %v8358
    %v8364 = vmul.f32 %v7994, %v8358
    %v8365 = vmul.f32 %v7996, %v8358
    %v8366 = vmul.f32 %v8275, %v8358
    %v8368 = vlaneseq
    %v8369 = vshrl.u32 %v8368, 7
    %v8370 = vsub.s32 1, %v8369
    %v8371 = vrot.slane %v8351, %v8370
    %s8372 = vtos %v8371
    %v8373 = vstv %s8372
    %v8375 = vadd.f32 %v8360, %v8373
    %v8376 = vadd.f32 %v8361, %v8373
    %v8377 = vadd.f32 %v8362, %v8373
    %v8378 = vadd.f32 %v8363, %v8373
    %v8379 = vadd.f32 %v8364, %v8373
    %v8380 = vadd.f32 %v8365, %v8373
    %v8381 = vadd.f32 %v8366, %v8373
    %vm8382 = vcmp.ge.f32.partialorder %v8375, 0.0
    %vm8383 = vcmp.ge.f32.partialorder %v8376, 0.0
    %vm8384 = vcmp.ge.f32.partialorder %v8377, 0.0
    %vm8385 = vcmp.ge.f32.partialorder %v8378, 0.0
    %vm8386 = vcmp.ge.f32.partialorder %v8379, 0.0
    %vm8387 = vcmp.ge.f32.partialorder %v8380, 0.0
    %vm8388 = vcmp.ge.f32.partialorder %v8381, 0.0
    %v8389 = vmul.f32 %v8375, 0.01
    %v8390 = vmul.f32 %v8376, 0.01
    %v8391 = vmul.f32 %v8377, 0.01
    %v8392 = vmul.f32 %v8378, 0.01
    %v8393 = vmul.f32 %v8379, 0.01
    %v8394 = vmul.f32 %v8380, 0.01
    %v8395 = vmul.f32 %v8381, 0.01
    %v8396 = vsel %vm8382, %v8375, %v8389
    %v8397 = vsel %vm8383, %v8376, %v8390
    %v8398 = vsel %vm8384, %v8377, %v8391
    %v8399 = vsel %vm8385, %v8378, %v8392
    %v8400 = vsel %vm8386, %v8379, %v8393
    %v8401 = vsel %vm8387, %v8380, %v8394
    %v8402 = vsel %vm8388, %v8381, %v8395
    %v8410 = vcombine.low %v8396, %v8397
    %v8411 = vcombine.low %v8398, %v8399
    %v8413 = vunpack.c.l.s4 1983009808
    %v8414 = vunpack.c.0.s8 %v8413
    %v8415 = vlaneseq
    %v8416 = vshrl.u32 %v8415, 7
    %v8417 = vsub.s32 %v8414, %v8416
    %v8418 = vrot.slane %v8410, %v8417
    %v8420 = vunpack.c.l.s4 1983009808
    %v8421 = vunpack.c.0.s8 %v8420
    %v8422 = vlaneseq
    %v8423 = vshrl.u32 %v8422, 7
    %v8424 = vsub.s32 %v8421, %v8423
    %v8425 = vrot.slane %v8411, %v8424
    %v8426 = vcombine.low %v8418, %v8425
    %v8427 = vcombine.low %v8400, %v8401
    %v8429 = vunpack.c.l.s4 1983009808
    %v8430 = vunpack.c.0.s8 %v8429
    %v8431 = vlaneseq
    %v8432 = vshrl.u32 %v8431, 7
    %v8433 = vsub.s32 %v8430, %v8432
    %v8434 = vrot.slane %v8427, %v8433
    %v8436 = vunpack.c.l.s4 1983009808
    %v8437 = vunpack.c.0.s8 %v8436
    %v8438 = vlaneseq
    %v8439 = vshrl.u32 %v8438, 7
    %v8440 = vsub.s32 %v8437, %v8439
    %v8441 = vrot.slane %v8402, %v8440
    %v8442 = vcombine.low %v8434, %v8441
    %8445 = vst [vmem:[#allocation11] sm:$0xff] %v8426
    %8446 = vst [vmem:[#allocation11 + $0x8] sm:$0x3f] %v8442
    // Predicated region
    $region42: #{tpu_custom_call.1} parent=1 // pred_check
      _
    $region43: #{tpu_custom_call.1} parent=1 // pred_check_branch
      %8448 = sbr.rel (0) target = $region45
    $region44: #{tpu_custom_call.1} parent=1 // pred_region
      %s8450 = ssub.s32 224, 224
      %8451 = vsyncadd [#allocation4], %s8450
      %s8453 = sshll.u32 [#allocation11], 4
      %s8454 = int_to_ptr.vmem [resolvable:$true] %s8453
      %8456 = dma.vmem_to_hbm [thread:$0]  %s8454, 224, %s5, [#allocation4]
    $region45: #{tpu_custom_call.1} parent=1 // pred_fallthru
      _
    // Predicated region
    $region46: #{tpu_custom_call.1} parent=1 // pred_check
      _
    $region47: #{tpu_custom_call.1} parent=1 // pred_check_branch
      %8458 = sbr.rel (0) target = $region49
    $region48: #{tpu_custom_call.1} parent=1 // pred_region
      %8459 = dma.done [#allocation4], 224
    $region49: #{tpu_custom_call.1} parent=1 // pred_fallthru
      _
    %8460 = vsyncpa [#allocation3], 1
    %8461 = vsyncpa [#allocation6], 1
    %8462 = vsyncpa [#allocation9], 1
    %8463 = vsyncpa [#allocation4], 1

</llo_original>
